<compile_context>
chip_gen: v5e
topology: v5e:2x2
jax: 0.10.0
libtpu: 0.0.40
codegen_flags: <defaults>
</compile_context>

<pallas_src>
import jax
import jax.numpy as jnp
from jax.experimental import pallas as pl
from jax.experimental.pallas import tpu as pltpu

NEG_SLOPE = 0.01   # F.leaky_relu default
EPS = 1e-5         # nn.BatchNorm3d default


# ---------------------------------------------------------------------------
# Kernel 1: Conv3d(3x3x3, pad=1) + bias + LeakyReLU + fused BN batch-stats,
#           with the previous BatchNorm's affine fused on the input side.
# ---------------------------------------------------------------------------

def _conv_lrelu_stats_kernel(x0_ref, x1_ref, x2_ref, scl_ref, sft_ref, w_ref,
                             b_ref, y_ref, sum_ref, sq_ref, xpad_ref):
    """One (n, d) grid step computes one output depth-slice.

    x{0,1,2}_ref : (1, 1, H, W, Cin) input depth-slices d-1, d, d+1 (index maps clamp at
                   the D border; clamped slabs are zeroed here).
    scl_ref/sft_ref : (1, Cin) affine of the *previous* BatchNorm (identity for conv1),
                   applied in-kernel so no separate BN-apply HBM pass is needed.
    w_ref        : (27, Cin, Cout) taps in (kd, kh, kw) row-major order.
    b_ref        : (1, Cout) bias.
    y_ref        : (1, 1, H*W, Cout) leaky_relu(conv) output (pre-BN).
    sum_ref/sq_ref : (1, 1, Cout) per-n accumulators of sum(y) / sum(y*y) (BN batch stats).
    xpad_ref     : VMEM scratch (H+2, W+2, Cin); its zero border is the spatial padding halo.
    """
    d = pl.program_id(1)
    num_d = pl.num_programs(1)

    @pl.when(d == 0)
    def _init():
        sum_ref[...] = jnp.zeros_like(sum_ref)
        sq_ref[...] = jnp.zeros_like(sq_ref)
        xpad_ref[...] = jnp.zeros_like(xpad_ref)   # border stays zero for all d of this n

    H = x0_ref.shape[2]
    W = x0_ref.shape[3]
    Cin = x0_ref.shape[4]
    Cout = w_ref.shape[2]

    acc = jnp.zeros((H * W, Cout), jnp.float32) + b_ref[...]          # bias

    for kd, xr in enumerate((x0_ref, x1_ref, x2_ref)):
        slab = xr[0, 0].astype(jnp.float32)                           # (H, W, Cin)
        # Fused BN-apply of the previous layer (identity scale/shift for the first conv).
        slab = slab * scl_ref[...] + sft_ref[...]
        if kd != 1:
            # Depth border: this slab is out of range -> contributes zero.
            src_d = d + (kd - 1)
            valid = jnp.logical_and(src_d >= 0, src_d < num_d)
            slab = slab * jnp.where(valid, jnp.float32(1.0), jnp.float32(0.0))
        # Write into the interior of the zero-halo scratch (borders already zero).
        xpad_ref[1:H + 1, 1:W + 1, :] = slab
        for kh in range(3):
            for kw in range(3):
                patch = xpad_ref[kh:kh + H, kw:kw + W, :].reshape(H * W, Cin)
                acc = acc + jnp.dot(patch, w_ref[(kd * 3 + kh) * 3 + kw],
                                    preferred_element_type=jnp.float32)

    y = jnp.where(acc > 0, acc, NEG_SLOPE * acc)                      # LeakyReLU
    y_ref[0, 0] = y.astype(y_ref.dtype)

    # BN batch-stat accumulation fused into the conv epilogue (free VPU/XLU slots).
    sum_ref[0] = sum_ref[0] + jnp.sum(y, axis=0, keepdims=True)
    sq_ref[0] = sq_ref[0] + jnp.sum(y * y, axis=0, keepdims=True)


def conv3d_lrelu_stats(x_ndhwc, w_oidhw, bias, scale_in, shift_in):
    """3x3x3 conv (padding=1, stride=1) + bias + leaky_relu, with the previous BN affine
    applied to the input inside the kernel, and BN batch stats of the output accumulated.

    Returns (y, sum_partial, sq_partial) with y in (N, D, H, W, Cout) and the partials
    shaped (N, 1, Cout)."""
    N, D, H, W, Cin = x_ndhwc.shape
    Cout = w_oidhw.shape[0]

    # (Cout, Cin, 3, 3, 3) -> (27, Cin, Cout), taps in (kd, kh, kw) row-major order.
    w = jnp.transpose(w_oidhw, (2, 3, 4, 1, 0)).reshape(27, Cin, Cout).astype(jnp.float32)
    b = bias.reshape(1, Cout).astype(jnp.float32)

    def slab_map(k):
        # Depth halo: slice d + (k-1), clamped at the border (kernel zeroes clamped slabs).
        if k == 0:
            return lambda n, d: (n, jnp.maximum(d - 1, 0), 0, 0, 0)
        if k == 1:
            return lambda n, d: (n, d, 0, 0, 0)
        return lambda n, d: (n, jnp.minimum(d + 1, D - 1), 0, 0, 0)

    y, s, sq = pl.pallas_call(
        _conv_lrelu_stats_kernel,
        out_shape=(
            jax.ShapeDtypeStruct((N, D, H * W, Cout), jnp.float32),
            jax.ShapeDtypeStruct((N, 1, Cout), jnp.float32),
            jax.ShapeDtypeStruct((N, 1, Cout), jnp.float32),
        ),
        grid_spec=pltpu.PrefetchScalarGridSpec(
            num_scalar_prefetch=0,
            grid=(N, D),
            in_specs=[
                pl.BlockSpec((1, 1, H, W, Cin), slab_map(0)),
                pl.BlockSpec((1, 1, H, W, Cin), slab_map(1)),
                pl.BlockSpec((1, 1, H, W, Cin), slab_map(2)),
                pl.BlockSpec((1, Cin), lambda n, d: (0, 0)),
                pl.BlockSpec((1, Cin), lambda n, d: (0, 0)),
                pl.BlockSpec((27, Cin, Cout), lambda n, d: (0, 0, 0)),
                pl.BlockSpec((1, Cout), lambda n, d: (0, 0)),
            ],
            out_specs=(
                pl.BlockSpec((1, 1, H * W, Cout), lambda n, d: (n, d, 0, 0)),
                pl.BlockSpec((1, 1, Cout), lambda n, d: (n, 0, 0)),
                pl.BlockSpec((1, 1, Cout), lambda n, d: (n, 0, 0)),
            ),
            scratch_shapes=[pltpu.VMEM((H + 2, W + 2, Cin), jnp.float32)],
        ),
        compiler_params=pltpu.CompilerParams(
            dimension_semantics=("parallel", "arbitrary")),
    )(x_ndhwc.astype(jnp.float32), x_ndhwc.astype(jnp.float32), x_ndhwc.astype(jnp.float32),
      scale_in.astype(jnp.float32), shift_in.astype(jnp.float32), w, b)

    return y.reshape(N, D, H, W, Cout), s, sq


def _bn_scale_shift(s_partial, sq_partial, count, gamma, beta):
    """Turn fused per-n partial sums into the BatchNorm (scale, shift) affine."""
    s = jnp.sum(s_partial, axis=(0, 1))        # (C,)
    sq = jnp.sum(sq_partial, axis=(0, 1))      # (C,)
    mean = s / count
    var = sq / count - mean * mean             # biased variance (PyTorch BN normalization)
    # NOTE: E[x^2]-E[x]^2 in f32 can lose precision for extremely large N*D*H*W;
    #       acceptable here (values are O(1) and counts are modest).
    inv = jax.lax.rsqrt(var + EPS)
    scale = gamma.astype(jnp.float32) * inv
    shift = beta.astype(jnp.float32) - mean * scale
    return scale.reshape(1, -1), shift.reshape(1, -1)


# ---------------------------------------------------------------------------
# Kernel 2: BatchNorm apply + MaxPool3d(kernel=2, stride=2), fused.
# ---------------------------------------------------------------------------

def _bn_maxpool_kernel(y_ref, scl_ref, sft_ref, o_ref):
    """One (n, d_out) step: BN affine then 2x2x2 max over one output depth-slice.

    y_ref : (1, 2, H, Wo, 2*C) — two input depth-slices; lane axis packs [C @ even w | C @ odd w].
    scl_ref/sft_ref : (1, 2*C) — BN affine tiled twice to match the packed lane layout.
    o_ref : (1, 1, Ho, Wo, C).
    """
    C = o_ref.shape[-1]
    # Apply BN *before* the max so the result is correct for negative gamma as well.
    y = y_ref[...].astype(jnp.float32) * scl_ref[...] + sft_ref[...]
    m = jnp.max(y, axis=1)                                             # depth pair -> (1,H,Wo,2C)
    h = m.shape[1]
    m = jnp.max(m.reshape(1, h // 2, 2, m.shape[2], m.shape[3]), axis=2)  # height pair
    m = jnp.maximum(m[..., :C], m[..., C:])                            # width pair (lane halves)
    o_ref[0, 0] = m[0].astype(o_ref.dtype)


def bn_maxpool3d_2(y_ndhwc, scale, shift):
    """Fused BatchNorm-apply + MaxPool3d(2) over D, H, W."""
    N, D, H, W, C = y_ndhwc.shape
    Do, Ho, Wo = D // 2, H // 2, W // 2
    # PyTorch MaxPool3d floors odd sizes: drop trailing slices (no-op when even).
    y = y_ndhwc[:, :2 * Do, :2 * Ho, :2 * Wo, :]
    # Metadata-only reshape: pack the W pooling pair onto the lane axis (no HBM window gather).
    y = y.reshape(N, 2 * Do, 2 * Ho, Wo, 2 * C)
    scl = jnp.tile(scale.reshape(1, C).astype(jnp.float32), (1, 2))
    sft = jnp.tile(shift.reshape(1, C).astype(jnp.float32), (1, 2))

    out = pl.pallas_call(
        _bn_maxpool_kernel,
        out_shape=jax.ShapeDtypeStruct((N, Do, Ho, Wo, C), jnp.float32),
        grid_spec=pltpu.PrefetchScalarGridSpec(
            num_scalar_prefetch=0,
            grid=(N, Do),
            in_specs=[
                pl.BlockSpec((1, 2, 2 * Ho, Wo, 2 * C), lambda n, do: (n, do, 0, 0, 0)),
                pl.BlockSpec((1, 2 * C), lambda n, do: (0, 0)),
                pl.BlockSpec((1, 2 * C), lambda n, do: (0, 0)),
            ],
            out_specs=pl.BlockSpec((1, 1, Ho, Wo, C), lambda n, do: (n, do, 0, 0, 0)),
        ),
        compiler_params=pltpu.CompilerParams(
            dimension_semantics=("parallel", "parallel")),
    )(y, scl, sft)
    return out


# ---------------------------------------------------------------------------
# Full forward
# ---------------------------------------------------------------------------

def unet_dblock_forward(x_ncdhw, params):
    """Matches UNetDBlock.forward (training mode): NCDHW in / NCDHW out.
    Note: the module applies the *same* BatchNorm3d (gamma/beta) twice — reproduced here."""
    x = jnp.transpose(x_ncdhw, (0, 2, 3, 4, 1)).astype(jnp.float32)    # -> NDHWC
    N, D, H, W, Cin = x.shape
    count = N * D * H * W

    ident_scl = jnp.ones((1, Cin), jnp.float32)
    ident_sft = jnp.zeros((1, Cin), jnp.float32)

    # conv1 + leaky_relu (+ BN1 batch stats fused in the epilogue)
    y1, s1, q1 = conv3d_lrelu_stats(x, params["w1"], params["b1"], ident_scl, ident_sft)
    scale1, shift1 = _bn_scale_shift(s1, q1, count, params["gamma"], params["beta"])

    # BN1-apply fused into conv2's input path + conv2 + leaky_relu (+ BN2 stats)
    y2, s2, q2 = conv3d_lrelu_stats(y1, params["w2"], params["b2"], scale1, shift1)
    scale2, shift2 = _bn_scale_shift(s2, q2, count, params["gamma"], params["beta"])

    # BN2-apply fused into the max-pool kernel
    out = bn_maxpool3d_2(y2, scale2, shift2)
    # TODO(synk): running_mean/running_var momentum buffer updates are stateful training
    #             bookkeeping and do not affect the training-mode forward output; not modeled.
    return jnp.transpose(out, (0, 4, 1, 2, 3))                         # -> NCDHW


# ---------------------------------------------------------------------------
# Pure-JAX reference (for the correctness check)
# ---------------------------------------------------------------------------

def ref_forward(x, params):
    def conv(x, w, b):
        y = jax.lax.conv_general_dilated(
            x, w, window_strides=(1, 1, 1),
            padding=((1, 1), (1, 1), (1, 1)),
            dimension_numbers=("NCDHW", "OIDHW", "NCDHW"))
        return y + b[None, :, None, None, None]

    def lrelu(v):
        return jnp.where(v > 0, v, NEG_SLOPE * v)

    def bn(v):
        mean = jnp.mean(v, axis=(0, 2, 3, 4), keepdims=True)
        var = jnp.mean((v - mean) ** 2, axis=(0, 2, 3, 4), keepdims=True)
        g = params["gamma"][None, :, None, None, None]
        b = params["beta"][None, :, None, None, None]
        return (v - mean) / jnp.sqrt(var + EPS) * g + b

    y = bn(lrelu(conv(x, params["w1"], params["b1"])))
    y = bn(lrelu(conv(y, params["w2"], params["b2"])))
    y = jax.lax.reduce_window(
        y, -jnp.inf, jax.lax.max,
        window_dimensions=(1, 1, 2, 2, 2),
        window_strides=(1, 1, 2, 2, 2), padding="VALID")
    return y


if __name__ == "__main__":
    key = jax.random.PRNGKey(0)
    ks = jax.random.split(key, 7)

    N, in_c, out_c, S = 2, 4, 8, 8   # small shapes consistent with the module
    x = jax.random.normal(ks[0], (N, in_c, S, S, S), dtype=jnp.float32)

    params = {
        "w1": 0.1 * jax.random.normal(ks[1], (out_c, in_c, 3, 3, 3), dtype=jnp.float32),
        "b1": 0.1 * jax.random.normal(ks[2], (out_c,), dtype=jnp.float32),
        "w2": 0.1 * jax.random.normal(ks[3], (out_c, out_c, 3, 3, 3), dtype=jnp.float32),
        "b2": 0.1 * jax.random.normal(ks[4], (out_c,), dtype=jnp.float32),
        "gamma": 1.0 + 0.1 * jax.random.normal(ks[5], (out_c,), dtype=jnp.float32),
        "beta": 0.1 * jax.random.normal(ks[6], (out_c,), dtype=jnp.float32),
    }

    fwd = jax.jit(unet_dblock_forward)
    out = jax.block_until_ready(fwd(x, params))

    ref = jax.block_until_ready(ref_forward(x, params))
    assert out.shape == (N, out_c, S // 2, S // 2, S // 2), out.shape
    assert jnp.allclose(out, ref, atol=1e-4, rtol=1e-4), float(jnp.max(jnp.abs(out - ref)))

    print("KERNEL_OK")
</pallas_src>

<mosaic_0001>
module attributes {stable_mosaic.version = 11 : i64} {
  func.func @_conv_lrelu_stats_kernel(%arg0: i32, %arg1: i32, %arg2: memref<1x1x8x8x4xf32, #tpu.memory_space<vmem>>, %arg3: memref<1x1x8x8x4xf32, #tpu.memory_space<vmem>>, %arg4: memref<1x1x8x8x4xf32, #tpu.memory_space<vmem>>, %arg5: memref<1x4xf32, #tpu.memory_space<vmem>>, %arg6: memref<1x4xf32, #tpu.memory_space<vmem>>, %arg7: memref<27x4x8xf32, #tpu.memory_space<vmem>>, %arg8: memref<1x8xf32, #tpu.memory_space<vmem>>, %arg9: memref<1x1x64x8xf32, #tpu.memory_space<vmem>>, %arg10: memref<1x1x8xf32, #tpu.memory_space<vmem>>, %arg11: memref<1x1x8xf32, #tpu.memory_space<vmem>>, %arg12: memref<10x10x4xf32, #tpu.memory_space<vmem>>) attributes {dimension_semantics = [#tpu.dimension_semantics<parallel>, #tpu.dimension_semantics<arbitrary>], iteration_bounds = array<i64: 2, 8>, scalar_prefetch = 0 : i64, scratch_operands = 1 : i64, tpu.core_type = #tpu.core_type<tc>, window_params = [{transform_indices = @transform_0, window_bounds = array<i64: 1, 1, 8, 8, 4>}, {transform_indices = @transform_1, window_bounds = array<i64: 1, 1, 8, 8, 4>}, {transform_indices = @transform_2, window_bounds = array<i64: 1, 1, 8, 8, 4>}, {pipeline_mode = #tpu.pipeline_mode<synchronous>, transform_indices = @transform_3, window_bounds = array<i64: 1, 4>}, {pipeline_mode = #tpu.pipeline_mode<synchronous>, transform_indices = @transform_4, window_bounds = array<i64: 1, 4>}, {pipeline_mode = #tpu.pipeline_mode<synchronous>, transform_indices = @transform_5, window_bounds = array<i64: 27, 4, 8>}, {pipeline_mode = #tpu.pipeline_mode<synchronous>, transform_indices = @transform_6, window_bounds = array<i64: 1, 8>}, {transform_indices = @transform_7, window_bounds = array<i64: 1, 1, 64, 8>}, {transform_indices = @transform_8, window_bounds = array<i64: 1, 1, 8>}, {transform_indices = @transform_9, window_bounds = array<i64: 1, 1, 8>}]} {
    %c0_i32 = arith.constant 0 : i32
    %0 = arith.cmpi eq, %arg1, %c0_i32 : i32
    %1 = arith.extui %0 : i1 to i32
    %c0_i32_0 = arith.constant 0 : i32
    %2 = arith.cmpi ne, %1, %c0_i32_0 : i32
    scf.if %2 {
      %cst_228 = arith.constant 0.000000e+00 : f32
      %241 = vector.broadcast %cst_228 : f32 to vector<1x1x8xf32>
      %c0_229 = arith.constant 0 : index
      %c0_230 = arith.constant 0 : index
      %c0_231 = arith.constant 0 : index
      %242 = vector.load %arg10[%c0_229, %c0_230, %c0_231] : memref<1x1x8xf32, #tpu.memory_space<vmem>>, vector<1x1x8xf32>
      tpu.vector_store %arg10[%c0_229, %c0_230, %c0_231], %241 {strides = array<i32>} : memref<1x1x8xf32, #tpu.memory_space<vmem>>, vector<1x1x8xf32>,
      %cst_232 = arith.constant 0.000000e+00 : f32
      %243 = vector.broadcast %cst_232 : f32 to vector<1x1x8xf32>
      %c0_233 = arith.constant 0 : index
      %c0_234 = arith.constant 0 : index
      %c0_235 = arith.constant 0 : index
      %244 = vector.load %arg11[%c0_233, %c0_234, %c0_235] : memref<1x1x8xf32, #tpu.memory_space<vmem>>, vector<1x1x8xf32>
      tpu.vector_store %arg11[%c0_233, %c0_234, %c0_235], %243 {strides = array<i32>} : memref<1x1x8xf32, #tpu.memory_space<vmem>>, vector<1x1x8xf32>,
      %cst_236 = arith.constant 0.000000e+00 : f32
      %245 = vector.broadcast %cst_236 : f32 to vector<10x10x4xf32>
      %c0_237 = arith.constant 0 : index
      %c0_238 = arith.constant 0 : index
      %c0_239 = arith.constant 0 : index
      %246 = vector.load %arg12[%c0_237, %c0_238, %c0_239] : memref<10x10x4xf32, #tpu.memory_space<vmem>>, vector<10x10x4xf32>
      tpu.vector_store %arg12[%c0_237, %c0_238, %c0_239], %245 {strides = array<i32>} : memref<10x10x4xf32, #tpu.memory_space<vmem>>, vector<10x10x4xf32>,
    } else {
    }
    %cst = arith.constant 0.000000e+00 : f32
    %3 = vector.broadcast %cst : f32 to vector<64x8xf32>
    %c0 = arith.constant 0 : index
    %c0_1 = arith.constant 0 : index
    %4 = vector.load %arg8[%c0, %c0_1] : memref<1x8xf32, #tpu.memory_space<vmem>>, vector<1x8xf32>
    %5 = vector.broadcast %4 : vector<1x8xf32> to vector<64x8xf32>
    %6 = arith.addf %3, %5 : vector<64x8xf32>
    %c0_2 = arith.constant 0 : index
    %c0_3 = arith.constant 0 : index
    %c0_4 = arith.constant 0 : index
    %c0_5 = arith.constant 0 : index
    %c0_6 = arith.constant 0 : index
    %7 = vector.load %arg2[%c0_2, %c0_3, %c0_4, %c0_5, %c0_6] : memref<1x1x8x8x4xf32, #tpu.memory_space<vmem>>, vector<1x1x8x8x4xf32>
    %8 = vector.shape_cast %7 : vector<1x1x8x8x4xf32> to vector<8x8x4xf32>
    %c0_7 = arith.constant 0 : index
    %c0_8 = arith.constant 0 : index
    %9 = vector.load %arg5[%c0_7, %c0_8] : memref<1x4xf32, #tpu.memory_space<vmem>>, vector<1x4xf32>
    %10 = vector.shape_cast %9 : vector<1x4xf32> to vector<1x1x4xf32>
    %11 = vector.broadcast %10 : vector<1x1x4xf32> to vector<8x8x4xf32>
    %12 = arith.mulf %8, %11 : vector<8x8x4xf32>
    %c0_9 = arith.constant 0 : index
    %c0_10 = arith.constant 0 : index
    %13 = vector.load %arg6[%c0_9, %c0_10] : memref<1x4xf32, #tpu.memory_space<vmem>>, vector<1x4xf32>
    %14 = vector.shape_cast %13 : vector<1x4xf32> to vector<1x1x4xf32>
    %15 = vector.broadcast %14 : vector<1x1x4xf32> to vector<8x8x4xf32>
    %16 = arith.addf %12, %15 : vector<8x8x4xf32>
    %c-1_i32 = arith.constant -1 : i32
    %17 = arith.addi %arg1, %c-1_i32 : i32
    %c0_i32_11 = arith.constant 0 : i32
    %18 = arith.cmpi sge, %17, %c0_i32_11 : i32
    %c8_i32 = arith.constant 8 : i32
    %19 = arith.cmpi slt, %17, %c8_i32 : i32
    %20 = arith.andi %18, %19 : i1
    %cst_12 = arith.constant 1.000000e+00 : f32
    %cst_13 = arith.constant 0.000000e+00 : f32
    %21 = arith.select %20, %cst_12, %cst_13 : f32
    %22 = vector.broadcast %21 : f32 to vector<8x8x4xf32>
    %23 = arith.mulf %16, %22 : vector<8x8x4xf32>
    %c1 = arith.constant 1 : index
    %c1_14 = arith.constant 1 : index
    %c0_15 = arith.constant 0 : index
    %24 = vector.load %arg12[%c1, %c1_14, %c0_15] : memref<10x10x4xf32, #tpu.memory_space<vmem>>, vector<8x8x4xf32>
    tpu.vector_store %arg12[%c1, %c1_14, %c0_15], %23 {strides = array<i32>} : memref<10x10x4xf32, #tpu.memory_space<vmem>>, vector<8x8x4xf32>,
    %c0_16 = arith.constant 0 : index
    %c0_17 = arith.constant 0 : index
    %c0_18 = arith.constant 0 : index
    %25 = vector.load %arg12[%c0_16, %c0_17, %c0_18] : memref<10x10x4xf32, #tpu.memory_space<vmem>>, vector<8x8x4xf32>
    %26 = vector.shape_cast %25 : vector<8x8x4xf32> to vector<64x4xf32>
    %c0_19 = arith.constant 0 : index
    %c0_20 = arith.constant 0 : index
    %c0_21 = arith.constant 0 : index
    %27 = vector.load %arg7[%c0_19, %c0_20, %c0_21] : memref<27x4x8xf32, #tpu.memory_space<vmem>>, vector<1x4x8xf32>
    %28 = vector.shape_cast %27 : vector<1x4x8xf32> to vector<4x8xf32>
    %cst_22 = arith.constant dense<0.000000e+00> : vector<64x8xf32>
    %29 = tpu.matmul %26, %28, %cst_22 {dimension_numbers = #tpu.dot_dimension_numbers<[1], [0], [0], [1], [0, 0, 1, 1], [], []>} : vector<64x4xf32>, vector<4x8xf32>, vector<64x8xf32> -> vector<64x8xf32>
    %30 = arith.addf %6, %29 : vector<64x8xf32>
    %c0_23 = arith.constant 0 : index
    %c1_24 = arith.constant 1 : index
    %c0_25 = arith.constant 0 : index
    %31 = vector.load %arg12[%c0_23, %c1_24, %c0_25] : memref<10x10x4xf32, #tpu.memory_space<vmem>>, vector<8x8x4xf32>
    %32 = vector.shape_cast %31 : vector<8x8x4xf32> to vector<64x4xf32>
    %c1_26 = arith.constant 1 : index
    %c0_27 = arith.constant 0 : index
    %c0_28 = arith.constant 0 : index
    %33 = vector.load %arg7[%c1_26, %c0_27, %c0_28] : memref<27x4x8xf32, #tpu.memory_space<vmem>>, vector<1x4x8xf32>
    %34 = vector.shape_cast %33 : vector<1x4x8xf32> to vector<4x8xf32>
    %cst_29 = arith.constant dense<0.000000e+00> : vector<64x8xf32>
    %35 = tpu.matmul %32, %34, %cst_29 {dimension_numbers = #tpu.dot_dimension_numbers<[1], [0], [0], [1], [0, 0, 1, 1], [], []>} : vector<64x4xf32>, vector<4x8xf32>, vector<64x8xf32> -> vector<64x8xf32>
    %36 = arith.addf %30, %35 : vector<64x8xf32>
    %c0_30 = arith.constant 0 : index
    %c2 = arith.constant 2 : index
    %c0_31 = arith.constant 0 : index
    %37 = vector.load %arg12[%c0_30, %c2, %c0_31] : memref<10x10x4xf32, #tpu.memory_space<vmem>>, vector<8x8x4xf32>
    %38 = vector.shape_cast %37 : vector<8x8x4xf32> to vector<64x4xf32>
    %c2_32 = arith.constant 2 : index
    %c0_33 = arith.constant 0 : index
    %c0_34 = arith.constant 0 : index
    %39 = vector.load %arg7[%c2_32, %c0_33, %c0_34] : memref<27x4x8xf32, #tpu.memory_space<vmem>>, vector<1x4x8xf32>
    %40 = vector.shape_cast %39 : vector<1x4x8xf32> to vector<4x8xf32>
    %cst_35 = arith.constant dense<0.000000e+00> : vector<64x8xf32>
    %41 = tpu.matmul %38, %40, %cst_35 {dimension_numbers = #tpu.dot_dimension_numbers<[1], [0], [0], [1], [0, 0, 1, 1], [], []>} : vector<64x4xf32>, vector<4x8xf32>, vector<64x8xf32> -> vector<64x8xf32>
    %42 = arith.addf %36, %41 : vector<64x8xf32>
    %c1_36 = arith.constant 1 : index
    %c0_37 = arith.constant 0 : index
    %c0_38 = arith.constant 0 : index
    %43 = vector.load %arg12[%c1_36, %c0_37, %c0_38] : memref<10x10x4xf32, #tpu.memory_space<vmem>>, vector<8x8x4xf32>
    %44 = vector.shape_cast %43 : vector<8x8x4xf32> to vector<64x4xf32>
    %c3 = arith.constant 3 : index
    %c0_39 = arith.constant 0 : index
    %c0_40 = arith.constant 0 : index
    %45 = vector.load %arg7[%c3, %c0_39, %c0_40] : memref<27x4x8xf32, #tpu.memory_space<vmem>>, vector<1x4x8xf32>
    %46 = vector.shape_cast %45 : vector<1x4x8xf32> to vector<4x8xf32>
    %cst_41 = arith.constant dense<0.000000e+00> : vector<64x8xf32>
    %47 = tpu.matmul %44, %46, %cst_41 {dimension_numbers = #tpu.dot_dimension_numbers<[1], [0], [0], [1], [0, 0, 1, 1], [], []>} : vector<64x4xf32>, vector<4x8xf32>, vector<64x8xf32> -> vector<64x8xf32>
    %48 = arith.addf %42, %47 : vector<64x8xf32>
    %c1_42 = arith.constant 1 : index
    %c1_43 = arith.constant 1 : index
    %c0_44 = arith.constant 0 : index
    %49 = vector.load %arg12[%c1_42, %c1_43, %c0_44] : memref<10x10x4xf32, #tpu.memory_space<vmem>>, vector<8x8x4xf32>
    %50 = vector.shape_cast %49 : vector<8x8x4xf32> to vector<64x4xf32>
    %c4 = arith.constant 4 : index
    %c0_45 = arith.constant 0 : index
    %c0_46 = arith.constant 0 : index
    %51 = vector.load %arg7[%c4, %c0_45, %c0_46] : memref<27x4x8xf32, #tpu.memory_space<vmem>>, vector<1x4x8xf32>
    %52 = vector.shape_cast %51 : vector<1x4x8xf32> to vector<4x8xf32>
    %cst_47 = arith.constant dense<0.000000e+00> : vector<64x8xf32>
    %53 = tpu.matmul %50, %52, %cst_47 {dimension_numbers = #tpu.dot_dimension_numbers<[1], [0], [0], [1], [0, 0, 1, 1], [], []>} : vector<64x4xf32>, vector<4x8xf32>, vector<64x8xf32> -> vector<64x8xf32>
    %54 = arith.addf %48, %53 : vector<64x8xf32>
    %c1_48 = arith.constant 1 : index
    %c2_49 = arith.constant 2 : index
    %c0_50 = arith.constant 0 : index
    %55 = vector.load %arg12[%c1_48, %c2_49, %c0_50] : memref<10x10x4xf32, #tpu.memory_space<vmem>>, vector<8x8x4xf32>
    %56 = vector.shape_cast %55 : vector<8x8x4xf32> to vector<64x4xf32>
    %c5 = arith.constant 5 : index
    %c0_51 = arith.constant 0 : index
    %c0_52 = arith.constant 0 : index
    %57 = vector.load %arg7[%c5, %c0_51, %c0_52] : memref<27x4x8xf32, #tpu.memory_space<vmem>>, vector<1x4x8xf32>
    %58 = vector.shape_cast %57 : vector<1x4x8xf32> to vector<4x8xf32>
    %cst_53 = arith.constant dense<0.000000e+00> : vector<64x8xf32>
    %59 = tpu.matmul %56, %58, %cst_53 {dimension_numbers = #tpu.dot_dimension_numbers<[1], [0], [0], [1], [0, 0, 1, 1], [], []>} : vector<64x4xf32>, vector<4x8xf32>, vector<64x8xf32> -> vector<64x8xf32>
    %60 = arith.addf %54, %59 : vector<64x8xf32>
    %c2_54 = arith.constant 2 : index
    %c0_55 = arith.constant 0 : index
    %c0_56 = arith.constant 0 : index
    %61 = vector.load %arg12[%c2_54, %c0_55, %c0_56] : memref<10x10x4xf32, #tpu.memory_space<vmem>>, vector<8x8x4xf32>
    %62 = vector.shape_cast %61 : vector<8x8x4xf32> to vector<64x4xf32>
    %c6 = arith.constant 6 : index
    %c0_57 = arith.constant 0 : index
    %c0_58 = arith.constant 0 : index
    %63 = vector.load %arg7[%c6, %c0_57, %c0_58] : memref<27x4x8xf32, #tpu.memory_space<vmem>>, vector<1x4x8xf32>
    %64 = vector.shape_cast %63 : vector<1x4x8xf32> to vector<4x8xf32>
    %cst_59 = arith.constant dense<0.000000e+00> : vector<64x8xf32>
    %65 = tpu.matmul %62, %64, %cst_59 {dimension_numbers = #tpu.dot_dimension_numbers<[1], [0], [0], [1], [0, 0, 1, 1], [], []>} : vector<64x4xf32>, vector<4x8xf32>, vector<64x8xf32> -> vector<64x8xf32>
    %66 = arith.addf %60, %65 : vector<64x8xf32>
    %c2_60 = arith.constant 2 : index
    %c1_61 = arith.constant 1 : index
    %c0_62 = arith.constant 0 : index
    %67 = vector.load %arg12[%c2_60, %c1_61, %c0_62] : memref<10x10x4xf32, #tpu.memory_space<vmem>>, vector<8x8x4xf32>
    %68 = vector.shape_cast %67 : vector<8x8x4xf32> to vector<64x4xf32>
    %c7 = arith.constant 7 : index
    %c0_63 = arith.constant 0 : index
    %c0_64 = arith.constant 0 : index
    %69 = vector.load %arg7[%c7, %c0_63, %c0_64] : memref<27x4x8xf32, #tpu.memory_space<vmem>>, vector<1x4x8xf32>
    %70 = vector.shape_cast %69 : vector<1x4x8xf32> to vector<4x8xf32>
    %cst_65 = arith.constant dense<0.000000e+00> : vector<64x8xf32>
    %71 = tpu.matmul %68, %70, %cst_65 {dimension_numbers = #tpu.dot_dimension_numbers<[1], [0], [0], [1], [0, 0, 1, 1], [], []>} : vector<64x4xf32>, vector<4x8xf32>, vector<64x8xf32> -> vector<64x8xf32>
    %72 = arith.addf %66, %71 : vector<64x8xf32>
    %c2_66 = arith.constant 2 : index
    %c2_67 = arith.constant 2 : index
    %c0_68 = arith.constant 0 : index
    %73 = vector.load %arg12[%c2_66, %c2_67, %c0_68] : memref<10x10x4xf32, #tpu.memory_space<vmem>>, vector<8x8x4xf32>
    %74 = vector.shape_cast %73 : vector<8x8x4xf32> to vector<64x4xf32>
    %c8 = arith.constant 8 : index
    %c0_69 = arith.constant 0 : index
    %c0_70 = arith.constant 0 : index
    %75 = vector.load %arg7[%c8, %c0_69, %c0_70] : memref<27x4x8xf32, #tpu.memory_space<vmem>>, vector<1x4x8xf32>
    %76 = vector.shape_cast %75 : vector<1x4x8xf32> to vector<4x8xf32>
    %cst_71 = arith.constant dense<0.000000e+00> : vector<64x8xf32>
    %77 = tpu.matmul %74, %76, %cst_71 {dimension_numbers = #tpu.dot_dimension_numbers<[1], [0], [0], [1], [0, 0, 1, 1], [], []>} : vector<64x4xf32>, vector<4x8xf32>, vector<64x8xf32> -> vector<64x8xf32>
    %78 = arith.addf %72, %77 : vector<64x8xf32>
    %c0_72 = arith.constant 0 : index
    %c0_73 = arith.constant 0 : index
    %c0_74 = arith.constant 0 : index
    %c0_75 = arith.constant 0 : index
    %c0_76 = arith.constant 0 : index
    %79 = vector.load %arg3[%c0_72, %c0_73, %c0_74, %c0_75, %c0_76] : memref<1x1x8x8x4xf32, #tpu.memory_space<vmem>>, vector<1x1x8x8x4xf32>
    %80 = vector.shape_cast %79 : vector<1x1x8x8x4xf32> to vector<8x8x4xf32>
    %c0_77 = arith.constant 0 : index
    %c0_78 = arith.constant 0 : index
    %81 = vector.load %arg5[%c0_77, %c0_78] : memref<1x4xf32, #tpu.memory_space<vmem>>, vector<1x4xf32>
    %82 = vector.shape_cast %81 : vector<1x4xf32> to vector<1x1x4xf32>
    %83 = vector.broadcast %82 : vector<1x1x4xf32> to vector<8x8x4xf32>
    %84 = arith.mulf %80, %83 : vector<8x8x4xf32>
    %c0_79 = arith.constant 0 : index
    %c0_80 = arith.constant 0 : index
    %85 = vector.load %arg6[%c0_79, %c0_80] : memref<1x4xf32, #tpu.memory_space<vmem>>, vector<1x4xf32>
    %86 = vector.shape_cast %85 : vector<1x4xf32> to vector<1x1x4xf32>
    %87 = vector.broadcast %86 : vector<1x1x4xf32> to vector<8x8x4xf32>
    %88 = arith.addf %84, %87 : vector<8x8x4xf32>
    %c1_81 = arith.constant 1 : index
    %c1_82 = arith.constant 1 : index
    %c0_83 = arith.constant 0 : index
    %89 = vector.load %arg12[%c1_81, %c1_82, %c0_83] : memref<10x10x4xf32, #tpu.memory_space<vmem>>, vector<8x8x4xf32>
    tpu.vector_store %arg12[%c1_81, %c1_82, %c0_83], %88 {strides = array<i32>} : memref<10x10x4xf32, #tpu.memory_space<vmem>>, vector<8x8x4xf32>,
    %c0_84 = arith.constant 0 : index
    %c0_85 = arith.constant 0 : index
    %c0_86 = arith.constant 0 : index
    %90 = vector.load %arg12[%c0_84, %c0_85, %c0_86] : memref<10x10x4xf32, #tpu.memory_space<vmem>>, vector<8x8x4xf32>
    %91 = vector.shape_cast %90 : vector<8x8x4xf32> to vector<64x4xf32>
    %c9 = arith.constant 9 : index
    %c0_87 = arith.constant 0 : index
    %c0_88 = arith.constant 0 : index
    %92 = vector.load %arg7[%c9, %c0_87, %c0_88] : memref<27x4x8xf32, #tpu.memory_space<vmem>>, vector<1x4x8xf32>
    %93 = vector.shape_cast %92 : vector<1x4x8xf32> to vector<4x8xf32>
    %cst_89 = arith.constant dense<0.000000e+00> : vector<64x8xf32>
    %94 = tpu.matmul %91, %93, %cst_89 {dimension_numbers = #tpu.dot_dimension_numbers<[1], [0], [0], [1], [0, 0, 1, 1], [], []>} : vector<64x4xf32>, vector<4x8xf32>, vector<64x8xf32> -> vector<64x8xf32>
    %95 = arith.addf %78, %94 : vector<64x8xf32>
    %c0_90 = arith.constant 0 : index
    %c1_91 = arith.constant 1 : index
    %c0_92 = arith.constant 0 : index
    %96 = vector.load %arg12[%c0_90, %c1_91, %c0_92] : memref<10x10x4xf32, #tpu.memory_space<vmem>>, vector<8x8x4xf32>
    %97 = vector.shape_cast %96 : vector<8x8x4xf32> to vector<64x4xf32>
    %c10 = arith.constant 10 : index
    %c0_93 = arith.constant 0 : index
    %c0_94 = arith.constant 0 : index
    %98 = vector.load %arg7[%c10, %c0_93, %c0_94] : memref<27x4x8xf32, #tpu.memory_space<vmem>>, vector<1x4x8xf32>
    %99 = vector.shape_cast %98 : vector<1x4x8xf32> to vector<4x8xf32>
    %cst_95 = arith.constant dense<0.000000e+00> : vector<64x8xf32>
    %100 = tpu.matmul %97, %99, %cst_95 {dimension_numbers = #tpu.dot_dimension_numbers<[1], [0], [0], [1], [0, 0, 1, 1], [], []>} : vector<64x4xf32>, vector<4x8xf32>, vector<64x8xf32> -> vector<64x8xf32>
    %101 = arith.addf %95, %100 : vector<64x8xf32>
    %c0_96 = arith.constant 0 : index
    %c2_97 = arith.constant 2 : index
    %c0_98 = arith.constant 0 : index
    %102 = vector.load %arg12[%c0_96, %c2_97, %c0_98] : memref<10x10x4xf32, #tpu.memory_space<vmem>>, vector<8x8x4xf32>
    %103 = vector.shape_cast %102 : vector<8x8x4xf32> to vector<64x4xf32>
    %c11 = arith.constant 11 : index
    %c0_99 = arith.constant 0 : index
    %c0_100 = arith.constant 0 : index
    %104 = vector.load %arg7[%c11, %c0_99, %c0_100] : memref<27x4x8xf32, #tpu.memory_space<vmem>>, vector<1x4x8xf32>
    %105 = vector.shape_cast %104 : vector<1x4x8xf32> to vector<4x8xf32>
    %cst_101 = arith.constant dense<0.000000e+00> : vector<64x8xf32>
    %106 = tpu.matmul %103, %105, %cst_101 {dimension_numbers = #tpu.dot_dimension_numbers<[1], [0], [0], [1], [0, 0, 1, 1], [], []>} : vector<64x4xf32>, vector<4x8xf32>, vector<64x8xf32> -> vector<64x8xf32>
    %107 = arith.addf %101, %106 : vector<64x8xf32>
    %c1_102 = arith.constant 1 : index
    %c0_103 = arith.constant 0 : index
    %c0_104 = arith.constant 0 : index
    %108 = vector.load %arg12[%c1_102, %c0_103, %c0_104] : memref<10x10x4xf32, #tpu.memory_space<vmem>>, vector<8x8x4xf32>
    %109 = vector.shape_cast %108 : vector<8x8x4xf32> to vector<64x4xf32>
    %c12 = arith.constant 12 : index
    %c0_105 = arith.constant 0 : index
    %c0_106 = arith.constant 0 : index
    %110 = vector.load %arg7[%c12, %c0_105, %c0_106] : memref<27x4x8xf32, #tpu.memory_space<vmem>>, vector<1x4x8xf32>
    %111 = vector.shape_cast %110 : vector<1x4x8xf32> to vector<4x8xf32>
    %cst_107 = arith.constant dense<0.000000e+00> : vector<64x8xf32>
    %112 = tpu.matmul %109, %111, %cst_107 {dimension_numbers = #tpu.dot_dimension_numbers<[1], [0], [0], [1], [0, 0, 1, 1], [], []>} : vector<64x4xf32>, vector<4x8xf32>, vector<64x8xf32> -> vector<64x8xf32>
    %113 = arith.addf %107, %112 : vector<64x8xf32>
    %c1_108 = arith.constant 1 : index
    %c1_109 = arith.constant 1 : index
    %c0_110 = arith.constant 0 : index
    %114 = vector.load %arg12[%c1_108, %c1_109, %c0_110] : memref<10x10x4xf32, #tpu.memory_space<vmem>>, vector<8x8x4xf32>
    %115 = vector.shape_cast %114 : vector<8x8x4xf32> to vector<64x4xf32>
    %c13 = arith.constant 13 : index
    %c0_111 = arith.constant 0 : index
    %c0_112 = arith.constant 0 : index
    %116 = vector.load %arg7[%c13, %c0_111, %c0_112] : memref<27x4x8xf32, #tpu.memory_space<vmem>>, vector<1x4x8xf32>
    %117 = vector.shape_cast %116 : vector<1x4x8xf32> to vector<4x8xf32>
    %cst_113 = arith.constant dense<0.000000e+00> : vector<64x8xf32>
    %118 = tpu.matmul %115, %117, %cst_113 {dimension_numbers = #tpu.dot_dimension_numbers<[1], [0], [0], [1], [0, 0, 1, 1], [], []>} : vector<64x4xf32>, vector<4x8xf32>, vector<64x8xf32> -> vector<64x8xf32>
    %119 = arith.addf %113, %118 : vector<64x8xf32>
    %c1_114 = arith.constant 1 : index
    %c2_115 = arith.constant 2 : index
    %c0_116 = arith.constant 0 : index
    %120 = vector.load %arg12[%c1_114, %c2_115, %c0_116] : memref<10x10x4xf32, #tpu.memory_space<vmem>>, vector<8x8x4xf32>
    %121 = vector.shape_cast %120 : vector<8x8x4xf32> to vector<64x4xf32>
    %c14 = arith.constant 14 : index
    %c0_117 = arith.constant 0 : index
    %c0_118 = arith.constant 0 : index
    %122 = vector.load %arg7[%c14, %c0_117, %c0_118] : memref<27x4x8xf32, #tpu.memory_space<vmem>>, vector<1x4x8xf32>
    %123 = vector.shape_cast %122 : vector<1x4x8xf32> to vector<4x8xf32>
    %cst_119 = arith.constant dense<0.000000e+00> : vector<64x8xf32>
    %124 = tpu.matmul %121, %123, %cst_119 {dimension_numbers = #tpu.dot_dimension_numbers<[1], [0], [0], [1], [0, 0, 1, 1], [], []>} : vector<64x4xf32>, vector<4x8xf32>, vector<64x8xf32> -> vector<64x8xf32>
    %125 = arith.addf %119, %124 : vector<64x8xf32>
    %c2_120 = arith.constant 2 : index
    %c0_121 = arith.constant 0 : index
    %c0_122 = arith.constant 0 : index
    %126 = vector.load %arg12[%c2_120, %c0_121, %c0_122] : memref<10x10x4xf32, #tpu.memory_space<vmem>>, vector<8x8x4xf32>
    %127 = vector.shape_cast %126 : vector<8x8x4xf32> to vector<64x4xf32>
    %c15 = arith.constant 15 : index
    %c0_123 = arith.constant 0 : index
    %c0_124 = arith.constant 0 : index
    %128 = vector.load %arg7[%c15, %c0_123, %c0_124] : memref<27x4x8xf32, #tpu.memory_space<vmem>>, vector<1x4x8xf32>
    %129 = vector.shape_cast %128 : vector<1x4x8xf32> to vector<4x8xf32>
    %cst_125 = arith.constant dense<0.000000e+00> : vector<64x8xf32>
    %130 = tpu.matmul %127, %129, %cst_125 {dimension_numbers = #tpu.dot_dimension_numbers<[1], [0], [0], [1], [0, 0, 1, 1], [], []>} : vector<64x4xf32>, vector<4x8xf32>, vector<64x8xf32> -> vector<64x8xf32>
    %131 = arith.addf %125, %130 : vector<64x8xf32>
    %c2_126 = arith.constant 2 : index
    %c1_127 = arith.constant 1 : index
    %c0_128 = arith.constant 0 : index
    %132 = vector.load %arg12[%c2_126, %c1_127, %c0_128] : memref<10x10x4xf32, #tpu.memory_space<vmem>>, vector<8x8x4xf32>
    %133 = vector.shape_cast %132 : vector<8x8x4xf32> to vector<64x4xf32>
    %c16 = arith.constant 16 : index
    %c0_129 = arith.constant 0 : index
    %c0_130 = arith.constant 0 : index
    %134 = vector.load %arg7[%c16, %c0_129, %c0_130] : memref<27x4x8xf32, #tpu.memory_space<vmem>>, vector<1x4x8xf32>
    %135 = vector.shape_cast %134 : vector<1x4x8xf32> to vector<4x8xf32>
    %cst_131 = arith.constant dense<0.000000e+00> : vector<64x8xf32>
    %136 = tpu.matmul %133, %135, %cst_131 {dimension_numbers = #tpu.dot_dimension_numbers<[1], [0], [0], [1], [0, 0, 1, 1], [], []>} : vector<64x4xf32>, vector<4x8xf32>, vector<64x8xf32> -> vector<64x8xf32>
    %137 = arith.addf %131, %136 : vector<64x8xf32>
    %c2_132 = arith.constant 2 : index
    %c2_133 = arith.constant 2 : index
    %c0_134 = arith.constant 0 : index
    %138 = vector.load %arg12[%c2_132, %c2_133, %c0_134] : memref<10x10x4xf32, #tpu.memory_space<vmem>>, vector<8x8x4xf32>
    %139 = vector.shape_cast %138 : vector<8x8x4xf32> to vector<64x4xf32>
    %c17 = arith.constant 17 : index
    %c0_135 = arith.constant 0 : index
    %c0_136 = arith.constant 0 : index
    %140 = vector.load %arg7[%c17, %c0_135, %c0_136] : memref<27x4x8xf32, #tpu.memory_space<vmem>>, vector<1x4x8xf32>
    %141 = vector.shape_cast %140 : vector<1x4x8xf32> to vector<4x8xf32>
    %cst_137 = arith.constant dense<0.000000e+00> : vector<64x8xf32>
    %142 = tpu.matmul %139, %141, %cst_137 {dimension_numbers = #tpu.dot_dimension_numbers<[1], [0], [0], [1], [0, 0, 1, 1], [], []>} : vector<64x4xf32>, vector<4x8xf32>, vector<64x8xf32> -> vector<64x8xf32>
    %143 = arith.addf %137, %142 : vector<64x8xf32>
    %c0_138 = arith.constant 0 : index
    %c0_139 = arith.constant 0 : index
    %c0_140 = arith.constant 0 : index
    %c0_141 = arith.constant 0 : index
    %c0_142 = arith.constant 0 : index
    %144 = vector.load %arg4[%c0_138, %c0_139, %c0_140, %c0_141, %c0_142] : memref<1x1x8x8x4xf32, #tpu.memory_space<vmem>>, vector<1x1x8x8x4xf32>
    %145 = vector.shape_cast %144 : vector<1x1x8x8x4xf32> to vector<8x8x4xf32>
    %c0_143 = arith.constant 0 : index
    %c0_144 = arith.constant 0 : index
    %146 = vector.load %arg5[%c0_143, %c0_144] : memref<1x4xf32, #tpu.memory_space<vmem>>, vector<1x4xf32>
    %147 = vector.shape_cast %146 : vector<1x4xf32> to vector<1x1x4xf32>
    %148 = vector.broadcast %147 : vector<1x1x4xf32> to vector<8x8x4xf32>
    %149 = arith.mulf %145, %148 : vector<8x8x4xf32>
    %c0_145 = arith.constant 0 : index
    %c0_146 = arith.constant 0 : index
    %150 = vector.load %arg6[%c0_145, %c0_146] : memref<1x4xf32, #tpu.memory_space<vmem>>, vector<1x4xf32>
    %151 = vector.shape_cast %150 : vector<1x4xf32> to vector<1x1x4xf32>
    %152 = vector.broadcast %151 : vector<1x1x4xf32> to vector<8x8x4xf32>
    %153 = arith.addf %149, %152 : vector<8x8x4xf32>
    %c1_i32 = arith.constant 1 : i32
    %154 = arith.addi %arg1, %c1_i32 : i32
    %c0_i32_147 = arith.constant 0 : i32
    %155 = arith.cmpi sge, %154, %c0_i32_147 : i32
    %c8_i32_148 = arith.constant 8 : i32
    %156 = arith.cmpi slt, %154, %c8_i32_148 : i32
    %157 = arith.andi %155, %156 : i1
    %cst_149 = arith.constant 1.000000e+00 : f32
    %cst_150 = arith.constant 0.000000e+00 : f32
    %158 = arith.select %157, %cst_149, %cst_150 : f32
    %159 = vector.broadcast %158 : f32 to vector<8x8x4xf32>
    %160 = arith.mulf %153, %159 : vector<8x8x4xf32>
    %c1_151 = arith.constant 1 : index
    %c1_152 = arith.constant 1 : index
    %c0_153 = arith.constant 0 : index
    %161 = vector.load %arg12[%c1_151, %c1_152, %c0_153] : memref<10x10x4xf32, #tpu.memory_space<vmem>>, vector<8x8x4xf32>
    tpu.vector_store %arg12[%c1_151, %c1_152, %c0_153], %160 {strides = array<i32>} : memref<10x10x4xf32, #tpu.memory_space<vmem>>, vector<8x8x4xf32>,
    %c0_154 = arith.constant 0 : index
    %c0_155 = arith.constant 0 : index
    %c0_156 = arith.constant 0 : index
    %162 = vector.load %arg12[%c0_154, %c0_155, %c0_156] : memref<10x10x4xf32, #tpu.memory_space<vmem>>, vector<8x8x4xf32>
    %163 = vector.shape_cast %162 : vector<8x8x4xf32> to vector<64x4xf32>
    %c18 = arith.constant 18 : index
    %c0_157 = arith.constant 0 : index
    %c0_158 = arith.constant 0 : index
    %164 = vector.load %arg7[%c18, %c0_157, %c0_158] : memref<27x4x8xf32, #tpu.memory_space<vmem>>, vector<1x4x8xf32>
    %165 = vector.shape_cast %164 : vector<1x4x8xf32> to vector<4x8xf32>
    %cst_159 = arith.constant dense<0.000000e+00> : vector<64x8xf32>
    %166 = tpu.matmul %163, %165, %cst_159 {dimension_numbers = #tpu.dot_dimension_numbers<[1], [0], [0], [1], [0, 0, 1, 1], [], []>} : vector<64x4xf32>, vector<4x8xf32>, vector<64x8xf32> -> vector<64x8xf32>
    %167 = arith.addf %143, %166 : vector<64x8xf32>
    %c0_160 = arith.constant 0 : index
    %c1_161 = arith.constant 1 : index
    %c0_162 = arith.constant 0 : index
    %168 = vector.load %arg12[%c0_160, %c1_161, %c0_162] : memref<10x10x4xf32, #tpu.memory_space<vmem>>, vector<8x8x4xf32>
    %169 = vector.shape_cast %168 : vector<8x8x4xf32> to vector<64x4xf32>
    %c19 = arith.constant 19 : index
    %c0_163 = arith.constant 0 : index
    %c0_164 = arith.constant 0 : index
    %170 = vector.load %arg7[%c19, %c0_163, %c0_164] : memref<27x4x8xf32, #tpu.memory_space<vmem>>, vector<1x4x8xf32>
    %171 = vector.shape_cast %170 : vector<1x4x8xf32> to vector<4x8xf32>
    %cst_165 = arith.constant dense<0.000000e+00> : vector<64x8xf32>
    %172 = tpu.matmul %169, %171, %cst_165 {dimension_numbers = #tpu.dot_dimension_numbers<[1], [0], [0], [1], [0, 0, 1, 1], [], []>} : vector<64x4xf32>, vector<4x8xf32>, vector<64x8xf32> -> vector<64x8xf32>
    %173 = arith.addf %167, %172 : vector<64x8xf32>
    %c0_166 = arith.constant 0 : index
    %c2_167 = arith.constant 2 : index
    %c0_168 = arith.constant 0 : index
    %174 = vector.load %arg12[%c0_166, %c2_167, %c0_168] : memref<10x10x4xf32, #tpu.memory_space<vmem>>, vector<8x8x4xf32>
    %175 = vector.shape_cast %174 : vector<8x8x4xf32> to vector<64x4xf32>
    %c20 = arith.constant 20 : index
    %c0_169 = arith.constant 0 : index
    %c0_170 = arith.constant 0 : index
    %176 = vector.load %arg7[%c20, %c0_169, %c0_170] : memref<27x4x8xf32, #tpu.memory_space<vmem>>, vector<1x4x8xf32>
    %177 = vector.shape_cast %176 : vector<1x4x8xf32> to vector<4x8xf32>
    %cst_171 = arith.constant dense<0.000000e+00> : vector<64x8xf32>
    %178 = tpu.matmul %175, %177, %cst_171 {dimension_numbers = #tpu.dot_dimension_numbers<[1], [0], [0], [1], [0, 0, 1, 1], [], []>} : vector<64x4xf32>, vector<4x8xf32>, vector<64x8xf32> -> vector<64x8xf32>
    %179 = arith.addf %173, %178 : vector<64x8xf32>
    %c1_172 = arith.constant 1 : index
    %c0_173 = arith.constant 0 : index
    %c0_174 = arith.constant 0 : index
    %180 = vector.load %arg12[%c1_172, %c0_173, %c0_174] : memref<10x10x4xf32, #tpu.memory_space<vmem>>, vector<8x8x4xf32>
    %181 = vector.shape_cast %180 : vector<8x8x4xf32> to vector<64x4xf32>
    %c21 = arith.constant 21 : index
    %c0_175 = arith.constant 0 : index
    %c0_176 = arith.constant 0 : index
    %182 = vector.load %arg7[%c21, %c0_175, %c0_176] : memref<27x4x8xf32, #tpu.memory_space<vmem>>, vector<1x4x8xf32>
    %183 = vector.shape_cast %182 : vector<1x4x8xf32> to vector<4x8xf32>
    %cst_177 = arith.constant dense<0.000000e+00> : vector<64x8xf32>
    %184 = tpu.matmul %181, %183, %cst_177 {dimension_numbers = #tpu.dot_dimension_numbers<[1], [0], [0], [1], [0, 0, 1, 1], [], []>} : vector<64x4xf32>, vector<4x8xf32>, vector<64x8xf32> -> vector<64x8xf32>
    %185 = arith.addf %179, %184 : vector<64x8xf32>
    %c1_178 = arith.constant 1 : index
    %c1_179 = arith.constant 1 : index
    %c0_180 = arith.constant 0 : index
    %186 = vector.load %arg12[%c1_178, %c1_179, %c0_180] : memref<10x10x4xf32, #tpu.memory_space<vmem>>, vector<8x8x4xf32>
    %187 = vector.shape_cast %186 : vector<8x8x4xf32> to vector<64x4xf32>
    %c22 = arith.constant 22 : index
    %c0_181 = arith.constant 0 : index
    %c0_182 = arith.constant 0 : index
    %188 = vector.load %arg7[%c22, %c0_181, %c0_182] : memref<27x4x8xf32, #tpu.memory_space<vmem>>, vector<1x4x8xf32>
    %189 = vector.shape_cast %188 : vector<1x4x8xf32> to vector<4x8xf32>
    %cst_183 = arith.constant dense<0.000000e+00> : vector<64x8xf32>
    %190 = tpu.matmul %187, %189, %cst_183 {dimension_numbers = #tpu.dot_dimension_numbers<[1], [0], [0], [1], [0, 0, 1, 1], [], []>} : vector<64x4xf32>, vector<4x8xf32>, vector<64x8xf32> -> vector<64x8xf32>
    %191 = arith.addf %185, %190 : vector<64x8xf32>
    %c1_184 = arith.constant 1 : index
    %c2_185 = arith.constant 2 : index
    %c0_186 = arith.constant 0 : index
    %192 = vector.load %arg12[%c1_184, %c2_185, %c0_186] : memref<10x10x4xf32, #tpu.memory_space<vmem>>, vector<8x8x4xf32>
    %193 = vector.shape_cast %192 : vector<8x8x4xf32> to vector<64x4xf32>
    %c23 = arith.constant 23 : index
    %c0_187 = arith.constant 0 : index
    %c0_188 = arith.constant 0 : index
    %194 = vector.load %arg7[%c23, %c0_187, %c0_188] : memref<27x4x8xf32, #tpu.memory_space<vmem>>, vector<1x4x8xf32>
    %195 = vector.shape_cast %194 : vector<1x4x8xf32> to vector<4x8xf32>
    %cst_189 = arith.constant dense<0.000000e+00> : vector<64x8xf32>
    %196 = tpu.matmul %193, %195, %cst_189 {dimension_numbers = #tpu.dot_dimension_numbers<[1], [0], [0], [1], [0, 0, 1, 1], [], []>} : vector<64x4xf32>, vector<4x8xf32>, vector<64x8xf32> -> vector<64x8xf32>
    %197 = arith.addf %191, %196 : vector<64x8xf32>
    %c2_190 = arith.constant 2 : index
    %c0_191 = arith.constant 0 : index
    %c0_192 = arith.constant 0 : index
    %198 = vector.load %arg12[%c2_190, %c0_191, %c0_192] : memref<10x10x4xf32, #tpu.memory_space<vmem>>, vector<8x8x4xf32>
    %199 = vector.shape_cast %198 : vector<8x8x4xf32> to vector<64x4xf32>
    %c24 = arith.constant 24 : index
    %c0_193 = arith.constant 0 : index
    %c0_194 = arith.constant 0 : index
    %200 = vector.load %arg7[%c24, %c0_193, %c0_194] : memref<27x4x8xf32, #tpu.memory_space<vmem>>, vector<1x4x8xf32>
    %201 = vector.shape_cast %200 : vector<1x4x8xf32> to vector<4x8xf32>
    %cst_195 = arith.constant dense<0.000000e+00> : vector<64x8xf32>
    %202 = tpu.matmul %199, %201, %cst_195 {dimension_numbers = #tpu.dot_dimension_numbers<[1], [0], [0], [1], [0, 0, 1, 1], [], []>} : vector<64x4xf32>, vector<4x8xf32>, vector<64x8xf32> -> vector<64x8xf32>
    %203 = arith.addf %197, %202 : vector<64x8xf32>
    %c2_196 = arith.constant 2 : index
    %c1_197 = arith.constant 1 : index
    %c0_198 = arith.constant 0 : index
    %204 = vector.load %arg12[%c2_196, %c1_197, %c0_198] : memref<10x10x4xf32, #tpu.memory_space<vmem>>, vector<8x8x4xf32>
    %205 = vector.shape_cast %204 : vector<8x8x4xf32> to vector<64x4xf32>
    %c25 = arith.constant 25 : index
    %c0_199 = arith.constant 0 : index
    %c0_200 = arith.constant 0 : index
    %206 = vector.load %arg7[%c25, %c0_199, %c0_200] : memref<27x4x8xf32, #tpu.memory_space<vmem>>, vector<1x4x8xf32>
    %207 = vector.shape_cast %206 : vector<1x4x8xf32> to vector<4x8xf32>
    %cst_201 = arith.constant dense<0.000000e+00> : vector<64x8xf32>
    %208 = tpu.matmul %205, %207, %cst_201 {dimension_numbers = #tpu.dot_dimension_numbers<[1], [0], [0], [1], [0, 0, 1, 1], [], []>} : vector<64x4xf32>, vector<4x8xf32>, vector<64x8xf32> -> vector<64x8xf32>
    %209 = arith.addf %203, %208 : vector<64x8xf32>
    %c2_202 = arith.constant 2 : index
    %c2_203 = arith.constant 2 : index
    %c0_204 = arith.constant 0 : index
    %210 = vector.load %arg12[%c2_202, %c2_203, %c0_204] : memref<10x10x4xf32, #tpu.memory_space<vmem>>, vector<8x8x4xf32>
    %211 = vector.shape_cast %210 : vector<8x8x4xf32> to vector<64x4xf32>
    %c26 = arith.constant 26 : index
    %c0_205 = arith.constant 0 : index
    %c0_206 = arith.constant 0 : index
    %212 = vector.load %arg7[%c26, %c0_205, %c0_206] : memref<27x4x8xf32, #tpu.memory_space<vmem>>, vector<1x4x8xf32>
    %213 = vector.shape_cast %212 : vector<1x4x8xf32> to vector<4x8xf32>
    %cst_207 = arith.constant dense<0.000000e+00> : vector<64x8xf32>
    %214 = tpu.matmul %211, %213, %cst_207 {dimension_numbers = #tpu.dot_dimension_numbers<[1], [0], [0], [1], [0, 0, 1, 1], [], []>} : vector<64x4xf32>, vector<4x8xf32>, vector<64x8xf32> -> vector<64x8xf32>
    %215 = arith.addf %209, %214 : vector<64x8xf32>
    %cst_208 = arith.constant 0.000000e+00 : f32
    %216 = vector.broadcast %cst_208 : f32 to vector<64x8xf32>
    %217 = arith.cmpf ogt, %215, %216 : vector<64x8xf32>
    %cst_209 = arith.constant 0.00999999977 : f32
    %218 = vector.broadcast %cst_209 : f32 to vector<64x8xf32>
    %219 = arith.mulf %218, %215 : vector<64x8xf32>
    %220 = arith.select %217, %215, %219 : vector<64x8xi1>, vector<64x8xf32>
    %c0_210 = arith.constant 0 : index
    %c0_211 = arith.constant 0 : index
    %c0_212 = arith.constant 0 : index
    %c0_213 = arith.constant 0 : index
    %221 = vector.load %arg9[%c0_210, %c0_211, %c0_212, %c0_213] : memref<1x1x64x8xf32, #tpu.memory_space<vmem>>, vector<1x1x64x8xf32>
    %222 = vector.shape_cast %221 : vector<1x1x64x8xf32> to vector<64x8xf32>
    %223 = vector.shape_cast %220 : vector<64x8xf32> to vector<1x1x64x8xf32>
    tpu.vector_store %arg9[%c0_210, %c0_211, %c0_212, %c0_213], %223 {strides = array<i32>} : memref<1x1x64x8xf32, #tpu.memory_space<vmem>>, vector<1x1x64x8xf32>,
    %c0_214 = arith.constant 0 : index
    %c0_215 = arith.constant 0 : index
    %c0_216 = arith.constant 0 : index
    %224 = vector.load %arg10[%c0_214, %c0_215, %c0_216] : memref<1x1x8xf32, #tpu.memory_space<vmem>>, vector<1x1x8xf32>
    %225 = vector.shape_cast %224 : vector<1x1x8xf32> to vector<1x8xf32>
    %cst_217 = arith.constant dense<0.000000e+00> : vector<8xf32>
    %226 = vector.multi_reduction <add>, %220, %cst_217 [0] : vector<64x8xf32> to vector<8xf32>
    %227 = vector.shape_cast %226 : vector<8xf32> to vector<1x8xf32>
    %228 = arith.addf %225, %227 : vector<1x8xf32>
    %c0_218 = arith.constant 0 : index
    %c0_219 = arith.constant 0 : index
    %c0_220 = arith.constant 0 : index
    %229 = vector.load %arg10[%c0_218, %c0_219, %c0_220] : memref<1x1x8xf32, #tpu.memory_space<vmem>>, vector<1x1x8xf32>
    %230 = vector.shape_cast %229 : vector<1x1x8xf32> to vector<1x8xf32>
    %231 = vector.shape_cast %228 : vector<1x8xf32> to vector<1x1x8xf32>
    tpu.vector_store %arg10[%c0_218, %c0_219, %c0_220], %231 {strides = array<i32>} : memref<1x1x8xf32, #tpu.memory_space<vmem>>, vector<1x1x8xf32>,
    %c0_221 = arith.constant 0 : index
    %c0_222 = arith.constant 0 : index
    %c0_223 = arith.constant 0 : index
    %232 = vector.load %arg11[%c0_221, %c0_222, %c0_223] : memref<1x1x8xf32, #tpu.memory_space<vmem>>, vector<1x1x8xf32>
    %233 = vector.shape_cast %232 : vector<1x1x8xf32> to vector<1x8xf32>
    %234 = arith.mulf %220, %220 : vector<64x8xf32>
    %cst_224 = arith.constant dense<0.000000e+00> : vector<8xf32>
    %235 = vector.multi_reduction <add>, %234, %cst_224 [0] : vector<64x8xf32> to vector<8xf32>
    %236 = vector.shape_cast %235 : vector<8xf32> to vector<1x8xf32>
    %237 = arith.addf %233, %236 : vector<1x8xf32>
    %c0_225 = arith.constant 0 : index
    %c0_226 = arith.constant 0 : index
    %c0_227 = arith.constant 0 : index
    %238 = vector.load %arg11[%c0_225, %c0_226, %c0_227] : memref<1x1x8xf32, #tpu.memory_space<vmem>>, vector<1x1x8xf32>
    %239 = vector.shape_cast %238 : vector<1x1x8xf32> to vector<1x8xf32>
    %240 = vector.shape_cast %237 : vector<1x8xf32> to vector<1x1x8xf32>
    tpu.vector_store %arg11[%c0_225, %c0_226, %c0_227], %240 {strides = array<i32>} : memref<1x1x8xf32, #tpu.memory_space<vmem>>, vector<1x1x8xf32>,
    return
  }
  func.func @transform_0(%arg0: i32, %arg1: i32) -> (i32, i32, i32, i32, i32) {
    %c1_i32 = arith.constant 1 : i32
    %0 = arith.subi %arg1, %c1_i32 : i32
    %c0_i32 = arith.constant 0 : i32
    %1 = arith.maxsi %0, %c0_i32 : i32
    %c0_i32_0 = arith.constant 0 : i32
    %c0_i32_1 = arith.constant 0 : i32
    %c0_i32_2 = arith.constant 0 : i32
    %c0_i32_3 = arith.constant 0 : i32
    return %arg0, %1, %c0_i32_0, %c0_i32_1, %c0_i32_2 : i32, i32, i32, i32, i32
  }
  func.func @transform_1(%arg0: i32, %arg1: i32) -> (i32, i32, i32, i32, i32) {
    %c0_i32 = arith.constant 0 : i32
    %c0_i32_0 = arith.constant 0 : i32
    %c0_i32_1 = arith.constant 0 : i32
    %c0_i32_2 = arith.constant 0 : i32
    return %arg0, %arg1, %c0_i32, %c0_i32_0, %c0_i32_1 : i32, i32, i32, i32, i32
  }
  func.func @transform_2(%arg0: i32, %arg1: i32) -> (i32, i32, i32, i32, i32) {
    %c1_i32 = arith.constant 1 : i32
    %0 = arith.addi %arg1, %c1_i32 : i32
    %c7_i32 = arith.constant 7 : i32
    %1 = arith.minsi %0, %c7_i32 : i32
    %c0_i32 = arith.constant 0 : i32
    %c0_i32_0 = arith.constant 0 : i32
    %c0_i32_1 = arith.constant 0 : i32
    %c0_i32_2 = arith.constant 0 : i32
    return %arg0, %1, %c0_i32, %c0_i32_0, %c0_i32_1 : i32, i32, i32, i32, i32
  }
  func.func @transform_3(%arg0: i32, %arg1: i32) -> (i32, i32) {
    %c0_i32 = arith.constant 0 : i32
    %c0_i32_0 = arith.constant 0 : i32
    %c0_i32_1 = arith.constant 0 : i32
    return %c0_i32, %c0_i32_0 : i32, i32
  }
  func.func @transform_4(%arg0: i32, %arg1: i32) -> (i32, i32) {
    %c0_i32 = arith.constant 0 : i32
    %c0_i32_0 = arith.constant 0 : i32
    %c0_i32_1 = arith.constant 0 : i32
    return %c0_i32, %c0_i32_0 : i32, i32
  }
  func.func @transform_5(%arg0: i32, %arg1: i32) -> (i32, i32, i32) {
    %c0_i32 = arith.constant 0 : i32
    %c0_i32_0 = arith.constant 0 : i32
    %c0_i32_1 = arith.constant 0 : i32
    %c0_i32_2 = arith.constant 0 : i32
    return %c0_i32, %c0_i32_0, %c0_i32_1 : i32, i32, i32
  }
  func.func @transform_6(%arg0: i32, %arg1: i32) -> (i32, i32) {
    %c0_i32 = arith.constant 0 : i32
    %c0_i32_0 = arith.constant 0 : i32
    %c0_i32_1 = arith.constant 0 : i32
    return %c0_i32, %c0_i32_0 : i32, i32
  }
  func.func @transform_7(%arg0: i32, %arg1: i32) -> (i32, i32, i32, i32) {
    %c0_i32 = arith.constant 0 : i32
    %c0_i32_0 = arith.constant 0 : i32
    %c0_i32_1 = arith.constant 0 : i32
    return %arg0, %arg1, %c0_i32, %c0_i32_0 : i32, i32, i32, i32
  }
  func.func @transform_8(%arg0: i32, %arg1: i32) -> (i32, i32, i32) {
    %c0_i32 = arith.constant 0 : i32
    %c0_i32_0 = arith.constant 0 : i32
    %c0_i32_1 = arith.constant 0 : i32
    return %arg0, %c0_i32, %c0_i32_0 : i32, i32, i32
  }
  func.func @transform_9(%arg0: i32, %arg1: i32) -> (i32, i32, i32) {
    %c0_i32 = arith.constant 0 : i32
    %c0_i32_0 = arith.constant 0 : i32
    %c0_i32_1 = arith.constant 0 : i32
    return %arg0, %c0_i32, %c0_i32_0 : i32, i32, i32
  }
}

module attributes {stable_mosaic.version = 11 : i64} {
  func.func @_conv_lrelu_stats_kernel(%arg0: i32, %arg1: i32, %arg2: memref<1x1x8x8x8xf32, #tpu.memory_space<vmem>>, %arg3: memref<1x1x8x8x8xf32, #tpu.memory_space<vmem>>, %arg4: memref<1x1x8x8x8xf32, #tpu.memory_space<vmem>>, %arg5: memref<1x8xf32, #tpu.memory_space<vmem>>, %arg6: memref<1x8xf32, #tpu.memory_space<vmem>>, %arg7: memref<27x8x8xf32, #tpu.memory_space<vmem>>, %arg8: memref<1x8xf32, #tpu.memory_space<vmem>>, %arg9: memref<1x1x64x8xf32, #tpu.memory_space<vmem>>, %arg10: memref<1x1x8xf32, #tpu.memory_space<vmem>>, %arg11: memref<1x1x8xf32, #tpu.memory_space<vmem>>, %arg12: memref<10x10x8xf32, #tpu.memory_space<vmem>>) attributes {dimension_semantics = [#tpu.dimension_semantics<parallel>, #tpu.dimension_semantics<arbitrary>], iteration_bounds = array<i64: 2, 8>, scalar_prefetch = 0 : i64, scratch_operands = 1 : i64, tpu.core_type = #tpu.core_type<tc>, window_params = [{transform_indices = @transform_0, window_bounds = array<i64: 1, 1, 8, 8, 8>}, {transform_indices = @transform_1, window_bounds = array<i64: 1, 1, 8, 8, 8>}, {transform_indices = @transform_2, window_bounds = array<i64: 1, 1, 8, 8, 8>}, {pipeline_mode = #tpu.pipeline_mode<synchronous>, transform_indices = @transform_3, window_bounds = array<i64: 1, 8>}, {pipeline_mode = #tpu.pipeline_mode<synchronous>, transform_indices = @transform_4, window_bounds = array<i64: 1, 8>}, {pipeline_mode = #tpu.pipeline_mode<synchronous>, transform_indices = @transform_5, window_bounds = array<i64: 27, 8, 8>}, {pipeline_mode = #tpu.pipeline_mode<synchronous>, transform_indices = @transform_6, window_bounds = array<i64: 1, 8>}, {transform_indices = @transform_7, window_bounds = array<i64: 1, 1, 64, 8>}, {transform_indices = @transform_8, window_bounds = array<i64: 1, 1, 8>}, {transform_indices = @transform_9, window_bounds = array<i64: 1, 1, 8>}]} {
    %c0_i32 = arith.constant 0 : i32
    %0 = arith.cmpi eq, %arg1, %c0_i32 : i32
    %1 = arith.extui %0 : i1 to i32
    %c0_i32_0 = arith.constant 0 : i32
    %2 = arith.cmpi ne, %1, %c0_i32_0 : i32
    scf.if %2 {
      %cst_228 = arith.constant 0.000000e+00 : f32
      %241 = vector.broadcast %cst_228 : f32 to vector<1x1x8xf32>
      %c0_229 = arith.constant 0 : index
      %c0_230 = arith.constant 0 : index
      %c0_231 = arith.constant 0 : index
      %242 = vector.load %arg10[%c0_229, %c0_230, %c0_231] : memref<1x1x8xf32, #tpu.memory_space<vmem>>, vector<1x1x8xf32>
      tpu.vector_store %arg10[%c0_229, %c0_230, %c0_231], %241 {strides = array<i32>} : memref<1x1x8xf32, #tpu.memory_space<vmem>>, vector<1x1x8xf32>,
      %cst_232 = arith.constant 0.000000e+00 : f32
      %243 = vector.broadcast %cst_232 : f32 to vector<1x1x8xf32>
      %c0_233 = arith.constant 0 : index
      %c0_234 = arith.constant 0 : index
      %c0_235 = arith.constant 0 : index
      %244 = vector.load %arg11[%c0_233, %c0_234, %c0_235] : memref<1x1x8xf32, #tpu.memory_space<vmem>>, vector<1x1x8xf32>
      tpu.vector_store %arg11[%c0_233, %c0_234, %c0_235], %243 {strides = array<i32>} : memref<1x1x8xf32, #tpu.memory_space<vmem>>, vector<1x1x8xf32>,
      %cst_236 = arith.constant 0.000000e+00 : f32
      %245 = vector.broadcast %cst_236 : f32 to vector<10x10x8xf32>
      %c0_237 = arith.constant 0 : index
      %c0_238 = arith.constant 0 : index
      %c0_239 = arith.constant 0 : index
      %246 = vector.load %arg12[%c0_237, %c0_238, %c0_239] : memref<10x10x8xf32, #tpu.memory_space<vmem>>, vector<10x10x8xf32>
      tpu.vector_store %arg12[%c0_237, %c0_238, %c0_239], %245 {strides = array<i32>} : memref<10x10x8xf32, #tpu.memory_space<vmem>>, vector<10x10x8xf32>,
    } else {
    }
    %cst = arith.constant 0.000000e+00 : f32
    %3 = vector.broadcast %cst : f32 to vector<64x8xf32>
    %c0 = arith.constant 0 : index
    %c0_1 = arith.constant 0 : index
    %4 = vector.load %arg8[%c0, %c0_1] : memref<1x8xf32, #tpu.memory_space<vmem>>, vector<1x8xf32>
    %5 = vector.broadcast %4 : vector<1x8xf32> to vector<64x8xf32>
    %6 = arith.addf %3, %5 : vector<64x8xf32>
    %c0_2 = arith.constant 0 : index
    %c0_3 = arith.constant 0 : index
    %c0_4 = arith.constant 0 : index
    %c0_5 = arith.constant 0 : index
    %c0_6 = arith.constant 0 : index
    %7 = vector.load %arg2[%c0_2, %c0_3, %c0_4, %c0_5, %c0_6] : memref<1x1x8x8x8xf32, #tpu.memory_space<vmem>>, vector<1x1x8x8x8xf32>
    %8 = vector.shape_cast %7 : vector<1x1x8x8x8xf32> to vector<8x8x8xf32>
    %c0_7 = arith.constant 0 : index
    %c0_8 = arith.constant 0 : index
    %9 = vector.load %arg5[%c0_7, %c0_8] : memref<1x8xf32, #tpu.memory_space<vmem>>, vector<1x8xf32>
    %10 = vector.shape_cast %9 : vector<1x8xf32> to vector<1x1x8xf32>
    %11 = vector.broadcast %10 : vector<1x1x8xf32> to vector<8x8x8xf32>
    %12 = arith.mulf %8, %11 : vector<8x8x8xf32>
    %c0_9 = arith.constant 0 : index
    %c0_10 = arith.constant 0 : index
    %13 = vector.load %arg6[%c0_9, %c0_10] : memref<1x8xf32, #tpu.memory_space<vmem>>, vector<1x8xf32>
    %14 = vector.shape_cast %13 : vector<1x8xf32> to vector<1x1x8xf32>
    %15 = vector.broadcast %14 : vector<1x1x8xf32> to vector<8x8x8xf32>
    %16 = arith.addf %12, %15 : vector<8x8x8xf32>
    %c-1_i32 = arith.constant -1 : i32
    %17 = arith.addi %arg1, %c-1_i32 : i32
    %c0_i32_11 = arith.constant 0 : i32
    %18 = arith.cmpi sge, %17, %c0_i32_11 : i32
    %c8_i32 = arith.constant 8 : i32
    %19 = arith.cmpi slt, %17, %c8_i32 : i32
    %20 = arith.andi %18, %19 : i1
    %cst_12 = arith.constant 1.000000e+00 : f32
    %cst_13 = arith.constant 0.000000e+00 : f32
    %21 = arith.select %20, %cst_12, %cst_13 : f32
    %22 = vector.broadcast %21 : f32 to vector<8x8x8xf32>
    %23 = arith.mulf %16, %22 : vector<8x8x8xf32>
    %c1 = arith.constant 1 : index
    %c1_14 = arith.constant 1 : index
    %c0_15 = arith.constant 0 : index
    %24 = vector.load %arg12[%c1, %c1_14, %c0_15] : memref<10x10x8xf32, #tpu.memory_space<vmem>>, vector<8x8x8xf32>
    tpu.vector_store %arg12[%c1, %c1_14, %c0_15], %23 {strides = array<i32>} : memref<10x10x8xf32, #tpu.memory_space<vmem>>, vector<8x8x8xf32>,
    %c0_16 = arith.constant 0 : index
    %c0_17 = arith.constant 0 : index
    %c0_18 = arith.constant 0 : index
    %25 = vector.load %arg12[%c0_16, %c0_17, %c0_18] : memref<10x10x8xf32, #tpu.memory_space<vmem>>, vector<8x8x8xf32>
    %26 = vector.shape_cast %25 : vector<8x8x8xf32> to vector<64x8xf32>
    %c0_19 = arith.constant 0 : index
    %c0_20 = arith.constant 0 : index
    %c0_21 = arith.constant 0 : index
    %27 = vector.load %arg7[%c0_19, %c0_20, %c0_21] : memref<27x8x8xf32, #tpu.memory_space<vmem>>, vector<1x8x8xf32>
    %28 = vector.shape_cast %27 : vector<1x8x8xf32> to vector<8x8xf32>
    %cst_22 = arith.constant dense<0.000000e+00> : vector<64x8xf32>
    %29 = tpu.matmul %26, %28, %cst_22 {dimension_numbers = #tpu.dot_dimension_numbers<[1], [0], [0], [1], [0, 0, 1, 1], [], []>} : vector<64x8xf32>, vector<8x8xf32>, vector<64x8xf32> -> vector<64x8xf32>
    %30 = arith.addf %6, %29 : vector<64x8xf32>
    %c0_23 = arith.constant 0 : index
    %c1_24 = arith.constant 1 : index
    %c0_25 = arith.constant 0 : index
    %31 = vector.load %arg12[%c0_23, %c1_24, %c0_25] : memref<10x10x8xf32, #tpu.memory_space<vmem>>, vector<8x8x8xf32>
    %32 = vector.shape_cast %31 : vector<8x8x8xf32> to vector<64x8xf32>
    %c1_26 = arith.constant 1 : index
    %c0_27 = arith.constant 0 : index
    %c0_28 = arith.constant 0 : index
    %33 = vector.load %arg7[%c1_26, %c0_27, %c0_28] : memref<27x8x8xf32, #tpu.memory_space<vmem>>, vector<1x8x8xf32>
    %34 = vector.shape_cast %33 : vector<1x8x8xf32> to vector<8x8xf32>
    %cst_29 = arith.constant dense<0.000000e+00> : vector<64x8xf32>
    %35 = tpu.matmul %32, %34, %cst_29 {dimension_numbers = #tpu.dot_dimension_numbers<[1], [0], [0], [1], [0, 0, 1, 1], [], []>} : vector<64x8xf32>, vector<8x8xf32>, vector<64x8xf32> -> vector<64x8xf32>
    %36 = arith.addf %30, %35 : vector<64x8xf32>
    %c0_30 = arith.constant 0 : index
    %c2 = arith.constant 2 : index
    %c0_31 = arith.constant 0 : index
    %37 = vector.load %arg12[%c0_30, %c2, %c0_31] : memref<10x10x8xf32, #tpu.memory_space<vmem>>, vector<8x8x8xf32>
    %38 = vector.shape_cast %37 : vector<8x8x8xf32> to vector<64x8xf32>
    %c2_32 = arith.constant 2 : index
    %c0_33 = arith.constant 0 : index
    %c0_34 = arith.constant 0 : index
    %39 = vector.load %arg7[%c2_32, %c0_33, %c0_34] : memref<27x8x8xf32, #tpu.memory_space<vmem>>, vector<1x8x8xf32>
    %40 = vector.shape_cast %39 : vector<1x8x8xf32> to vector<8x8xf32>
    %cst_35 = arith.constant dense<0.000000e+00> : vector<64x8xf32>
    %41 = tpu.matmul %38, %40, %cst_35 {dimension_numbers = #tpu.dot_dimension_numbers<[1], [0], [0], [1], [0, 0, 1, 1], [], []>} : vector<64x8xf32>, vector<8x8xf32>, vector<64x8xf32> -> vector<64x8xf32>
    %42 = arith.addf %36, %41 : vector<64x8xf32>
    %c1_36 = arith.constant 1 : index
    %c0_37 = arith.constant 0 : index
    %c0_38 = arith.constant 0 : index
    %43 = vector.load %arg12[%c1_36, %c0_37, %c0_38] : memref<10x10x8xf32, #tpu.memory_space<vmem>>, vector<8x8x8xf32>
    %44 = vector.shape_cast %43 : vector<8x8x8xf32> to vector<64x8xf32>
    %c3 = arith.constant 3 : index
    %c0_39 = arith.constant 0 : index
    %c0_40 = arith.constant 0 : index
    %45 = vector.load %arg7[%c3, %c0_39, %c0_40] : memref<27x8x8xf32, #tpu.memory_space<vmem>>, vector<1x8x8xf32>
    %46 = vector.shape_cast %45 : vector<1x8x8xf32> to vector<8x8xf32>
    %cst_41 = arith.constant dense<0.000000e+00> : vector<64x8xf32>
    %47 = tpu.matmul %44, %46, %cst_41 {dimension_numbers = #tpu.dot_dimension_numbers<[1], [0], [0], [1], [0, 0, 1, 1], [], []>} : vector<64x8xf32>, vector<8x8xf32>, vector<64x8xf32> -> vector<64x8xf32>
    %48 = arith.addf %42, %47 : vector<64x8xf32>
    %c1_42 = arith.constant 1 : index
    %c1_43 = arith.constant 1 : index
    %c0_44 = arith.constant 0 : index
    %49 = vector.load %arg12[%c1_42, %c1_43, %c0_44] : memref<10x10x8xf32, #tpu.memory_space<vmem>>, vector<8x8x8xf32>
    %50 = vector.shape_cast %49 : vector<8x8x8xf32> to vector<64x8xf32>
    %c4 = arith.constant 4 : index
    %c0_45 = arith.constant 0 : index
    %c0_46 = arith.constant 0 : index
    %51 = vector.load %arg7[%c4, %c0_45, %c0_46] : memref<27x8x8xf32, #tpu.memory_space<vmem>>, vector<1x8x8xf32>
    %52 = vector.shape_cast %51 : vector<1x8x8xf32> to vector<8x8xf32>
    %cst_47 = arith.constant dense<0.000000e+00> : vector<64x8xf32>
    %53 = tpu.matmul %50, %52, %cst_47 {dimension_numbers = #tpu.dot_dimension_numbers<[1], [0], [0], [1], [0, 0, 1, 1], [], []>} : vector<64x8xf32>, vector<8x8xf32>, vector<64x8xf32> -> vector<64x8xf32>
    %54 = arith.addf %48, %53 : vector<64x8xf32>
    %c1_48 = arith.constant 1 : index
    %c2_49 = arith.constant 2 : index
    %c0_50 = arith.constant 0 : index
    %55 = vector.load %arg12[%c1_48, %c2_49, %c0_50] : memref<10x10x8xf32, #tpu.memory_space<vmem>>, vector<8x8x8xf32>
    %56 = vector.shape_cast %55 : vector<8x8x8xf32> to vector<64x8xf32>
    %c5 = arith.constant 5 : index
    %c0_51 = arith.constant 0 : index
    %c0_52 = arith.constant 0 : index
    %57 = vector.load %arg7[%c5, %c0_51, %c0_52] : memref<27x8x8xf32, #tpu.memory_space<vmem>>, vector<1x8x8xf32>
    %58 = vector.shape_cast %57 : vector<1x8x8xf32> to vector<8x8xf32>
    %cst_53 = arith.constant dense<0.000000e+00> : vector<64x8xf32>
    %59 = tpu.matmul %56, %58, %cst_53 {dimension_numbers = #tpu.dot_dimension_numbers<[1], [0], [0], [1], [0, 0, 1, 1], [], []>} : vector<64x8xf32>, vector<8x8xf32>, vector<64x8xf32> -> vector<64x8xf32>
    %60 = arith.addf %54, %59 : vector<64x8xf32>
    %c2_54 = arith.constant 2 : index
    %c0_55 = arith.constant 0 : index
    %c0_56 = arith.constant 0 : index
    %61 = vector.load %arg12[%c2_54, %c0_55, %c0_56] : memref<10x10x8xf32, #tpu.memory_space<vmem>>, vector<8x8x8xf32>
    %62 = vector.shape_cast %61 : vector<8x8x8xf32> to vector<64x8xf32>
    %c6 = arith.constant 6 : index
    %c0_57 = arith.constant 0 : index
    %c0_58 = arith.constant 0 : index
    %63 = vector.load %arg7[%c6, %c0_57, %c0_58] : memref<27x8x8xf32, #tpu.memory_space<vmem>>, vector<1x8x8xf32>
    %64 = vector.shape_cast %63 : vector<1x8x8xf32> to vector<8x8xf32>
    %cst_59 = arith.constant dense<0.000000e+00> : vector<64x8xf32>
    %65 = tpu.matmul %62, %64, %cst_59 {dimension_numbers = #tpu.dot_dimension_numbers<[1], [0], [0], [1], [0, 0, 1, 1], [], []>} : vector<64x8xf32>, vector<8x8xf32>, vector<64x8xf32> -> vector<64x8xf32>
    %66 = arith.addf %60, %65 : vector<64x8xf32>
    %c2_60 = arith.constant 2 : index
    %c1_61 = arith.constant 1 : index
    %c0_62 = arith.constant 0 : index
    %67 = vector.load %arg12[%c2_60, %c1_61, %c0_62] : memref<10x10x8xf32, #tpu.memory_space<vmem>>, vector<8x8x8xf32>
    %68 = vector.shape_cast %67 : vector<8x8x8xf32> to vector<64x8xf32>
    %c7 = arith.constant 7 : index
    %c0_63 = arith.constant 0 : index
    %c0_64 = arith.constant 0 : index
    %69 = vector.load %arg7[%c7, %c0_63, %c0_64] : memref<27x8x8xf32, #tpu.memory_space<vmem>>, vector<1x8x8xf32>
    %70 = vector.shape_cast %69 : vector<1x8x8xf32> to vector<8x8xf32>
    %cst_65 = arith.constant dense<0.000000e+00> : vector<64x8xf32>
    %71 = tpu.matmul %68, %70, %cst_65 {dimension_numbers = #tpu.dot_dimension_numbers<[1], [0], [0], [1], [0, 0, 1, 1], [], []>} : vector<64x8xf32>, vector<8x8xf32>, vector<64x8xf32> -> vector<64x8xf32>
    %72 = arith.addf %66, %71 : vector<64x8xf32>
    %c2_66 = arith.constant 2 : index
    %c2_67 = arith.constant 2 : index
    %c0_68 = arith.constant 0 : index
    %73 = vector.load %arg12[%c2_66, %c2_67, %c0_68] : memref<10x10x8xf32, #tpu.memory_space<vmem>>, vector<8x8x8xf32>
    %74 = vector.shape_cast %73 : vector<8x8x8xf32> to vector<64x8xf32>
    %c8 = arith.constant 8 : index
    %c0_69 = arith.constant 0 : index
    %c0_70 = arith.constant 0 : index
    %75 = vector.load %arg7[%c8, %c0_69, %c0_70] : memref<27x8x8xf32, #tpu.memory_space<vmem>>, vector<1x8x8xf32>
    %76 = vector.shape_cast %75 : vector<1x8x8xf32> to vector<8x8xf32>
    %cst_71 = arith.constant dense<0.000000e+00> : vector<64x8xf32>
    %77 = tpu.matmul %74, %76, %cst_71 {dimension_numbers = #tpu.dot_dimension_numbers<[1], [0], [0], [1], [0, 0, 1, 1], [], []>} : vector<64x8xf32>, vector<8x8xf32>, vector<64x8xf32> -> vector<64x8xf32>
    %78 = arith.addf %72, %77 : vector<64x8xf32>
    %c0_72 = arith.constant 0 : index
    %c0_73 = arith.constant 0 : index
    %c0_74 = arith.constant 0 : index
    %c0_75 = arith.constant 0 : index
    %c0_76 = arith.constant 0 : index
    %79 = vector.load %arg3[%c0_72, %c0_73, %c0_74, %c0_75, %c0_76] : memref<1x1x8x8x8xf32, #tpu.memory_space<vmem>>, vector<1x1x8x8x8xf32>
    %80 = vector.shape_cast %79 : vector<1x1x8x8x8xf32> to vector<8x8x8xf32>
    %c0_77 = arith.constant 0 : index
    %c0_78 = arith.constant 0 : index
    %81 = vector.load %arg5[%c0_77, %c0_78] : memref<1x8xf32, #tpu.memory_space<vmem>>, vector<1x8xf32>
    %82 = vector.shape_cast %81 : vector<1x8xf32> to vector<1x1x8xf32>
    %83 = vector.broadcast %82 : vector<1x1x8xf32> to vector<8x8x8xf32>
    %84 = arith.mulf %80, %83 : vector<8x8x8xf32>
    %c0_79 = arith.constant 0 : index
    %c0_80 = arith.constant 0 : index
    %85 = vector.load %arg6[%c0_79, %c0_80] : memref<1x8xf32, #tpu.memory_space<vmem>>, vector<1x8xf32>
    %86 = vector.shape_cast %85 : vector<1x8xf32> to vector<1x1x8xf32>
    %87 = vector.broadcast %86 : vector<1x1x8xf32> to vector<8x8x8xf32>
    %88 = arith.addf %84, %87 : vector<8x8x8xf32>
    %c1_81 = arith.constant 1 : index
    %c1_82 = arith.constant 1 : index
    %c0_83 = arith.constant 0 : index
    %89 = vector.load %arg12[%c1_81, %c1_82, %c0_83] : memref<10x10x8xf32, #tpu.memory_space<vmem>>, vector<8x8x8xf32>
    tpu.vector_store %arg12[%c1_81, %c1_82, %c0_83], %88 {strides = array<i32>} : memref<10x10x8xf32, #tpu.memory_space<vmem>>, vector<8x8x8xf32>,
    %c0_84 = arith.constant 0 : index
    %c0_85 = arith.constant 0 : index
    %c0_86 = arith.constant 0 : index
    %90 = vector.load %arg12[%c0_84, %c0_85, %c0_86] : memref<10x10x8xf32, #tpu.memory_space<vmem>>, vector<8x8x8xf32>
    %91 = vector.shape_cast %90 : vector<8x8x8xf32> to vector<64x8xf32>
    %c9 = arith.constant 9 : index
    %c0_87 = arith.constant 0 : index
    %c0_88 = arith.constant 0 : index
    %92 = vector.load %arg7[%c9, %c0_87, %c0_88] : memref<27x8x8xf32, #tpu.memory_space<vmem>>, vector<1x8x8xf32>
    %93 = vector.shape_cast %92 : vector<1x8x8xf32> to vector<8x8xf32>
    %cst_89 = arith.constant dense<0.000000e+00> : vector<64x8xf32>
    %94 = tpu.matmul %91, %93, %cst_89 {dimension_numbers = #tpu.dot_dimension_numbers<[1], [0], [0], [1], [0, 0, 1, 1], [], []>} : vector<64x8xf32>, vector<8x8xf32>, vector<64x8xf32> -> vector<64x8xf32>
    %95 = arith.addf %78, %94 : vector<64x8xf32>
    %c0_90 = arith.constant 0 : index
    %c1_91 = arith.constant 1 : index
    %c0_92 = arith.constant 0 : index
    %96 = vector.load %arg12[%c0_90, %c1_91, %c0_92] : memref<10x10x8xf32, #tpu.memory_space<vmem>>, vector<8x8x8xf32>
    %97 = vector.shape_cast %96 : vector<8x8x8xf32> to vector<64x8xf32>
    %c10 = arith.constant 10 : index
    %c0_93 = arith.constant 0 : index
    %c0_94 = arith.constant 0 : index
    %98 = vector.load %arg7[%c10, %c0_93, %c0_94] : memref<27x8x8xf32, #tpu.memory_space<vmem>>, vector<1x8x8xf32>
    %99 = vector.shape_cast %98 : vector<1x8x8xf32> to vector<8x8xf32>
    %cst_95 = arith.constant dense<0.000000e+00> : vector<64x8xf32>
    %100 = tpu.matmul %97, %99, %cst_95 {dimension_numbers = #tpu.dot_dimension_numbers<[1], [0], [0], [1], [0, 0, 1, 1], [], []>} : vector<64x8xf32>, vector<8x8xf32>, vector<64x8xf32> -> vector<64x8xf32>
    %101 = arith.addf %95, %100 : vector<64x8xf32>
    %c0_96 = arith.constant 0 : index
    %c2_97 = arith.constant 2 : index
    %c0_98 = arith.constant 0 : index
    %102 = vector.load %arg12[%c0_96, %c2_97, %c0_98] : memref<10x10x8xf32, #tpu.memory_space<vmem>>, vector<8x8x8xf32>
    %103 = vector.shape_cast %102 : vector<8x8x8xf32> to vector<64x8xf32>
    %c11 = arith.constant 11 : index
    %c0_99 = arith.constant 0 : index
    %c0_100 = arith.constant 0 : index
    %104 = vector.load %arg7[%c11, %c0_99, %c0_100] : memref<27x8x8xf32, #tpu.memory_space<vmem>>, vector<1x8x8xf32>
    %105 = vector.shape_cast %104 : vector<1x8x8xf32> to vector<8x8xf32>
    %cst_101 = arith.constant dense<0.000000e+00> : vector<64x8xf32>
    %106 = tpu.matmul %103, %105, %cst_101 {dimension_numbers = #tpu.dot_dimension_numbers<[1], [0], [0], [1], [0, 0, 1, 1], [], []>} : vector<64x8xf32>, vector<8x8xf32>, vector<64x8xf32> -> vector<64x8xf32>
    %107 = arith.addf %101, %106 : vector<64x8xf32>
    %c1_102 = arith.constant 1 : index
    %c0_103 = arith.constant 0 : index
    %c0_104 = arith.constant 0 : index
    %108 = vector.load %arg12[%c1_102, %c0_103, %c0_104] : memref<10x10x8xf32, #tpu.memory_space<vmem>>, vector<8x8x8xf32>
    %109 = vector.shape_cast %108 : vector<8x8x8xf32> to vector<64x8xf32>
    %c12 = arith.constant 12 : index
    %c0_105 = arith.constant 0 : index
    %c0_106 = arith.constant 0 : index
    %110 = vector.load %arg7[%c12, %c0_105, %c0_106] : memref<27x8x8xf32, #tpu.memory_space<vmem>>, vector<1x8x8xf32>
    %111 = vector.shape_cast %110 : vector<1x8x8xf32> to vector<8x8xf32>
    %cst_107 = arith.constant dense<0.000000e+00> : vector<64x8xf32>
    %112 = tpu.matmul %109, %111, %cst_107 {dimension_numbers = #tpu.dot_dimension_numbers<[1], [0], [0], [1], [0, 0, 1, 1], [], []>} : vector<64x8xf32>, vector<8x8xf32>, vector<64x8xf32> -> vector<64x8xf32>
    %113 = arith.addf %107, %112 : vector<64x8xf32>
    %c1_108 = arith.constant 1 : index
    %c1_109 = arith.constant 1 : index
    %c0_110 = arith.constant 0 : index
    %114 = vector.load %arg12[%c1_108, %c1_109, %c0_110] : memref<10x10x8xf32, #tpu.memory_space<vmem>>, vector<8x8x8xf32>
    %115 = vector.shape_cast %114 : vector<8x8x8xf32> to vector<64x8xf32>
    %c13 = arith.constant 13 : index
    %c0_111 = arith.constant 0 : index
    %c0_112 = arith.constant 0 : index
    %116 = vector.load %arg7[%c13, %c0_111, %c0_112] : memref<27x8x8xf32, #tpu.memory_space<vmem>>, vector<1x8x8xf32>
    %117 = vector.shape_cast %116 : vector<1x8x8xf32> to vector<8x8xf32>
    %cst_113 = arith.constant dense<0.000000e+00> : vector<64x8xf32>
    %118 = tpu.matmul %115, %117, %cst_113 {dimension_numbers = #tpu.dot_dimension_numbers<[1], [0], [0], [1], [0, 0, 1, 1], [], []>} : vector<64x8xf32>, vector<8x8xf32>, vector<64x8xf32> -> vector<64x8xf32>
    %119 = arith.addf %113, %118 : vector<64x8xf32>
    %c1_114 = arith.constant 1 : index
    %c2_115 = arith.constant 2 : index
    %c0_116 = arith.constant 0 : index
    %120 = vector.load %arg12[%c1_114, %c2_115, %c0_116] : memref<10x10x8xf32, #tpu.memory_space<vmem>>, vector<8x8x8xf32>
    %121 = vector.shape_cast %120 : vector<8x8x8xf32> to vector<64x8xf32>
    %c14 = arith.constant 14 : index
    %c0_117 = arith.constant 0 : index
    %c0_118 = arith.constant 0 : index
    %122 = vector.load %arg7[%c14, %c0_117, %c0_118] : memref<27x8x8xf32, #tpu.memory_space<vmem>>, vector<1x8x8xf32>
    %123 = vector.shape_cast %122 : vector<1x8x8xf32> to vector<8x8xf32>
    %cst_119 = arith.constant dense<0.000000e+00> : vector<64x8xf32>
    %124 = tpu.matmul %121, %123, %cst_119 {dimension_numbers = #tpu.dot_dimension_numbers<[1], [0], [0], [1], [0, 0, 1, 1], [], []>} : vector<64x8xf32>, vector<8x8xf32>, vector<64x8xf32> -> vector<64x8xf32>
    %125 = arith.addf %119, %124 : vector<64x8xf32>
    %c2_120 = arith.constant 2 : index
    %c0_121 = arith.constant 0 : index
    %c0_122 = arith.constant 0 : index
    %126 = vector.load %arg12[%c2_120, %c0_121, %c0_122] : memref<10x10x8xf32, #tpu.memory_space<vmem>>, vector<8x8x8xf32>
    %127 = vector.shape_cast %126 : vector<8x8x8xf32> to vector<64x8xf32>
    %c15 = arith.constant 15 : index
    %c0_123 = arith.constant 0 : index
    %c0_124 = arith.constant 0 : index
    %128 = vector.load %arg7[%c15, %c0_123, %c0_124] : memref<27x8x8xf32, #tpu.memory_space<vmem>>, vector<1x8x8xf32>
    %129 = vector.shape_cast %128 : vector<1x8x8xf32> to vector<8x8xf32>
    %cst_125 = arith.constant dense<0.000000e+00> : vector<64x8xf32>
    %130 = tpu.matmul %127, %129, %cst_125 {dimension_numbers = #tpu.dot_dimension_numbers<[1], [0], [0], [1], [0, 0, 1, 1], [], []>} : vector<64x8xf32>, vector<8x8xf32>, vector<64x8xf32> -> vector<64x8xf32>
    %131 = arith.addf %125, %130 : vector<64x8xf32>
    %c2_126 = arith.constant 2 : index
    %c1_127 = arith.constant 1 : index
    %c0_128 = arith.constant 0 : index
    %132 = vector.load %arg12[%c2_126, %c1_127, %c0_128] : memref<10x10x8xf32, #tpu.memory_space<vmem>>, vector<8x8x8xf32>
    %133 = vector.shape_cast %132 : vector<8x8x8xf32> to vector<64x8xf32>
    %c16 = arith.constant 16 : index
    %c0_129 = arith.constant 0 : index
    %c0_130 = arith.constant 0 : index
    %134 = vector.load %arg7[%c16, %c0_129, %c0_130] : memref<27x8x8xf32, #tpu.memory_space<vmem>>, vector<1x8x8xf32>
    %135 = vector.shape_cast %134 : vector<1x8x8xf32> to vector<8x8xf32>
    %cst_131 = arith.constant dense<0.000000e+00> : vector<64x8xf32>
    %136 = tpu.matmul %133, %135, %cst_131 {dimension_numbers = #tpu.dot_dimension_numbers<[1], [0], [0], [1], [0, 0, 1, 1], [], []>} : vector<64x8xf32>, vector<8x8xf32>, vector<64x8xf32> -> vector<64x8xf32>
    %137 = arith.addf %131, %136 : vector<64x8xf32>
    %c2_132 = arith.constant 2 : index
    %c2_133 = arith.constant 2 : index
    %c0_134 = arith.constant 0 : index
    %138 = vector.load %arg12[%c2_132, %c2_133, %c0_134] : memref<10x10x8xf32, #tpu.memory_space<vmem>>, vector<8x8x8xf32>
    %139 = vector.shape_cast %138 : vector<8x8x8xf32> to vector<64x8xf32>
    %c17 = arith.constant 17 : index
    %c0_135 = arith.constant 0 : index
    %c0_136 = arith.constant 0 : index
    %140 = vector.load %arg7[%c17, %c0_135, %c0_136] : memref<27x8x8xf32, #tpu.memory_space<vmem>>, vector<1x8x8xf32>
    %141 = vector.shape_cast %140 : vector<1x8x8xf32> to vector<8x8xf32>
    %cst_137 = arith.constant dense<0.000000e+00> : vector<64x8xf32>
    %142 = tpu.matmul %139, %141, %cst_137 {dimension_numbers = #tpu.dot_dimension_numbers<[1], [0], [0], [1], [0, 0, 1, 1], [], []>} : vector<64x8xf32>, vector<8x8xf32>, vector<64x8xf32> -> vector<64x8xf32>
    %143 = arith.addf %137, %142 : vector<64x8xf32>
    %c0_138 = arith.constant 0 : index
    %c0_139 = arith.constant 0 : index
    %c0_140 = arith.constant 0 : index
    %c0_141 = arith.constant 0 : index
    %c0_142 = arith.constant 0 : index
    %144 = vector.load %arg4[%c0_138, %c0_139, %c0_140, %c0_141, %c0_142] : memref<1x1x8x8x8xf32, #tpu.memory_space<vmem>>, vector<1x1x8x8x8xf32>
    %145 = vector.shape_cast %144 : vector<1x1x8x8x8xf32> to vector<8x8x8xf32>
    %c0_143 = arith.constant 0 : index
    %c0_144 = arith.constant 0 : index
    %146 = vector.load %arg5[%c0_143, %c0_144] : memref<1x8xf32, #tpu.memory_space<vmem>>, vector<1x8xf32>
    %147 = vector.shape_cast %146 : vector<1x8xf32> to vector<1x1x8xf32>
    %148 = vector.broadcast %147 : vector<1x1x8xf32> to vector<8x8x8xf32>
    %149 = arith.mulf %145, %148 : vector<8x8x8xf32>
    %c0_145 = arith.constant 0 : index
    %c0_146 = arith.constant 0 : index
    %150 = vector.load %arg6[%c0_145, %c0_146] : memref<1x8xf32, #tpu.memory_space<vmem>>, vector<1x8xf32>
    %151 = vector.shape_cast %150 : vector<1x8xf32> to vector<1x1x8xf32>
    %152 = vector.broadcast %151 : vector<1x1x8xf32> to vector<8x8x8xf32>
    %153 = arith.addf %149, %152 : vector<8x8x8xf32>
    %c1_i32 = arith.constant 1 : i32
    %154 = arith.addi %arg1, %c1_i32 : i32
    %c0_i32_147 = arith.constant 0 : i32
    %155 = arith.cmpi sge, %154, %c0_i32_147 : i32
    %c8_i32_148 = arith.constant 8 : i32
    %156 = arith.cmpi slt, %154, %c8_i32_148 : i32
    %157 = arith.andi %155, %156 : i1
    %cst_149 = arith.constant 1.000000e+00 : f32
    %cst_150 = arith.constant 0.000000e+00 : f32
    %158 = arith.select %157, %cst_149, %cst_150 : f32
    %159 = vector.broadcast %158 : f32 to vector<8x8x8xf32>
    %160 = arith.mulf %153, %159 : vector<8x8x8xf32>
    %c1_151 = arith.constant 1 : index
    %c1_152 = arith.constant 1 : index
    %c0_153 = arith.constant 0 : index
    %161 = vector.load %arg12[%c1_151, %c1_152, %c0_153] : memref<10x10x8xf32, #tpu.memory_space<vmem>>, vector<8x8x8xf32>
    tpu.vector_store %arg12[%c1_151, %c1_152, %c0_153], %160 {strides = array<i32>} : memref<10x10x8xf32, #tpu.memory_space<vmem>>, vector<8x8x8xf32>,
    %c0_154 = arith.constant 0 : index
    %c0_155 = arith.constant 0 : index
    %c0_156 = arith.constant 0 : index
    %162 = vector.load %arg12[%c0_154, %c0_155, %c0_156] : memref<10x10x8xf32, #tpu.memory_space<vmem>>, vector<8x8x8xf32>
    %163 = vector.shape_cast %162 : vector<8x8x8xf32> to vector<64x8xf32>
    %c18 = arith.constant 18 : index
    %c0_157 = arith.constant 0 : index
    %c0_158 = arith.constant 0 : index
    %164 = vector.load %arg7[%c18, %c0_157, %c0_158] : memref<27x8x8xf32, #tpu.memory_space<vmem>>, vector<1x8x8xf32>
    %165 = vector.shape_cast %164 : vector<1x8x8xf32> to vector<8x8xf32>
    %cst_159 = arith.constant dense<0.000000e+00> : vector<64x8xf32>
    %166 = tpu.matmul %163, %165, %cst_159 {dimension_numbers = #tpu.dot_dimension_numbers<[1], [0], [0], [1], [0, 0, 1, 1], [], []>} : vector<64x8xf32>, vector<8x8xf32>, vector<64x8xf32> -> vector<64x8xf32>
    %167 = arith.addf %143, %166 : vector<64x8xf32>
    %c0_160 = arith.constant 0 : index
    %c1_161 = arith.constant 1 : index
    %c0_162 = arith.constant 0 : index
    %168 = vector.load %arg12[%c0_160, %c1_161, %c0_162] : memref<10x10x8xf32, #tpu.memory_space<vmem>>, vector<8x8x8xf32>
    %169 = vector.shape_cast %168 : vector<8x8x8xf32> to vector<64x8xf32>
    %c19 = arith.constant 19 : index
    %c0_163 = arith.constant 0 : index
    %c0_164 = arith.constant 0 : index
    %170 = vector.load %arg7[%c19, %c0_163, %c0_164] : memref<27x8x8xf32, #tpu.memory_space<vmem>>, vector<1x8x8xf32>
    %171 = vector.shape_cast %170 : vector<1x8x8xf32> to vector<8x8xf32>
    %cst_165 = arith.constant dense<0.000000e+00> : vector<64x8xf32>
    %172 = tpu.matmul %169, %171, %cst_165 {dimension_numbers = #tpu.dot_dimension_numbers<[1], [0], [0], [1], [0, 0, 1, 1], [], []>} : vector<64x8xf32>, vector<8x8xf32>, vector<64x8xf32> -> vector<64x8xf32>
    %173 = arith.addf %167, %172 : vector<64x8xf32>
    %c0_166 = arith.constant 0 : index
    %c2_167 = arith.constant 2 : index
    %c0_168 = arith.constant 0 : index
    %174 = vector.load %arg12[%c0_166, %c2_167, %c0_168] : memref<10x10x8xf32, #tpu.memory_space<vmem>>, vector<8x8x8xf32>
    %175 = vector.shape_cast %174 : vector<8x8x8xf32> to vector<64x8xf32>
    %c20 = arith.constant 20 : index
    %c0_169 = arith.constant 0 : index
    %c0_170 = arith.constant 0 : index
    %176 = vector.load %arg7[%c20, %c0_169, %c0_170] : memref<27x8x8xf32, #tpu.memory_space<vmem>>, vector<1x8x8xf32>
    %177 = vector.shape_cast %176 : vector<1x8x8xf32> to vector<8x8xf32>
    %cst_171 = arith.constant dense<0.000000e+00> : vector<64x8xf32>
    %178 = tpu.matmul %175, %177, %cst_171 {dimension_numbers = #tpu.dot_dimension_numbers<[1], [0], [0], [1], [0, 0, 1, 1], [], []>} : vector<64x8xf32>, vector<8x8xf32>, vector<64x8xf32> -> vector<64x8xf32>
    %179 = arith.addf %173, %178 : vector<64x8xf32>
    %c1_172 = arith.constant 1 : index
    %c0_173 = arith.constant 0 : index
    %c0_174 = arith.constant 0 : index
    %180 = vector.load %arg12[%c1_172, %c0_173, %c0_174] : memref<10x10x8xf32, #tpu.memory_space<vmem>>, vector<8x8x8xf32>
    %181 = vector.shape_cast %180 : vector<8x8x8xf32> to vector<64x8xf32>
    %c21 = arith.constant 21 : index
    %c0_175 = arith.constant 0 : index
    %c0_176 = arith.constant 0 : index
    %182 = vector.load %arg7[%c21, %c0_175, %c0_176] : memref<27x8x8xf32, #tpu.memory_space<vmem>>, vector<1x8x8xf32>
    %183 = vector.shape_cast %182 : vector<1x8x8xf32> to vector<8x8xf32>
    %cst_177 = arith.constant dense<0.000000e+00> : vector<64x8xf32>
    %184 = tpu.matmul %181, %183, %cst_177 {dimension_numbers = #tpu.dot_dimension_numbers<[1], [0], [0], [1], [0, 0, 1, 1], [], []>} : vector<64x8xf32>, vector<8x8xf32>, vector<64x8xf32> -> vector<64x8xf32>
    %185 = arith.addf %179, %184 : vector<64x8xf32>
    %c1_178 = arith.constant 1 : index
    %c1_179 = arith.constant 1 : index
    %c0_180 = arith.constant 0 : index
    %186 = vector.load %arg12[%c1_178, %c1_179, %c0_180] : memref<10x10x8xf32, #tpu.memory_space<vmem>>, vector<8x8x8xf32>
    %187 = vector.shape_cast %186 : vector<8x8x8xf32> to vector<64x8xf32>
    %c22 = arith.constant 22 : index
    %c0_181 = arith.constant 0 : index
    %c0_182 = arith.constant 0 : index
    %188 = vector.load %arg7[%c22, %c0_181, %c0_182] : memref<27x8x8xf32, #tpu.memory_space<vmem>>, vector<1x8x8xf32>
    %189 = vector.shape_cast %188 : vector<1x8x8xf32> to vector<8x8xf32>
    %cst_183 = arith.constant dense<0.000000e+00> : vector<64x8xf32>
    %190 = tpu.matmul %187, %189, %cst_183 {dimension_numbers = #tpu.dot_dimension_numbers<[1], [0], [0], [1], [0, 0, 1, 1], [], []>} : vector<64x8xf32>, vector<8x8xf32>, vector<64x8xf32> -> vector<64x8xf32>
    %191 = arith.addf %185, %190 : vector<64x8xf32>
    %c1_184 = arith.constant 1 : index
    %c2_185 = arith.constant 2 : index
    %c0_186 = arith.constant 0 : index
    %192 = vector.load %arg12[%c1_184, %c2_185, %c0_186] : memref<10x10x8xf32, #tpu.memory_space<vmem>>, vector<8x8x8xf32>
    %193 = vector.shape_cast %192 : vector<8x8x8xf32> to vector<64x8xf32>
    %c23 = arith.constant 23 : index
    %c0_187 = arith.constant 0 : index
    %c0_188 = arith.constant 0 : index
    %194 = vector.load %arg7[%c23, %c0_187, %c0_188] : memref<27x8x8xf32, #tpu.memory_space<vmem>>, vector<1x8x8xf32>
    %195 = vector.shape_cast %194 : vector<1x8x8xf32> to vector<8x8xf32>
    %cst_189 = arith.constant dense<0.000000e+00> : vector<64x8xf32>
    %196 = tpu.matmul %193, %195, %cst_189 {dimension_numbers = #tpu.dot_dimension_numbers<[1], [0], [0], [1], [0, 0, 1, 1], [], []>} : vector<64x8xf32>, vector<8x8xf32>, vector<64x8xf32> -> vector<64x8xf32>
    %197 = arith.addf %191, %196 : vector<64x8xf32>
    %c2_190 = arith.constant 2 : index
    %c0_191 = arith.constant 0 : index
    %c0_192 = arith.constant 0 : index
    %198 = vector.load %arg12[%c2_190, %c0_191, %c0_192] : memref<10x10x8xf32, #tpu.memory_space<vmem>>, vector<8x8x8xf32>
    %199 = vector.shape_cast %198 : vector<8x8x8xf32> to vector<64x8xf32>
    %c24 = arith.constant 24 : index
    %c0_193 = arith.constant 0 : index
    %c0_194 = arith.constant 0 : index
    %200 = vector.load %arg7[%c24, %c0_193, %c0_194] : memref<27x8x8xf32, #tpu.memory_space<vmem>>, vector<1x8x8xf32>
    %201 = vector.shape_cast %200 : vector<1x8x8xf32> to vector<8x8xf32>
    %cst_195 = arith.constant dense<0.000000e+00> : vector<64x8xf32>
    %202 = tpu.matmul %199, %201, %cst_195 {dimension_numbers = #tpu.dot_dimension_numbers<[1], [0], [0], [1], [0, 0, 1, 1], [], []>} : vector<64x8xf32>, vector<8x8xf32>, vector<64x8xf32> -> vector<64x8xf32>
    %203 = arith.addf %197, %202 : vector<64x8xf32>
    %c2_196 = arith.constant 2 : index
    %c1_197 = arith.constant 1 : index
    %c0_198 = arith.constant 0 : index
    %204 = vector.load %arg12[%c2_196, %c1_197, %c0_198] : memref<10x10x8xf32, #tpu.memory_space<vmem>>, vector<8x8x8xf32>
    %205 = vector.shape_cast %204 : vector<8x8x8xf32> to vector<64x8xf32>
    %c25 = arith.constant 25 : index
    %c0_199 = arith.constant 0 : index
    %c0_200 = arith.constant 0 : index
    %206 = vector.load %arg7[%c25, %c0_199, %c0_200] : memref<27x8x8xf32, #tpu.memory_space<vmem>>, vector<1x8x8xf32>
    %207 = vector.shape_cast %206 : vector<1x8x8xf32> to vector<8x8xf32>
    %cst_201 = arith.constant dense<0.000000e+00> : vector<64x8xf32>
    %208 = tpu.matmul %205, %207, %cst_201 {dimension_numbers = #tpu.dot_dimension_numbers<[1], [0], [0], [1], [0, 0, 1, 1], [], []>} : vector<64x8xf32>, vector<8x8xf32>, vector<64x8xf32> -> vector<64x8xf32>
    %209 = arith.addf %203, %208 : vector<64x8xf32>
    %c2_202 = arith.constant 2 : index
    %c2_203 = arith.constant 2 : index
    %c0_204 = arith.constant 0 : index
    %210 = vector.load %arg12[%c2_202, %c2_203, %c0_204] : memref<10x10x8xf32, #tpu.memory_space<vmem>>, vector<8x8x8xf32>
    %211 = vector.shape_cast %210 : vector<8x8x8xf32> to vector<64x8xf32>
    %c26 = arith.constant 26 : index
    %c0_205 = arith.constant 0 : index
    %c0_206 = arith.constant 0 : index
    %212 = vector.load %arg7[%c26, %c0_205, %c0_206] : memref<27x8x8xf32, #tpu.memory_space<vmem>>, vector<1x8x8xf32>
    %213 = vector.shape_cast %212 : vector<1x8x8xf32> to vector<8x8xf32>
    %cst_207 = arith.constant dense<0.000000e+00> : vector<64x8xf32>
    %214 = tpu.matmul %211, %213, %cst_207 {dimension_numbers = #tpu.dot_dimension_numbers<[1], [0], [0], [1], [0, 0, 1, 1], [], []>} : vector<64x8xf32>, vector<8x8xf32>, vector<64x8xf32> -> vector<64x8xf32>
    %215 = arith.addf %209, %214 : vector<64x8xf32>
    %cst_208 = arith.constant 0.000000e+00 : f32
    %216 = vector.broadcast %cst_208 : f32 to vector<64x8xf32>
    %217 = arith.cmpf ogt, %215, %216 : vector<64x8xf32>
    %cst_209 = arith.constant 0.00999999977 : f32
    %218 = vector.broadcast %cst_209 : f32 to vector<64x8xf32>
    %219 = arith.mulf %218, %215 : vector<64x8xf32>
    %220 = arith.select %217, %215, %219 : vector<64x8xi1>, vector<64x8xf32>
    %c0_210 = arith.constant 0 : index
    %c0_211 = arith.constant 0 : index
    %c0_212 = arith.constant 0 : index
    %c0_213 = arith.constant 0 : index
    %221 = vector.load %arg9[%c0_210, %c0_211, %c0_212, %c0_213] : memref<1x1x64x8xf32, #tpu.memory_space<vmem>>, vector<1x1x64x8xf32>
    %222 = vector.shape_cast %221 : vector<1x1x64x8xf32> to vector<64x8xf32>
    %223 = vector.shape_cast %220 : vector<64x8xf32> to vector<1x1x64x8xf32>
    tpu.vector_store %arg9[%c0_210, %c0_211, %c0_212, %c0_213], %223 {strides = array<i32>} : memref<1x1x64x8xf32, #tpu.memory_space<vmem>>, vector<1x1x64x8xf32>,
    %c0_214 = arith.constant 0 : index
    %c0_215 = arith.constant 0 : index
    %c0_216 = arith.constant 0 : index
    %224 = vector.load %arg10[%c0_214, %c0_215, %c0_216] : memref<1x1x8xf32, #tpu.memory_space<vmem>>, vector<1x1x8xf32>
    %225 = vector.shape_cast %224 : vector<1x1x8xf32> to vector<1x8xf32>
    %cst_217 = arith.constant dense<0.000000e+00> : vector<8xf32>
    %226 = vector.multi_reduction <add>, %220, %cst_217 [0] : vector<64x8xf32> to vector<8xf32>
    %227 = vector.shape_cast %226 : vector<8xf32> to vector<1x8xf32>
    %228 = arith.addf %225, %227 : vector<1x8xf32>
    %c0_218 = arith.constant 0 : index
    %c0_219 = arith.constant 0 : index
    %c0_220 = arith.constant 0 : index
    %229 = vector.load %arg10[%c0_218, %c0_219, %c0_220] : memref<1x1x8xf32, #tpu.memory_space<vmem>>, vector<1x1x8xf32>
    %230 = vector.shape_cast %229 : vector<1x1x8xf32> to vector<1x8xf32>
    %231 = vector.shape_cast %228 : vector<1x8xf32> to vector<1x1x8xf32>
    tpu.vector_store %arg10[%c0_218, %c0_219, %c0_220], %231 {strides = array<i32>} : memref<1x1x8xf32, #tpu.memory_space<vmem>>, vector<1x1x8xf32>,
    %c0_221 = arith.constant 0 : index
    %c0_222 = arith.constant 0 : index
    %c0_223 = arith.constant 0 : index
    %232 = vector.load %arg11[%c0_221, %c0_222, %c0_223] : memref<1x1x8xf32, #tpu.memory_space<vmem>>, vector<1x1x8xf32>
    %233 = vector.shape_cast %232 : vector<1x1x8xf32> to vector<1x8xf32>
    %234 = arith.mulf %220, %220 : vector<64x8xf32>
    %cst_224 = arith.constant dense<0.000000e+00> : vector<8xf32>
    %235 = vector.multi_reduction <add>, %234, %cst_224 [0] : vector<64x8xf32> to vector<8xf32>
    %236 = vector.shape_cast %235 : vector<8xf32> to vector<1x8xf32>
    %237 = arith.addf %233, %236 : vector<1x8xf32>
    %c0_225 = arith.constant 0 : index
    %c0_226 = arith.constant 0 : index
    %c0_227 = arith.constant 0 : index
    %238 = vector.load %arg11[%c0_225, %c0_226, %c0_227] : memref<1x1x8xf32, #tpu.memory_space<vmem>>, vector<1x1x8xf32>
    %239 = vector.shape_cast %238 : vector<1x1x8xf32> to vector<1x8xf32>
    %240 = vector.shape_cast %237 : vector<1x8xf32> to vector<1x1x8xf32>
    tpu.vector_store %arg11[%c0_225, %c0_226, %c0_227], %240 {strides = array<i32>} : memref<1x1x8xf32, #tpu.memory_space<vmem>>, vector<1x1x8xf32>,
    return
  }
  func.func @transform_0(%arg0: i32, %arg1: i32) -> (i32, i32, i32, i32, i32) {
    %c1_i32 = arith.constant 1 : i32
    %0 = arith.subi %arg1, %c1_i32 : i32
    %c0_i32 = arith.constant 0 : i32
    %1 = arith.maxsi %0, %c0_i32 : i32
    %c0_i32_0 = arith.constant 0 : i32
    %c0_i32_1 = arith.constant 0 : i32
    %c0_i32_2 = arith.constant 0 : i32
    %c0_i32_3 = arith.constant 0 : i32
    return %arg0, %1, %c0_i32_0, %c0_i32_1, %c0_i32_2 : i32, i32, i32, i32, i32
  }
  func.func @transform_1(%arg0: i32, %arg1: i32) -> (i32, i32, i32, i32, i32) {
    %c0_i32 = arith.constant 0 : i32
    %c0_i32_0 = arith.constant 0 : i32
    %c0_i32_1 = arith.constant 0 : i32
    %c0_i32_2 = arith.constant 0 : i32
    return %arg0, %arg1, %c0_i32, %c0_i32_0, %c0_i32_1 : i32, i32, i32, i32, i32
  }
  func.func @transform_2(%arg0: i32, %arg1: i32) -> (i32, i32, i32, i32, i32) {
    %c1_i32 = arith.constant 1 : i32
    %0 = arith.addi %arg1, %c1_i32 : i32
    %c7_i32 = arith.constant 7 : i32
    %1 = arith.minsi %0, %c7_i32 : i32
    %c0_i32 = arith.constant 0 : i32
    %c0_i32_0 = arith.constant 0 : i32
    %c0_i32_1 = arith.constant 0 : i32
    %c0_i32_2 = arith.constant 0 : i32
    return %arg0, %1, %c0_i32, %c0_i32_0, %c0_i32_1 : i32, i32, i32, i32, i32
  }
  func.func @transform_3(%arg0: i32, %arg1: i32) -> (i32, i32) {
    %c0_i32 = arith.constant 0 : i32
    %c0_i32_0 = arith.constant 0 : i32
    %c0_i32_1 = arith.constant 0 : i32
    return %c0_i32, %c0_i32_0 : i32, i32
  }
  func.func @transform_4(%arg0: i32, %arg1: i32) -> (i32, i32) {
    %c0_i32 = arith.constant 0 : i32
    %c0_i32_0 = arith.constant 0 : i32
    %c0_i32_1 = arith.constant 0 : i32
    return %c0_i32, %c0_i32_0 : i32, i32
  }
  func.func @transform_5(%arg0: i32, %arg1: i32) -> (i32, i32, i32) {
    %c0_i32 = arith.constant 0 : i32
    %c0_i32_0 = arith.constant 0 : i32
    %c0_i32_1 = arith.constant 0 : i32
    %c0_i32_2 = arith.constant 0 : i32
    return %c0_i32, %c0_i32_0, %c0_i32_1 : i32, i32, i32
  }
  func.func @transform_6(%arg0: i32, %arg1: i32) -> (i32, i32) {
    %c0_i32 = arith.constant 0 : i32
    %c0_i32_0 = arith.constant 0 : i32
    %c0_i32_1 = arith.constant 0 : i32
    return %c0_i32, %c0_i32_0 : i32, i32
  }
  func.func @transform_7(%arg0: i32, %arg1: i32) -> (i32, i32, i32, i32) {
    %c0_i32 = arith.constant 0 : i32
    %c0_i32_0 = arith.constant 0 : i32
    %c0_i32_1 = arith.constant 0 : i32
    return %arg0, %arg1, %c0_i32, %c0_i32_0 : i32, i32, i32, i32
  }
  func.func @transform_8(%arg0: i32, %arg1: i32) -> (i32, i32, i32) {
    %c0_i32 = arith.constant 0 : i32
    %c0_i32_0 = arith.constant 0 : i32
    %c0_i32_1 = arith.constant 0 : i32
    return %arg0, %c0_i32, %c0_i32_0 : i32, i32, i32
  }
  func.func @transform_9(%arg0: i32, %arg1: i32) -> (i32, i32, i32) {
    %c0_i32 = arith.constant 0 : i32
    %c0_i32_0 = arith.constant 0 : i32
    %c0_i32_1 = arith.constant 0 : i32
    return %arg0, %c0_i32, %c0_i32_0 : i32, i32, i32
  }
}

module attributes {stable_mosaic.version = 11 : i64} {
  func.func @_bn_maxpool_kernel(%arg0: i32, %arg1: i32, %arg2: memref<1x2x8x4x16xf32, #tpu.memory_space<vmem>>, %arg3: memref<1x16xf32, #tpu.memory_space<vmem>>, %arg4: memref<1x16xf32, #tpu.memory_space<vmem>>, %arg5: memref<1x1x4x4x8xf32, #tpu.memory_space<vmem>>) attributes {dimension_semantics = [#tpu.dimension_semantics<parallel>, #tpu.dimension_semantics<parallel>], iteration_bounds = array<i64: 2, 4>, scalar_prefetch = 0 : i64, scratch_operands = 0 : i64, tpu.core_type = #tpu.core_type<tc>, window_params = [{transform_indices = @transform_0, window_bounds = array<i64: 1, 2, 8, 4, 16>}, {pipeline_mode = #tpu.pipeline_mode<synchronous>, transform_indices = @transform_1, window_bounds = array<i64: 1, 16>}, {pipeline_mode = #tpu.pipeline_mode<synchronous>, transform_indices = @transform_2, window_bounds = array<i64: 1, 16>}, {transform_indices = @transform_3, window_bounds = array<i64: 1, 1, 4, 4, 8>}]} {
    %c0 = arith.constant 0 : index
    %c0_0 = arith.constant 0 : index
    %c0_1 = arith.constant 0 : index
    %c0_2 = arith.constant 0 : index
    %c0_3 = arith.constant 0 : index
    %0 = vector.load %arg2[%c0, %c0_0, %c0_1, %c0_2, %c0_3] : memref<1x2x8x4x16xf32, #tpu.memory_space<vmem>>, vector<1x2x8x4x16xf32>
    %c0_4 = arith.constant 0 : index
    %c0_5 = arith.constant 0 : index
    %1 = vector.load %arg3[%c0_4, %c0_5] : memref<1x16xf32, #tpu.memory_space<vmem>>, vector<1x16xf32>
    %2 = vector.shape_cast %1 : vector<1x16xf32> to vector<1x1x1x1x16xf32>
    %3 = vector.broadcast %2 : vector<1x1x1x1x16xf32> to vector<1x2x8x4x16xf32>
    %4 = arith.mulf %0, %3 : vector<1x2x8x4x16xf32>
    %c0_6 = arith.constant 0 : index
    %c0_7 = arith.constant 0 : index
    %5 = vector.load %arg4[%c0_6, %c0_7] : memref<1x16xf32, #tpu.memory_space<vmem>>, vector<1x16xf32>
    %6 = vector.shape_cast %5 : vector<1x16xf32> to vector<1x1x1x1x16xf32>
    %7 = vector.broadcast %6 : vector<1x1x1x1x16xf32> to vector<1x2x8x4x16xf32>
    %8 = arith.addf %4, %7 : vector<1x2x8x4x16xf32>
    %cst = arith.constant dense<0xFF800000> : vector<1x8x4x16xf32>
    %9 = vector.multi_reduction <maximumf>, %8, %cst [1] : vector<1x2x8x4x16xf32> to vector<1x8x4x16xf32>
    %10 = vector.shape_cast %9 : vector<1x8x4x16xf32> to vector<1x4x2x4x16xf32>
    %cst_8 = arith.constant dense<0xFF800000> : vector<1x4x4x16xf32>
    %11 = vector.multi_reduction <maximumf>, %10, %cst_8 [2] : vector<1x4x2x4x16xf32> to vector<1x4x4x16xf32>
    %12 = vector.extract_strided_slice %11 {offsets = [0, 0, 0, 0], sizes = [1, 4, 4, 8], strides = [1, 1, 1, 1]} : vector<1x4x4x16xf32> to vector<1x4x4x8xf32>
    %13 = vector.extract_strided_slice %11 {offsets = [0, 0, 0, 8], sizes = [1, 4, 4, 8], strides = [1, 1, 1, 1]} : vector<1x4x4x16xf32> to vector<1x4x4x8xf32>
    %14 = arith.maximumf %12, %13 : vector<1x4x4x8xf32>
    %15 = vector.shape_cast %14 : vector<1x4x4x8xf32> to vector<4x4x8xf32>
    %c0_9 = arith.constant 0 : index
    %c0_10 = arith.constant 0 : index
    %c0_11 = arith.constant 0 : index
    %c0_12 = arith.constant 0 : index
    %c0_13 = arith.constant 0 : index
    %16 = vector.load %arg5[%c0_9, %c0_10, %c0_11, %c0_12, %c0_13] : memref<1x1x4x4x8xf32, #tpu.memory_space<vmem>>, vector<1x1x4x4x8xf32>
    %17 = vector.shape_cast %16 : vector<1x1x4x4x8xf32> to vector<4x4x8xf32>
    %18 = vector.shape_cast %15 : vector<4x4x8xf32> to vector<1x1x4x4x8xf32>
    tpu.vector_store %arg5[%c0_9, %c0_10, %c0_11, %c0_12, %c0_13], %18 {strides = array<i32>} : memref<1x1x4x4x8xf32, #tpu.memory_space<vmem>>, vector<1x1x4x4x8xf32>,
    return
  }
  func.func @transform_0(%arg0: i32, %arg1: i32) -> (i32, i32, i32, i32, i32) {
    %c0_i32 = arith.constant 0 : i32
    %c0_i32_0 = arith.constant 0 : i32
    %c0_i32_1 = arith.constant 0 : i32
    %c0_i32_2 = arith.constant 0 : i32
    return %arg0, %arg1, %c0_i32, %c0_i32_0, %c0_i32_1 : i32, i32, i32, i32, i32
  }
  func.func @transform_1(%arg0: i32, %arg1: i32) -> (i32, i32) {
    %c0_i32 = arith.constant 0 : i32
    %c0_i32_0 = arith.constant 0 : i32
    %c0_i32_1 = arith.constant 0 : i32
    return %c0_i32, %c0_i32_0 : i32, i32
  }
  func.func @transform_2(%arg0: i32, %arg1: i32) -> (i32, i32) {
    %c0_i32 = arith.constant 0 : i32
    %c0_i32_0 = arith.constant 0 : i32
    %c0_i32_1 = arith.constant 0 : i32
    return %c0_i32, %c0_i32_0 : i32, i32
  }
  func.func @transform_3(%arg0: i32, %arg1: i32) -> (i32, i32, i32, i32, i32) {
    %c0_i32 = arith.constant 0 : i32
    %c0_i32_0 = arith.constant 0 : i32
    %c0_i32_1 = arith.constant 0 : i32
    %c0_i32_2 = arith.constant 0 : i32
    return %arg0, %arg1, %c0_i32, %c0_i32_0, %c0_i32_1 : i32, i32, i32, i32, i32
  }
}

</mosaic_0001>

<llo_original>
// kernel: unet_dblock_forward.5
$region0: #{unet_dblock_forward.5}
  #allocation0 [shape = 'u32[]', space=smem, size = 0x4, offset = 0x4, fixed_abs, tag = 'smem constant byte address 0x4 - core index']
  #allocation1 [shape = 'u32[72,128]{1,0:T(1,128)}', space=vmem, size = 0x9000, scoped, tag = 'internal scratch']
  %s0 = inlined_call_operand.vmem [shape: f32[2,8,8,4,16], index: 0, kind: input, shape index: {}]
  %s1 = inlined_call_operand.vmem [shape: f32[1,16], index: 1, kind: input, shape index: {}]
  %s2 = inlined_call_operand.vmem [shape: f32[1,16], index: 2, kind: input, shape index: {}]
  %s3 = inlined_call_operand.hbm [shape: f32[2,4,4,4,8], index: 3, kind: output, shape index: {}]
  %s4 = sld [smem:[#allocation0]]
  $region45: #{unet_dblock_forward.5} parent=0
    _
  %s6 = ssub.s32 1, %s4
  %s7 = scalar_select 0, %s6, %s4
  $region1: #{unet_dblock_forward.5} parent=0
    #allocation2 [shape = 'u8[16384]{0}', space=vmem, size = 0x4000, scoped, tag = 'output window, operand 0']
    #allocation3 [shape = 's32[2]{0}', space=sflag, size = 0x8, scoped, tag = 'scoped memory for unet_dblock_forward.5']
    %8 = vsyncpa [#allocation3], 0
    %s9 = scalar_lea.sflag [#allocation3], 1
    %10 = vsyncpa %s9, 0
    loop: start=0, step=1, limit=10
    $region2: #{unet_dblock_forward.5} parent=1 // loop_pre_header
      _
    $region3: #{unet_dblock_forward.5} parent=1 // loop_header
      %s12 = sphi 0, %s16
      %p13 = scmp.ge.s32.totalorder %s12, 10
      %s19 = sphi 0, %s31
      %s20 = sphi 0, %s27
      %s21 = sphi 0, %s19
      %s22 = sphi 0, %s20
      %s23 = sphi 0, %s21
      %s24 = sphi 0, %s22
      %s36 = sphi 0, %s38
      %s39 = sphi 0, %s36
      %s40 = sphi 0, %s39
      %s56 = sphi 0, %s40
      %s60 = sphi 0, %s60
      %s62 = sphi 0, %s60
      %s63 = sphi 0, %s62
      %s77 = sphi 0, %s63
      %s81 = sphi 0, %s81
      %s83 = sphi 0, %s81
      %s84 = sphi 0, %s83
      %s98 = sphi 0, %s84
      %s106 = sphi 0, %s108
      %s109 = sphi 0, %s106
      %s110 = sphi 0, %s109
      %s126 = sphi 0, %s110
    $region4: #{unet_dblock_forward.5} parent=1 // loop_header_branch
      %15 = sbr.rel (%p13) target = $region8
    $region5: #{unet_dblock_forward.5} parent=1 // loop_body
      %s17 = ssub.s32 %s12, 1
      %s18 = ssub.s32 %s12, 2
      %s25 = sadd.s32 1, %s20
      %p26 = scmp.ge.s32.totalorder %s25, 4
      %s27 = scalar_select %p26, 0, %s25
      %s28 = sadd.s32 1, %s19
      %s29 = scalar_select %p26, %s28, %s19
      %p30 = scmp.ge.s32.totalorder %s29, 2
      %s31 = scalar_select %p30, 0, %s29
      %s32 = ssub.s32 %s19, %s31
      %s33 = ssub.s32 %s20, %s27
      %s34 = sor.u32 %s32, %s33
      %p35 = scmp.eq.s32.totalorder %s34, 0
      %s37 = sadd.s32 %s36, 1
      %s38 = scalar_select %p35, %s36, %s37
      %p41 = pneg %p35
      %p42 = scmp.eq.s32.totalorder %s12, 7
      %p43 = por %p41, %p42
      %p44 = scmp.ne.s32.totalorder %s36, %s39
      %p45 = scmp.eq.s32.totalorder %s12, 0
      %p46 = por %p44, %p45
      %p47 = scmp.ne.s32.totalorder %s36, %s39
      %p48 = scmp.eq.s32.totalorder %s17, 7
      %p49 = por %p47, %p48
      %p50 = scmp.ne.s32.totalorder %s39, %s40
      %p51 = scmp.eq.s32.totalorder %s17, 0
      %p52 = por %p50, %p51
      %p53 = scmp.ne.s32.totalorder %s39, %s40
      %p54 = scmp.eq.s32.totalorder %s18, 7
      %p55 = por %p53, %p54
      %p57 = scmp.ne.s32.totalorder %s40, %s56
      %p58 = scmp.eq.s32.totalorder %s18, 0
      %p59 = por %p57, %p58
      %s61 = sadd.s32 %s60, 1
      %p64 = scmp.eq.s32.totalorder %s12, 7
      %p65 = scmp.ne.s32.totalorder %s60, %s62
      %p66 = scmp.eq.s32.totalorder %s12, 0
      %p67 = por %p65, %p66
      %p68 = scmp.ne.s32.totalorder %s60, %s62
      %p69 = scmp.eq.s32.totalorder %s17, 7
      %p70 = por %p68, %p69
      %p71 = scmp.ne.s32.totalorder %s62, %s63
      %p72 = scmp.eq.s32.totalorder %s17, 0
      %p73 = por %p71, %p72
      %p74 = scmp.ne.s32.totalorder %s62, %s63
      %p75 = scmp.eq.s32.totalorder %s18, 7
      %p76 = por %p74, %p75
      %p78 = scmp.ne.s32.totalorder %s63, %s77
      %p79 = scmp.eq.s32.totalorder %s18, 0
      %p80 = por %p78, %p79
      %s82 = sadd.s32 %s81, 1
      %p85 = scmp.eq.s32.totalorder %s12, 7
      %p86 = scmp.ne.s32.totalorder %s81, %s83
      %p87 = scmp.eq.s32.totalorder %s12, 0
      %p88 = por %p86, %p87
      %p89 = scmp.ne.s32.totalorder %s81, %s83
      %p90 = scmp.eq.s32.totalorder %s17, 7
      %p91 = por %p89, %p90
      %p92 = scmp.ne.s32.totalorder %s83, %s84
      %p93 = scmp.eq.s32.totalorder %s17, 0
      %p94 = por %p92, %p93
      %p95 = scmp.ne.s32.totalorder %s83, %s84
      %p96 = scmp.eq.s32.totalorder %s18, 7
      %p97 = por %p95, %p96
      %p99 = scmp.ne.s32.totalorder %s84, %s98
      %p100 = scmp.eq.s32.totalorder %s18, 0
      %p101 = por %p99, %p100
      %s102 = ssub.s32 %s19, %s31
      %s103 = ssub.s32 %s20, %s27
      %s104 = sor.u32 %s102, %s103
      %p105 = scmp.eq.s32.totalorder %s104, 0
      %s107 = sadd.s32 %s106, 1
      %s108 = scalar_select %p105, %s106, %s107
      %p111 = pneg %p105
      %p112 = scmp.eq.s32.totalorder %s12, 7
      %p113 = por %p111, %p112
      %p114 = scmp.ne.s32.totalorder %s106, %s109
      %p115 = scmp.eq.s32.totalorder %s12, 0
      %p116 = por %p114, %p115
      %p117 = scmp.ne.s32.totalorder %s106, %s109
      %p118 = scmp.eq.s32.totalorder %s17, 7
      %p119 = por %p117, %p118
      %p120 = scmp.ne.s32.totalorder %s109, %s110
      %p121 = scmp.eq.s32.totalorder %s17, 0
      %p122 = por %p120, %p121
      %p123 = scmp.ne.s32.totalorder %s109, %s110
      %p124 = scmp.eq.s32.totalorder %s18, 7
      %p125 = por %p123, %p124
      %p127 = scmp.ne.s32.totalorder %s110, %s126
      %p128 = scmp.eq.s32.totalorder %s18, 0
      %p129 = por %p127, %p128
      %p130 = scmp.le.s32.totalorder 1, %s12
      %p131 = scmp.lt.s32.totalorder %s12, 9
      %p132 = pnand %p130, %p131
      %p133 = pneg %p132
      // Predicated region
      $region9: #{unet_dblock_forward.5} parent=5 // pred_check
        _
      $region10: #{unet_dblock_forward.5} parent=5 // pred_check_branch
        %135 = sbr.rel (%p132) target = $region12
      $region11: #{unet_dblock_forward.5} parent=5 // pred_region
        %s136 = ssub.s32 %s12, 1
        // Predicated region
        $region13: #{unet_dblock_forward.5} parent=11 // pred_check
          %p137 = pneg %p73
        $region14: #{unet_dblock_forward.5} parent=11 // pred_check_branch
          %139 = sbr.rel (%p137) target = $region16
        $region15: #{unet_dblock_forward.5} parent=11 // pred_region
          _
        $region16: #{unet_dblock_forward.5} parent=11 // pred_fallthru
          _
        // Predicated region
        $region17: #{unet_dblock_forward.5} parent=11 // pred_check
          %p140 = pneg %p94
        $region18: #{unet_dblock_forward.5} parent=11 // pred_check_branch
          %142 = sbr.rel (%p140) target = $region20
        $region19: #{unet_dblock_forward.5} parent=11 // pred_region
          _
        $region20: #{unet_dblock_forward.5} parent=11 // pred_fallthru
          _
      $region12: #{unet_dblock_forward.5} parent=5 // pred_fallthru
        _
      %p143 = scmp.lt.s32.totalorder %s12, 8
      // Predicated region
      $region21: #{unet_dblock_forward.5} parent=5 // pred_check
        %p144 = pneg %p143
      $region22: #{unet_dblock_forward.5} parent=5 // pred_check_branch
        %146 = sbr.rel (%p144) target = $region24
      $region23: #{unet_dblock_forward.5} parent=5 // pred_region
        // Predicated region
        $region25: #{unet_dblock_forward.5} parent=23 // pred_check
          %p147 = pneg %p46
        $region26: #{unet_dblock_forward.5} parent=23 // pred_check_branch
          %149 = sbr.rel (%p147) target = $region28
        $region27: #{unet_dblock_forward.5} parent=23 // pred_region
          %s150 = smul.u32 2, %s20
          %p151 = scmp.lt.s32.totalorder %s19, 1
          %s152 = scalar_select %p151, %s19, 1
          %p153 = scmp.lt.s32.totalorder %s150, 7
          %s154 = scalar_select %p153, %s150, 7
          %s155 = smul.addr %s154, 8
          %s156 = smul.addr %s152, 64
          %s157 = sadd.s32 %s155, %s156
          %s158 = smul.addr %s157, 4
          %s159 = scalar_lea.vmem %s0, %s158
          %s160 = smul.u32 2, %s20
        $region28: #{unet_dblock_forward.5} parent=23 // pred_fallthru
          _
      $region24: #{unet_dblock_forward.5} parent=5 // pred_fallthru
        _
      %p161 = scmp.le.s32.totalorder 1, %s12
      %p162 = scmp.lt.s32.totalorder %s12, 9
      %p163 = pnand %p161, %p162
      %p164 = pneg %p163
      // Predicated region
      $region29: #{unet_dblock_forward.5} parent=5 // pred_check
        _
      $region30: #{unet_dblock_forward.5} parent=5 // pred_check_branch
        %166 = sbr.rel (%p163) target = $region32
      $region31: #{unet_dblock_forward.5} parent=5 // pred_region
        %s167 = ssub.s32 %s12, 1
        %s168 = smul.u32 2, %s22
        %p169 = scmp.lt.s32.totalorder %s21, 1
        %s170 = scalar_select %p169, %s21, 1
        %p171 = scmp.lt.s32.totalorder %s168, 7
        %s172 = scalar_select %p171, %s168, 7
        %s173 = smul.addr %s172, 8
        %s174 = smul.addr %s170, 64
        %s175 = sadd.s32 %s173, %s174
        %s176 = smul.addr %s175, 4
        %s177 = scalar_lea.vmem %s0, %s176
        %p178 = pneg %p52
        %p179 = pneg %p49
        %p180 = pneg %p73
        %p181 = pneg %p70
        %p182 = pneg %p94
        %p183 = pneg %p91
        %p184 = pneg %p122
        %p185 = pneg %p119
        %s186 = sand.u32 %s109, 1
        %s187 = scalar_lea.sflag [#allocation3], %s186
        %s188 = sand.u32 %s109, 1
        %s189 = smul.addr %s188, 16
        %s190 = scalar_lea.vmem [#allocation2], %s189
        %s191 = smul.u32 2, %s22
        %p192 = scmp.lt.s32.totalorder %s21, 1
        %s193 = scalar_select %p192, %s21, 1
        %p194 = scmp.lt.s32.totalorder %s191, 7
        %s195 = scalar_select %p194, %s191, 7
        %s196 = smul.addr %s195, 8
        %s197 = smul.addr %s193, 64
        %s198 = sadd.s32 %s196, %s197
        %s199 = smul.addr %s198, 4
        %s200 = scalar_lea.vmem %s0, %s199
        %s201 = smul.u32 2, %s22
        %v202 = vld [vmem:[%s200] sm:$0xf]
        %v203 = vld [vmem:[%s200 + $0x4] sm:$0xf]
        %v204 = vld [vmem:[%s200 + $0x8] sm:$0xf]
        %v205 = vld [vmem:[%s200 + $0xc] sm:$0xf]
        %v206 = vld [vmem:[%s200 + $0x10] sm:$0xf]
        %v207 = vld [vmem:[%s200 + $0x14] sm:$0xf]
        %v208 = vld [vmem:[%s200 + $0x18] sm:$0xf]
        %v209 = vld [vmem:[%s200 + $0x1c] sm:$0xf]
        %v210 = vld [vmem:[%s200 + $0x20] sm:$0xf]
        %v211 = vld [vmem:[%s200 + $0x24] sm:$0xf]
        %v212 = vld [vmem:[%s200 + $0x28] sm:$0xf]
        %v213 = vld [vmem:[%s200 + $0x2c] sm:$0xf]
        %v214 = vld [vmem:[%s200 + $0x30] sm:$0xf]
        %v215 = vld [vmem:[%s200 + $0x34] sm:$0xf]
        %v216 = vld [vmem:[%s200 + $0x38] sm:$0xf]
        %v217 = vld [vmem:[%s200 + $0x3c] sm:$0xf]
        %v218 = vld [vmem:[%s1] sm:$0x1]
        %v220 = vperm.slane %v218, 0
        %v222 = vmul.f32 %v202, %v220
        %v223 = vmul.f32 %v203, %v220
        %v224 = vmul.f32 %v204, %v220
        %v225 = vmul.f32 %v205, %v220
        %v226 = vmul.f32 %v206, %v220
        %v227 = vmul.f32 %v207, %v220
        %v228 = vmul.f32 %v208, %v220
        %v229 = vmul.f32 %v209, %v220
        %v230 = vmul.f32 %v210, %v220
        %v231 = vmul.f32 %v211, %v220
        %v232 = vmul.f32 %v212, %v220
        %v233 = vmul.f32 %v213, %v220
        %v234 = vmul.f32 %v214, %v220
        %v235 = vmul.f32 %v215, %v220
        %v236 = vmul.f32 %v216, %v220
        %v237 = vmul.f32 %v217, %v220
        %v238 = vld [vmem:[%s2] sm:$0x1]
        %v240 = vperm.slane %v238, 0
        %v242 = vadd.f32 %v222, %v240
        %v243 = vadd.f32 %v223, %v240
        %v244 = vadd.f32 %v224, %v240
        %v245 = vadd.f32 %v225, %v240
        %v246 = vadd.f32 %v226, %v240
        %v247 = vadd.f32 %v227, %v240
        %v248 = vadd.f32 %v228, %v240
        %v249 = vadd.f32 %v229, %v240
        %v250 = vadd.f32 %v230, %v240
        %v251 = vadd.f32 %v231, %v240
        %v252 = vadd.f32 %v232, %v240
        %v253 = vadd.f32 %v233, %v240
        %v254 = vadd.f32 %v234, %v240
        %v255 = vadd.f32 %v235, %v240
        %v256 = vadd.f32 %v236, %v240
        %v257 = vadd.f32 %v237, %v240
        %vm258 = vcmask 125952
        %v259 = vsel %vm258, %v242, -inf
        %v260 = vsel %vm258, %v250, -inf
        %v261 = vmax.f32 %v259, %v260
        %v262 = vsel %vm258, %v243, -inf
        %v263 = vsel %vm258, %v251, -inf
        %v264 = vmax.f32 %v262, %v263
        %v265 = vsel %vm258, %v244, -inf
        %v266 = vsel %vm258, %v252, -inf
        %v267 = vmax.f32 %v265, %v266
        %v268 = vsel %vm258, %v245, -inf
        %v269 = vsel %vm258, %v253, -inf
        %v270 = vmax.f32 %v268, %v269
        %v271 = vsel %vm258, %v246, -inf
        %v272 = vsel %vm258, %v254, -inf
        %v273 = vmax.f32 %v271, %v272
        %v274 = vsel %vm258, %v247, -inf
        %v275 = vsel %vm258, %v255, -inf
        %v276 = vmax.f32 %v274, %v275
        %v277 = vsel %vm258, %v248, -inf
        %v278 = vsel %vm258, %v256, -inf
        %v279 = vmax.f32 %v277, %v278
        %v280 = vsel %vm258, %v249, -inf
        %v281 = vsel %vm258, %v257, -inf
        %v282 = vmax.f32 %v280, %v281
        %v283 = vsel %vm258, %v261, -inf
        %v284 = vsel %vm258, %v264, -inf
        %v285 = vmax.f32 %v283, %v284
        %v286 = vsel %vm258, %v267, -inf
        %v287 = vsel %vm258, %v270, -inf
        %v288 = vmax.f32 %v286, %v287
        %v289 = vsel %vm258, %v273, -inf
        %v290 = vsel %vm258, %v276, -inf
        %v291 = vmax.f32 %v289, %v290
        %v292 = vsel %vm258, %v279, -inf
        %v293 = vsel %vm258, %v282, -inf
        %v294 = vmax.f32 %v292, %v293
        %299 = vrot.lane.b32.xlu0 %v285, 120
        %v300 = vpop.permute.xlu0 %299
        %301 = vrot.lane.b32.xlu0 %v288, 120
        %v302 = vpop.permute.xlu0 %301
        %303 = vrot.lane.b32.xlu0 %v291, 120
        %v304 = vpop.permute.xlu0 %303
        %305 = vrot.lane.b32.xlu0 %v294, 120
        %v306 = vpop.permute.xlu0 %305
        %v311 = vmax.f32 %v285, %v300
        %v312 = vmax.f32 %v288, %v302
        %v313 = vmax.f32 %v291, %v304
        %v314 = vmax.f32 %v294, %v306
        %vm315 = vcmask 60416
        %316 = vst.msk [vmem:[%s190] sm:$0xf] %vm315, %v311
        %317 = vst.msk [vmem:[%s190 + $0x4] sm:$0xf] %vm315, %v312
        %318 = vst.msk [vmem:[%s190 + $0x8] sm:$0xf] %vm315, %v313
        %319 = vst.msk [vmem:[%s190 + $0xc] sm:$0xf] %vm315, %v314
        %s320 = sand.u32 %s109, 1
        %s321 = scalar_lea.sflag [#allocation3], %s320
        %s322 = sand.u32 %s109, 1
        %s323 = smul.addr %s322, 16
        %s324 = scalar_lea.vmem [#allocation2], %s323
        // Predicated region
        $region33: #{unet_dblock_forward.5} parent=31 // pred_check
          %p325 = pneg %p119
        $region34: #{unet_dblock_forward.5} parent=31 // pred_check_branch
          %327 = sbr.rel (%p325) target = $region36
        $region35: #{unet_dblock_forward.5} parent=31 // pred_region
          %329 = vsyncadd %s321, 0
          %s330 = smul.addr %s22, 4
          %s331 = smul.addr %s21, 16
          %s332 = sadd.s32 %s330, %s331
          %s333 = smul.addr %s332, 4
          %s334 = scalar_lea.hbm %s3, %s333
          %s335 = sshll.u32 %s324, 4
          %s336 = int_to_ptr.vmem [resolvable:$true] %s335
          %s337 = sshll.u32 %s334, 4
          %s338 = int_to_ptr.hbm [resolvable:$true] %s337
          %343 = dma.vmem_to_hbm [thread:$0]  %s336, 256, %s338, %s321, 64, 64, 4
        $region36: #{unet_dblock_forward.5} parent=31 // pred_fallthru
          _
      $region32: #{unet_dblock_forward.5} parent=5 // pred_fallthru
        _
      %p344 = scmp.le.s32.totalorder 2, %s12
      // Predicated region
      $region37: #{unet_dblock_forward.5} parent=5 // pred_check
        %p345 = pneg %p344
      $region38: #{unet_dblock_forward.5} parent=5 // pred_check_branch
        %347 = sbr.rel (%p345) target = $region40
      $region39: #{unet_dblock_forward.5} parent=5 // pred_region
        %s348 = ssub.s32 %s12, 2
        // Predicated region
        $region41: #{unet_dblock_forward.5} parent=39 // pred_check
          %p349 = pneg %p125
        $region42: #{unet_dblock_forward.5} parent=39 // pred_check_branch
          %351 = sbr.rel (%p349) target = $region44
        $region43: #{unet_dblock_forward.5} parent=39 // pred_region
          %s352 = sand.u32 %s110, 1
          %s353 = scalar_lea.sflag [#allocation3], %s352
          %s354 = sand.u32 %s110, 1
          %s355 = smul.addr %s354, 16
          %s356 = scalar_lea.vmem [#allocation2], %s355
          %358 = dma.done %s353, 256
        $region44: #{unet_dblock_forward.5} parent=39 // pred_fallthru
          _
      $region40: #{unet_dblock_forward.5} parent=5 // pred_fallthru
        _
    $region6: #{unet_dblock_forward.5} parent=1 // loop_footer
      %s16 = sadd.s32 1, %s12
    $region7: #{unet_dblock_forward.5} parent=1 // loop_footer_branch
      %11 = sbr.rel target = $region3
    $region8: #{unet_dblock_forward.5} parent=1 // loop_exit
      _
    %359 = vsyncpa [#allocation3], 1
    %s360 = scalar_lea.sflag [#allocation3], 1
    %361 = vsyncpa %s360, 1

// kernel: unet_dblock_forward.3
$region0: #{unet_dblock_forward.3}
  #allocation0 [shape = 'u32[]', space=smem, size = 0x4, offset = 0x4, fixed_abs, tag = 'smem constant byte address 0x4 - core index']
  #allocation1 [shape = 'u32[72,128]{1,0:T(1,128)}', space=vmem, size = 0x9000, scoped, tag = 'internal scratch']
  #allocation2 [shape = 'f32[10,10,4]{2,1,0:T(8,128)}', space=vmem, size = 0x14000, scoped, tag = 'scratch operand']
  %s0 = inlined_call_operand.vmem [shape: f32[2,8,8,8,4], index: 0, kind: input, shape index: {}, may-alias: {0,1,2}]
  %s1 = inlined_call_operand.vmem [shape: f32[2,8,8,8,4], index: 1, kind: input, shape index: {}, may-alias: {0,1,2}]
  %s2 = inlined_call_operand.vmem [shape: f32[2,8,8,8,4], index: 2, kind: input, shape index: {}, may-alias: {0,1,2}]
  %s3 = inlined_call_operand.vmem [shape: f32[1,4], index: 3, kind: input, shape index: {}]
  %s4 = inlined_call_operand.vmem [shape: f32[1,4], index: 4, kind: input, shape index: {}]
  %s5 = inlined_call_operand.vmem [shape: f32[27,4,8], index: 5, kind: input, shape index: {}]
  %s6 = inlined_call_operand.vmem [shape: f32[1,8], index: 6, kind: input, shape index: {}]
  %s7 = inlined_call_operand.vmem [shape: f32[2,8,64,8], index: 7, kind: output, shape index: {0}]
  %s8 = inlined_call_operand.vmem [shape: f32[2,1,8], index: 8, kind: output, shape index: {1}]
  %s9 = inlined_call_operand.vmem [shape: f32[2,1,8], index: 9, kind: output, shape index: {2}]
  %10 = xla_tuple %s7, %s8, %s9
  %s11 = sld [smem:[#allocation0]]
  $region81: #{unet_dblock_forward.3} parent=0
    _
  %s13 = ssub.s32 1, %s11
  %s14 = scalar_select 0, %s13, %s11
  loop: start=0, step=1, limit=18
  $region2: #{unet_dblock_forward.3} parent=0 // loop_pre_header
    _
  $region3: #{unet_dblock_forward.3} parent=0 // loop_header
    %s16 = sphi 0, %s20
    %p17 = scmp.ge.s32.totalorder %s16, 18
    %s23 = sphi 0, %s35
    %s24 = sphi 0, %s31
    %s25 = sphi 0, %s23
    %s26 = sphi 0, %s24
    %s27 = sphi 0, %s25
    %s28 = sphi 0, %s26
    %s46 = sphi 0, %s48
    %s49 = sphi 0, %s46
    %s50 = sphi 0, %s49
    %s66 = sphi 0, %s50
    %s74 = sphi 0, %s76
    %s77 = sphi 0, %s74
    %s78 = sphi 0, %s77
    %s94 = sphi 0, %s78
    %s108 = sphi 0, %s110
    %s111 = sphi 0, %s108
    %s112 = sphi 0, %s111
    %s128 = sphi 0, %s112
    %s132 = sphi 0, %s132
    %s134 = sphi 0, %s132
    %s135 = sphi 0, %s134
    %s149 = sphi 0, %s135
    %s153 = sphi 0, %s153
    %s155 = sphi 0, %s153
    %s156 = sphi 0, %s155
    %s170 = sphi 0, %s156
    %s174 = sphi 0, %s174
    %s176 = sphi 0, %s174
    %s177 = sphi 0, %s176
    %s191 = sphi 0, %s177
    %s195 = sphi 0, %s195
    %s197 = sphi 0, %s195
    %s198 = sphi 0, %s197
    %s212 = sphi 0, %s198
    %s220 = sphi 0, %s222
    %s223 = sphi 0, %s220
    %s224 = sphi 0, %s223
    %s240 = sphi 0, %s224
    %s246 = sphi 0, %s248
    %s249 = sphi 0, %s246
    %s250 = sphi 0, %s249
    %s266 = sphi 0, %s250
    %s272 = sphi 0, %s274
    %s275 = sphi 0, %s272
    %s276 = sphi 0, %s275
    %s292 = sphi 0, %s276
  $region4: #{unet_dblock_forward.3} parent=0 // loop_header_branch
    %19 = sbr.rel (%p17) target = $region8
  $region5: #{unet_dblock_forward.3} parent=0 // loop_body
    %s21 = ssub.s32 %s16, 1
    %s22 = ssub.s32 %s16, 2
    %s29 = sadd.s32 1, %s24
    %p30 = scmp.ge.s32.totalorder %s29, 8
    %s31 = scalar_select %p30, 0, %s29
    %s32 = sadd.s32 1, %s23
    %s33 = scalar_select %p30, %s32, %s23
    %p34 = scmp.ge.s32.totalorder %s33, 2
    %s35 = scalar_select %p34, 0, %s33
    %s36 = ssub.s32 %s24, 1
    %p37 = scmp.gt.s32.totalorder %s36, 0
    %s38 = scalar_select %p37, %s36, 0
    %s39 = ssub.s32 %s31, 1
    %p40 = scmp.gt.s32.totalorder %s39, 0
    %s41 = scalar_select %p40, %s39, 0
    %s42 = ssub.s32 %s23, %s35
    %s43 = ssub.s32 %s38, %s41
    %s44 = sor.u32 %s42, %s43
    %p45 = scmp.eq.s32.totalorder %s44, 0
    %s47 = sadd.s32 %s46, 1
    %s48 = scalar_select %p45, %s46, %s47
    %p51 = pneg %p45
    %p52 = scmp.eq.s32.totalorder %s16, 15
    %p53 = por %p51, %p52
    %p54 = scmp.ne.s32.totalorder %s46, %s49
    %p55 = scmp.eq.s32.totalorder %s16, 0
    %p56 = por %p54, %p55
    %p57 = scmp.ne.s32.totalorder %s46, %s49
    %p58 = scmp.eq.s32.totalorder %s21, 15
    %p59 = por %p57, %p58
    %p60 = scmp.ne.s32.totalorder %s49, %s50
    %p61 = scmp.eq.s32.totalorder %s21, 0
    %p62 = por %p60, %p61
    %p63 = scmp.ne.s32.totalorder %s49, %s50
    %p64 = scmp.eq.s32.totalorder %s22, 15
    %p65 = por %p63, %p64
    %p67 = scmp.ne.s32.totalorder %s50, %s66
    %p68 = scmp.eq.s32.totalorder %s22, 0
    %p69 = por %p67, %p68
    %s70 = ssub.s32 %s23, %s35
    %s71 = ssub.s32 %s24, %s31
    %s72 = sor.u32 %s70, %s71
    %p73 = scmp.eq.s32.totalorder %s72, 0
    %s75 = sadd.s32 %s74, 1
    %s76 = scalar_select %p73, %s74, %s75
    %p79 = pneg %p73
    %p80 = scmp.eq.s32.totalorder %s16, 15
    %p81 = por %p79, %p80
    %p82 = scmp.ne.s32.totalorder %s74, %s77
    %p83 = scmp.eq.s32.totalorder %s16, 0
    %p84 = por %p82, %p83
    %p85 = scmp.ne.s32.totalorder %s74, %s77
    %p86 = scmp.eq.s32.totalorder %s21, 15
    %p87 = por %p85, %p86
    %p88 = scmp.ne.s32.totalorder %s77, %s78
    %p89 = scmp.eq.s32.totalorder %s21, 0
    %p90 = por %p88, %p89
    %p91 = scmp.ne.s32.totalorder %s77, %s78
    %p92 = scmp.eq.s32.totalorder %s22, 15
    %p93 = por %p91, %p92
    %p95 = scmp.ne.s32.totalorder %s78, %s94
    %p96 = scmp.eq.s32.totalorder %s22, 0
    %p97 = por %p95, %p96
    %s98 = sadd.s32 %s24, 1
    %p99 = scmp.lt.s32.totalorder %s98, 7
    %s100 = scalar_select %p99, %s98, 7
    %s101 = sadd.s32 %s31, 1
    %p102 = scmp.lt.s32.totalorder %s101, 7
    %s103 = scalar_select %p102, %s101, 7
    %s104 = ssub.s32 %s23, %s35
    %s105 = ssub.s32 %s100, %s103
    %s106 = sor.u32 %s104, %s105
    %p107 = scmp.eq.s32.totalorder %s106, 0
    %s109 = sadd.s32 %s108, 1
    %s110 = scalar_select %p107, %s108, %s109
    %p113 = pneg %p107
    %p114 = scmp.eq.s32.totalorder %s16, 15
    %p115 = por %p113, %p114
    %p116 = scmp.ne.s32.totalorder %s108, %s111
    %p117 = scmp.eq.s32.totalorder %s16, 0
    %p118 = por %p116, %p117
    %p119 = scmp.ne.s32.totalorder %s108, %s111
    %p120 = scmp.eq.s32.totalorder %s21, 15
    %p121 = por %p119, %p120
    %p122 = scmp.ne.s32.totalorder %s111, %s112
    %p123 = scmp.eq.s32.totalorder %s21, 0
    %p124 = por %p122, %p123
    %p125 = scmp.ne.s32.totalorder %s111, %s112
    %p126 = scmp.eq.s32.totalorder %s22, 15
    %p127 = por %p125, %p126
    %p129 = scmp.ne.s32.totalorder %s112, %s128
    %p130 = scmp.eq.s32.totalorder %s22, 0
    %p131 = por %p129, %p130
    %s133 = sadd.s32 %s132, 1
    %p136 = scmp.eq.s32.totalorder %s16, 15
    %p137 = scmp.ne.s32.totalorder %s132, %s134
    %p138 = scmp.eq.s32.totalorder %s16, 0
    %p139 = por %p137, %p138
    %p140 = scmp.ne.s32.totalorder %s132, %s134
    %p141 = scmp.eq.s32.totalorder %s21, 15
    %p142 = por %p140, %p141
    %p143 = scmp.ne.s32.totalorder %s134, %s135
    %p144 = scmp.eq.s32.totalorder %s21, 0
    %p145 = por %p143, %p144
    %p146 = scmp.ne.s32.totalorder %s134, %s135
    %p147 = scmp.eq.s32.totalorder %s22, 15
    %p148 = por %p146, %p147
    %p150 = scmp.ne.s32.totalorder %s135, %s149
    %p151 = scmp.eq.s32.totalorder %s22, 0
    %p152 = por %p150, %p151
    %s154 = sadd.s32 %s153, 1
    %p157 = scmp.eq.s32.totalorder %s16, 15
    %p158 = scmp.ne.s32.totalorder %s153, %s155
    %p159 = scmp.eq.s32.totalorder %s16, 0
    %p160 = por %p158, %p159
    %p161 = scmp.ne.s32.totalorder %s153, %s155
    %p162 = scmp.eq.s32.totalorder %s21, 15
    %p163 = por %p161, %p162
    %p164 = scmp.ne.s32.totalorder %s155, %s156
    %p165 = scmp.eq.s32.totalorder %s21, 0
    %p166 = por %p164, %p165
    %p167 = scmp.ne.s32.totalorder %s155, %s156
    %p168 = scmp.eq.s32.totalorder %s22, 15
    %p169 = por %p167, %p168
    %p171 = scmp.ne.s32.totalorder %s156, %s170
    %p172 = scmp.eq.s32.totalorder %s22, 0
    %p173 = por %p171, %p172
    %s175 = sadd.s32 %s174, 1
    %p178 = scmp.eq.s32.totalorder %s16, 15
    %p179 = scmp.ne.s32.totalorder %s174, %s176
    %p180 = scmp.eq.s32.totalorder %s16, 0
    %p181 = por %p179, %p180
    %p182 = scmp.ne.s32.totalorder %s174, %s176
    %p183 = scmp.eq.s32.totalorder %s21, 15
    %p184 = por %p182, %p183
    %p185 = scmp.ne.s32.totalorder %s176, %s177
    %p186 = scmp.eq.s32.totalorder %s21, 0
    %p187 = por %p185, %p186
    %p188 = scmp.ne.s32.totalorder %s176, %s177
    %p189 = scmp.eq.s32.totalorder %s22, 15
    %p190 = por %p188, %p189
    %p192 = scmp.ne.s32.totalorder %s177, %s191
    %p193 = scmp.eq.s32.totalorder %s22, 0
    %p194 = por %p192, %p193
    %s196 = sadd.s32 %s195, 1
    %p199 = scmp.eq.s32.totalorder %s16, 15
    %p200 = scmp.ne.s32.totalorder %s195, %s197
    %p201 = scmp.eq.s32.totalorder %s16, 0
    %p202 = por %p200, %p201
    %p203 = scmp.ne.s32.totalorder %s195, %s197
    %p204 = scmp.eq.s32.totalorder %s21, 15
    %p205 = por %p203, %p204
    %p206 = scmp.ne.s32.totalorder %s197, %s198
    %p207 = scmp.eq.s32.totalorder %s21, 0
    %p208 = por %p206, %p207
    %p209 = scmp.ne.s32.totalorder %s197, %s198
    %p210 = scmp.eq.s32.totalorder %s22, 15
    %p211 = por %p209, %p210
    %p213 = scmp.ne.s32.totalorder %s198, %s212
    %p214 = scmp.eq.s32.totalorder %s22, 0
    %p215 = por %p213, %p214
    %s216 = ssub.s32 %s23, %s35
    %s217 = ssub.s32 %s24, %s31
    %s218 = sor.u32 %s216, %s217
    %p219 = scmp.eq.s32.totalorder %s218, 0
    %s221 = sadd.s32 %s220, 1
    %s222 = scalar_select %p219, %s220, %s221
    %p225 = pneg %p219
    %p226 = scmp.eq.s32.totalorder %s16, 15
    %p227 = por %p225, %p226
    %p228 = scmp.ne.s32.totalorder %s220, %s223
    %p229 = scmp.eq.s32.totalorder %s16, 0
    %p230 = por %p228, %p229
    %p231 = scmp.ne.s32.totalorder %s220, %s223
    %p232 = scmp.eq.s32.totalorder %s21, 15
    %p233 = por %p231, %p232
    %p234 = scmp.ne.s32.totalorder %s223, %s224
    %p235 = scmp.eq.s32.totalorder %s21, 0
    %p236 = por %p234, %p235
    %p237 = scmp.ne.s32.totalorder %s223, %s224
    %p238 = scmp.eq.s32.totalorder %s22, 15
    %p239 = por %p237, %p238
    %p241 = scmp.ne.s32.totalorder %s224, %s240
    %p242 = scmp.eq.s32.totalorder %s22, 0
    %p243 = por %p241, %p242
    %s244 = ssub.s32 %s23, %s35
    %p245 = scmp.eq.s32.totalorder %s244, 0
    %s247 = sadd.s32 %s246, 1
    %s248 = scalar_select %p245, %s246, %s247
    %p251 = pneg %p245
    %p252 = scmp.eq.s32.totalorder %s16, 15
    %p253 = por %p251, %p252
    %p254 = scmp.ne.s32.totalorder %s246, %s249
    %p255 = scmp.eq.s32.totalorder %s16, 0
    %p256 = por %p254, %p255
    %p257 = scmp.ne.s32.totalorder %s246, %s249
    %p258 = scmp.eq.s32.totalorder %s21, 15
    %p259 = por %p257, %p258
    %p260 = scmp.ne.s32.totalorder %s249, %s250
    %p261 = scmp.eq.s32.totalorder %s21, 0
    %p262 = por %p260, %p261
    %p263 = scmp.ne.s32.totalorder %s249, %s250
    %p264 = scmp.eq.s32.totalorder %s22, 15
    %p265 = por %p263, %p264
    %p267 = scmp.ne.s32.totalorder %s250, %s266
    %p268 = scmp.eq.s32.totalorder %s22, 0
    %p269 = por %p267, %p268
    %s270 = ssub.s32 %s23, %s35
    %p271 = scmp.eq.s32.totalorder %s270, 0
    %s273 = sadd.s32 %s272, 1
    %s274 = scalar_select %p271, %s272, %s273
    %p277 = pneg %p271
    %p278 = scmp.eq.s32.totalorder %s16, 15
    %p279 = por %p277, %p278
    %p280 = scmp.ne.s32.totalorder %s272, %s275
    %p281 = scmp.eq.s32.totalorder %s16, 0
    %p282 = por %p280, %p281
    %p283 = scmp.ne.s32.totalorder %s272, %s275
    %p284 = scmp.eq.s32.totalorder %s21, 15
    %p285 = por %p283, %p284
    %p286 = scmp.ne.s32.totalorder %s275, %s276
    %p287 = scmp.eq.s32.totalorder %s21, 0
    %p288 = por %p286, %p287
    %p289 = scmp.ne.s32.totalorder %s275, %s276
    %p290 = scmp.eq.s32.totalorder %s22, 15
    %p291 = por %p289, %p290
    %p293 = scmp.ne.s32.totalorder %s276, %s292
    %p294 = scmp.eq.s32.totalorder %s22, 0
    %p295 = por %p293, %p294
    %p296 = scmp.le.s32.totalorder 1, %s16
    %p297 = scmp.lt.s32.totalorder %s16, 17
    %p298 = pnand %p296, %p297
    %p299 = pneg %p298
    // Predicated region
    $region9: #{unet_dblock_forward.3} parent=5 // pred_check
      _
    $region10: #{unet_dblock_forward.3} parent=5 // pred_check_branch
      %301 = sbr.rel (%p298) target = $region12
    $region11: #{unet_dblock_forward.3} parent=5 // pred_region
      %s302 = ssub.s32 %s16, 1
      // Predicated region
      $region13: #{unet_dblock_forward.3} parent=11 // pred_check
        %p303 = pneg %p145
      $region14: #{unet_dblock_forward.3} parent=11 // pred_check_branch
        %305 = sbr.rel (%p303) target = $region16
      $region15: #{unet_dblock_forward.3} parent=11 // pred_region
        _
      $region16: #{unet_dblock_forward.3} parent=11 // pred_fallthru
        _
      // Predicated region
      $region17: #{unet_dblock_forward.3} parent=11 // pred_check
        %p306 = pneg %p166
      $region18: #{unet_dblock_forward.3} parent=11 // pred_check_branch
        %308 = sbr.rel (%p306) target = $region20
      $region19: #{unet_dblock_forward.3} parent=11 // pred_region
        _
      $region20: #{unet_dblock_forward.3} parent=11 // pred_fallthru
        _
      // Predicated region
      $region21: #{unet_dblock_forward.3} parent=11 // pred_check
        %p309 = pneg %p187
      $region22: #{unet_dblock_forward.3} parent=11 // pred_check_branch
        %311 = sbr.rel (%p309) target = $region24
      $region23: #{unet_dblock_forward.3} parent=11 // pred_region
        _
      $region24: #{unet_dblock_forward.3} parent=11 // pred_fallthru
        _
      // Predicated region
      $region25: #{unet_dblock_forward.3} parent=11 // pred_check
        %p312 = pneg %p208
      $region26: #{unet_dblock_forward.3} parent=11 // pred_check_branch
        %314 = sbr.rel (%p312) target = $region28
      $region27: #{unet_dblock_forward.3} parent=11 // pred_region
        _
      $region28: #{unet_dblock_forward.3} parent=11 // pred_fallthru
        _
    $region12: #{unet_dblock_forward.3} parent=5 // pred_fallthru
      _
    %p315 = scmp.lt.s32.totalorder %s16, 16
    // Predicated region
    $region29: #{unet_dblock_forward.3} parent=5 // pred_check
      %p316 = pneg %p315
    $region30: #{unet_dblock_forward.3} parent=5 // pred_check_branch
      %318 = sbr.rel (%p316) target = $region32
    $region31: #{unet_dblock_forward.3} parent=5 // pred_region
      // Predicated region
      $region33: #{unet_dblock_forward.3} parent=31 // pred_check
        %p319 = pneg %p56
      $region34: #{unet_dblock_forward.3} parent=31 // pred_check_branch
        %321 = sbr.rel (%p319) target = $region36
      $region35: #{unet_dblock_forward.3} parent=31 // pred_region
        %s322 = ssub.s32 %s24, 1
        %p323 = scmp.gt.s32.totalorder %s322, 0
        %s324 = scalar_select %p323, %s322, 0
        %p325 = scmp.lt.s32.totalorder %s23, 1
        %s326 = scalar_select %p325, %s23, 1
        %p327 = scmp.lt.s32.totalorder %s324, 7
        %s328 = scalar_select %p327, %s324, 7
        %s329 = smul.addr %s328, 8
        %s330 = smul.addr %s326, 64
        %s331 = sadd.s32 %s329, %s330
        %s332 = smul.addr %s331, 8
        %s333 = scalar_lea.vmem %s0, %s332
        %s334 = ssub.s32 %s24, 1
        %p335 = scmp.gt.s32.totalorder %s334, 0
        %s336 = scalar_select %p335, %s334, 0
      $region36: #{unet_dblock_forward.3} parent=31 // pred_fallthru
        _
      // Predicated region
      $region37: #{unet_dblock_forward.3} parent=31 // pred_check
        %p337 = pneg %p84
      $region38: #{unet_dblock_forward.3} parent=31 // pred_check_branch
        %339 = sbr.rel (%p337) target = $region40
      $region39: #{unet_dblock_forward.3} parent=31 // pred_region
        %p340 = scmp.lt.s32.totalorder %s23, 1
        %s341 = scalar_select %p340, %s23, 1
        %p342 = scmp.lt.s32.totalorder %s24, 7
        %s343 = scalar_select %p342, %s24, 7
        %s344 = smul.addr %s343, 8
        %s345 = smul.addr %s341, 64
        %s346 = sadd.s32 %s344, %s345
        %s347 = smul.addr %s346, 8
        %s348 = scalar_lea.vmem %s1, %s347
      $region40: #{unet_dblock_forward.3} parent=31 // pred_fallthru
        _
      // Predicated region
      $region41: #{unet_dblock_forward.3} parent=31 // pred_check
        %p349 = pneg %p118
      $region42: #{unet_dblock_forward.3} parent=31 // pred_check_branch
        %351 = sbr.rel (%p349) target = $region44
      $region43: #{unet_dblock_forward.3} parent=31 // pred_region
        %s352 = sadd.s32 %s24, 1
        %p353 = scmp.lt.s32.totalorder %s352, 7
        %s354 = scalar_select %p353, %s352, 7
        %p355 = scmp.lt.s32.totalorder %s23, 1
        %s356 = scalar_select %p355, %s23, 1
        %p357 = scmp.lt.s32.totalorder %s354, 7
        %s358 = scalar_select %p357, %s354, 7
        %s359 = smul.addr %s358, 8
        %s360 = smul.addr %s356, 64
        %s361 = sadd.s32 %s359, %s360
        %s362 = smul.addr %s361, 8
        %s363 = scalar_lea.vmem %s2, %s362
        %s364 = sadd.s32 %s24, 1
        %p365 = scmp.lt.s32.totalorder %s364, 7
        %s366 = scalar_select %p365, %s364, 7
      $region44: #{unet_dblock_forward.3} parent=31 // pred_fallthru
        _
    $region32: #{unet_dblock_forward.3} parent=5 // pred_fallthru
      _
    %p367 = scmp.le.s32.totalorder 1, %s16
    %p368 = scmp.lt.s32.totalorder %s16, 17
    %p369 = pnand %p367, %p368
    %p370 = pneg %p369
    // Predicated region
    $region45: #{unet_dblock_forward.3} parent=5 // pred_check
      _
    $region46: #{unet_dblock_forward.3} parent=5 // pred_check_branch
      %372 = sbr.rel (%p369) target = $region48
    $region47: #{unet_dblock_forward.3} parent=5 // pred_region
      %s373 = ssub.s32 %s16, 1
      %s374 = ssub.s32 %s26, 1
      %p375 = scmp.gt.s32.totalorder %s374, 0
      %s376 = scalar_select %p375, %s374, 0
      %p377 = scmp.lt.s32.totalorder %s25, 1
      %s378 = scalar_select %p377, %s25, 1
      %p379 = scmp.lt.s32.totalorder %s376, 7
      %s380 = scalar_select %p379, %s376, 7
      %s381 = smul.addr %s380, 8
      %s382 = smul.addr %s378, 64
      %s383 = sadd.s32 %s381, %s382
      %s384 = smul.addr %s383, 8
      %s385 = scalar_lea.vmem %s0, %s384
      %p386 = pneg %p62
      %p387 = pneg %p59
      %p388 = scmp.lt.s32.totalorder %s25, 1
      %s389 = scalar_select %p388, %s25, 1
      %p390 = scmp.lt.s32.totalorder %s26, 7
      %s391 = scalar_select %p390, %s26, 7
      %s392 = smul.addr %s391, 8
      %s393 = smul.addr %s389, 64
      %s394 = sadd.s32 %s392, %s393
      %s395 = smul.addr %s394, 8
      %s396 = scalar_lea.vmem %s1, %s395
      %p397 = pneg %p90
      %p398 = pneg %p87
      %s399 = sadd.s32 %s26, 1
      %p400 = scmp.lt.s32.totalorder %s399, 7
      %s401 = scalar_select %p400, %s399, 7
      %p402 = scmp.lt.s32.totalorder %s25, 1
      %s403 = scalar_select %p402, %s25, 1
      %p404 = scmp.lt.s32.totalorder %s401, 7
      %s405 = scalar_select %p404, %s401, 7
      %s406 = smul.addr %s405, 8
      %s407 = smul.addr %s403, 64
      %s408 = sadd.s32 %s406, %s407
      %s409 = smul.addr %s408, 8
      %s410 = scalar_lea.vmem %s2, %s409
      %p411 = pneg %p124
      %p412 = pneg %p121
      %p413 = pneg %p145
      %p414 = pneg %p142
      %p415 = pneg %p166
      %p416 = pneg %p163
      %p417 = pneg %p187
      %p418 = pneg %p184
      %p419 = pneg %p208
      %p420 = pneg %p205
      %p421 = pneg %p236
      %p422 = pneg %p233
      %p423 = scmp.lt.s32.totalorder %s25, 1
      %s424 = scalar_select %p423, %s25, 1
      %p425 = scmp.lt.s32.totalorder %s26, 7
      %s426 = scalar_select %p425, %s26, 7
      %s427 = smul.addr %s426, 8
      %s428 = smul.addr %s424, 64
      %s429 = sadd.s32 %s427, %s428
      %s430 = smul.addr %s429, 8
      %s431 = scalar_lea.vmem %s7, %s430
      %p432 = pneg %p262
      %p433 = pneg %p259
      %p434 = scmp.lt.s32.totalorder %s25, 1
      %s435 = scalar_select %p434, %s25, 1
      %s436 = scalar_lea.vmem %s8, %s435
      %p437 = pneg %p288
      %p438 = pneg %p285
      %p439 = scmp.lt.s32.totalorder %s25, 1
      %s440 = scalar_select %p439, %s25, 1
      %s441 = scalar_lea.vmem %s9, %s440
      %s442 = ssub.s32 %s26, 1
      %p443 = scmp.gt.s32.totalorder %s442, 0
      %s444 = scalar_select %p443, %s442, 0
      %p445 = scmp.lt.s32.totalorder %s25, 1
      %s446 = scalar_select %p445, %s25, 1
      %p447 = scmp.lt.s32.totalorder %s444, 7
      %s448 = scalar_select %p447, %s444, 7
      %s449 = smul.addr %s448, 8
      %s450 = smul.addr %s446, 64
      %s451 = sadd.s32 %s449, %s450
      %s452 = smul.addr %s451, 8
      %s453 = scalar_lea.vmem %s0, %s452
      %s454 = ssub.s32 %s26, 1
      %p455 = scmp.gt.s32.totalorder %s454, 0
      %s456 = scalar_select %p455, %s454, 0
      %p457 = scmp.lt.s32.totalorder %s25, 1
      %s458 = scalar_select %p457, %s25, 1
      %p459 = scmp.lt.s32.totalorder %s26, 7
      %s460 = scalar_select %p459, %s26, 7
      %s461 = smul.addr %s460, 8
      %s462 = smul.addr %s458, 64
      %s463 = sadd.s32 %s461, %s462
      %s464 = smul.addr %s463, 8
      %s465 = scalar_lea.vmem %s1, %s464
      %s466 = sadd.s32 %s26, 1
      %p467 = scmp.lt.s32.totalorder %s466, 7
      %s468 = scalar_select %p467, %s466, 7
      %p469 = scmp.lt.s32.totalorder %s25, 1
      %s470 = scalar_select %p469, %s25, 1
      %p471 = scmp.lt.s32.totalorder %s468, 7
      %s472 = scalar_select %p471, %s468, 7
      %s473 = smul.addr %s472, 8
      %s474 = smul.addr %s470, 64
      %s475 = sadd.s32 %s473, %s474
      %s476 = smul.addr %s475, 8
      %s477 = scalar_lea.vmem %s2, %s476
      %s478 = sadd.s32 %s26, 1
      %p479 = scmp.lt.s32.totalorder %s478, 7
      %s480 = scalar_select %p479, %s478, 7
      %p481 = scmp.lt.s32.totalorder %s25, 1
      %s482 = scalar_select %p481, %s25, 1
      %p483 = scmp.lt.s32.totalorder %s26, 7
      %s484 = scalar_select %p483, %s26, 7
      %s485 = smul.addr %s484, 8
      %s486 = smul.addr %s482, 64
      %s487 = sadd.s32 %s485, %s486
      %s488 = smul.addr %s487, 8
      %s489 = scalar_lea.vmem %s7, %s488
      %p490 = scmp.lt.s32.totalorder %s25, 1
      %s491 = scalar_select %p490, %s25, 1
      %s492 = scalar_lea.vmem %s8, %s491
      %p493 = scmp.lt.s32.totalorder %s25, 1
      %s494 = scalar_select %p493, %s25, 1
      %s495 = scalar_lea.vmem %s9, %s494
      %p496 = scmp.eq.s32.totalorder %s26, 0
      // Predicated region
      $region49: #{unet_dblock_forward.3} parent=47 // pred_check
        %p497 = pneg %p496
      $region50: #{unet_dblock_forward.3} parent=47 // pred_check_branch
        %499 = sbr.rel (%p497) target = $region52
      $region51: #{unet_dblock_forward.3} parent=47 // pred_region
        %vm500 = vcmask 57344
        %501 = vst.msk [vmem:[%s492] sm:$0x1] %vm500, 0.0
        %502 = vst.msk [vmem:[%s495] sm:$0x1] %vm500, 0.0
        %vm503 = vcmask 31744
        %504 = vst.msk [vmem:[#allocation2] sm:$0xff] %vm503, 0.0
        %vm505 = vcmask 25600
        %506 = vst.msk [vmem:[#allocation2 + $0x8] sm:$0x3] %vm505, 0.0
        %507 = vst.msk [vmem:[#allocation2 + $0x10] sm:$0xff] %vm503, 0.0
        %508 = vst.msk [vmem:[#allocation2 + $0x18] sm:$0x3] %vm505, 0.0
        %509 = vst.msk [vmem:[#allocation2 + $0x20] sm:$0xff] %vm503, 0.0
        %510 = vst.msk [vmem:[#allocation2 + $0x28] sm:$0x3] %vm505, 0.0
        %511 = vst.msk [vmem:[#allocation2 + $0x30] sm:$0xff] %vm503, 0.0
        %512 = vst.msk [vmem:[#allocation2 + $0x38] sm:$0x3] %vm505, 0.0
        %513 = vst.msk [vmem:[#allocation2 + $0x40] sm:$0xff] %vm503, 0.0
        %514 = vst.msk [vmem:[#allocation2 + $0x48] sm:$0x3] %vm505, 0.0
        %515 = vst.msk [vmem:[#allocation2 + $0x50] sm:$0xff] %vm503, 0.0
        %516 = vst.msk [vmem:[#allocation2 + $0x58] sm:$0x3] %vm505, 0.0
        %517 = vst.msk [vmem:[#allocation2 + $0x60] sm:$0xff] %vm503, 0.0
        %518 = vst.msk [vmem:[#allocation2 + $0x68] sm:$0x3] %vm505, 0.0
        %519 = vst.msk [vmem:[#allocation2 + $0x70] sm:$0xff] %vm503, 0.0
        %520 = vst.msk [vmem:[#allocation2 + $0x78] sm:$0x3] %vm505, 0.0
        %521 = vst.msk [vmem:[#allocation2 + $0x80] sm:$0xff] %vm503, 0.0
        %522 = vst.msk [vmem:[#allocation2 + $0x88] sm:$0x3] %vm505, 0.0
        %523 = vst.msk [vmem:[#allocation2 + $0x90] sm:$0xff] %vm503, 0.0
        %524 = vst.msk [vmem:[#allocation2 + $0x98] sm:$0x3] %vm505, 0.0
      $region52: #{unet_dblock_forward.3} parent=47 // pred_fallthru
        _
      %v525 = vld [vmem:[%s6] sm:$0x1]
      %v527 = vperm.slane %v525, 0
      %v529 = vadd.f32 %v527, 0.0
      %v530 = vld [vmem:[%s453] sm:$0xff]
      %v531 = vld [vmem:[%s453 + $0x8] sm:$0xff]
      %v532 = vld [vmem:[%s453 + $0x10] sm:$0xff]
      %v533 = vld [vmem:[%s453 + $0x18] sm:$0xff]
      %v534 = vld [vmem:[%s453 + $0x20] sm:$0xff]
      %v535 = vld [vmem:[%s453 + $0x28] sm:$0xff]
      %v536 = vld [vmem:[%s453 + $0x30] sm:$0xff]
      %v537 = vld [vmem:[%s453 + $0x38] sm:$0xff]
      %v538 = vld [vmem:[%s3] sm:$0x1]
      %v540 = vperm.slane %v538, 0
      %v542 = vmul.f32 %v530, %v540
      %v543 = vmul.f32 %v531, %v540
      %v544 = vmul.f32 %v532, %v540
      %v545 = vmul.f32 %v533, %v540
      %v546 = vmul.f32 %v534, %v540
      %v547 = vmul.f32 %v535, %v540
      %v548 = vmul.f32 %v536, %v540
      %v549 = vmul.f32 %v537, %v540
      %v550 = vld [vmem:[%s4] sm:$0x1]
      %v552 = vperm.slane %v550, 0
      %v554 = vadd.f32 %v542, %v552
      %v555 = vadd.f32 %v543, %v552
      %v556 = vadd.f32 %v544, %v552
      %v557 = vadd.f32 %v545, %v552
      %v558 = vadd.f32 %v546, %v552
      %v559 = vadd.f32 %v547, %v552
      %v560 = vadd.f32 %v548, %v552
      %v561 = vadd.f32 %v549, %v552
      %s562 = sadd.s32 %s26, 4294967295
      %p563 = scmp.ge.s32.totalorder %s562, 0
      %p564 = scmp.lt.s32.totalorder %s562, 8
      %p565 = pnand %p563, %p564
      %p566 = pneg %p565
      %s567 = scalar_select %p566, 1.0, 0.0
      %v568 = vstv %s567
      %v569 = vmul.f32 %v554, %v568
      %v570 = vmul.f32 %v555, %v568
      %v571 = vmul.f32 %v556, %v568
      %v572 = vmul.f32 %v557, %v568
      %v573 = vmul.f32 %v558, %v568
      %v574 = vmul.f32 %v559, %v568
      %v575 = vmul.f32 %v560, %v568
      %v576 = vmul.f32 %v561, %v568
      %s577 = scalar_lea.vmem [#allocation2], 16
      %vm578 = vcmask 31744
      %579 = vst.msk [vmem:[%s577 + $0x1] sm:$0xff] %vm578, %v569
      %580 = vst.msk [vmem:[%s577 + $0x11] sm:$0xff] %vm578, %v570
      %581 = vst.msk [vmem:[%s577 + $0x21] sm:$0xff] %vm578, %v571
      %582 = vst.msk [vmem:[%s577 + $0x31] sm:$0xff] %vm578, %v572
      %583 = vst.msk [vmem:[%s577 + $0x41] sm:$0xff] %vm578, %v573
      %584 = vst.msk [vmem:[%s577 + $0x51] sm:$0xff] %vm578, %v574
      %585 = vst.msk [vmem:[%s577 + $0x61] sm:$0xff] %vm578, %v575
      %586 = vst.msk [vmem:[%s577 + $0x71] sm:$0xff] %vm578, %v576
      %v587 = vld [vmem:[#allocation2] sm:$0xff]
      %v588 = vld [vmem:[#allocation2 + $0x10] sm:$0xff]
      %v589 = vld [vmem:[#allocation2 + $0x20] sm:$0xff]
      %v590 = vld [vmem:[#allocation2 + $0x30] sm:$0xff]
      %v591 = vld [vmem:[#allocation2 + $0x40] sm:$0xff]
      %v592 = vld [vmem:[#allocation2 + $0x50] sm:$0xff]
      %v593 = vld [vmem:[#allocation2 + $0x60] sm:$0xff]
      %v594 = vld [vmem:[#allocation2 + $0x70] sm:$0xff]
      %v595 = vld [vmem:[%s5] sm:$0xf]
      %v597 = vsel %vm578, %v587, 0
      %v600 = vsel %vm578, %v588, 0
      %v603 = vsel %vm578, %v589, 0
      %v606 = vsel %vm578, %v590, 0
      %v609 = vsel %vm578, %v591, 0
      %v612 = vsel %vm578, %v592, 0
      %v615 = vsel %vm578, %v593, 0
      %v618 = vsel %vm578, %v594, 0
      %vm620 = vcmask 1043456
      %v622 = vsel %vm620, %v595, 0
      %624 = vmatpush.msra.mxu0 0.0
      %625 = vmatpush.msra.mxu0 0.0
      %626 = vmatpush.msra.mxu0 0.0
      %627 = vmatpush.msra.mxu0 0.0
      %628 = vmatpush.msra.mxu0 0.0
      %629 = vmatpush.msra.mxu0 0.0
      %630 = vmatpush.msra.mxu0 0.0
      %631 = vmatpush.msra.mxu0 0.0
      %632 = vmatpush.msra.mxu0 0.0
      %633 = vmatpush.msra.mxu0 0.0
      %634 = vmatpush.msra.mxu0 0.0
      %635 = vmatpush.msra.mxu0 0.0
      %636 = vmatpush.msra.mxu0 0.0
      %637 = vmatpush.msra.mxu0 0.0
      %638 = vmatpush.msra.mxu0 0.0
      %639 = vmatpush.msra.mxu0 %v622
      %640 = vmatmul.f32.gmra.mxu0 %v597
      %v641 = vpop.f32.mrf.mxu0
      %v642 = vadd.f32 0.0, %v641
      %643 = vmatmul.f32.gmra.mxu0 %v600
      %v644 = vpop.f32.mrf.mxu0
      %v645 = vadd.f32 0.0, %v644
      %646 = vmatmul.f32.gmra.mxu0 %v603
      %v647 = vpop.f32.mrf.mxu0
      %v648 = vadd.f32 0.0, %v647
      %649 = vmatmul.f32.gmra.mxu0 %v606
      %v650 = vpop.f32.mrf.mxu0
      %v651 = vadd.f32 0.0, %v650
      %652 = vmatmul.f32.gmra.mxu0 %v609
      %v653 = vpop.f32.mrf.mxu0
      %v654 = vadd.f32 0.0, %v653
      %655 = vmatmul.f32.gmra.mxu0 %v612
      %v656 = vpop.f32.mrf.mxu0
      %v657 = vadd.f32 0.0, %v656
      %658 = vmatmul.f32.gmra.mxu0 %v615
      %v659 = vpop.f32.mrf.mxu0
      %v660 = vadd.f32 0.0, %v659
      %661 = vmatmul.f32.gmra.mxu0 %v618
      %v662 = vpop.f32.mrf.mxu0
      %v663 = vadd.f32 0.0, %v662
      %664 = vdwg.mxu0
      %v665 = vadd.f32 %v529, %v642
      %v666 = vadd.f32 %v529, %v645
      %v667 = vadd.f32 %v529, %v648
      %v668 = vadd.f32 %v529, %v651
      %v669 = vadd.f32 %v529, %v654
      %v670 = vadd.f32 %v529, %v657
      %v671 = vadd.f32 %v529, %v660
      %v672 = vadd.f32 %v529, %v663
      %v673 = vld [vmem:[#allocation2 + $0x1] sm:$0xff]
      %v674 = vld [vmem:[#allocation2 + $0x11] sm:$0xff]
      %v675 = vld [vmem:[#allocation2 + $0x21] sm:$0xff]
      %v676 = vld [vmem:[#allocation2 + $0x31] sm:$0xff]
      %v677 = vld [vmem:[#allocation2 + $0x41] sm:$0xff]
      %v678 = vld [vmem:[#allocation2 + $0x51] sm:$0xff]
      %v679 = vld [vmem:[#allocation2 + $0x61] sm:$0xff]
      %v680 = vld [vmem:[#allocation2 + $0x71] sm:$0xff]
      %s681 = scalar_lea.vmem %s5, 4
      %v682 = vld [vmem:[%s681] sm:$0xf]
      %v684 = vsel %vm578, %v673, 0
      %v687 = vsel %vm578, %v674, 0
      %v690 = vsel %vm578, %v675, 0
      %v693 = vsel %vm578, %v676, 0
      %v696 = vsel %vm578, %v677, 0
      %v699 = vsel %vm578, %v678, 0
      %v702 = vsel %vm578, %v679, 0
      %v705 = vsel %vm578, %v680, 0
      %v708 = vsel %vm620, %v682, 0
      %710 = vmatpush.msra.mxu0 0.0
      %711 = vmatpush.msra.mxu0 0.0
      %712 = vmatpush.msra.mxu0 0.0
      %713 = vmatpush.msra.mxu0 0.0
      %714 = vmatpush.msra.mxu0 0.0
      %715 = vmatpush.msra.mxu0 0.0
      %716 = vmatpush.msra.mxu0 0.0
      %717 = vmatpush.msra.mxu0 0.0
      %718 = vmatpush.msra.mxu0 0.0
      %719 = vmatpush.msra.mxu0 0.0
      %720 = vmatpush.msra.mxu0 0.0
      %721 = vmatpush.msra.mxu0 0.0
      %722 = vmatpush.msra.mxu0 0.0
      %723 = vmatpush.msra.mxu0 0.0
      %724 = vmatpush.msra.mxu0 0.0
      %725 = vmatpush.msra.mxu0 %v708
      %726 = vmatmul.f32.gmra.mxu0 %v684
      %v727 = vpop.f32.mrf.mxu0
      %v728 = vadd.f32 0.0, %v727
      %729 = vmatmul.f32.gmra.mxu0 %v687
      %v730 = vpop.f32.mrf.mxu0
      %v731 = vadd.f32 0.0, %v730
      %732 = vmatmul.f32.gmra.mxu0 %v690
      %v733 = vpop.f32.mrf.mxu0
      %v734 = vadd.f32 0.0, %v733
      %735 = vmatmul.f32.gmra.mxu0 %v693
      %v736 = vpop.f32.mrf.mxu0
      %v737 = vadd.f32 0.0, %v736
      %738 = vmatmul.f32.gmra.mxu0 %v696
      %v739 = vpop.f32.mrf.mxu0
      %v740 = vadd.f32 0.0, %v739
      %741 = vmatmul.f32.gmra.mxu0 %v699
      %v742 = vpop.f32.mrf.mxu0
      %v743 = vadd.f32 0.0, %v742
      %744 = vmatmul.f32.gmra.mxu0 %v702
      %v745 = vpop.f32.mrf.mxu0
      %v746 = vadd.f32 0.0, %v745
      %747 = vmatmul.f32.gmra.mxu0 %v705
      %v748 = vpop.f32.mrf.mxu0
      %v749 = vadd.f32 0.0, %v748
      %750 = vdwg.mxu0
      %v751 = vadd.f32 %v665, %v728
      %v752 = vadd.f32 %v666, %v731
      %v753 = vadd.f32 %v667, %v734
      %v754 = vadd.f32 %v668, %v737
      %v755 = vadd.f32 %v669, %v740
      %v756 = vadd.f32 %v670, %v743
      %v757 = vadd.f32 %v671, %v746
      %v758 = vadd.f32 %v672, %v749
      %v759 = vld [vmem:[#allocation2 + $0x2] sm:$0xff]
      %v760 = vld [vmem:[#allocation2 + $0x12] sm:$0xff]
      %v761 = vld [vmem:[#allocation2 + $0x22] sm:$0xff]
      %v762 = vld [vmem:[#allocation2 + $0x32] sm:$0xff]
      %v763 = vld [vmem:[#allocation2 + $0x42] sm:$0xff]
      %v764 = vld [vmem:[#allocation2 + $0x52] sm:$0xff]
      %v765 = vld [vmem:[#allocation2 + $0x62] sm:$0xff]
      %v766 = vld [vmem:[#allocation2 + $0x72] sm:$0xff]
      %s767 = scalar_lea.vmem %s5, 8
      %v768 = vld [vmem:[%s767] sm:$0xf]
      %v770 = vsel %vm578, %v759, 0
      %v773 = vsel %vm578, %v760, 0
      %v776 = vsel %vm578, %v761, 0
      %v779 = vsel %vm578, %v762, 0
      %v782 = vsel %vm578, %v763, 0
      %v785 = vsel %vm578, %v764, 0
      %v788 = vsel %vm578, %v765, 0
      %v791 = vsel %vm578, %v766, 0
      %v794 = vsel %vm620, %v768, 0
      %796 = vmatpush.msra.mxu0 0.0
      %797 = vmatpush.msra.mxu0 0.0
      %798 = vmatpush.msra.mxu0 0.0
      %799 = vmatpush.msra.mxu0 0.0
      %800 = vmatpush.msra.mxu0 0.0
      %801 = vmatpush.msra.mxu0 0.0
      %802 = vmatpush.msra.mxu0 0.0
      %803 = vmatpush.msra.mxu0 0.0
      %804 = vmatpush.msra.mxu0 0.0
      %805 = vmatpush.msra.mxu0 0.0
      %806 = vmatpush.msra.mxu0 0.0
      %807 = vmatpush.msra.mxu0 0.0
      %808 = vmatpush.msra.mxu0 0.0
      %809 = vmatpush.msra.mxu0 0.0
      %810 = vmatpush.msra.mxu0 0.0
      %811 = vmatpush.msra.mxu0 %v794
      %812 = vmatmul.f32.gmra.mxu0 %v770
      %v813 = vpop.f32.mrf.mxu0
      %v814 = vadd.f32 0.0, %v813
      %815 = vmatmul.f32.gmra.mxu0 %v773
      %v816 = vpop.f32.mrf.mxu0
      %v817 = vadd.f32 0.0, %v816
      %818 = vmatmul.f32.gmra.mxu0 %v776
      %v819 = vpop.f32.mrf.mxu0
      %v820 = vadd.f32 0.0, %v819
      %821 = vmatmul.f32.gmra.mxu0 %v779
      %v822 = vpop.f32.mrf.mxu0
      %v823 = vadd.f32 0.0, %v822
      %824 = vmatmul.f32.gmra.mxu0 %v782
      %v825 = vpop.f32.mrf.mxu0
      %v826 = vadd.f32 0.0, %v825
      %827 = vmatmul.f32.gmra.mxu0 %v785
      %v828 = vpop.f32.mrf.mxu0
      %v829 = vadd.f32 0.0, %v828
      %830 = vmatmul.f32.gmra.mxu0 %v788
      %v831 = vpop.f32.mrf.mxu0
      %v832 = vadd.f32 0.0, %v831
      %833 = vmatmul.f32.gmra.mxu0 %v791
      %v834 = vpop.f32.mrf.mxu0
      %v835 = vadd.f32 0.0, %v834
      %836 = vdwg.mxu0
      %v837 = vadd.f32 %v751, %v814
      %v838 = vadd.f32 %v752, %v817
      %v839 = vadd.f32 %v753, %v820
      %v840 = vadd.f32 %v754, %v823
      %v841 = vadd.f32 %v755, %v826
      %v842 = vadd.f32 %v756, %v829
      %v843 = vadd.f32 %v757, %v832
      %v844 = vadd.f32 %v758, %v835
      %v845 = vld [vmem:[%s577] sm:$0xff]
      %v846 = vld [vmem:[%s577 + $0x10] sm:$0xff]
      %v847 = vld [vmem:[%s577 + $0x20] sm:$0xff]
      %v848 = vld [vmem:[%s577 + $0x30] sm:$0xff]
      %v849 = vld [vmem:[%s577 + $0x40] sm:$0xff]
      %v850 = vld [vmem:[%s577 + $0x50] sm:$0xff]
      %v851 = vld [vmem:[%s577 + $0x60] sm:$0xff]
      %v852 = vld [vmem:[%s577 + $0x70] sm:$0xff]
      %s853 = scalar_lea.vmem %s5, 12
      %v854 = vld [vmem:[%s853] sm:$0xf]
      %v856 = vsel %vm578, %v845, 0
      %v859 = vsel %vm578, %v846, 0
      %v862 = vsel %vm578, %v847, 0
      %v865 = vsel %vm578, %v848, 0
      %v868 = vsel %vm578, %v849, 0
      %v871 = vsel %vm578, %v850, 0
      %v874 = vsel %vm578, %v851, 0
      %v877 = vsel %vm578, %v852, 0
      %v880 = vsel %vm620, %v854, 0
      %882 = vmatpush.msra.mxu0 0.0
      %883 = vmatpush.msra.mxu0 0.0
      %884 = vmatpush.msra.mxu0 0.0
      %885 = vmatpush.msra.mxu0 0.0
      %886 = vmatpush.msra.mxu0 0.0
      %887 = vmatpush.msra.mxu0 0.0
      %888 = vmatpush.msra.mxu0 0.0
      %889 = vmatpush.msra.mxu0 0.0
      %890 = vmatpush.msra.mxu0 0.0
      %891 = vmatpush.msra.mxu0 0.0
      %892 = vmatpush.msra.mxu0 0.0
      %893 = vmatpush.msra.mxu0 0.0
      %894 = vmatpush.msra.mxu0 0.0
      %895 = vmatpush.msra.mxu0 0.0
      %896 = vmatpush.msra.mxu0 0.0
      %897 = vmatpush.msra.mxu0 %v880
      %898 = vmatmul.f32.gmra.mxu0 %v856
      %v899 = vpop.f32.mrf.mxu0
      %v900 = vadd.f32 0.0, %v899
      %901 = vmatmul.f32.gmra.mxu0 %v859
      %v902 = vpop.f32.mrf.mxu0
      %v903 = vadd.f32 0.0, %v902
      %904 = vmatmul.f32.gmra.mxu0 %v862
      %v905 = vpop.f32.mrf.mxu0
      %v906 = vadd.f32 0.0, %v905
      %907 = vmatmul.f32.gmra.mxu0 %v865
      %v908 = vpop.f32.mrf.mxu0
      %v909 = vadd.f32 0.0, %v908
      %910 = vmatmul.f32.gmra.mxu0 %v868
      %v911 = vpop.f32.mrf.mxu0
      %v912 = vadd.f32 0.0, %v911
      %913 = vmatmul.f32.gmra.mxu0 %v871
      %v914 = vpop.f32.mrf.mxu0
      %v915 = vadd.f32 0.0, %v914
      %916 = vmatmul.f32.gmra.mxu0 %v874
      %v917 = vpop.f32.mrf.mxu0
      %v918 = vadd.f32 0.0, %v917
      %919 = vmatmul.f32.gmra.mxu0 %v877
      %v920 = vpop.f32.mrf.mxu0
      %v921 = vadd.f32 0.0, %v920
      %922 = vdwg.mxu0
      %v923 = vadd.f32 %v837, %v900
      %v924 = vadd.f32 %v838, %v903
      %v925 = vadd.f32 %v839, %v906
      %v926 = vadd.f32 %v840, %v909
      %v927 = vadd.f32 %v841, %v912
      %v928 = vadd.f32 %v842, %v915
      %v929 = vadd.f32 %v843, %v918
      %v930 = vadd.f32 %v844, %v921
      %v931 = vld [vmem:[%s577 + $0x1] sm:$0xff]
      %v932 = vld [vmem:[%s577 + $0x11] sm:$0xff]
      %v933 = vld [vmem:[%s577 + $0x21] sm:$0xff]
      %v934 = vld [vmem:[%s577 + $0x31] sm:$0xff]
      %v935 = vld [vmem:[%s577 + $0x41] sm:$0xff]
      %v936 = vld [vmem:[%s577 + $0x51] sm:$0xff]
      %v937 = vld [vmem:[%s577 + $0x61] sm:$0xff]
      %v938 = vld [vmem:[%s577 + $0x71] sm:$0xff]
      %s939 = scalar_lea.vmem %s5, 16
      %v940 = vld [vmem:[%s939] sm:$0xf]
      %v942 = vsel %vm578, %v931, 0
      %v945 = vsel %vm578, %v932, 0
      %v948 = vsel %vm578, %v933, 0
      %v951 = vsel %vm578, %v934, 0
      %v954 = vsel %vm578, %v935, 0
      %v957 = vsel %vm578, %v936, 0
      %v960 = vsel %vm578, %v937, 0
      %v963 = vsel %vm578, %v938, 0
      %v966 = vsel %vm620, %v940, 0
      %968 = vmatpush.msra.mxu0 0.0
      %969 = vmatpush.msra.mxu0 0.0
      %970 = vmatpush.msra.mxu0 0.0
      %971 = vmatpush.msra.mxu0 0.0
      %972 = vmatpush.msra.mxu0 0.0
      %973 = vmatpush.msra.mxu0 0.0
      %974 = vmatpush.msra.mxu0 0.0
      %975 = vmatpush.msra.mxu0 0.0
      %976 = vmatpush.msra.mxu0 0.0
      %977 = vmatpush.msra.mxu0 0.0
      %978 = vmatpush.msra.mxu0 0.0
      %979 = vmatpush.msra.mxu0 0.0
      %980 = vmatpush.msra.mxu0 0.0
      %981 = vmatpush.msra.mxu0 0.0
      %982 = vmatpush.msra.mxu0 0.0
      %983 = vmatpush.msra.mxu0 %v966
      %984 = vmatmul.f32.gmra.mxu0 %v942
      %v985 = vpop.f32.mrf.mxu0
      %v986 = vadd.f32 0.0, %v985
      %987 = vmatmul.f32.gmra.mxu0 %v945
      %v988 = vpop.f32.mrf.mxu0
      %v989 = vadd.f32 0.0, %v988
      %990 = vmatmul.f32.gmra.mxu0 %v948
      %v991 = vpop.f32.mrf.mxu0
      %v992 = vadd.f32 0.0, %v991
      %993 = vmatmul.f32.gmra.mxu0 %v951
      %v994 = vpop.f32.mrf.mxu0
      %v995 = vadd.f32 0.0, %v994
      %996 = vmatmul.f32.gmra.mxu0 %v954
      %v997 = vpop.f32.mrf.mxu0
      %v998 = vadd.f32 0.0, %v997
      %999 = vmatmul.f32.gmra.mxu0 %v957
      %v1000 = vpop.f32.mrf.mxu0
      %v1001 = vadd.f32 0.0, %v1000
      %1002 = vmatmul.f32.gmra.mxu0 %v960
      %v1003 = vpop.f32.mrf.mxu0
      %v1004 = vadd.f32 0.0, %v1003
      %1005 = vmatmul.f32.gmra.mxu0 %v963
      %v1006 = vpop.f32.mrf.mxu0
      %v1007 = vadd.f32 0.0, %v1006
      %1008 = vdwg.mxu0
      %v1009 = vadd.f32 %v923, %v986
      %v1010 = vadd.f32 %v924, %v989
      %v1011 = vadd.f32 %v925, %v992
      %v1012 = vadd.f32 %v926, %v995
      %v1013 = vadd.f32 %v927, %v998
      %v1014 = vadd.f32 %v928, %v1001
      %v1015 = vadd.f32 %v929, %v1004
      %v1016 = vadd.f32 %v930, %v1007
      %v1017 = vld [vmem:[%s577 + $0x2] sm:$0xff]
      %v1018 = vld [vmem:[%s577 + $0x12] sm:$0xff]
      %v1019 = vld [vmem:[%s577 + $0x22] sm:$0xff]
      %v1020 = vld [vmem:[%s577 + $0x32] sm:$0xff]
      %v1021 = vld [vmem:[%s577 + $0x42] sm:$0xff]
      %v1022 = vld [vmem:[%s577 + $0x52] sm:$0xff]
      %v1023 = vld [vmem:[%s577 + $0x62] sm:$0xff]
      %v1024 = vld [vmem:[%s577 + $0x72] sm:$0xff]
      %s1025 = scalar_lea.vmem %s5, 20
      %v1026 = vld [vmem:[%s1025] sm:$0xf]
      %v1028 = vsel %vm578, %v1017, 0
      %v1031 = vsel %vm578, %v1018, 0
      %v1034 = vsel %vm578, %v1019, 0
      %v1037 = vsel %vm578, %v1020, 0
      %v1040 = vsel %vm578, %v1021, 0
      %v1043 = vsel %vm578, %v1022, 0
      %v1046 = vsel %vm578, %v1023, 0
      %v1049 = vsel %vm578, %v1024, 0
      %v1052 = vsel %vm620, %v1026, 0
      %1054 = vmatpush.msra.mxu0 0.0
      %1055 = vmatpush.msra.mxu0 0.0
      %1056 = vmatpush.msra.mxu0 0.0
      %1057 = vmatpush.msra.mxu0 0.0
      %1058 = vmatpush.msra.mxu0 0.0
      %1059 = vmatpush.msra.mxu0 0.0
      %1060 = vmatpush.msra.mxu0 0.0
      %1061 = vmatpush.msra.mxu0 0.0
      %1062 = vmatpush.msra.mxu0 0.0
      %1063 = vmatpush.msra.mxu0 0.0
      %1064 = vmatpush.msra.mxu0 0.0
      %1065 = vmatpush.msra.mxu0 0.0
      %1066 = vmatpush.msra.mxu0 0.0
      %1067 = vmatpush.msra.mxu0 0.0
      %1068 = vmatpush.msra.mxu0 0.0
      %1069 = vmatpush.msra.mxu0 %v1052
      %1070 = vmatmul.f32.gmra.mxu0 %v1028
      %v1071 = vpop.f32.mrf.mxu0
      %v1072 = vadd.f32 0.0, %v1071
      %1073 = vmatmul.f32.gmra.mxu0 %v1031
      %v1074 = vpop.f32.mrf.mxu0
      %v1075 = vadd.f32 0.0, %v1074
      %1076 = vmatmul.f32.gmra.mxu0 %v1034
      %v1077 = vpop.f32.mrf.mxu0
      %v1078 = vadd.f32 0.0, %v1077
      %1079 = vmatmul.f32.gmra.mxu0 %v1037
      %v1080 = vpop.f32.mrf.mxu0
      %v1081 = vadd.f32 0.0, %v1080
      %1082 = vmatmul.f32.gmra.mxu0 %v1040
      %v1083 = vpop.f32.mrf.mxu0
      %v1084 = vadd.f32 0.0, %v1083
      %1085 = vmatmul.f32.gmra.mxu0 %v1043
      %v1086 = vpop.f32.mrf.mxu0
      %v1087 = vadd.f32 0.0, %v1086
      %1088 = vmatmul.f32.gmra.mxu0 %v1046
      %v1089 = vpop.f32.mrf.mxu0
      %v1090 = vadd.f32 0.0, %v1089
      %1091 = vmatmul.f32.gmra.mxu0 %v1049
      %v1092 = vpop.f32.mrf.mxu0
      %v1093 = vadd.f32 0.0, %v1092
      %1094 = vdwg.mxu0
      %v1095 = vadd.f32 %v1009, %v1072
      %v1096 = vadd.f32 %v1010, %v1075
      %v1097 = vadd.f32 %v1011, %v1078
      %v1098 = vadd.f32 %v1012, %v1081
      %v1099 = vadd.f32 %v1013, %v1084
      %v1100 = vadd.f32 %v1014, %v1087
      %v1101 = vadd.f32 %v1015, %v1090
      %v1102 = vadd.f32 %v1016, %v1093
      %s1103 = scalar_lea.vmem [#allocation2], 32
      %v1104 = vld [vmem:[%s1103] sm:$0xff]
      %v1105 = vld [vmem:[%s1103 + $0x10] sm:$0xff]
      %v1106 = vld [vmem:[%s1103 + $0x20] sm:$0xff]
      %v1107 = vld [vmem:[%s1103 + $0x30] sm:$0xff]
      %v1108 = vld [vmem:[%s1103 + $0x40] sm:$0xff]
      %v1109 = vld [vmem:[%s1103 + $0x50] sm:$0xff]
      %v1110 = vld [vmem:[%s1103 + $0x60] sm:$0xff]
      %v1111 = vld [vmem:[%s1103 + $0x70] sm:$0xff]
      %s1112 = scalar_lea.vmem %s5, 24
      %v1113 = vld [vmem:[%s1112] sm:$0xf]
      %v1115 = vsel %vm578, %v1104, 0
      %v1118 = vsel %vm578, %v1105, 0
      %v1121 = vsel %vm578, %v1106, 0
      %v1124 = vsel %vm578, %v1107, 0
      %v1127 = vsel %vm578, %v1108, 0
      %v1130 = vsel %vm578, %v1109, 0
      %v1133 = vsel %vm578, %v1110, 0
      %v1136 = vsel %vm578, %v1111, 0
      %v1139 = vsel %vm620, %v1113, 0
      %1141 = vmatpush.msra.mxu0 0.0
      %1142 = vmatpush.msra.mxu0 0.0
      %1143 = vmatpush.msra.mxu0 0.0
      %1144 = vmatpush.msra.mxu0 0.0
      %1145 = vmatpush.msra.mxu0 0.0
      %1146 = vmatpush.msra.mxu0 0.0
      %1147 = vmatpush.msra.mxu0 0.0
      %1148 = vmatpush.msra.mxu0 0.0
      %1149 = vmatpush.msra.mxu0 0.0
      %1150 = vmatpush.msra.mxu0 0.0
      %1151 = vmatpush.msra.mxu0 0.0
      %1152 = vmatpush.msra.mxu0 0.0
      %1153 = vmatpush.msra.mxu0 0.0
      %1154 = vmatpush.msra.mxu0 0.0
      %1155 = vmatpush.msra.mxu0 0.0
      %1156 = vmatpush.msra.mxu0 %v1139
      %1157 = vmatmul.f32.gmra.mxu0 %v1115
      %v1158 = vpop.f32.mrf.mxu0
      %v1159 = vadd.f32 0.0, %v1158
      %1160 = vmatmul.f32.gmra.mxu0 %v1118
      %v1161 = vpop.f32.mrf.mxu0
      %v1162 = vadd.f32 0.0, %v1161
      %1163 = vmatmul.f32.gmra.mxu0 %v1121
      %v1164 = vpop.f32.mrf.mxu0
      %v1165 = vadd.f32 0.0, %v1164
      %1166 = vmatmul.f32.gmra.mxu0 %v1124
      %v1167 = vpop.f32.mrf.mxu0
      %v1168 = vadd.f32 0.0, %v1167
      %1169 = vmatmul.f32.gmra.mxu0 %v1127
      %v1170 = vpop.f32.mrf.mxu0
      %v1171 = vadd.f32 0.0, %v1170
      %1172 = vmatmul.f32.gmra.mxu0 %v1130
      %v1173 = vpop.f32.mrf.mxu0
      %v1174 = vadd.f32 0.0, %v1173
      %1175 = vmatmul.f32.gmra.mxu0 %v1133
      %v1176 = vpop.f32.mrf.mxu0
      %v1177 = vadd.f32 0.0, %v1176
      %1178 = vmatmul.f32.gmra.mxu0 %v1136
      %v1179 = vpop.f32.mrf.mxu0
      %v1180 = vadd.f32 0.0, %v1179
      %1181 = vdwg.mxu0
      %v1182 = vadd.f32 %v1095, %v1159
      %v1183 = vadd.f32 %v1096, %v1162
      %v1184 = vadd.f32 %v1097, %v1165
      %v1185 = vadd.f32 %v1098, %v1168
      %v1186 = vadd.f32 %v1099, %v1171
      %v1187 = vadd.f32 %v1100, %v1174
      %v1188 = vadd.f32 %v1101, %v1177
      %v1189 = vadd.f32 %v1102, %v1180
      %v1190 = vld [vmem:[%s1103 + $0x1] sm:$0xff]
      %v1191 = vld [vmem:[%s1103 + $0x11] sm:$0xff]
      %v1192 = vld [vmem:[%s1103 + $0x21] sm:$0xff]
      %v1193 = vld [vmem:[%s1103 + $0x31] sm:$0xff]
      %v1194 = vld [vmem:[%s1103 + $0x41] sm:$0xff]
      %v1195 = vld [vmem:[%s1103 + $0x51] sm:$0xff]
      %v1196 = vld [vmem:[%s1103 + $0x61] sm:$0xff]
      %v1197 = vld [vmem:[%s1103 + $0x71] sm:$0xff]
      %s1198 = scalar_lea.vmem %s5, 28
      %v1199 = vld [vmem:[%s1198] sm:$0xf]
      %v1201 = vsel %vm578, %v1190, 0
      %v1204 = vsel %vm578, %v1191, 0
      %v1207 = vsel %vm578, %v1192, 0
      %v1210 = vsel %vm578, %v1193, 0
      %v1213 = vsel %vm578, %v1194, 0
      %v1216 = vsel %vm578, %v1195, 0
      %v1219 = vsel %vm578, %v1196, 0
      %v1222 = vsel %vm578, %v1197, 0
      %v1225 = vsel %vm620, %v1199, 0
      %1227 = vmatpush.msra.mxu0 0.0
      %1228 = vmatpush.msra.mxu0 0.0
      %1229 = vmatpush.msra.mxu0 0.0
      %1230 = vmatpush.msra.mxu0 0.0
      %1231 = vmatpush.msra.mxu0 0.0
      %1232 = vmatpush.msra.mxu0 0.0
      %1233 = vmatpush.msra.mxu0 0.0
      %1234 = vmatpush.msra.mxu0 0.0
      %1235 = vmatpush.msra.mxu0 0.0
      %1236 = vmatpush.msra.mxu0 0.0
      %1237 = vmatpush.msra.mxu0 0.0
      %1238 = vmatpush.msra.mxu0 0.0
      %1239 = vmatpush.msra.mxu0 0.0
      %1240 = vmatpush.msra.mxu0 0.0
      %1241 = vmatpush.msra.mxu0 0.0
      %1242 = vmatpush.msra.mxu0 %v1225
      %1243 = vmatmul.f32.gmra.mxu0 %v1201
      %v1244 = vpop.f32.mrf.mxu0
      %v1245 = vadd.f32 0.0, %v1244
      %1246 = vmatmul.f32.gmra.mxu0 %v1204
      %v1247 = vpop.f32.mrf.mxu0
      %v1248 = vadd.f32 0.0, %v1247
      %1249 = vmatmul.f32.gmra.mxu0 %v1207
      %v1250 = vpop.f32.mrf.mxu0
      %v1251 = vadd.f32 0.0, %v1250
      %1252 = vmatmul.f32.gmra.mxu0 %v1210
      %v1253 = vpop.f32.mrf.mxu0
      %v1254 = vadd.f32 0.0, %v1253
      %1255 = vmatmul.f32.gmra.mxu0 %v1213
      %v1256 = vpop.f32.mrf.mxu0
      %v1257 = vadd.f32 0.0, %v1256
      %1258 = vmatmul.f32.gmra.mxu0 %v1216
      %v1259 = vpop.f32.mrf.mxu0
      %v1260 = vadd.f32 0.0, %v1259
      %1261 = vmatmul.f32.gmra.mxu0 %v1219
      %v1262 = vpop.f32.mrf.mxu0
      %v1263 = vadd.f32 0.0, %v1262
      %1264 = vmatmul.f32.gmra.mxu0 %v1222
      %v1265 = vpop.f32.mrf.mxu0
      %v1266 = vadd.f32 0.0, %v1265
      %1267 = vdwg.mxu0
      %v1268 = vadd.f32 %v1182, %v1245
      %v1269 = vadd.f32 %v1183, %v1248
      %v1270 = vadd.f32 %v1184, %v1251
      %v1271 = vadd.f32 %v1185, %v1254
      %v1272 = vadd.f32 %v1186, %v1257
      %v1273 = vadd.f32 %v1187, %v1260
      %v1274 = vadd.f32 %v1188, %v1263
      %v1275 = vadd.f32 %v1189, %v1266
      %v1276 = vld [vmem:[%s1103 + $0x2] sm:$0xff]
      %v1277 = vld [vmem:[%s1103 + $0x12] sm:$0xff]
      %v1278 = vld [vmem:[%s1103 + $0x22] sm:$0xff]
      %v1279 = vld [vmem:[%s1103 + $0x32] sm:$0xff]
      %v1280 = vld [vmem:[%s1103 + $0x42] sm:$0xff]
      %v1281 = vld [vmem:[%s1103 + $0x52] sm:$0xff]
      %v1282 = vld [vmem:[%s1103 + $0x62] sm:$0xff]
      %v1283 = vld [vmem:[%s1103 + $0x72] sm:$0xff]
      %s1284 = scalar_lea.vmem %s5, 32
      %v1285 = vld [vmem:[%s1284] sm:$0xf]
      %v1287 = vsel %vm578, %v1276, 0
      %v1290 = vsel %vm578, %v1277, 0
      %v1293 = vsel %vm578, %v1278, 0
      %v1296 = vsel %vm578, %v1279, 0
      %v1299 = vsel %vm578, %v1280, 0
      %v1302 = vsel %vm578, %v1281, 0
      %v1305 = vsel %vm578, %v1282, 0
      %v1308 = vsel %vm578, %v1283, 0
      %v1311 = vsel %vm620, %v1285, 0
      %1313 = vmatpush.msra.mxu0 0.0
      %1314 = vmatpush.msra.mxu0 0.0
      %1315 = vmatpush.msra.mxu0 0.0
      %1316 = vmatpush.msra.mxu0 0.0
      %1317 = vmatpush.msra.mxu0 0.0
      %1318 = vmatpush.msra.mxu0 0.0
      %1319 = vmatpush.msra.mxu0 0.0
      %1320 = vmatpush.msra.mxu0 0.0
      %1321 = vmatpush.msra.mxu0 0.0
      %1322 = vmatpush.msra.mxu0 0.0
      %1323 = vmatpush.msra.mxu0 0.0
      %1324 = vmatpush.msra.mxu0 0.0
      %1325 = vmatpush.msra.mxu0 0.0
      %1326 = vmatpush.msra.mxu0 0.0
      %1327 = vmatpush.msra.mxu0 0.0
      %1328 = vmatpush.msra.mxu0 %v1311
      %1329 = vmatmul.f32.gmra.mxu0 %v1287
      %v1330 = vpop.f32.mrf.mxu0
      %v1331 = vadd.f32 0.0, %v1330
      %1332 = vmatmul.f32.gmra.mxu0 %v1290
      %v1333 = vpop.f32.mrf.mxu0
      %v1334 = vadd.f32 0.0, %v1333
      %1335 = vmatmul.f32.gmra.mxu0 %v1293
      %v1336 = vpop.f32.mrf.mxu0
      %v1337 = vadd.f32 0.0, %v1336
      %1338 = vmatmul.f32.gmra.mxu0 %v1296
      %v1339 = vpop.f32.mrf.mxu0
      %v1340 = vadd.f32 0.0, %v1339
      %1341 = vmatmul.f32.gmra.mxu0 %v1299
      %v1342 = vpop.f32.mrf.mxu0
      %v1343 = vadd.f32 0.0, %v1342
      %1344 = vmatmul.f32.gmra.mxu0 %v1302
      %v1345 = vpop.f32.mrf.mxu0
      %v1346 = vadd.f32 0.0, %v1345
      %1347 = vmatmul.f32.gmra.mxu0 %v1305
      %v1348 = vpop.f32.mrf.mxu0
      %v1349 = vadd.f32 0.0, %v1348
      %1350 = vmatmul.f32.gmra.mxu0 %v1308
      %v1351 = vpop.f32.mrf.mxu0
      %v1352 = vadd.f32 0.0, %v1351
      %1353 = vdwg.mxu0
      %v1354 = vadd.f32 %v1268, %v1331
      %v1355 = vadd.f32 %v1269, %v1334
      %v1356 = vadd.f32 %v1270, %v1337
      %v1357 = vadd.f32 %v1271, %v1340
      %v1358 = vadd.f32 %v1272, %v1343
      %v1359 = vadd.f32 %v1273, %v1346
      %v1360 = vadd.f32 %v1274, %v1349
      %v1361 = vadd.f32 %v1275, %v1352
      %v1362 = vld [vmem:[%s465] sm:$0xff]
      %v1363 = vld [vmem:[%s465 + $0x8] sm:$0xff]
      %v1364 = vld [vmem:[%s465 + $0x10] sm:$0xff]
      %v1365 = vld [vmem:[%s465 + $0x18] sm:$0xff]
      %v1366 = vld [vmem:[%s465 + $0x20] sm:$0xff]
      %v1367 = vld [vmem:[%s465 + $0x28] sm:$0xff]
      %v1368 = vld [vmem:[%s465 + $0x30] sm:$0xff]
      %v1369 = vld [vmem:[%s465 + $0x38] sm:$0xff]
      %v1370 = vld [vmem:[%s3] sm:$0x1]
      %v1372 = vperm.slane %v1370, 0
      %v1374 = vmul.f32 %v1362, %v1372
      %v1375 = vmul.f32 %v1363, %v1372
      %v1376 = vmul.f32 %v1364, %v1372
      %v1377 = vmul.f32 %v1365, %v1372
      %v1378 = vmul.f32 %v1366, %v1372
      %v1379 = vmul.f32 %v1367, %v1372
      %v1380 = vmul.f32 %v1368, %v1372
      %v1381 = vmul.f32 %v1369, %v1372
      %v1382 = vld [vmem:[%s4] sm:$0x1]
      %v1384 = vperm.slane %v1382, 0
      %v1386 = vadd.f32 %v1374, %v1384
      %v1387 = vadd.f32 %v1375, %v1384
      %v1388 = vadd.f32 %v1376, %v1384
      %v1389 = vadd.f32 %v1377, %v1384
      %v1390 = vadd.f32 %v1378, %v1384
      %v1391 = vadd.f32 %v1379, %v1384
      %v1392 = vadd.f32 %v1380, %v1384
      %v1393 = vadd.f32 %v1381, %v1384
      %1394 = vst.msk [vmem:[%s577 + $0x1] sm:$0xff] %vm578, %v1386
      %1395 = vst.msk [vmem:[%s577 + $0x11] sm:$0xff] %vm578, %v1387
      %1396 = vst.msk [vmem:[%s577 + $0x21] sm:$0xff] %vm578, %v1388
      %1397 = vst.msk [vmem:[%s577 + $0x31] sm:$0xff] %vm578, %v1389
      %1398 = vst.msk [vmem:[%s577 + $0x41] sm:$0xff] %vm578, %v1390
      %1399 = vst.msk [vmem:[%s577 + $0x51] sm:$0xff] %vm578, %v1391
      %1400 = vst.msk [vmem:[%s577 + $0x61] sm:$0xff] %vm578, %v1392
      %1401 = vst.msk [vmem:[%s577 + $0x71] sm:$0xff] %vm578, %v1393
      %v1402 = vld [vmem:[#allocation2] sm:$0xff]
      %v1403 = vld [vmem:[#allocation2 + $0x10] sm:$0xff]
      %v1404 = vld [vmem:[#allocation2 + $0x20] sm:$0xff]
      %v1405 = vld [vmem:[#allocation2 + $0x30] sm:$0xff]
      %v1406 = vld [vmem:[#allocation2 + $0x40] sm:$0xff]
      %v1407 = vld [vmem:[#allocation2 + $0x50] sm:$0xff]
      %v1408 = vld [vmem:[#allocation2 + $0x60] sm:$0xff]
      %v1409 = vld [vmem:[#allocation2 + $0x70] sm:$0xff]
      %s1410 = scalar_lea.vmem %s5, 36
      %v1411 = vld [vmem:[%s1410] sm:$0xf]
      %v1413 = vsel %vm578, %v1402, 0
      %v1416 = vsel %vm578, %v1403, 0
      %v1419 = vsel %vm578, %v1404, 0
      %v1422 = vsel %vm578, %v1405, 0
      %v1425 = vsel %vm578, %v1406, 0
      %v1428 = vsel %vm578, %v1407, 0
      %v1431 = vsel %vm578, %v1408, 0
      %v1434 = vsel %vm578, %v1409, 0
      %v1437 = vsel %vm620, %v1411, 0
      %1439 = vmatpush.msra.mxu0 0.0
      %1440 = vmatpush.msra.mxu0 0.0
      %1441 = vmatpush.msra.mxu0 0.0
      %1442 = vmatpush.msra.mxu0 0.0
      %1443 = vmatpush.msra.mxu0 0.0
      %1444 = vmatpush.msra.mxu0 0.0
      %1445 = vmatpush.msra.mxu0 0.0
      %1446 = vmatpush.msra.mxu0 0.0
      %1447 = vmatpush.msra.mxu0 0.0
      %1448 = vmatpush.msra.mxu0 0.0
      %1449 = vmatpush.msra.mxu0 0.0
      %1450 = vmatpush.msra.mxu0 0.0
      %1451 = vmatpush.msra.mxu0 0.0
      %1452 = vmatpush.msra.mxu0 0.0
      %1453 = vmatpush.msra.mxu0 0.0
      %1454 = vmatpush.msra.mxu0 %v1437
      %1455 = vmatmul.f32.gmra.mxu0 %v1413
      %v1456 = vpop.f32.mrf.mxu0
      %v1457 = vadd.f32 0.0, %v1456
      %1458 = vmatmul.f32.gmra.mxu0 %v1416
      %v1459 = vpop.f32.mrf.mxu0
      %v1460 = vadd.f32 0.0, %v1459
      %1461 = vmatmul.f32.gmra.mxu0 %v1419
      %v1462 = vpop.f32.mrf.mxu0
      %v1463 = vadd.f32 0.0, %v1462
      %1464 = vmatmul.f32.gmra.mxu0 %v1422
      %v1465 = vpop.f32.mrf.mxu0
      %v1466 = vadd.f32 0.0, %v1465
      %1467 = vmatmul.f32.gmra.mxu0 %v1425
      %v1468 = vpop.f32.mrf.mxu0
      %v1469 = vadd.f32 0.0, %v1468
      %1470 = vmatmul.f32.gmra.mxu0 %v1428
      %v1471 = vpop.f32.mrf.mxu0
      %v1472 = vadd.f32 0.0, %v1471
      %1473 = vmatmul.f32.gmra.mxu0 %v1431
      %v1474 = vpop.f32.mrf.mxu0
      %v1475 = vadd.f32 0.0, %v1474
      %1476 = vmatmul.f32.gmra.mxu0 %v1434
      %v1477 = vpop.f32.mrf.mxu0
      %v1478 = vadd.f32 0.0, %v1477
      %1479 = vdwg.mxu0
      %v1480 = vadd.f32 %v1354, %v1457
      %v1481 = vadd.f32 %v1355, %v1460
      %v1482 = vadd.f32 %v1356, %v1463
      %v1483 = vadd.f32 %v1357, %v1466
      %v1484 = vadd.f32 %v1358, %v1469
      %v1485 = vadd.f32 %v1359, %v1472
      %v1486 = vadd.f32 %v1360, %v1475
      %v1487 = vadd.f32 %v1361, %v1478
      %v1488 = vld [vmem:[#allocation2 + $0x1] sm:$0xff]
      %v1489 = vld [vmem:[#allocation2 + $0x11] sm:$0xff]
      %v1490 = vld [vmem:[#allocation2 + $0x21] sm:$0xff]
      %v1491 = vld [vmem:[#allocation2 + $0x31] sm:$0xff]
      %v1492 = vld [vmem:[#allocation2 + $0x41] sm:$0xff]
      %v1493 = vld [vmem:[#allocation2 + $0x51] sm:$0xff]
      %v1494 = vld [vmem:[#allocation2 + $0x61] sm:$0xff]
      %v1495 = vld [vmem:[#allocation2 + $0x71] sm:$0xff]
      %s1496 = scalar_lea.vmem %s5, 40
      %v1497 = vld [vmem:[%s1496] sm:$0xf]
      %v1499 = vsel %vm578, %v1488, 0
      %v1502 = vsel %vm578, %v1489, 0
      %v1505 = vsel %vm578, %v1490, 0
      %v1508 = vsel %vm578, %v1491, 0
      %v1511 = vsel %vm578, %v1492, 0
      %v1514 = vsel %vm578, %v1493, 0
      %v1517 = vsel %vm578, %v1494, 0
      %v1520 = vsel %vm578, %v1495, 0
      %v1523 = vsel %vm620, %v1497, 0
      %1525 = vmatpush.msra.mxu0 0.0
      %1526 = vmatpush.msra.mxu0 0.0
      %1527 = vmatpush.msra.mxu0 0.0
      %1528 = vmatpush.msra.mxu0 0.0
      %1529 = vmatpush.msra.mxu0 0.0
      %1530 = vmatpush.msra.mxu0 0.0
      %1531 = vmatpush.msra.mxu0 0.0
      %1532 = vmatpush.msra.mxu0 0.0
      %1533 = vmatpush.msra.mxu0 0.0
      %1534 = vmatpush.msra.mxu0 0.0
      %1535 = vmatpush.msra.mxu0 0.0
      %1536 = vmatpush.msra.mxu0 0.0
      %1537 = vmatpush.msra.mxu0 0.0
      %1538 = vmatpush.msra.mxu0 0.0
      %1539 = vmatpush.msra.mxu0 0.0
      %1540 = vmatpush.msra.mxu0 %v1523
      %1541 = vmatmul.f32.gmra.mxu0 %v1499
      %v1542 = vpop.f32.mrf.mxu0
      %v1543 = vadd.f32 0.0, %v1542
      %1544 = vmatmul.f32.gmra.mxu0 %v1502
      %v1545 = vpop.f32.mrf.mxu0
      %v1546 = vadd.f32 0.0, %v1545
      %1547 = vmatmul.f32.gmra.mxu0 %v1505
      %v1548 = vpop.f32.mrf.mxu0
      %v1549 = vadd.f32 0.0, %v1548
      %1550 = vmatmul.f32.gmra.mxu0 %v1508
      %v1551 = vpop.f32.mrf.mxu0
      %v1552 = vadd.f32 0.0, %v1551
      %1553 = vmatmul.f32.gmra.mxu0 %v1511
      %v1554 = vpop.f32.mrf.mxu0
      %v1555 = vadd.f32 0.0, %v1554
      %1556 = vmatmul.f32.gmra.mxu0 %v1514
      %v1557 = vpop.f32.mrf.mxu0
      %v1558 = vadd.f32 0.0, %v1557
      %1559 = vmatmul.f32.gmra.mxu0 %v1517
      %v1560 = vpop.f32.mrf.mxu0
      %v1561 = vadd.f32 0.0, %v1560
      %1562 = vmatmul.f32.gmra.mxu0 %v1520
      %v1563 = vpop.f32.mrf.mxu0
      %v1564 = vadd.f32 0.0, %v1563
      %1565 = vdwg.mxu0
      %v1566 = vadd.f32 %v1480, %v1543
      %v1567 = vadd.f32 %v1481, %v1546
      %v1568 = vadd.f32 %v1482, %v1549
      %v1569 = vadd.f32 %v1483, %v1552
      %v1570 = vadd.f32 %v1484, %v1555
      %v1571 = vadd.f32 %v1485, %v1558
      %v1572 = vadd.f32 %v1486, %v1561
      %v1573 = vadd.f32 %v1487, %v1564
      %v1574 = vld [vmem:[#allocation2 + $0x2] sm:$0xff]
      %v1575 = vld [vmem:[#allocation2 + $0x12] sm:$0xff]
      %v1576 = vld [vmem:[#allocation2 + $0x22] sm:$0xff]
      %v1577 = vld [vmem:[#allocation2 + $0x32] sm:$0xff]
      %v1578 = vld [vmem:[#allocation2 + $0x42] sm:$0xff]
      %v1579 = vld [vmem:[#allocation2 + $0x52] sm:$0xff]
      %v1580 = vld [vmem:[#allocation2 + $0x62] sm:$0xff]
      %v1581 = vld [vmem:[#allocation2 + $0x72] sm:$0xff]
      %s1582 = scalar_lea.vmem %s5, 44
      %v1583 = vld [vmem:[%s1582] sm:$0xf]
      %v1585 = vsel %vm578, %v1574, 0
      %v1588 = vsel %vm578, %v1575, 0
      %v1591 = vsel %vm578, %v1576, 0
      %v1594 = vsel %vm578, %v1577, 0
      %v1597 = vsel %vm578, %v1578, 0
      %v1600 = vsel %vm578, %v1579, 0
      %v1603 = vsel %vm578, %v1580, 0
      %v1606 = vsel %vm578, %v1581, 0
      %v1609 = vsel %vm620, %v1583, 0
      %1611 = vmatpush.msra.mxu0 0.0
      %1612 = vmatpush.msra.mxu0 0.0
      %1613 = vmatpush.msra.mxu0 0.0
      %1614 = vmatpush.msra.mxu0 0.0
      %1615 = vmatpush.msra.mxu0 0.0
      %1616 = vmatpush.msra.mxu0 0.0
      %1617 = vmatpush.msra.mxu0 0.0
      %1618 = vmatpush.msra.mxu0 0.0
      %1619 = vmatpush.msra.mxu0 0.0
      %1620 = vmatpush.msra.mxu0 0.0
      %1621 = vmatpush.msra.mxu0 0.0
      %1622 = vmatpush.msra.mxu0 0.0
      %1623 = vmatpush.msra.mxu0 0.0
      %1624 = vmatpush.msra.mxu0 0.0
      %1625 = vmatpush.msra.mxu0 0.0
      %1626 = vmatpush.msra.mxu0 %v1609
      %1627 = vmatmul.f32.gmra.mxu0 %v1585
      %v1628 = vpop.f32.mrf.mxu0
      %v1629 = vadd.f32 0.0, %v1628
      %1630 = vmatmul.f32.gmra.mxu0 %v1588
      %v1631 = vpop.f32.mrf.mxu0
      %v1632 = vadd.f32 0.0, %v1631
      %1633 = vmatmul.f32.gmra.mxu0 %v1591
      %v1634 = vpop.f32.mrf.mxu0
      %v1635 = vadd.f32 0.0, %v1634
      %1636 = vmatmul.f32.gmra.mxu0 %v1594
      %v1637 = vpop.f32.mrf.mxu0
      %v1638 = vadd.f32 0.0, %v1637
      %1639 = vmatmul.f32.gmra.mxu0 %v1597
      %v1640 = vpop.f32.mrf.mxu0
      %v1641 = vadd.f32 0.0, %v1640
      %1642 = vmatmul.f32.gmra.mxu0 %v1600
      %v1643 = vpop.f32.mrf.mxu0
      %v1644 = vadd.f32 0.0, %v1643
      %1645 = vmatmul.f32.gmra.mxu0 %v1603
      %v1646 = vpop.f32.mrf.mxu0
      %v1647 = vadd.f32 0.0, %v1646
      %1648 = vmatmul.f32.gmra.mxu0 %v1606
      %v1649 = vpop.f32.mrf.mxu0
      %v1650 = vadd.f32 0.0, %v1649
      %1651 = vdwg.mxu0
      %v1652 = vadd.f32 %v1566, %v1629
      %v1653 = vadd.f32 %v1567, %v1632
      %v1654 = vadd.f32 %v1568, %v1635
      %v1655 = vadd.f32 %v1569, %v1638
      %v1656 = vadd.f32 %v1570, %v1641
      %v1657 = vadd.f32 %v1571, %v1644
      %v1658 = vadd.f32 %v1572, %v1647
      %v1659 = vadd.f32 %v1573, %v1650
      %v1660 = vld [vmem:[%s577] sm:$0xff]
      %v1661 = vld [vmem:[%s577 + $0x10] sm:$0xff]
      %v1662 = vld [vmem:[%s577 + $0x20] sm:$0xff]
      %v1663 = vld [vmem:[%s577 + $0x30] sm:$0xff]
      %v1664 = vld [vmem:[%s577 + $0x40] sm:$0xff]
      %v1665 = vld [vmem:[%s577 + $0x50] sm:$0xff]
      %v1666 = vld [vmem:[%s577 + $0x60] sm:$0xff]
      %v1667 = vld [vmem:[%s577 + $0x70] sm:$0xff]
      %s1668 = scalar_lea.vmem %s5, 48
      %v1669 = vld [vmem:[%s1668] sm:$0xf]
      %v1671 = vsel %vm578, %v1660, 0
      %v1674 = vsel %vm578, %v1661, 0
      %v1677 = vsel %vm578, %v1662, 0
      %v1680 = vsel %vm578, %v1663, 0
      %v1683 = vsel %vm578, %v1664, 0
      %v1686 = vsel %vm578, %v1665, 0
      %v1689 = vsel %vm578, %v1666, 0
      %v1692 = vsel %vm578, %v1667, 0
      %v1695 = vsel %vm620, %v1669, 0
      %1697 = vmatpush.msra.mxu0 0.0
      %1698 = vmatpush.msra.mxu0 0.0
      %1699 = vmatpush.msra.mxu0 0.0
      %1700 = vmatpush.msra.mxu0 0.0
      %1701 = vmatpush.msra.mxu0 0.0
      %1702 = vmatpush.msra.mxu0 0.0
      %1703 = vmatpush.msra.mxu0 0.0
      %1704 = vmatpush.msra.mxu0 0.0
      %1705 = vmatpush.msra.mxu0 0.0
      %1706 = vmatpush.msra.mxu0 0.0
      %1707 = vmatpush.msra.mxu0 0.0
      %1708 = vmatpush.msra.mxu0 0.0
      %1709 = vmatpush.msra.mxu0 0.0
      %1710 = vmatpush.msra.mxu0 0.0
      %1711 = vmatpush.msra.mxu0 0.0
      %1712 = vmatpush.msra.mxu0 %v1695
      %1713 = vmatmul.f32.gmra.mxu0 %v1671
      %v1714 = vpop.f32.mrf.mxu0
      %v1715 = vadd.f32 0.0, %v1714
      %1716 = vmatmul.f32.gmra.mxu0 %v1674
      %v1717 = vpop.f32.mrf.mxu0
      %v1718 = vadd.f32 0.0, %v1717
      %1719 = vmatmul.f32.gmra.mxu0 %v1677
      %v1720 = vpop.f32.mrf.mxu0
      %v1721 = vadd.f32 0.0, %v1720
      %1722 = vmatmul.f32.gmra.mxu0 %v1680
      %v1723 = vpop.f32.mrf.mxu0
      %v1724 = vadd.f32 0.0, %v1723
      %1725 = vmatmul.f32.gmra.mxu0 %v1683
      %v1726 = vpop.f32.mrf.mxu0
      %v1727 = vadd.f32 0.0, %v1726
      %1728 = vmatmul.f32.gmra.mxu0 %v1686
      %v1729 = vpop.f32.mrf.mxu0
      %v1730 = vadd.f32 0.0, %v1729
      %1731 = vmatmul.f32.gmra.mxu0 %v1689
      %v1732 = vpop.f32.mrf.mxu0
      %v1733 = vadd.f32 0.0, %v1732
      %1734 = vmatmul.f32.gmra.mxu0 %v1692
      %v1735 = vpop.f32.mrf.mxu0
      %v1736 = vadd.f32 0.0, %v1735
      %1737 = vdwg.mxu0
      %v1738 = vadd.f32 %v1652, %v1715
      %v1739 = vadd.f32 %v1653, %v1718
      %v1740 = vadd.f32 %v1654, %v1721
      %v1741 = vadd.f32 %v1655, %v1724
      %v1742 = vadd.f32 %v1656, %v1727
      %v1743 = vadd.f32 %v1657, %v1730
      %v1744 = vadd.f32 %v1658, %v1733
      %v1745 = vadd.f32 %v1659, %v1736
      %v1746 = vld [vmem:[%s577 + $0x1] sm:$0xff]
      %v1747 = vld [vmem:[%s577 + $0x11] sm:$0xff]
      %v1748 = vld [vmem:[%s577 + $0x21] sm:$0xff]
      %v1749 = vld [vmem:[%s577 + $0x31] sm:$0xff]
      %v1750 = vld [vmem:[%s577 + $0x41] sm:$0xff]
      %v1751 = vld [vmem:[%s577 + $0x51] sm:$0xff]
      %v1752 = vld [vmem:[%s577 + $0x61] sm:$0xff]
      %v1753 = vld [vmem:[%s577 + $0x71] sm:$0xff]
      %s1754 = scalar_lea.vmem %s5, 52
      %v1755 = vld [vmem:[%s1754] sm:$0xf]
      %v1757 = vsel %vm578, %v1746, 0
      %v1760 = vsel %vm578, %v1747, 0
      %v1763 = vsel %vm578, %v1748, 0
      %v1766 = vsel %vm578, %v1749, 0
      %v1769 = vsel %vm578, %v1750, 0
      %v1772 = vsel %vm578, %v1751, 0
      %v1775 = vsel %vm578, %v1752, 0
      %v1778 = vsel %vm578, %v1753, 0
      %v1781 = vsel %vm620, %v1755, 0
      %1783 = vmatpush.msra.mxu0 0.0
      %1784 = vmatpush.msra.mxu0 0.0
      %1785 = vmatpush.msra.mxu0 0.0
      %1786 = vmatpush.msra.mxu0 0.0
      %1787 = vmatpush.msra.mxu0 0.0
      %1788 = vmatpush.msra.mxu0 0.0
      %1789 = vmatpush.msra.mxu0 0.0
      %1790 = vmatpush.msra.mxu0 0.0
      %1791 = vmatpush.msra.mxu0 0.0
      %1792 = vmatpush.msra.mxu0 0.0
      %1793 = vmatpush.msra.mxu0 0.0
      %1794 = vmatpush.msra.mxu0 0.0
      %1795 = vmatpush.msra.mxu0 0.0
      %1796 = vmatpush.msra.mxu0 0.0
      %1797 = vmatpush.msra.mxu0 0.0
      %1798 = vmatpush.msra.mxu0 %v1781
      %1799 = vmatmul.f32.gmra.mxu0 %v1757
      %v1800 = vpop.f32.mrf.mxu0
      %v1801 = vadd.f32 0.0, %v1800
      %1802 = vmatmul.f32.gmra.mxu0 %v1760
      %v1803 = vpop.f32.mrf.mxu0
      %v1804 = vadd.f32 0.0, %v1803
      %1805 = vmatmul.f32.gmra.mxu0 %v1763
      %v1806 = vpop.f32.mrf.mxu0
      %v1807 = vadd.f32 0.0, %v1806
      %1808 = vmatmul.f32.gmra.mxu0 %v1766
      %v1809 = vpop.f32.mrf.mxu0
      %v1810 = vadd.f32 0.0, %v1809
      %1811 = vmatmul.f32.gmra.mxu0 %v1769
      %v1812 = vpop.f32.mrf.mxu0
      %v1813 = vadd.f32 0.0, %v1812
      %1814 = vmatmul.f32.gmra.mxu0 %v1772
      %v1815 = vpop.f32.mrf.mxu0
      %v1816 = vadd.f32 0.0, %v1815
      %1817 = vmatmul.f32.gmra.mxu0 %v1775
      %v1818 = vpop.f32.mrf.mxu0
      %v1819 = vadd.f32 0.0, %v1818
      %1820 = vmatmul.f32.gmra.mxu0 %v1778
      %v1821 = vpop.f32.mrf.mxu0
      %v1822 = vadd.f32 0.0, %v1821
      %1823 = vdwg.mxu0
      %v1824 = vadd.f32 %v1738, %v1801
      %v1825 = vadd.f32 %v1739, %v1804
      %v1826 = vadd.f32 %v1740, %v1807
      %v1827 = vadd.f32 %v1741, %v1810
      %v1828 = vadd.f32 %v1742, %v1813
      %v1829 = vadd.f32 %v1743, %v1816
      %v1830 = vadd.f32 %v1744, %v1819
      %v1831 = vadd.f32 %v1745, %v1822
      %v1832 = vld [vmem:[%s577 + $0x2] sm:$0xff]
      %v1833 = vld [vmem:[%s577 + $0x12] sm:$0xff]
      %v1834 = vld [vmem:[%s577 + $0x22] sm:$0xff]
      %v1835 = vld [vmem:[%s577 + $0x32] sm:$0xff]
      %v1836 = vld [vmem:[%s577 + $0x42] sm:$0xff]
      %v1837 = vld [vmem:[%s577 + $0x52] sm:$0xff]
      %v1838 = vld [vmem:[%s577 + $0x62] sm:$0xff]
      %v1839 = vld [vmem:[%s577 + $0x72] sm:$0xff]
      %s1840 = scalar_lea.vmem %s5, 56
      %v1841 = vld [vmem:[%s1840] sm:$0xf]
      %v1843 = vsel %vm578, %v1832, 0
      %v1846 = vsel %vm578, %v1833, 0
      %v1849 = vsel %vm578, %v1834, 0
      %v1852 = vsel %vm578, %v1835, 0
      %v1855 = vsel %vm578, %v1836, 0
      %v1858 = vsel %vm578, %v1837, 0
      %v1861 = vsel %vm578, %v1838, 0
      %v1864 = vsel %vm578, %v1839, 0
      %v1867 = vsel %vm620, %v1841, 0
      %1869 = vmatpush.msra.mxu0 0.0
      %1870 = vmatpush.msra.mxu0 0.0
      %1871 = vmatpush.msra.mxu0 0.0
      %1872 = vmatpush.msra.mxu0 0.0
      %1873 = vmatpush.msra.mxu0 0.0
      %1874 = vmatpush.msra.mxu0 0.0
      %1875 = vmatpush.msra.mxu0 0.0
      %1876 = vmatpush.msra.mxu0 0.0
      %1877 = vmatpush.msra.mxu0 0.0
      %1878 = vmatpush.msra.mxu0 0.0
      %1879 = vmatpush.msra.mxu0 0.0
      %1880 = vmatpush.msra.mxu0 0.0
      %1881 = vmatpush.msra.mxu0 0.0
      %1882 = vmatpush.msra.mxu0 0.0
      %1883 = vmatpush.msra.mxu0 0.0
      %1884 = vmatpush.msra.mxu0 %v1867
      %1885 = vmatmul.f32.gmra.mxu0 %v1843
      %v1886 = vpop.f32.mrf.mxu0
      %v1887 = vadd.f32 0.0, %v1886
      %1888 = vmatmul.f32.gmra.mxu0 %v1846
      %v1889 = vpop.f32.mrf.mxu0
      %v1890 = vadd.f32 0.0, %v1889
      %1891 = vmatmul.f32.gmra.mxu0 %v1849
      %v1892 = vpop.f32.mrf.mxu0
      %v1893 = vadd.f32 0.0, %v1892
      %1894 = vmatmul.f32.gmra.mxu0 %v1852
      %v1895 = vpop.f32.mrf.mxu0
      %v1896 = vadd.f32 0.0, %v1895
      %1897 = vmatmul.f32.gmra.mxu0 %v1855
      %v1898 = vpop.f32.mrf.mxu0
      %v1899 = vadd.f32 0.0, %v1898
      %1900 = vmatmul.f32.gmra.mxu0 %v1858
      %v1901 = vpop.f32.mrf.mxu0
      %v1902 = vadd.f32 0.0, %v1901
      %1903 = vmatmul.f32.gmra.mxu0 %v1861
      %v1904 = vpop.f32.mrf.mxu0
      %v1905 = vadd.f32 0.0, %v1904
      %1906 = vmatmul.f32.gmra.mxu0 %v1864
      %v1907 = vpop.f32.mrf.mxu0
      %v1908 = vadd.f32 0.0, %v1907
      %1909 = vdwg.mxu0
      %v1910 = vadd.f32 %v1824, %v1887
      %v1911 = vadd.f32 %v1825, %v1890
      %v1912 = vadd.f32 %v1826, %v1893
      %v1913 = vadd.f32 %v1827, %v1896
      %v1914 = vadd.f32 %v1828, %v1899
      %v1915 = vadd.f32 %v1829, %v1902
      %v1916 = vadd.f32 %v1830, %v1905
      %v1917 = vadd.f32 %v1831, %v1908
      %v1918 = vld [vmem:[%s1103] sm:$0xff]
      %v1919 = vld [vmem:[%s1103 + $0x10] sm:$0xff]
      %v1920 = vld [vmem:[%s1103 + $0x20] sm:$0xff]
      %v1921 = vld [vmem:[%s1103 + $0x30] sm:$0xff]
      %v1922 = vld [vmem:[%s1103 + $0x40] sm:$0xff]
      %v1923 = vld [vmem:[%s1103 + $0x50] sm:$0xff]
      %v1924 = vld [vmem:[%s1103 + $0x60] sm:$0xff]
      %v1925 = vld [vmem:[%s1103 + $0x70] sm:$0xff]
      %s1926 = scalar_lea.vmem %s5, 60
      %v1927 = vld [vmem:[%s1926] sm:$0xf]
      %v1929 = vsel %vm578, %v1918, 0
      %v1932 = vsel %vm578, %v1919, 0
      %v1935 = vsel %vm578, %v1920, 0
      %v1938 = vsel %vm578, %v1921, 0
      %v1941 = vsel %vm578, %v1922, 0
      %v1944 = vsel %vm578, %v1923, 0
      %v1947 = vsel %vm578, %v1924, 0
      %v1950 = vsel %vm578, %v1925, 0
      %v1953 = vsel %vm620, %v1927, 0
      %1955 = vmatpush.msra.mxu0 0.0
      %1956 = vmatpush.msra.mxu0 0.0
      %1957 = vmatpush.msra.mxu0 0.0
      %1958 = vmatpush.msra.mxu0 0.0
      %1959 = vmatpush.msra.mxu0 0.0
      %1960 = vmatpush.msra.mxu0 0.0
      %1961 = vmatpush.msra.mxu0 0.0
      %1962 = vmatpush.msra.mxu0 0.0
      %1963 = vmatpush.msra.mxu0 0.0
      %1964 = vmatpush.msra.mxu0 0.0
      %1965 = vmatpush.msra.mxu0 0.0
      %1966 = vmatpush.msra.mxu0 0.0
      %1967 = vmatpush.msra.mxu0 0.0
      %1968 = vmatpush.msra.mxu0 0.0
      %1969 = vmatpush.msra.mxu0 0.0
      %1970 = vmatpush.msra.mxu0 %v1953
      %1971 = vmatmul.f32.gmra.mxu0 %v1929
      %v1972 = vpop.f32.mrf.mxu0
      %v1973 = vadd.f32 0.0, %v1972
      %1974 = vmatmul.f32.gmra.mxu0 %v1932
      %v1975 = vpop.f32.mrf.mxu0
      %v1976 = vadd.f32 0.0, %v1975
      %1977 = vmatmul.f32.gmra.mxu0 %v1935
      %v1978 = vpop.f32.mrf.mxu0
      %v1979 = vadd.f32 0.0, %v1978
      %1980 = vmatmul.f32.gmra.mxu0 %v1938
      %v1981 = vpop.f32.mrf.mxu0
      %v1982 = vadd.f32 0.0, %v1981
      %1983 = vmatmul.f32.gmra.mxu0 %v1941
      %v1984 = vpop.f32.mrf.mxu0
      %v1985 = vadd.f32 0.0, %v1984
      %1986 = vmatmul.f32.gmra.mxu0 %v1944
      %v1987 = vpop.f32.mrf.mxu0
      %v1988 = vadd.f32 0.0, %v1987
      %1989 = vmatmul.f32.gmra.mxu0 %v1947
      %v1990 = vpop.f32.mrf.mxu0
      %v1991 = vadd.f32 0.0, %v1990
      %1992 = vmatmul.f32.gmra.mxu0 %v1950
      %v1993 = vpop.f32.mrf.mxu0
      %v1994 = vadd.f32 0.0, %v1993
      %1995 = vdwg.mxu0
      %v1996 = vadd.f32 %v1910, %v1973
      %v1997 = vadd.f32 %v1911, %v1976
      %v1998 = vadd.f32 %v1912, %v1979
      %v1999 = vadd.f32 %v1913, %v1982
      %v2000 = vadd.f32 %v1914, %v1985
      %v2001 = vadd.f32 %v1915, %v1988
      %v2002 = vadd.f32 %v1916, %v1991
      %v2003 = vadd.f32 %v1917, %v1994
      %v2004 = vld [vmem:[%s1103 + $0x1] sm:$0xff]
      %v2005 = vld [vmem:[%s1103 + $0x11] sm:$0xff]
      %v2006 = vld [vmem:[%s1103 + $0x21] sm:$0xff]
      %v2007 = vld [vmem:[%s1103 + $0x31] sm:$0xff]
      %v2008 = vld [vmem:[%s1103 + $0x41] sm:$0xff]
      %v2009 = vld [vmem:[%s1103 + $0x51] sm:$0xff]
      %v2010 = vld [vmem:[%s1103 + $0x61] sm:$0xff]
      %v2011 = vld [vmem:[%s1103 + $0x71] sm:$0xff]
      %s2012 = scalar_lea.vmem %s5, 64
      %v2013 = vld [vmem:[%s2012] sm:$0xf]
      %v2015 = vsel %vm578, %v2004, 0
      %v2018 = vsel %vm578, %v2005, 0
      %v2021 = vsel %vm578, %v2006, 0
      %v2024 = vsel %vm578, %v2007, 0
      %v2027 = vsel %vm578, %v2008, 0
      %v2030 = vsel %vm578, %v2009, 0
      %v2033 = vsel %vm578, %v2010, 0
      %v2036 = vsel %vm578, %v2011, 0
      %v2039 = vsel %vm620, %v2013, 0
      %2041 = vmatpush.msra.mxu0 0.0
      %2042 = vmatpush.msra.mxu0 0.0
      %2043 = vmatpush.msra.mxu0 0.0
      %2044 = vmatpush.msra.mxu0 0.0
      %2045 = vmatpush.msra.mxu0 0.0
      %2046 = vmatpush.msra.mxu0 0.0
      %2047 = vmatpush.msra.mxu0 0.0
      %2048 = vmatpush.msra.mxu0 0.0
      %2049 = vmatpush.msra.mxu0 0.0
      %2050 = vmatpush.msra.mxu0 0.0
      %2051 = vmatpush.msra.mxu0 0.0
      %2052 = vmatpush.msra.mxu0 0.0
      %2053 = vmatpush.msra.mxu0 0.0
      %2054 = vmatpush.msra.mxu0 0.0
      %2055 = vmatpush.msra.mxu0 0.0
      %2056 = vmatpush.msra.mxu0 %v2039
      %2057 = vmatmul.f32.gmra.mxu0 %v2015
      %v2058 = vpop.f32.mrf.mxu0
      %v2059 = vadd.f32 0.0, %v2058
      %2060 = vmatmul.f32.gmra.mxu0 %v2018
      %v2061 = vpop.f32.mrf.mxu0
      %v2062 = vadd.f32 0.0, %v2061
      %2063 = vmatmul.f32.gmra.mxu0 %v2021
      %v2064 = vpop.f32.mrf.mxu0
      %v2065 = vadd.f32 0.0, %v2064
      %2066 = vmatmul.f32.gmra.mxu0 %v2024
      %v2067 = vpop.f32.mrf.mxu0
      %v2068 = vadd.f32 0.0, %v2067
      %2069 = vmatmul.f32.gmra.mxu0 %v2027
      %v2070 = vpop.f32.mrf.mxu0
      %v2071 = vadd.f32 0.0, %v2070
      %2072 = vmatmul.f32.gmra.mxu0 %v2030
      %v2073 = vpop.f32.mrf.mxu0
      %v2074 = vadd.f32 0.0, %v2073
      %2075 = vmatmul.f32.gmra.mxu0 %v2033
      %v2076 = vpop.f32.mrf.mxu0
      %v2077 = vadd.f32 0.0, %v2076
      %2078 = vmatmul.f32.gmra.mxu0 %v2036
      %v2079 = vpop.f32.mrf.mxu0
      %v2080 = vadd.f32 0.0, %v2079
      %2081 = vdwg.mxu0
      %v2082 = vadd.f32 %v1996, %v2059
      %v2083 = vadd.f32 %v1997, %v2062
      %v2084 = vadd.f32 %v1998, %v2065
      %v2085 = vadd.f32 %v1999, %v2068
      %v2086 = vadd.f32 %v2000, %v2071
      %v2087 = vadd.f32 %v2001, %v2074
      %v2088 = vadd.f32 %v2002, %v2077
      %v2089 = vadd.f32 %v2003, %v2080
      %v2090 = vld [vmem:[%s1103 + $0x2] sm:$0xff]
      %v2091 = vld [vmem:[%s1103 + $0x12] sm:$0xff]
      %v2092 = vld [vmem:[%s1103 + $0x22] sm:$0xff]
      %v2093 = vld [vmem:[%s1103 + $0x32] sm:$0xff]
      %v2094 = vld [vmem:[%s1103 + $0x42] sm:$0xff]
      %v2095 = vld [vmem:[%s1103 + $0x52] sm:$0xff]
      %v2096 = vld [vmem:[%s1103 + $0x62] sm:$0xff]
      %v2097 = vld [vmem:[%s1103 + $0x72] sm:$0xff]
      %s2098 = scalar_lea.vmem %s5, 68
      %v2099 = vld [vmem:[%s2098] sm:$0xf]
      %v2101 = vsel %vm578, %v2090, 0
      %v2104 = vsel %vm578, %v2091, 0
      %v2107 = vsel %vm578, %v2092, 0
      %v2110 = vsel %vm578, %v2093, 0
      %v2113 = vsel %vm578, %v2094, 0
      %v2116 = vsel %vm578, %v2095, 0
      %v2119 = vsel %vm578, %v2096, 0
      %v2122 = vsel %vm578, %v2097, 0
      %v2125 = vsel %vm620, %v2099, 0
      %2127 = vmatpush.msra.mxu0 0.0
      %2128 = vmatpush.msra.mxu0 0.0
      %2129 = vmatpush.msra.mxu0 0.0
      %2130 = vmatpush.msra.mxu0 0.0
      %2131 = vmatpush.msra.mxu0 0.0
      %2132 = vmatpush.msra.mxu0 0.0
      %2133 = vmatpush.msra.mxu0 0.0
      %2134 = vmatpush.msra.mxu0 0.0
      %2135 = vmatpush.msra.mxu0 0.0
      %2136 = vmatpush.msra.mxu0 0.0
      %2137 = vmatpush.msra.mxu0 0.0
      %2138 = vmatpush.msra.mxu0 0.0
      %2139 = vmatpush.msra.mxu0 0.0
      %2140 = vmatpush.msra.mxu0 0.0
      %2141 = vmatpush.msra.mxu0 0.0
      %2142 = vmatpush.msra.mxu0 %v2125
      %2143 = vmatmul.f32.gmra.mxu0 %v2101
      %v2144 = vpop.f32.mrf.mxu0
      %v2145 = vadd.f32 0.0, %v2144
      %2146 = vmatmul.f32.gmra.mxu0 %v2104
      %v2147 = vpop.f32.mrf.mxu0
      %v2148 = vadd.f32 0.0, %v2147
      %2149 = vmatmul.f32.gmra.mxu0 %v2107
      %v2150 = vpop.f32.mrf.mxu0
      %v2151 = vadd.f32 0.0, %v2150
      %2152 = vmatmul.f32.gmra.mxu0 %v2110
      %v2153 = vpop.f32.mrf.mxu0
      %v2154 = vadd.f32 0.0, %v2153
      %2155 = vmatmul.f32.gmra.mxu0 %v2113
      %v2156 = vpop.f32.mrf.mxu0
      %v2157 = vadd.f32 0.0, %v2156
      %2158 = vmatmul.f32.gmra.mxu0 %v2116
      %v2159 = vpop.f32.mrf.mxu0
      %v2160 = vadd.f32 0.0, %v2159
      %2161 = vmatmul.f32.gmra.mxu0 %v2119
      %v2162 = vpop.f32.mrf.mxu0
      %v2163 = vadd.f32 0.0, %v2162
      %2164 = vmatmul.f32.gmra.mxu0 %v2122
      %v2165 = vpop.f32.mrf.mxu0
      %v2166 = vadd.f32 0.0, %v2165
      %2167 = vdwg.mxu0
      %v2168 = vadd.f32 %v2082, %v2145
      %v2169 = vadd.f32 %v2083, %v2148
      %v2170 = vadd.f32 %v2084, %v2151
      %v2171 = vadd.f32 %v2085, %v2154
      %v2172 = vadd.f32 %v2086, %v2157
      %v2173 = vadd.f32 %v2087, %v2160
      %v2174 = vadd.f32 %v2088, %v2163
      %v2175 = vadd.f32 %v2089, %v2166
      %v2176 = vld [vmem:[%s477] sm:$0xff]
      %v2177 = vld [vmem:[%s477 + $0x8] sm:$0xff]
      %v2178 = vld [vmem:[%s477 + $0x10] sm:$0xff]
      %v2179 = vld [vmem:[%s477 + $0x18] sm:$0xff]
      %v2180 = vld [vmem:[%s477 + $0x20] sm:$0xff]
      %v2181 = vld [vmem:[%s477 + $0x28] sm:$0xff]
      %v2182 = vld [vmem:[%s477 + $0x30] sm:$0xff]
      %v2183 = vld [vmem:[%s477 + $0x38] sm:$0xff]
      %v2184 = vld [vmem:[%s3] sm:$0x1]
      %v2186 = vperm.slane %v2184, 0
      %v2188 = vmul.f32 %v2176, %v2186
      %v2189 = vmul.f32 %v2177, %v2186
      %v2190 = vmul.f32 %v2178, %v2186
      %v2191 = vmul.f32 %v2179, %v2186
      %v2192 = vmul.f32 %v2180, %v2186
      %v2193 = vmul.f32 %v2181, %v2186
      %v2194 = vmul.f32 %v2182, %v2186
      %v2195 = vmul.f32 %v2183, %v2186
      %v2196 = vld [vmem:[%s4] sm:$0x1]
      %v2198 = vperm.slane %v2196, 0
      %v2200 = vadd.f32 %v2188, %v2198
      %v2201 = vadd.f32 %v2189, %v2198
      %v2202 = vadd.f32 %v2190, %v2198
      %v2203 = vadd.f32 %v2191, %v2198
      %v2204 = vadd.f32 %v2192, %v2198
      %v2205 = vadd.f32 %v2193, %v2198
      %v2206 = vadd.f32 %v2194, %v2198
      %v2207 = vadd.f32 %v2195, %v2198
      %s2208 = sadd.s32 %s26, 1
      %p2209 = scmp.ge.s32.totalorder %s2208, 0
      %p2210 = scmp.lt.s32.totalorder %s2208, 8
      %p2211 = pnand %p2209, %p2210
      %p2212 = pneg %p2211
      %s2213 = scalar_select %p2212, 1.0, 0.0
      %v2214 = vstv %s2213
      %v2215 = vmul.f32 %v2200, %v2214
      %v2216 = vmul.f32 %v2201, %v2214
      %v2217 = vmul.f32 %v2202, %v2214
      %v2218 = vmul.f32 %v2203, %v2214
      %v2219 = vmul.f32 %v2204, %v2214
      %v2220 = vmul.f32 %v2205, %v2214
      %v2221 = vmul.f32 %v2206, %v2214
      %v2222 = vmul.f32 %v2207, %v2214
      %2223 = vst.msk [vmem:[%s577 + $0x1] sm:$0xff] %vm578, %v2215
      %2224 = vst.msk [vmem:[%s577 + $0x11] sm:$0xff] %vm578, %v2216
      %2225 = vst.msk [vmem:[%s577 + $0x21] sm:$0xff] %vm578, %v2217
      %2226 = vst.msk [vmem:[%s577 + $0x31] sm:$0xff] %vm578, %v2218
      %2227 = vst.msk [vmem:[%s577 + $0x41] sm:$0xff] %vm578, %v2219
      %2228 = vst.msk [vmem:[%s577 + $0x51] sm:$0xff] %vm578, %v2220
      %2229 = vst.msk [vmem:[%s577 + $0x61] sm:$0xff] %vm578, %v2221
      %2230 = vst.msk [vmem:[%s577 + $0x71] sm:$0xff] %vm578, %v2222
      %v2231 = vld [vmem:[#allocation2] sm:$0xff]
      %v2232 = vld [vmem:[#allocation2 + $0x10] sm:$0xff]
      %v2233 = vld [vmem:[#allocation2 + $0x20] sm:$0xff]
      %v2234 = vld [vmem:[#allocation2 + $0x30] sm:$0xff]
      %v2235 = vld [vmem:[#allocation2 + $0x40] sm:$0xff]
      %v2236 = vld [vmem:[#allocation2 + $0x50] sm:$0xff]
      %v2237 = vld [vmem:[#allocation2 + $0x60] sm:$0xff]
      %v2238 = vld [vmem:[#allocation2 + $0x70] sm:$0xff]
      %s2239 = scalar_lea.vmem %s5, 72
      %v2240 = vld [vmem:[%s2239] sm:$0xf]
      %v2242 = vsel %vm578, %v2231, 0
      %v2245 = vsel %vm578, %v2232, 0
      %v2248 = vsel %vm578, %v2233, 0
      %v2251 = vsel %vm578, %v2234, 0
      %v2254 = vsel %vm578, %v2235, 0
      %v2257 = vsel %vm578, %v2236, 0
      %v2260 = vsel %vm578, %v2237, 0
      %v2263 = vsel %vm578, %v2238, 0
      %v2266 = vsel %vm620, %v2240, 0
      %2268 = vmatpush.msra.mxu0 0.0
      %2269 = vmatpush.msra.mxu0 0.0
      %2270 = vmatpush.msra.mxu0 0.0
      %2271 = vmatpush.msra.mxu0 0.0
      %2272 = vmatpush.msra.mxu0 0.0
      %2273 = vmatpush.msra.mxu0 0.0
      %2274 = vmatpush.msra.mxu0 0.0
      %2275 = vmatpush.msra.mxu0 0.0
      %2276 = vmatpush.msra.mxu0 0.0
      %2277 = vmatpush.msra.mxu0 0.0
      %2278 = vmatpush.msra.mxu0 0.0
      %2279 = vmatpush.msra.mxu0 0.0
      %2280 = vmatpush.msra.mxu0 0.0
      %2281 = vmatpush.msra.mxu0 0.0
      %2282 = vmatpush.msra.mxu0 0.0
      %2283 = vmatpush.msra.mxu0 %v2266
      %2284 = vmatmul.f32.gmra.mxu0 %v2242
      %v2285 = vpop.f32.mrf.mxu0
      %v2286 = vadd.f32 0.0, %v2285
      %2287 = vmatmul.f32.gmra.mxu0 %v2245
      %v2288 = vpop.f32.mrf.mxu0
      %v2289 = vadd.f32 0.0, %v2288
      %2290 = vmatmul.f32.gmra.mxu0 %v2248
      %v2291 = vpop.f32.mrf.mxu0
      %v2292 = vadd.f32 0.0, %v2291
      %2293 = vmatmul.f32.gmra.mxu0 %v2251
      %v2294 = vpop.f32.mrf.mxu0
      %v2295 = vadd.f32 0.0, %v2294
      %2296 = vmatmul.f32.gmra.mxu0 %v2254
      %v2297 = vpop.f32.mrf.mxu0
      %v2298 = vadd.f32 0.0, %v2297
      %2299 = vmatmul.f32.gmra.mxu0 %v2257
      %v2300 = vpop.f32.mrf.mxu0
      %v2301 = vadd.f32 0.0, %v2300
      %2302 = vmatmul.f32.gmra.mxu0 %v2260
      %v2303 = vpop.f32.mrf.mxu0
      %v2304 = vadd.f32 0.0, %v2303
      %2305 = vmatmul.f32.gmra.mxu0 %v2263
      %v2306 = vpop.f32.mrf.mxu0
      %v2307 = vadd.f32 0.0, %v2306
      %2308 = vdwg.mxu0
      %v2309 = vadd.f32 %v2168, %v2286
      %v2310 = vadd.f32 %v2169, %v2289
      %v2311 = vadd.f32 %v2170, %v2292
      %v2312 = vadd.f32 %v2171, %v2295
      %v2313 = vadd.f32 %v2172, %v2298
      %v2314 = vadd.f32 %v2173, %v2301
      %v2315 = vadd.f32 %v2174, %v2304
      %v2316 = vadd.f32 %v2175, %v2307
      %v2317 = vld [vmem:[#allocation2 + $0x1] sm:$0xff]
      %v2318 = vld [vmem:[#allocation2 + $0x11] sm:$0xff]
      %v2319 = vld [vmem:[#allocation2 + $0x21] sm:$0xff]
      %v2320 = vld [vmem:[#allocation2 + $0x31] sm:$0xff]
      %v2321 = vld [vmem:[#allocation2 + $0x41] sm:$0xff]
      %v2322 = vld [vmem:[#allocation2 + $0x51] sm:$0xff]
      %v2323 = vld [vmem:[#allocation2 + $0x61] sm:$0xff]
      %v2324 = vld [vmem:[#allocation2 + $0x71] sm:$0xff]
      %s2325 = scalar_lea.vmem %s5, 76
      %v2326 = vld [vmem:[%s2325] sm:$0xf]
      %v2328 = vsel %vm578, %v2317, 0
      %v2331 = vsel %vm578, %v2318, 0
      %v2334 = vsel %vm578, %v2319, 0
      %v2337 = vsel %vm578, %v2320, 0
      %v2340 = vsel %vm578, %v2321, 0
      %v2343 = vsel %vm578, %v2322, 0
      %v2346 = vsel %vm578, %v2323, 0
      %v2349 = vsel %vm578, %v2324, 0
      %v2352 = vsel %vm620, %v2326, 0
      %2354 = vmatpush.msra.mxu0 0.0
      %2355 = vmatpush.msra.mxu0 0.0
      %2356 = vmatpush.msra.mxu0 0.0
      %2357 = vmatpush.msra.mxu0 0.0
      %2358 = vmatpush.msra.mxu0 0.0
      %2359 = vmatpush.msra.mxu0 0.0
      %2360 = vmatpush.msra.mxu0 0.0
      %2361 = vmatpush.msra.mxu0 0.0
      %2362 = vmatpush.msra.mxu0 0.0
      %2363 = vmatpush.msra.mxu0 0.0
      %2364 = vmatpush.msra.mxu0 0.0
      %2365 = vmatpush.msra.mxu0 0.0
      %2366 = vmatpush.msra.mxu0 0.0
      %2367 = vmatpush.msra.mxu0 0.0
      %2368 = vmatpush.msra.mxu0 0.0
      %2369 = vmatpush.msra.mxu0 %v2352
      %2370 = vmatmul.f32.gmra.mxu0 %v2328
      %v2371 = vpop.f32.mrf.mxu0
      %v2372 = vadd.f32 0.0, %v2371
      %2373 = vmatmul.f32.gmra.mxu0 %v2331
      %v2374 = vpop.f32.mrf.mxu0
      %v2375 = vadd.f32 0.0, %v2374
      %2376 = vmatmul.f32.gmra.mxu0 %v2334
      %v2377 = vpop.f32.mrf.mxu0
      %v2378 = vadd.f32 0.0, %v2377
      %2379 = vmatmul.f32.gmra.mxu0 %v2337
      %v2380 = vpop.f32.mrf.mxu0
      %v2381 = vadd.f32 0.0, %v2380
      %2382 = vmatmul.f32.gmra.mxu0 %v2340
      %v2383 = vpop.f32.mrf.mxu0
      %v2384 = vadd.f32 0.0, %v2383
      %2385 = vmatmul.f32.gmra.mxu0 %v2343
      %v2386 = vpop.f32.mrf.mxu0
      %v2387 = vadd.f32 0.0, %v2386
      %2388 = vmatmul.f32.gmra.mxu0 %v2346
      %v2389 = vpop.f32.mrf.mxu0
      %v2390 = vadd.f32 0.0, %v2389
      %2391 = vmatmul.f32.gmra.mxu0 %v2349
      %v2392 = vpop.f32.mrf.mxu0
      %v2393 = vadd.f32 0.0, %v2392
      %2394 = vdwg.mxu0
      %v2395 = vadd.f32 %v2309, %v2372
      %v2396 = vadd.f32 %v2310, %v2375
      %v2397 = vadd.f32 %v2311, %v2378
      %v2398 = vadd.f32 %v2312, %v2381
      %v2399 = vadd.f32 %v2313, %v2384
      %v2400 = vadd.f32 %v2314, %v2387
      %v2401 = vadd.f32 %v2315, %v2390
      %v2402 = vadd.f32 %v2316, %v2393
      %v2403 = vld [vmem:[#allocation2 + $0x2] sm:$0xff]
      %v2404 = vld [vmem:[#allocation2 + $0x12] sm:$0xff]
      %v2405 = vld [vmem:[#allocation2 + $0x22] sm:$0xff]
      %v2406 = vld [vmem:[#allocation2 + $0x32] sm:$0xff]
      %v2407 = vld [vmem:[#allocation2 + $0x42] sm:$0xff]
      %v2408 = vld [vmem:[#allocation2 + $0x52] sm:$0xff]
      %v2409 = vld [vmem:[#allocation2 + $0x62] sm:$0xff]
      %v2410 = vld [vmem:[#allocation2 + $0x72] sm:$0xff]
      %s2411 = scalar_lea.vmem %s5, 80
      %v2412 = vld [vmem:[%s2411] sm:$0xf]
      %v2414 = vsel %vm578, %v2403, 0
      %v2417 = vsel %vm578, %v2404, 0
      %v2420 = vsel %vm578, %v2405, 0
      %v2423 = vsel %vm578, %v2406, 0
      %v2426 = vsel %vm578, %v2407, 0
      %v2429 = vsel %vm578, %v2408, 0
      %v2432 = vsel %vm578, %v2409, 0
      %v2435 = vsel %vm578, %v2410, 0
      %v2438 = vsel %vm620, %v2412, 0
      %2440 = vmatpush.msra.mxu0 0.0
      %2441 = vmatpush.msra.mxu0 0.0
      %2442 = vmatpush.msra.mxu0 0.0
      %2443 = vmatpush.msra.mxu0 0.0
      %2444 = vmatpush.msra.mxu0 0.0
      %2445 = vmatpush.msra.mxu0 0.0
      %2446 = vmatpush.msra.mxu0 0.0
      %2447 = vmatpush.msra.mxu0 0.0
      %2448 = vmatpush.msra.mxu0 0.0
      %2449 = vmatpush.msra.mxu0 0.0
      %2450 = vmatpush.msra.mxu0 0.0
      %2451 = vmatpush.msra.mxu0 0.0
      %2452 = vmatpush.msra.mxu0 0.0
      %2453 = vmatpush.msra.mxu0 0.0
      %2454 = vmatpush.msra.mxu0 0.0
      %2455 = vmatpush.msra.mxu0 %v2438
      %2456 = vmatmul.f32.gmra.mxu0 %v2414
      %v2457 = vpop.f32.mrf.mxu0
      %v2458 = vadd.f32 0.0, %v2457
      %2459 = vmatmul.f32.gmra.mxu0 %v2417
      %v2460 = vpop.f32.mrf.mxu0
      %v2461 = vadd.f32 0.0, %v2460
      %2462 = vmatmul.f32.gmra.mxu0 %v2420
      %v2463 = vpop.f32.mrf.mxu0
      %v2464 = vadd.f32 0.0, %v2463
      %2465 = vmatmul.f32.gmra.mxu0 %v2423
      %v2466 = vpop.f32.mrf.mxu0
      %v2467 = vadd.f32 0.0, %v2466
      %2468 = vmatmul.f32.gmra.mxu0 %v2426
      %v2469 = vpop.f32.mrf.mxu0
      %v2470 = vadd.f32 0.0, %v2469
      %2471 = vmatmul.f32.gmra.mxu0 %v2429
      %v2472 = vpop.f32.mrf.mxu0
      %v2473 = vadd.f32 0.0, %v2472
      %2474 = vmatmul.f32.gmra.mxu0 %v2432
      %v2475 = vpop.f32.mrf.mxu0
      %v2476 = vadd.f32 0.0, %v2475
      %2477 = vmatmul.f32.gmra.mxu0 %v2435
      %v2478 = vpop.f32.mrf.mxu0
      %v2479 = vadd.f32 0.0, %v2478
      %2480 = vdwg.mxu0
      %v2481 = vadd.f32 %v2395, %v2458
      %v2482 = vadd.f32 %v2396, %v2461
      %v2483 = vadd.f32 %v2397, %v2464
      %v2484 = vadd.f32 %v2398, %v2467
      %v2485 = vadd.f32 %v2399, %v2470
      %v2486 = vadd.f32 %v2400, %v2473
      %v2487 = vadd.f32 %v2401, %v2476
      %v2488 = vadd.f32 %v2402, %v2479
      %v2489 = vld [vmem:[%s577] sm:$0xff]
      %v2490 = vld [vmem:[%s577 + $0x10] sm:$0xff]
      %v2491 = vld [vmem:[%s577 + $0x20] sm:$0xff]
      %v2492 = vld [vmem:[%s577 + $0x30] sm:$0xff]
      %v2493 = vld [vmem:[%s577 + $0x40] sm:$0xff]
      %v2494 = vld [vmem:[%s577 + $0x50] sm:$0xff]
      %v2495 = vld [vmem:[%s577 + $0x60] sm:$0xff]
      %v2496 = vld [vmem:[%s577 + $0x70] sm:$0xff]
      %s2497 = scalar_lea.vmem %s5, 84
      %v2498 = vld [vmem:[%s2497] sm:$0xf]
      %v2500 = vsel %vm578, %v2489, 0
      %v2503 = vsel %vm578, %v2490, 0
      %v2506 = vsel %vm578, %v2491, 0
      %v2509 = vsel %vm578, %v2492, 0
      %v2512 = vsel %vm578, %v2493, 0
      %v2515 = vsel %vm578, %v2494, 0
      %v2518 = vsel %vm578, %v2495, 0
      %v2521 = vsel %vm578, %v2496, 0
      %v2524 = vsel %vm620, %v2498, 0
      %2526 = vmatpush.msra.mxu0 0.0
      %2527 = vmatpush.msra.mxu0 0.0
      %2528 = vmatpush.msra.mxu0 0.0
      %2529 = vmatpush.msra.mxu0 0.0
      %2530 = vmatpush.msra.mxu0 0.0
      %2531 = vmatpush.msra.mxu0 0.0
      %2532 = vmatpush.msra.mxu0 0.0
      %2533 = vmatpush.msra.mxu0 0.0
      %2534 = vmatpush.msra.mxu0 0.0
      %2535 = vmatpush.msra.mxu0 0.0
      %2536 = vmatpush.msra.mxu0 0.0
      %2537 = vmatpush.msra.mxu0 0.0
      %2538 = vmatpush.msra.mxu0 0.0
      %2539 = vmatpush.msra.mxu0 0.0
      %2540 = vmatpush.msra.mxu0 0.0
      %2541 = vmatpush.msra.mxu0 %v2524
      %2542 = vmatmul.f32.gmra.mxu0 %v2500
      %v2543 = vpop.f32.mrf.mxu0
      %v2544 = vadd.f32 0.0, %v2543
      %2545 = vmatmul.f32.gmra.mxu0 %v2503
      %v2546 = vpop.f32.mrf.mxu0
      %v2547 = vadd.f32 0.0, %v2546
      %2548 = vmatmul.f32.gmra.mxu0 %v2506
      %v2549 = vpop.f32.mrf.mxu0
      %v2550 = vadd.f32 0.0, %v2549
      %2551 = vmatmul.f32.gmra.mxu0 %v2509
      %v2552 = vpop.f32.mrf.mxu0
      %v2553 = vadd.f32 0.0, %v2552
      %2554 = vmatmul.f32.gmra.mxu0 %v2512
      %v2555 = vpop.f32.mrf.mxu0
      %v2556 = vadd.f32 0.0, %v2555
      %2557 = vmatmul.f32.gmra.mxu0 %v2515
      %v2558 = vpop.f32.mrf.mxu0
      %v2559 = vadd.f32 0.0, %v2558
      %2560 = vmatmul.f32.gmra.mxu0 %v2518
      %v2561 = vpop.f32.mrf.mxu0
      %v2562 = vadd.f32 0.0, %v2561
      %2563 = vmatmul.f32.gmra.mxu0 %v2521
      %v2564 = vpop.f32.mrf.mxu0
      %v2565 = vadd.f32 0.0, %v2564
      %2566 = vdwg.mxu0
      %v2567 = vadd.f32 %v2481, %v2544
      %v2568 = vadd.f32 %v2482, %v2547
      %v2569 = vadd.f32 %v2483, %v2550
      %v2570 = vadd.f32 %v2484, %v2553
      %v2571 = vadd.f32 %v2485, %v2556
      %v2572 = vadd.f32 %v2486, %v2559
      %v2573 = vadd.f32 %v2487, %v2562
      %v2574 = vadd.f32 %v2488, %v2565
      %v2575 = vld [vmem:[%s577 + $0x1] sm:$0xff]
      %v2576 = vld [vmem:[%s577 + $0x11] sm:$0xff]
      %v2577 = vld [vmem:[%s577 + $0x21] sm:$0xff]
      %v2578 = vld [vmem:[%s577 + $0x31] sm:$0xff]
      %v2579 = vld [vmem:[%s577 + $0x41] sm:$0xff]
      %v2580 = vld [vmem:[%s577 + $0x51] sm:$0xff]
      %v2581 = vld [vmem:[%s577 + $0x61] sm:$0xff]
      %v2582 = vld [vmem:[%s577 + $0x71] sm:$0xff]
      %s2583 = scalar_lea.vmem %s5, 88
      %v2584 = vld [vmem:[%s2583] sm:$0xf]
      %v2586 = vsel %vm578, %v2575, 0
      %v2589 = vsel %vm578, %v2576, 0
      %v2592 = vsel %vm578, %v2577, 0
      %v2595 = vsel %vm578, %v2578, 0
      %v2598 = vsel %vm578, %v2579, 0
      %v2601 = vsel %vm578, %v2580, 0
      %v2604 = vsel %vm578, %v2581, 0
      %v2607 = vsel %vm578, %v2582, 0
      %v2610 = vsel %vm620, %v2584, 0
      %2612 = vmatpush.msra.mxu0 0.0
      %2613 = vmatpush.msra.mxu0 0.0
      %2614 = vmatpush.msra.mxu0 0.0
      %2615 = vmatpush.msra.mxu0 0.0
      %2616 = vmatpush.msra.mxu0 0.0
      %2617 = vmatpush.msra.mxu0 0.0
      %2618 = vmatpush.msra.mxu0 0.0
      %2619 = vmatpush.msra.mxu0 0.0
      %2620 = vmatpush.msra.mxu0 0.0
      %2621 = vmatpush.msra.mxu0 0.0
      %2622 = vmatpush.msra.mxu0 0.0
      %2623 = vmatpush.msra.mxu0 0.0
      %2624 = vmatpush.msra.mxu0 0.0
      %2625 = vmatpush.msra.mxu0 0.0
      %2626 = vmatpush.msra.mxu0 0.0
      %2627 = vmatpush.msra.mxu0 %v2610
      %2628 = vmatmul.f32.gmra.mxu0 %v2586
      %v2629 = vpop.f32.mrf.mxu0
      %v2630 = vadd.f32 0.0, %v2629
      %2631 = vmatmul.f32.gmra.mxu0 %v2589
      %v2632 = vpop.f32.mrf.mxu0
      %v2633 = vadd.f32 0.0, %v2632
      %2634 = vmatmul.f32.gmra.mxu0 %v2592
      %v2635 = vpop.f32.mrf.mxu0
      %v2636 = vadd.f32 0.0, %v2635
      %2637 = vmatmul.f32.gmra.mxu0 %v2595
      %v2638 = vpop.f32.mrf.mxu0
      %v2639 = vadd.f32 0.0, %v2638
      %2640 = vmatmul.f32.gmra.mxu0 %v2598
      %v2641 = vpop.f32.mrf.mxu0
      %v2642 = vadd.f32 0.0, %v2641
      %2643 = vmatmul.f32.gmra.mxu0 %v2601
      %v2644 = vpop.f32.mrf.mxu0
      %v2645 = vadd.f32 0.0, %v2644
      %2646 = vmatmul.f32.gmra.mxu0 %v2604
      %v2647 = vpop.f32.mrf.mxu0
      %v2648 = vadd.f32 0.0, %v2647
      %2649 = vmatmul.f32.gmra.mxu0 %v2607
      %v2650 = vpop.f32.mrf.mxu0
      %v2651 = vadd.f32 0.0, %v2650
      %2652 = vdwg.mxu0
      %v2653 = vadd.f32 %v2567, %v2630
      %v2654 = vadd.f32 %v2568, %v2633
      %v2655 = vadd.f32 %v2569, %v2636
      %v2656 = vadd.f32 %v2570, %v2639
      %v2657 = vadd.f32 %v2571, %v2642
      %v2658 = vadd.f32 %v2572, %v2645
      %v2659 = vadd.f32 %v2573, %v2648
      %v2660 = vadd.f32 %v2574, %v2651
      %v2661 = vld [vmem:[%s577 + $0x2] sm:$0xff]
      %v2662 = vld [vmem:[%s577 + $0x12] sm:$0xff]
      %v2663 = vld [vmem:[%s577 + $0x22] sm:$0xff]
      %v2664 = vld [vmem:[%s577 + $0x32] sm:$0xff]
      %v2665 = vld [vmem:[%s577 + $0x42] sm:$0xff]
      %v2666 = vld [vmem:[%s577 + $0x52] sm:$0xff]
      %v2667 = vld [vmem:[%s577 + $0x62] sm:$0xff]
      %v2668 = vld [vmem:[%s577 + $0x72] sm:$0xff]
      %s2669 = scalar_lea.vmem %s5, 92
      %v2670 = vld [vmem:[%s2669] sm:$0xf]
      %v2672 = vsel %vm578, %v2661, 0
      %v2675 = vsel %vm578, %v2662, 0
      %v2678 = vsel %vm578, %v2663, 0
      %v2681 = vsel %vm578, %v2664, 0
      %v2684 = vsel %vm578, %v2665, 0
      %v2687 = vsel %vm578, %v2666, 0
      %v2690 = vsel %vm578, %v2667, 0
      %v2693 = vsel %vm578, %v2668, 0
      %v2696 = vsel %vm620, %v2670, 0
      %2698 = vmatpush.msra.mxu0 0.0
      %2699 = vmatpush.msra.mxu0 0.0
      %2700 = vmatpush.msra.mxu0 0.0
      %2701 = vmatpush.msra.mxu0 0.0
      %2702 = vmatpush.msra.mxu0 0.0
      %2703 = vmatpush.msra.mxu0 0.0
      %2704 = vmatpush.msra.mxu0 0.0
      %2705 = vmatpush.msra.mxu0 0.0
      %2706 = vmatpush.msra.mxu0 0.0
      %2707 = vmatpush.msra.mxu0 0.0
      %2708 = vmatpush.msra.mxu0 0.0
      %2709 = vmatpush.msra.mxu0 0.0
      %2710 = vmatpush.msra.mxu0 0.0
      %2711 = vmatpush.msra.mxu0 0.0
      %2712 = vmatpush.msra.mxu0 0.0
      %2713 = vmatpush.msra.mxu0 %v2696
      %2714 = vmatmul.f32.gmra.mxu0 %v2672
      %v2715 = vpop.f32.mrf.mxu0
      %v2716 = vadd.f32 0.0, %v2715
      %2717 = vmatmul.f32.gmra.mxu0 %v2675
      %v2718 = vpop.f32.mrf.mxu0
      %v2719 = vadd.f32 0.0, %v2718
      %2720 = vmatmul.f32.gmra.mxu0 %v2678
      %v2721 = vpop.f32.mrf.mxu0
      %v2722 = vadd.f32 0.0, %v2721
      %2723 = vmatmul.f32.gmra.mxu0 %v2681
      %v2724 = vpop.f32.mrf.mxu0
      %v2725 = vadd.f32 0.0, %v2724
      %2726 = vmatmul.f32.gmra.mxu0 %v2684
      %v2727 = vpop.f32.mrf.mxu0
      %v2728 = vadd.f32 0.0, %v2727
      %2729 = vmatmul.f32.gmra.mxu0 %v2687
      %v2730 = vpop.f32.mrf.mxu0
      %v2731 = vadd.f32 0.0, %v2730
      %2732 = vmatmul.f32.gmra.mxu0 %v2690
      %v2733 = vpop.f32.mrf.mxu0
      %v2734 = vadd.f32 0.0, %v2733
      %2735 = vmatmul.f32.gmra.mxu0 %v2693
      %v2736 = vpop.f32.mrf.mxu0
      %v2737 = vadd.f32 0.0, %v2736
      %2738 = vdwg.mxu0
      %v2739 = vadd.f32 %v2653, %v2716
      %v2740 = vadd.f32 %v2654, %v2719
      %v2741 = vadd.f32 %v2655, %v2722
      %v2742 = vadd.f32 %v2656, %v2725
      %v2743 = vadd.f32 %v2657, %v2728
      %v2744 = vadd.f32 %v2658, %v2731
      %v2745 = vadd.f32 %v2659, %v2734
      %v2746 = vadd.f32 %v2660, %v2737
      %v2747 = vld [vmem:[%s1103] sm:$0xff]
      %v2748 = vld [vmem:[%s1103 + $0x10] sm:$0xff]
      %v2749 = vld [vmem:[%s1103 + $0x20] sm:$0xff]
      %v2750 = vld [vmem:[%s1103 + $0x30] sm:$0xff]
      %v2751 = vld [vmem:[%s1103 + $0x40] sm:$0xff]
      %v2752 = vld [vmem:[%s1103 + $0x50] sm:$0xff]
      %v2753 = vld [vmem:[%s1103 + $0x60] sm:$0xff]
      %v2754 = vld [vmem:[%s1103 + $0x70] sm:$0xff]
      %s2755 = scalar_lea.vmem %s5, 96
      %v2756 = vld [vmem:[%s2755] sm:$0xf]
      %v2758 = vsel %vm578, %v2747, 0
      %v2761 = vsel %vm578, %v2748, 0
      %v2764 = vsel %vm578, %v2749, 0
      %v2767 = vsel %vm578, %v2750, 0
      %v2770 = vsel %vm578, %v2751, 0
      %v2773 = vsel %vm578, %v2752, 0
      %v2776 = vsel %vm578, %v2753, 0
      %v2779 = vsel %vm578, %v2754, 0
      %v2782 = vsel %vm620, %v2756, 0
      %2784 = vmatpush.msra.mxu0 0.0
      %2785 = vmatpush.msra.mxu0 0.0
      %2786 = vmatpush.msra.mxu0 0.0
      %2787 = vmatpush.msra.mxu0 0.0
      %2788 = vmatpush.msra.mxu0 0.0
      %2789 = vmatpush.msra.mxu0 0.0
      %2790 = vmatpush.msra.mxu0 0.0
      %2791 = vmatpush.msra.mxu0 0.0
      %2792 = vmatpush.msra.mxu0 0.0
      %2793 = vmatpush.msra.mxu0 0.0
      %2794 = vmatpush.msra.mxu0 0.0
      %2795 = vmatpush.msra.mxu0 0.0
      %2796 = vmatpush.msra.mxu0 0.0
      %2797 = vmatpush.msra.mxu0 0.0
      %2798 = vmatpush.msra.mxu0 0.0
      %2799 = vmatpush.msra.mxu0 %v2782
      %2800 = vmatmul.f32.gmra.mxu0 %v2758
      %v2801 = vpop.f32.mrf.mxu0
      %v2802 = vadd.f32 0.0, %v2801
      %2803 = vmatmul.f32.gmra.mxu0 %v2761
      %v2804 = vpop.f32.mrf.mxu0
      %v2805 = vadd.f32 0.0, %v2804
      %2806 = vmatmul.f32.gmra.mxu0 %v2764
      %v2807 = vpop.f32.mrf.mxu0
      %v2808 = vadd.f32 0.0, %v2807
      %2809 = vmatmul.f32.gmra.mxu0 %v2767
      %v2810 = vpop.f32.mrf.mxu0
      %v2811 = vadd.f32 0.0, %v2810
      %2812 = vmatmul.f32.gmra.mxu0 %v2770
      %v2813 = vpop.f32.mrf.mxu0
      %v2814 = vadd.f32 0.0, %v2813
      %2815 = vmatmul.f32.gmra.mxu0 %v2773
      %v2816 = vpop.f32.mrf.mxu0
      %v2817 = vadd.f32 0.0, %v2816
      %2818 = vmatmul.f32.gmra.mxu0 %v2776
      %v2819 = vpop.f32.mrf.mxu0
      %v2820 = vadd.f32 0.0, %v2819
      %2821 = vmatmul.f32.gmra.mxu0 %v2779
      %v2822 = vpop.f32.mrf.mxu0
      %v2823 = vadd.f32 0.0, %v2822
      %2824 = vdwg.mxu0
      %v2825 = vadd.f32 %v2739, %v2802
      %v2826 = vadd.f32 %v2740, %v2805
      %v2827 = vadd.f32 %v2741, %v2808
      %v2828 = vadd.f32 %v2742, %v2811
      %v2829 = vadd.f32 %v2743, %v2814
      %v2830 = vadd.f32 %v2744, %v2817
      %v2831 = vadd.f32 %v2745, %v2820
      %v2832 = vadd.f32 %v2746, %v2823
      %v2833 = vld [vmem:[%s1103 + $0x1] sm:$0xff]
      %v2834 = vld [vmem:[%s1103 + $0x11] sm:$0xff]
      %v2835 = vld [vmem:[%s1103 + $0x21] sm:$0xff]
      %v2836 = vld [vmem:[%s1103 + $0x31] sm:$0xff]
      %v2837 = vld [vmem:[%s1103 + $0x41] sm:$0xff]
      %v2838 = vld [vmem:[%s1103 + $0x51] sm:$0xff]
      %v2839 = vld [vmem:[%s1103 + $0x61] sm:$0xff]
      %v2840 = vld [vmem:[%s1103 + $0x71] sm:$0xff]
      %s2841 = scalar_lea.vmem %s5, 100
      %v2842 = vld [vmem:[%s2841] sm:$0xf]
      %v2844 = vsel %vm578, %v2833, 0
      %v2847 = vsel %vm578, %v2834, 0
      %v2850 = vsel %vm578, %v2835, 0
      %v2853 = vsel %vm578, %v2836, 0
      %v2856 = vsel %vm578, %v2837, 0
      %v2859 = vsel %vm578, %v2838, 0
      %v2862 = vsel %vm578, %v2839, 0
      %v2865 = vsel %vm578, %v2840, 0
      %v2868 = vsel %vm620, %v2842, 0
      %2870 = vmatpush.msra.mxu0 0.0
      %2871 = vmatpush.msra.mxu0 0.0
      %2872 = vmatpush.msra.mxu0 0.0
      %2873 = vmatpush.msra.mxu0 0.0
      %2874 = vmatpush.msra.mxu0 0.0
      %2875 = vmatpush.msra.mxu0 0.0
      %2876 = vmatpush.msra.mxu0 0.0
      %2877 = vmatpush.msra.mxu0 0.0
      %2878 = vmatpush.msra.mxu0 0.0
      %2879 = vmatpush.msra.mxu0 0.0
      %2880 = vmatpush.msra.mxu0 0.0
      %2881 = vmatpush.msra.mxu0 0.0
      %2882 = vmatpush.msra.mxu0 0.0
      %2883 = vmatpush.msra.mxu0 0.0
      %2884 = vmatpush.msra.mxu0 0.0
      %2885 = vmatpush.msra.mxu0 %v2868
      %2886 = vmatmul.f32.gmra.mxu0 %v2844
      %v2887 = vpop.f32.mrf.mxu0
      %v2888 = vadd.f32 0.0, %v2887
      %2889 = vmatmul.f32.gmra.mxu0 %v2847
      %v2890 = vpop.f32.mrf.mxu0
      %v2891 = vadd.f32 0.0, %v2890
      %2892 = vmatmul.f32.gmra.mxu0 %v2850
      %v2893 = vpop.f32.mrf.mxu0
      %v2894 = vadd.f32 0.0, %v2893
      %2895 = vmatmul.f32.gmra.mxu0 %v2853
      %v2896 = vpop.f32.mrf.mxu0
      %v2897 = vadd.f32 0.0, %v2896
      %2898 = vmatmul.f32.gmra.mxu0 %v2856
      %v2899 = vpop.f32.mrf.mxu0
      %v2900 = vadd.f32 0.0, %v2899
      %2901 = vmatmul.f32.gmra.mxu0 %v2859
      %v2902 = vpop.f32.mrf.mxu0
      %v2903 = vadd.f32 0.0, %v2902
      %2904 = vmatmul.f32.gmra.mxu0 %v2862
      %v2905 = vpop.f32.mrf.mxu0
      %v2906 = vadd.f32 0.0, %v2905
      %2907 = vmatmul.f32.gmra.mxu0 %v2865
      %v2908 = vpop.f32.mrf.mxu0
      %v2909 = vadd.f32 0.0, %v2908
      %2910 = vdwg.mxu0
      %v2911 = vadd.f32 %v2825, %v2888
      %v2912 = vadd.f32 %v2826, %v2891
      %v2913 = vadd.f32 %v2827, %v2894
      %v2914 = vadd.f32 %v2828, %v2897
      %v2915 = vadd.f32 %v2829, %v2900
      %v2916 = vadd.f32 %v2830, %v2903
      %v2917 = vadd.f32 %v2831, %v2906
      %v2918 = vadd.f32 %v2832, %v2909
      %v2919 = vld [vmem:[%s1103 + $0x2] sm:$0xff]
      %v2920 = vld [vmem:[%s1103 + $0x12] sm:$0xff]
      %v2921 = vld [vmem:[%s1103 + $0x22] sm:$0xff]
      %v2922 = vld [vmem:[%s1103 + $0x32] sm:$0xff]
      %v2923 = vld [vmem:[%s1103 + $0x42] sm:$0xff]
      %v2924 = vld [vmem:[%s1103 + $0x52] sm:$0xff]
      %v2925 = vld [vmem:[%s1103 + $0x62] sm:$0xff]
      %v2926 = vld [vmem:[%s1103 + $0x72] sm:$0xff]
      %s2927 = scalar_lea.vmem %s5, 104
      %v2928 = vld [vmem:[%s2927] sm:$0xf]
      %v2930 = vsel %vm578, %v2919, 0
      %v2933 = vsel %vm578, %v2920, 0
      %v2936 = vsel %vm578, %v2921, 0
      %v2939 = vsel %vm578, %v2922, 0
      %v2942 = vsel %vm578, %v2923, 0
      %v2945 = vsel %vm578, %v2924, 0
      %v2948 = vsel %vm578, %v2925, 0
      %v2951 = vsel %vm578, %v2926, 0
      %v2954 = vsel %vm620, %v2928, 0
      %2956 = vmatpush.msra.mxu0 0.0
      %2957 = vmatpush.msra.mxu0 0.0
      %2958 = vmatpush.msra.mxu0 0.0
      %2959 = vmatpush.msra.mxu0 0.0
      %2960 = vmatpush.msra.mxu0 0.0
      %2961 = vmatpush.msra.mxu0 0.0
      %2962 = vmatpush.msra.mxu0 0.0
      %2963 = vmatpush.msra.mxu0 0.0
      %2964 = vmatpush.msra.mxu0 0.0
      %2965 = vmatpush.msra.mxu0 0.0
      %2966 = vmatpush.msra.mxu0 0.0
      %2967 = vmatpush.msra.mxu0 0.0
      %2968 = vmatpush.msra.mxu0 0.0
      %2969 = vmatpush.msra.mxu0 0.0
      %2970 = vmatpush.msra.mxu0 0.0
      %2971 = vmatpush.msra.mxu0 %v2954
      %2972 = vmatmul.f32.gmra.mxu0 %v2930
      %v2973 = vpop.f32.mrf.mxu0
      %v2974 = vadd.f32 0.0, %v2973
      %2975 = vmatmul.f32.gmra.mxu0 %v2933
      %v2976 = vpop.f32.mrf.mxu0
      %v2977 = vadd.f32 0.0, %v2976
      %2978 = vmatmul.f32.gmra.mxu0 %v2936
      %v2979 = vpop.f32.mrf.mxu0
      %v2980 = vadd.f32 0.0, %v2979
      %2981 = vmatmul.f32.gmra.mxu0 %v2939
      %v2982 = vpop.f32.mrf.mxu0
      %v2983 = vadd.f32 0.0, %v2982
      %2984 = vmatmul.f32.gmra.mxu0 %v2942
      %v2985 = vpop.f32.mrf.mxu0
      %v2986 = vadd.f32 0.0, %v2985
      %2987 = vmatmul.f32.gmra.mxu0 %v2945
      %v2988 = vpop.f32.mrf.mxu0
      %v2989 = vadd.f32 0.0, %v2988
      %2990 = vmatmul.f32.gmra.mxu0 %v2948
      %v2991 = vpop.f32.mrf.mxu0
      %v2992 = vadd.f32 0.0, %v2991
      %2993 = vmatmul.f32.gmra.mxu0 %v2951
      %v2994 = vpop.f32.mrf.mxu0
      %v2995 = vadd.f32 0.0, %v2994
      %2996 = vdwg.mxu0
      %v2997 = vadd.f32 %v2911, %v2974
      %v2998 = vadd.f32 %v2912, %v2977
      %v2999 = vadd.f32 %v2913, %v2980
      %v3000 = vadd.f32 %v2914, %v2983
      %v3001 = vadd.f32 %v2915, %v2986
      %v3002 = vadd.f32 %v2916, %v2989
      %v3003 = vadd.f32 %v2917, %v2992
      %v3004 = vadd.f32 %v2918, %v2995
      %vm3005 = vcmp.gt.f32.partialorder %v2997, 0.0
      %vm3006 = vcmp.gt.f32.partialorder %v2998, 0.0
      %vm3007 = vcmp.gt.f32.partialorder %v2999, 0.0
      %vm3008 = vcmp.gt.f32.partialorder %v3000, 0.0
      %vm3009 = vcmp.gt.f32.partialorder %v3001, 0.0
      %vm3010 = vcmp.gt.f32.partialorder %v3002, 0.0
      %vm3011 = vcmp.gt.f32.partialorder %v3003, 0.0
      %vm3012 = vcmp.gt.f32.partialorder %v3004, 0.0
      %v3013 = vmul.f32 %v2997, 0.01
      %v3014 = vmul.f32 %v2998, 0.01
      %v3015 = vmul.f32 %v2999, 0.01
      %v3016 = vmul.f32 %v3000, 0.01
      %v3017 = vmul.f32 %v3001, 0.01
      %v3018 = vmul.f32 %v3002, 0.01
      %v3019 = vmul.f32 %v3003, 0.01
      %v3020 = vmul.f32 %v3004, 0.01
      %v3021 = vsel %vm3005, %v2997, %v3013
      %v3022 = vsel %vm3006, %v2998, %v3014
      %v3023 = vsel %vm3007, %v2999, %v3015
      %v3024 = vsel %vm3008, %v3000, %v3016
      %v3025 = vsel %vm3009, %v3001, %v3017
      %v3026 = vsel %vm3010, %v3002, %v3018
      %v3027 = vsel %vm3011, %v3003, %v3019
      %v3028 = vsel %vm3012, %v3004, %v3020
      %vm3029 = vcmask 64512
      %3030 = vst.msk [vmem:[%s489] sm:$0xff] %vm3029, %v3021
      %3031 = vst.msk [vmem:[%s489 + $0x8] sm:$0xff] %vm3029, %v3022
      %3032 = vst.msk [vmem:[%s489 + $0x10] sm:$0xff] %vm3029, %v3023
      %3033 = vst.msk [vmem:[%s489 + $0x18] sm:$0xff] %vm3029, %v3024
      %3034 = vst.msk [vmem:[%s489 + $0x20] sm:$0xff] %vm3029, %v3025
      %3035 = vst.msk [vmem:[%s489 + $0x28] sm:$0xff] %vm3029, %v3026
      %3036 = vst.msk [vmem:[%s489 + $0x30] sm:$0xff] %vm3029, %v3027
      %3037 = vst.msk [vmem:[%s489 + $0x38] sm:$0xff] %vm3029, %v3028
      %v3038 = vld [vmem:[%s492] sm:$0x1]
      %v3039 = vsel %vm3029, %v3021, 0.0
      %v3040 = vsel %vm3029, %v3022, 0.0
      %v3041 = vadd.f32 %v3039, %v3040
      %v3042 = vsel %vm3029, %v3023, 0.0
      %v3043 = vadd.f32 %v3041, %v3042
      %v3044 = vsel %vm3029, %v3024, 0.0
      %v3045 = vadd.f32 %v3043, %v3044
      %v3046 = vsel %vm3029, %v3025, 0.0
      %v3047 = vadd.f32 %v3045, %v3046
      %v3048 = vsel %vm3029, %v3026, 0.0
      %v3049 = vadd.f32 %v3047, %v3048
      %v3050 = vsel %vm3029, %v3027, 0.0
      %v3051 = vadd.f32 %v3049, %v3050
      %v3052 = vsel %vm3029, %v3028, 0.0
      %v3053 = vadd.f32 %v3051, %v3052
      %v3054 = vrot.slane %v3053, 4
      %v3055 = vadd.f32 %v3053, %v3054
      %v3056 = vrot.slane %v3055, 2
      %v3057 = vadd.f32 %v3055, %v3056
      %v3058 = vrot.slane %v3057, 1
      %v3059 = vadd.f32 %v3057, %v3058
      %v3060 = vadd.f32 %v3038, %v3059
      %vm3061 = vcmask 57344
      %3062 = vst.msk [vmem:[%s492] sm:$0x1] %vm3061, %v3060
      %v3063 = vld [vmem:[%s495] sm:$0x1]
      %v3064 = vmul.f32 %v3021, %v3021
      %v3065 = vmul.f32 %v3022, %v3022
      %v3066 = vmul.f32 %v3023, %v3023
      %v3067 = vmul.f32 %v3024, %v3024
      %v3068 = vmul.f32 %v3025, %v3025
      %v3069 = vmul.f32 %v3026, %v3026
      %v3070 = vmul.f32 %v3027, %v3027
      %v3071 = vmul.f32 %v3028, %v3028
      %v3072 = vsel %vm3029, %v3064, 0.0
      %v3073 = vsel %vm3029, %v3065, 0.0
      %v3074 = vadd.f32 %v3072, %v3073
      %v3075 = vsel %vm3029, %v3066, 0.0
      %v3076 = vadd.f32 %v3074, %v3075
      %v3077 = vsel %vm3029, %v3067, 0.0
      %v3078 = vadd.f32 %v3076, %v3077
      %v3079 = vsel %vm3029, %v3068, 0.0
      %v3080 = vadd.f32 %v3078, %v3079
      %v3081 = vsel %vm3029, %v3069, 0.0
      %v3082 = vadd.f32 %v3080, %v3081
      %v3083 = vsel %vm3029, %v3070, 0.0
      %v3084 = vadd.f32 %v3082, %v3083
      %v3085 = vsel %vm3029, %v3071, 0.0
      %v3086 = vadd.f32 %v3084, %v3085
      %v3087 = vrot.slane %v3086, 4
      %v3088 = vadd.f32 %v3086, %v3087
      %v3089 = vrot.slane %v3088, 2
      %v3090 = vadd.f32 %v3088, %v3089
      %v3091 = vrot.slane %v3090, 1
      %v3092 = vadd.f32 %v3090, %v3091
      %v3093 = vadd.f32 %v3063, %v3092
      %3094 = vst.msk [vmem:[%s495] sm:$0x1] %vm3061, %v3093
      %p3095 = scmp.lt.s32.totalorder %s25, 1
      %s3096 = scalar_select %p3095, %s25, 1
      %p3097 = scmp.lt.s32.totalorder %s26, 7
      %s3098 = scalar_select %p3097, %s26, 7
      %s3099 = smul.addr %s3098, 8
      %s3100 = smul.addr %s3096, 64
      %s3101 = sadd.s32 %s3099, %s3100
      %s3102 = smul.addr %s3101, 8
      %s3103 = scalar_lea.vmem %s7, %s3102
      %p3104 = scmp.lt.s32.totalorder %s25, 1
      %s3105 = scalar_select %p3104, %s25, 1
      %s3106 = scalar_lea.vmem %s8, %s3105
      %p3107 = scmp.lt.s32.totalorder %s25, 1
      %s3108 = scalar_select %p3107, %s25, 1
      %s3109 = scalar_lea.vmem %s9, %s3108
      // Predicated region
      $region53: #{unet_dblock_forward.3} parent=47 // pred_check
        %p3110 = pneg %p233
      $region54: #{unet_dblock_forward.3} parent=47 // pred_check_branch
        %3112 = sbr.rel (%p3110) target = $region56
      $region55: #{unet_dblock_forward.3} parent=47 // pred_region
        _
      $region56: #{unet_dblock_forward.3} parent=47 // pred_fallthru
        _
      // Predicated region
      $region57: #{unet_dblock_forward.3} parent=47 // pred_check
        %p3113 = pneg %p259
      $region58: #{unet_dblock_forward.3} parent=47 // pred_check_branch
        %3115 = sbr.rel (%p3113) target = $region60
      $region59: #{unet_dblock_forward.3} parent=47 // pred_region
        _
      $region60: #{unet_dblock_forward.3} parent=47 // pred_fallthru
        _
      // Predicated region
      $region61: #{unet_dblock_forward.3} parent=47 // pred_check
        %p3116 = pneg %p285
      $region62: #{unet_dblock_forward.3} parent=47 // pred_check_branch
        %3118 = sbr.rel (%p3116) target = $region64
      $region63: #{unet_dblock_forward.3} parent=47 // pred_region
        _
      $region64: #{unet_dblock_forward.3} parent=47 // pred_fallthru
        _
    $region48: #{unet_dblock_forward.3} parent=5 // pred_fallthru
      _
    %p3119 = scmp.le.s32.totalorder 2, %s16
    // Predicated region
    $region65: #{unet_dblock_forward.3} parent=5 // pred_check
      %p3120 = pneg %p3119
    $region66: #{unet_dblock_forward.3} parent=5 // pred_check_branch
      %3122 = sbr.rel (%p3120) target = $region68
    $region67: #{unet_dblock_forward.3} parent=5 // pred_region
      %s3123 = ssub.s32 %s16, 2
      // Predicated region
      $region69: #{unet_dblock_forward.3} parent=67 // pred_check
        %p3124 = pneg %p239
      $region70: #{unet_dblock_forward.3} parent=67 // pred_check_branch
        %3126 = sbr.rel (%p3124) target = $region72
      $region71: #{unet_dblock_forward.3} parent=67 // pred_region
        %p3127 = scmp.lt.s32.totalorder %s27, 1
        %s3128 = scalar_select %p3127, %s27, 1
        %p3129 = scmp.lt.s32.totalorder %s28, 7
        %s3130 = scalar_select %p3129, %s28, 7
        %s3131 = smul.addr %s3130, 8
        %s3132 = smul.addr %s3128, 64
        %s3133 = sadd.s32 %s3131, %s3132
        %s3134 = smul.addr %s3133, 8
        %s3135 = scalar_lea.vmem %s7, %s3134
      $region72: #{unet_dblock_forward.3} parent=67 // pred_fallthru
        _
      // Predicated region
      $region73: #{unet_dblock_forward.3} parent=67 // pred_check
        %p3136 = pneg %p265
      $region74: #{unet_dblock_forward.3} parent=67 // pred_check_branch
        %3138 = sbr.rel (%p3136) target = $region76
      $region75: #{unet_dblock_forward.3} parent=67 // pred_region
        %p3139 = scmp.lt.s32.totalorder %s27, 1
        %s3140 = scalar_select %p3139, %s27, 1
        %s3141 = scalar_lea.vmem %s8, %s3140
      $region76: #{unet_dblock_forward.3} parent=67 // pred_fallthru
        _
      // Predicated region
      $region77: #{unet_dblock_forward.3} parent=67 // pred_check
        %p3142 = pneg %p291
      $region78: #{unet_dblock_forward.3} parent=67 // pred_check_branch
        %3144 = sbr.rel (%p3142) target = $region80
      $region79: #{unet_dblock_forward.3} parent=67 // pred_region
        %p3145 = scmp.lt.s32.totalorder %s27, 1
        %s3146 = scalar_select %p3145, %s27, 1
        %s3147 = scalar_lea.vmem %s9, %s3146
      $region80: #{unet_dblock_forward.3} parent=67 // pred_fallthru
        _
    $region68: #{unet_dblock_forward.3} parent=5 // pred_fallthru
      _
  $region6: #{unet_dblock_forward.3} parent=0 // loop_footer
    %s20 = sadd.s32 1, %s16
  $region7: #{unet_dblock_forward.3} parent=0 // loop_footer_branch
    %15 = sbr.rel target = $region3
  $region8: #{unet_dblock_forward.3} parent=0 // loop_exit
    _

// kernel: unet_dblock_forward.4
$region0: #{unet_dblock_forward.4}
  #allocation0 [shape = 'u32[]', space=smem, size = 0x4, offset = 0x4, fixed_abs, tag = 'smem constant byte address 0x4 - core index']
  #allocation1 [shape = 'u32[72,128]{1,0:T(1,128)}', space=vmem, size = 0x9000, scoped, tag = 'internal scratch']
  #allocation2 [shape = 'f32[10,10,8]{2,1,0:T(8,128)}', space=vmem, size = 0x14000, scoped, tag = 'scratch operand']
  %s0 = inlined_call_operand.vmem [shape: f32[2,8,8,8,8], index: 0, kind: input, shape index: {}, may-alias: {0,1,2}]
  %s1 = inlined_call_operand.vmem [shape: f32[2,8,8,8,8], index: 1, kind: input, shape index: {}, may-alias: {0,1,2}]
  %s2 = inlined_call_operand.vmem [shape: f32[2,8,8,8,8], index: 2, kind: input, shape index: {}, may-alias: {0,1,2}]
  %s3 = inlined_call_operand.vmem [shape: f32[1,8], index: 3, kind: input, shape index: {}]
  %s4 = inlined_call_operand.vmem [shape: f32[1,8], index: 4, kind: input, shape index: {}]
  %s5 = inlined_call_operand.vmem [shape: f32[27,8,8], index: 5, kind: input, shape index: {}]
  %s6 = inlined_call_operand.vmem [shape: f32[1,8], index: 6, kind: input, shape index: {}]
  %s7 = inlined_call_operand.vmem [shape: f32[2,8,64,8], index: 7, kind: output, shape index: {0}]
  %s8 = inlined_call_operand.vmem [shape: f32[2,1,8], index: 8, kind: output, shape index: {1}]
  %s9 = inlined_call_operand.vmem [shape: f32[2,1,8], index: 9, kind: output, shape index: {2}]
  %10 = xla_tuple %s7, %s8, %s9
  %s11 = sld [smem:[#allocation0]]
  $region81: #{unet_dblock_forward.4} parent=0
    _
  %s13 = ssub.s32 1, %s11
  %s14 = scalar_select 0, %s13, %s11
  loop: start=0, step=1, limit=18
  $region2: #{unet_dblock_forward.4} parent=0 // loop_pre_header
    _
  $region3: #{unet_dblock_forward.4} parent=0 // loop_header
    %s16 = sphi 0, %s20
    %p17 = scmp.ge.s32.totalorder %s16, 18
    %s23 = sphi 0, %s35
    %s24 = sphi 0, %s31
    %s25 = sphi 0, %s23
    %s26 = sphi 0, %s24
    %s27 = sphi 0, %s25
    %s28 = sphi 0, %s26
    %s46 = sphi 0, %s48
    %s49 = sphi 0, %s46
    %s50 = sphi 0, %s49
    %s66 = sphi 0, %s50
    %s74 = sphi 0, %s76
    %s77 = sphi 0, %s74
    %s78 = sphi 0, %s77
    %s94 = sphi 0, %s78
    %s108 = sphi 0, %s110
    %s111 = sphi 0, %s108
    %s112 = sphi 0, %s111
    %s128 = sphi 0, %s112
    %s132 = sphi 0, %s132
    %s134 = sphi 0, %s132
    %s135 = sphi 0, %s134
    %s149 = sphi 0, %s135
    %s153 = sphi 0, %s153
    %s155 = sphi 0, %s153
    %s156 = sphi 0, %s155
    %s170 = sphi 0, %s156
    %s174 = sphi 0, %s174
    %s176 = sphi 0, %s174
    %s177 = sphi 0, %s176
    %s191 = sphi 0, %s177
    %s195 = sphi 0, %s195
    %s197 = sphi 0, %s195
    %s198 = sphi 0, %s197
    %s212 = sphi 0, %s198
    %s220 = sphi 0, %s222
    %s223 = sphi 0, %s220
    %s224 = sphi 0, %s223
    %s240 = sphi 0, %s224
    %s246 = sphi 0, %s248
    %s249 = sphi 0, %s246
    %s250 = sphi 0, %s249
    %s266 = sphi 0, %s250
    %s272 = sphi 0, %s274
    %s275 = sphi 0, %s272
    %s276 = sphi 0, %s275
    %s292 = sphi 0, %s276
  $region4: #{unet_dblock_forward.4} parent=0 // loop_header_branch
    %19 = sbr.rel (%p17) target = $region8
  $region5: #{unet_dblock_forward.4} parent=0 // loop_body
    %s21 = ssub.s32 %s16, 1
    %s22 = ssub.s32 %s16, 2
    %s29 = sadd.s32 1, %s24
    %p30 = scmp.ge.s32.totalorder %s29, 8
    %s31 = scalar_select %p30, 0, %s29
    %s32 = sadd.s32 1, %s23
    %s33 = scalar_select %p30, %s32, %s23
    %p34 = scmp.ge.s32.totalorder %s33, 2
    %s35 = scalar_select %p34, 0, %s33
    %s36 = ssub.s32 %s24, 1
    %p37 = scmp.gt.s32.totalorder %s36, 0
    %s38 = scalar_select %p37, %s36, 0
    %s39 = ssub.s32 %s31, 1
    %p40 = scmp.gt.s32.totalorder %s39, 0
    %s41 = scalar_select %p40, %s39, 0
    %s42 = ssub.s32 %s23, %s35
    %s43 = ssub.s32 %s38, %s41
    %s44 = sor.u32 %s42, %s43
    %p45 = scmp.eq.s32.totalorder %s44, 0
    %s47 = sadd.s32 %s46, 1
    %s48 = scalar_select %p45, %s46, %s47
    %p51 = pneg %p45
    %p52 = scmp.eq.s32.totalorder %s16, 15
    %p53 = por %p51, %p52
    %p54 = scmp.ne.s32.totalorder %s46, %s49
    %p55 = scmp.eq.s32.totalorder %s16, 0
    %p56 = por %p54, %p55
    %p57 = scmp.ne.s32.totalorder %s46, %s49
    %p58 = scmp.eq.s32.totalorder %s21, 15
    %p59 = por %p57, %p58
    %p60 = scmp.ne.s32.totalorder %s49, %s50
    %p61 = scmp.eq.s32.totalorder %s21, 0
    %p62 = por %p60, %p61
    %p63 = scmp.ne.s32.totalorder %s49, %s50
    %p64 = scmp.eq.s32.totalorder %s22, 15
    %p65 = por %p63, %p64
    %p67 = scmp.ne.s32.totalorder %s50, %s66
    %p68 = scmp.eq.s32.totalorder %s22, 0
    %p69 = por %p67, %p68
    %s70 = ssub.s32 %s23, %s35
    %s71 = ssub.s32 %s24, %s31
    %s72 = sor.u32 %s70, %s71
    %p73 = scmp.eq.s32.totalorder %s72, 0
    %s75 = sadd.s32 %s74, 1
    %s76 = scalar_select %p73, %s74, %s75
    %p79 = pneg %p73
    %p80 = scmp.eq.s32.totalorder %s16, 15
    %p81 = por %p79, %p80
    %p82 = scmp.ne.s32.totalorder %s74, %s77
    %p83 = scmp.eq.s32.totalorder %s16, 0
    %p84 = por %p82, %p83
    %p85 = scmp.ne.s32.totalorder %s74, %s77
    %p86 = scmp.eq.s32.totalorder %s21, 15
    %p87 = por %p85, %p86
    %p88 = scmp.ne.s32.totalorder %s77, %s78
    %p89 = scmp.eq.s32.totalorder %s21, 0
    %p90 = por %p88, %p89
    %p91 = scmp.ne.s32.totalorder %s77, %s78
    %p92 = scmp.eq.s32.totalorder %s22, 15
    %p93 = por %p91, %p92
    %p95 = scmp.ne.s32.totalorder %s78, %s94
    %p96 = scmp.eq.s32.totalorder %s22, 0
    %p97 = por %p95, %p96
    %s98 = sadd.s32 %s24, 1
    %p99 = scmp.lt.s32.totalorder %s98, 7
    %s100 = scalar_select %p99, %s98, 7
    %s101 = sadd.s32 %s31, 1
    %p102 = scmp.lt.s32.totalorder %s101, 7
    %s103 = scalar_select %p102, %s101, 7
    %s104 = ssub.s32 %s23, %s35
    %s105 = ssub.s32 %s100, %s103
    %s106 = sor.u32 %s104, %s105
    %p107 = scmp.eq.s32.totalorder %s106, 0
    %s109 = sadd.s32 %s108, 1
    %s110 = scalar_select %p107, %s108, %s109
    %p113 = pneg %p107
    %p114 = scmp.eq.s32.totalorder %s16, 15
    %p115 = por %p113, %p114
    %p116 = scmp.ne.s32.totalorder %s108, %s111
    %p117 = scmp.eq.s32.totalorder %s16, 0
    %p118 = por %p116, %p117
    %p119 = scmp.ne.s32.totalorder %s108, %s111
    %p120 = scmp.eq.s32.totalorder %s21, 15
    %p121 = por %p119, %p120
    %p122 = scmp.ne.s32.totalorder %s111, %s112
    %p123 = scmp.eq.s32.totalorder %s21, 0
    %p124 = por %p122, %p123
    %p125 = scmp.ne.s32.totalorder %s111, %s112
    %p126 = scmp.eq.s32.totalorder %s22, 15
    %p127 = por %p125, %p126
    %p129 = scmp.ne.s32.totalorder %s112, %s128
    %p130 = scmp.eq.s32.totalorder %s22, 0
    %p131 = por %p129, %p130
    %s133 = sadd.s32 %s132, 1
    %p136 = scmp.eq.s32.totalorder %s16, 15
    %p137 = scmp.ne.s32.totalorder %s132, %s134
    %p138 = scmp.eq.s32.totalorder %s16, 0
    %p139 = por %p137, %p138
    %p140 = scmp.ne.s32.totalorder %s132, %s134
    %p141 = scmp.eq.s32.totalorder %s21, 15
    %p142 = por %p140, %p141
    %p143 = scmp.ne.s32.totalorder %s134, %s135
    %p144 = scmp.eq.s32.totalorder %s21, 0
    %p145 = por %p143, %p144
    %p146 = scmp.ne.s32.totalorder %s134, %s135
    %p147 = scmp.eq.s32.totalorder %s22, 15
    %p148 = por %p146, %p147
    %p150 = scmp.ne.s32.totalorder %s135, %s149
    %p151 = scmp.eq.s32.totalorder %s22, 0
    %p152 = por %p150, %p151
    %s154 = sadd.s32 %s153, 1
    %p157 = scmp.eq.s32.totalorder %s16, 15
    %p158 = scmp.ne.s32.totalorder %s153, %s155
    %p159 = scmp.eq.s32.totalorder %s16, 0
    %p160 = por %p158, %p159
    %p161 = scmp.ne.s32.totalorder %s153, %s155
    %p162 = scmp.eq.s32.totalorder %s21, 15
    %p163 = por %p161, %p162
    %p164 = scmp.ne.s32.totalorder %s155, %s156
    %p165 = scmp.eq.s32.totalorder %s21, 0
    %p166 = por %p164, %p165
    %p167 = scmp.ne.s32.totalorder %s155, %s156
    %p168 = scmp.eq.s32.totalorder %s22, 15
    %p169 = por %p167, %p168
    %p171 = scmp.ne.s32.totalorder %s156, %s170
    %p172 = scmp.eq.s32.totalorder %s22, 0
    %p173 = por %p171, %p172
    %s175 = sadd.s32 %s174, 1
    %p178 = scmp.eq.s32.totalorder %s16, 15
    %p179 = scmp.ne.s32.totalorder %s174, %s176
    %p180 = scmp.eq.s32.totalorder %s16, 0
    %p181 = por %p179, %p180
    %p182 = scmp.ne.s32.totalorder %s174, %s176
    %p183 = scmp.eq.s32.totalorder %s21, 15
    %p184 = por %p182, %p183
    %p185 = scmp.ne.s32.totalorder %s176, %s177
    %p186 = scmp.eq.s32.totalorder %s21, 0
    %p187 = por %p185, %p186
    %p188 = scmp.ne.s32.totalorder %s176, %s177
    %p189 = scmp.eq.s32.totalorder %s22, 15
    %p190 = por %p188, %p189
    %p192 = scmp.ne.s32.totalorder %s177, %s191
    %p193 = scmp.eq.s32.totalorder %s22, 0
    %p194 = por %p192, %p193
    %s196 = sadd.s32 %s195, 1
    %p199 = scmp.eq.s32.totalorder %s16, 15
    %p200 = scmp.ne.s32.totalorder %s195, %s197
    %p201 = scmp.eq.s32.totalorder %s16, 0
    %p202 = por %p200, %p201
    %p203 = scmp.ne.s32.totalorder %s195, %s197
    %p204 = scmp.eq.s32.totalorder %s21, 15
    %p205 = por %p203, %p204
    %p206 = scmp.ne.s32.totalorder %s197, %s198
    %p207 = scmp.eq.s32.totalorder %s21, 0
    %p208 = por %p206, %p207
    %p209 = scmp.ne.s32.totalorder %s197, %s198
    %p210 = scmp.eq.s32.totalorder %s22, 15
    %p211 = por %p209, %p210
    %p213 = scmp.ne.s32.totalorder %s198, %s212
    %p214 = scmp.eq.s32.totalorder %s22, 0
    %p215 = por %p213, %p214
    %s216 = ssub.s32 %s23, %s35
    %s217 = ssub.s32 %s24, %s31
    %s218 = sor.u32 %s216, %s217
    %p219 = scmp.eq.s32.totalorder %s218, 0
    %s221 = sadd.s32 %s220, 1
    %s222 = scalar_select %p219, %s220, %s221
    %p225 = pneg %p219
    %p226 = scmp.eq.s32.totalorder %s16, 15
    %p227 = por %p225, %p226
    %p228 = scmp.ne.s32.totalorder %s220, %s223
    %p229 = scmp.eq.s32.totalorder %s16, 0
    %p230 = por %p228, %p229
    %p231 = scmp.ne.s32.totalorder %s220, %s223
    %p232 = scmp.eq.s32.totalorder %s21, 15
    %p233 = por %p231, %p232
    %p234 = scmp.ne.s32.totalorder %s223, %s224
    %p235 = scmp.eq.s32.totalorder %s21, 0
    %p236 = por %p234, %p235
    %p237 = scmp.ne.s32.totalorder %s223, %s224
    %p238 = scmp.eq.s32.totalorder %s22, 15
    %p239 = por %p237, %p238
    %p241 = scmp.ne.s32.totalorder %s224, %s240
    %p242 = scmp.eq.s32.totalorder %s22, 0
    %p243 = por %p241, %p242
    %s244 = ssub.s32 %s23, %s35
    %p245 = scmp.eq.s32.totalorder %s244, 0
    %s247 = sadd.s32 %s246, 1
    %s248 = scalar_select %p245, %s246, %s247
    %p251 = pneg %p245
    %p252 = scmp.eq.s32.totalorder %s16, 15
    %p253 = por %p251, %p252
    %p254 = scmp.ne.s32.totalorder %s246, %s249
    %p255 = scmp.eq.s32.totalorder %s16, 0
    %p256 = por %p254, %p255
    %p257 = scmp.ne.s32.totalorder %s246, %s249
    %p258 = scmp.eq.s32.totalorder %s21, 15
    %p259 = por %p257, %p258
    %p260 = scmp.ne.s32.totalorder %s249, %s250
    %p261 = scmp.eq.s32.totalorder %s21, 0
    %p262 = por %p260, %p261
    %p263 = scmp.ne.s32.totalorder %s249, %s250
    %p264 = scmp.eq.s32.totalorder %s22, 15
    %p265 = por %p263, %p264
    %p267 = scmp.ne.s32.totalorder %s250, %s266
    %p268 = scmp.eq.s32.totalorder %s22, 0
    %p269 = por %p267, %p268
    %s270 = ssub.s32 %s23, %s35
    %p271 = scmp.eq.s32.totalorder %s270, 0
    %s273 = sadd.s32 %s272, 1
    %s274 = scalar_select %p271, %s272, %s273
    %p277 = pneg %p271
    %p278 = scmp.eq.s32.totalorder %s16, 15
    %p279 = por %p277, %p278
    %p280 = scmp.ne.s32.totalorder %s272, %s275
    %p281 = scmp.eq.s32.totalorder %s16, 0
    %p282 = por %p280, %p281
    %p283 = scmp.ne.s32.totalorder %s272, %s275
    %p284 = scmp.eq.s32.totalorder %s21, 15
    %p285 = por %p283, %p284
    %p286 = scmp.ne.s32.totalorder %s275, %s276
    %p287 = scmp.eq.s32.totalorder %s21, 0
    %p288 = por %p286, %p287
    %p289 = scmp.ne.s32.totalorder %s275, %s276
    %p290 = scmp.eq.s32.totalorder %s22, 15
    %p291 = por %p289, %p290
    %p293 = scmp.ne.s32.totalorder %s276, %s292
    %p294 = scmp.eq.s32.totalorder %s22, 0
    %p295 = por %p293, %p294
    %p296 = scmp.le.s32.totalorder 1, %s16
    %p297 = scmp.lt.s32.totalorder %s16, 17
    %p298 = pnand %p296, %p297
    %p299 = pneg %p298
    // Predicated region
    $region9: #{unet_dblock_forward.4} parent=5 // pred_check
      _
    $region10: #{unet_dblock_forward.4} parent=5 // pred_check_branch
      %301 = sbr.rel (%p298) target = $region12
    $region11: #{unet_dblock_forward.4} parent=5 // pred_region
      %s302 = ssub.s32 %s16, 1
      // Predicated region
      $region13: #{unet_dblock_forward.4} parent=11 // pred_check
        %p303 = pneg %p145
      $region14: #{unet_dblock_forward.4} parent=11 // pred_check_branch
        %305 = sbr.rel (%p303) target = $region16
      $region15: #{unet_dblock_forward.4} parent=11 // pred_region
        _
      $region16: #{unet_dblock_forward.4} parent=11 // pred_fallthru
        _
      // Predicated region
      $region17: #{unet_dblock_forward.4} parent=11 // pred_check
        %p306 = pneg %p166
      $region18: #{unet_dblock_forward.4} parent=11 // pred_check_branch
        %308 = sbr.rel (%p306) target = $region20
      $region19: #{unet_dblock_forward.4} parent=11 // pred_region
        _
      $region20: #{unet_dblock_forward.4} parent=11 // pred_fallthru
        _
      // Predicated region
      $region21: #{unet_dblock_forward.4} parent=11 // pred_check
        %p309 = pneg %p187
      $region22: #{unet_dblock_forward.4} parent=11 // pred_check_branch
        %311 = sbr.rel (%p309) target = $region24
      $region23: #{unet_dblock_forward.4} parent=11 // pred_region
        _
      $region24: #{unet_dblock_forward.4} parent=11 // pred_fallthru
        _
      // Predicated region
      $region25: #{unet_dblock_forward.4} parent=11 // pred_check
        %p312 = pneg %p208
      $region26: #{unet_dblock_forward.4} parent=11 // pred_check_branch
        %314 = sbr.rel (%p312) target = $region28
      $region27: #{unet_dblock_forward.4} parent=11 // pred_region
        _
      $region28: #{unet_dblock_forward.4} parent=11 // pred_fallthru
        _
    $region12: #{unet_dblock_forward.4} parent=5 // pred_fallthru
      _
    %p315 = scmp.lt.s32.totalorder %s16, 16
    // Predicated region
    $region29: #{unet_dblock_forward.4} parent=5 // pred_check
      %p316 = pneg %p315
    $region30: #{unet_dblock_forward.4} parent=5 // pred_check_branch
      %318 = sbr.rel (%p316) target = $region32
    $region31: #{unet_dblock_forward.4} parent=5 // pred_region
      // Predicated region
      $region33: #{unet_dblock_forward.4} parent=31 // pred_check
        %p319 = pneg %p56
      $region34: #{unet_dblock_forward.4} parent=31 // pred_check_branch
        %321 = sbr.rel (%p319) target = $region36
      $region35: #{unet_dblock_forward.4} parent=31 // pred_region
        %s322 = ssub.s32 %s24, 1
        %p323 = scmp.gt.s32.totalorder %s322, 0
        %s324 = scalar_select %p323, %s322, 0
        %p325 = scmp.lt.s32.totalorder %s23, 1
        %s326 = scalar_select %p325, %s23, 1
        %p327 = scmp.lt.s32.totalorder %s324, 7
        %s328 = scalar_select %p327, %s324, 7
        %s329 = smul.addr %s328, 8
        %s330 = smul.addr %s326, 64
        %s331 = sadd.s32 %s329, %s330
        %s332 = smul.addr %s331, 8
        %s333 = scalar_lea.vmem %s0, %s332
        %s334 = ssub.s32 %s24, 1
        %p335 = scmp.gt.s32.totalorder %s334, 0
        %s336 = scalar_select %p335, %s334, 0
      $region36: #{unet_dblock_forward.4} parent=31 // pred_fallthru
        _
      // Predicated region
      $region37: #{unet_dblock_forward.4} parent=31 // pred_check
        %p337 = pneg %p84
      $region38: #{unet_dblock_forward.4} parent=31 // pred_check_branch
        %339 = sbr.rel (%p337) target = $region40
      $region39: #{unet_dblock_forward.4} parent=31 // pred_region
        %p340 = scmp.lt.s32.totalorder %s23, 1
        %s341 = scalar_select %p340, %s23, 1
        %p342 = scmp.lt.s32.totalorder %s24, 7
        %s343 = scalar_select %p342, %s24, 7
        %s344 = smul.addr %s343, 8
        %s345 = smul.addr %s341, 64
        %s346 = sadd.s32 %s344, %s345
        %s347 = smul.addr %s346, 8
        %s348 = scalar_lea.vmem %s1, %s347
      $region40: #{unet_dblock_forward.4} parent=31 // pred_fallthru
        _
      // Predicated region
      $region41: #{unet_dblock_forward.4} parent=31 // pred_check
        %p349 = pneg %p118
      $region42: #{unet_dblock_forward.4} parent=31 // pred_check_branch
        %351 = sbr.rel (%p349) target = $region44
      $region43: #{unet_dblock_forward.4} parent=31 // pred_region
        %s352 = sadd.s32 %s24, 1
        %p353 = scmp.lt.s32.totalorder %s352, 7
        %s354 = scalar_select %p353, %s352, 7
        %p355 = scmp.lt.s32.totalorder %s23, 1
        %s356 = scalar_select %p355, %s23, 1
        %p357 = scmp.lt.s32.totalorder %s354, 7
        %s358 = scalar_select %p357, %s354, 7
        %s359 = smul.addr %s358, 8
        %s360 = smul.addr %s356, 64
        %s361 = sadd.s32 %s359, %s360
        %s362 = smul.addr %s361, 8
        %s363 = scalar_lea.vmem %s2, %s362
        %s364 = sadd.s32 %s24, 1
        %p365 = scmp.lt.s32.totalorder %s364, 7
        %s366 = scalar_select %p365, %s364, 7
      $region44: #{unet_dblock_forward.4} parent=31 // pred_fallthru
        _
    $region32: #{unet_dblock_forward.4} parent=5 // pred_fallthru
      _
    %p367 = scmp.le.s32.totalorder 1, %s16
    %p368 = scmp.lt.s32.totalorder %s16, 17
    %p369 = pnand %p367, %p368
    %p370 = pneg %p369
    // Predicated region
    $region45: #{unet_dblock_forward.4} parent=5 // pred_check
      _
    $region46: #{unet_dblock_forward.4} parent=5 // pred_check_branch
      %372 = sbr.rel (%p369) target = $region48
    $region47: #{unet_dblock_forward.4} parent=5 // pred_region
      %s373 = ssub.s32 %s16, 1
      %s374 = ssub.s32 %s26, 1
      %p375 = scmp.gt.s32.totalorder %s374, 0
      %s376 = scalar_select %p375, %s374, 0
      %p377 = scmp.lt.s32.totalorder %s25, 1
      %s378 = scalar_select %p377, %s25, 1
      %p379 = scmp.lt.s32.totalorder %s376, 7
      %s380 = scalar_select %p379, %s376, 7
      %s381 = smul.addr %s380, 8
      %s382 = smul.addr %s378, 64
      %s383 = sadd.s32 %s381, %s382
      %s384 = smul.addr %s383, 8
      %s385 = scalar_lea.vmem %s0, %s384
      %p386 = pneg %p62
      %p387 = pneg %p59
      %p388 = scmp.lt.s32.totalorder %s25, 1
      %s389 = scalar_select %p388, %s25, 1
      %p390 = scmp.lt.s32.totalorder %s26, 7
      %s391 = scalar_select %p390, %s26, 7
      %s392 = smul.addr %s391, 8
      %s393 = smul.addr %s389, 64
      %s394 = sadd.s32 %s392, %s393
      %s395 = smul.addr %s394, 8
      %s396 = scalar_lea.vmem %s1, %s395
      %p397 = pneg %p90
      %p398 = pneg %p87
      %s399 = sadd.s32 %s26, 1
      %p400 = scmp.lt.s32.totalorder %s399, 7
      %s401 = scalar_select %p400, %s399, 7
      %p402 = scmp.lt.s32.totalorder %s25, 1
      %s403 = scalar_select %p402, %s25, 1
      %p404 = scmp.lt.s32.totalorder %s401, 7
      %s405 = scalar_select %p404, %s401, 7
      %s406 = smul.addr %s405, 8
      %s407 = smul.addr %s403, 64
      %s408 = sadd.s32 %s406, %s407
      %s409 = smul.addr %s408, 8
      %s410 = scalar_lea.vmem %s2, %s409
      %p411 = pneg %p124
      %p412 = pneg %p121
      %p413 = pneg %p145
      %p414 = pneg %p142
      %p415 = pneg %p166
      %p416 = pneg %p163
      %p417 = pneg %p187
      %p418 = pneg %p184
      %p419 = pneg %p208
      %p420 = pneg %p205
      %p421 = pneg %p236
      %p422 = pneg %p233
      %p423 = scmp.lt.s32.totalorder %s25, 1
      %s424 = scalar_select %p423, %s25, 1
      %p425 = scmp.lt.s32.totalorder %s26, 7
      %s426 = scalar_select %p425, %s26, 7
      %s427 = smul.addr %s426, 8
      %s428 = smul.addr %s424, 64
      %s429 = sadd.s32 %s427, %s428
      %s430 = smul.addr %s429, 8
      %s431 = scalar_lea.vmem %s7, %s430
      %p432 = pneg %p262
      %p433 = pneg %p259
      %p434 = scmp.lt.s32.totalorder %s25, 1
      %s435 = scalar_select %p434, %s25, 1
      %s436 = scalar_lea.vmem %s8, %s435
      %p437 = pneg %p288
      %p438 = pneg %p285
      %p439 = scmp.lt.s32.totalorder %s25, 1
      %s440 = scalar_select %p439, %s25, 1
      %s441 = scalar_lea.vmem %s9, %s440
      %s442 = ssub.s32 %s26, 1
      %p443 = scmp.gt.s32.totalorder %s442, 0
      %s444 = scalar_select %p443, %s442, 0
      %p445 = scmp.lt.s32.totalorder %s25, 1
      %s446 = scalar_select %p445, %s25, 1
      %p447 = scmp.lt.s32.totalorder %s444, 7
      %s448 = scalar_select %p447, %s444, 7
      %s449 = smul.addr %s448, 8
      %s450 = smul.addr %s446, 64
      %s451 = sadd.s32 %s449, %s450
      %s452 = smul.addr %s451, 8
      %s453 = scalar_lea.vmem %s0, %s452
      %s454 = ssub.s32 %s26, 1
      %p455 = scmp.gt.s32.totalorder %s454, 0
      %s456 = scalar_select %p455, %s454, 0
      %p457 = scmp.lt.s32.totalorder %s25, 1
      %s458 = scalar_select %p457, %s25, 1
      %p459 = scmp.lt.s32.totalorder %s26, 7
      %s460 = scalar_select %p459, %s26, 7
      %s461 = smul.addr %s460, 8
      %s462 = smul.addr %s458, 64
      %s463 = sadd.s32 %s461, %s462
      %s464 = smul.addr %s463, 8
      %s465 = scalar_lea.vmem %s1, %s464
      %s466 = sadd.s32 %s26, 1
      %p467 = scmp.lt.s32.totalorder %s466, 7
      %s468 = scalar_select %p467, %s466, 7
      %p469 = scmp.lt.s32.totalorder %s25, 1
      %s470 = scalar_select %p469, %s25, 1
      %p471 = scmp.lt.s32.totalorder %s468, 7
      %s472 = scalar_select %p471, %s468, 7
      %s473 = smul.addr %s472, 8
      %s474 = smul.addr %s470, 64
      %s475 = sadd.s32 %s473, %s474
      %s476 = smul.addr %s475, 8
      %s477 = scalar_lea.vmem %s2, %s476
      %s478 = sadd.s32 %s26, 1
      %p479 = scmp.lt.s32.totalorder %s478, 7
      %s480 = scalar_select %p479, %s478, 7
      %p481 = scmp.lt.s32.totalorder %s25, 1
      %s482 = scalar_select %p481, %s25, 1
      %p483 = scmp.lt.s32.totalorder %s26, 7
      %s484 = scalar_select %p483, %s26, 7
      %s485 = smul.addr %s484, 8
      %s486 = smul.addr %s482, 64
      %s487 = sadd.s32 %s485, %s486
      %s488 = smul.addr %s487, 8
      %s489 = scalar_lea.vmem %s7, %s488
      %p490 = scmp.lt.s32.totalorder %s25, 1
      %s491 = scalar_select %p490, %s25, 1
      %s492 = scalar_lea.vmem %s8, %s491
      %p493 = scmp.lt.s32.totalorder %s25, 1
      %s494 = scalar_select %p493, %s25, 1
      %s495 = scalar_lea.vmem %s9, %s494
      %p496 = scmp.eq.s32.totalorder %s26, 0
      // Predicated region
      $region49: #{unet_dblock_forward.4} parent=47 // pred_check
        %p497 = pneg %p496
      $region50: #{unet_dblock_forward.4} parent=47 // pred_check_branch
        %499 = sbr.rel (%p497) target = $region52
      $region51: #{unet_dblock_forward.4} parent=47 // pred_region
        %vm500 = vcmask 57344
        %501 = vst.msk [vmem:[%s492] sm:$0x1] %vm500, 0.0
        %502 = vst.msk [vmem:[%s495] sm:$0x1] %vm500, 0.0
        %vm503 = vcmask 64512
        %504 = vst.msk [vmem:[#allocation2] sm:$0xff] %vm503, 0.0
        %vm505 = vcmask 58368
        %506 = vst.msk [vmem:[#allocation2 + $0x8] sm:$0x3] %vm505, 0.0
        %507 = vst.msk [vmem:[#allocation2 + $0x10] sm:$0xff] %vm503, 0.0
        %508 = vst.msk [vmem:[#allocation2 + $0x18] sm:$0x3] %vm505, 0.0
        %509 = vst.msk [vmem:[#allocation2 + $0x20] sm:$0xff] %vm503, 0.0
        %510 = vst.msk [vmem:[#allocation2 + $0x28] sm:$0x3] %vm505, 0.0
        %511 = vst.msk [vmem:[#allocation2 + $0x30] sm:$0xff] %vm503, 0.0
        %512 = vst.msk [vmem:[#allocation2 + $0x38] sm:$0x3] %vm505, 0.0
        %513 = vst.msk [vmem:[#allocation2 + $0x40] sm:$0xff] %vm503, 0.0
        %514 = vst.msk [vmem:[#allocation2 + $0x48] sm:$0x3] %vm505, 0.0
        %515 = vst.msk [vmem:[#allocation2 + $0x50] sm:$0xff] %vm503, 0.0
        %516 = vst.msk [vmem:[#allocation2 + $0x58] sm:$0x3] %vm505, 0.0
        %517 = vst.msk [vmem:[#allocation2 + $0x60] sm:$0xff] %vm503, 0.0
        %518 = vst.msk [vmem:[#allocation2 + $0x68] sm:$0x3] %vm505, 0.0
        %519 = vst.msk [vmem:[#allocation2 + $0x70] sm:$0xff] %vm503, 0.0
        %520 = vst.msk [vmem:[#allocation2 + $0x78] sm:$0x3] %vm505, 0.0
        %521 = vst.msk [vmem:[#allocation2 + $0x80] sm:$0xff] %vm503, 0.0
        %522 = vst.msk [vmem:[#allocation2 + $0x88] sm:$0x3] %vm505, 0.0
        %523 = vst.msk [vmem:[#allocation2 + $0x90] sm:$0xff] %vm503, 0.0
        %524 = vst.msk [vmem:[#allocation2 + $0x98] sm:$0x3] %vm505, 0.0
      $region52: #{unet_dblock_forward.4} parent=47 // pred_fallthru
        _
      %v525 = vld [vmem:[%s6] sm:$0x1]
      %v527 = vperm.slane %v525, 0
      %v529 = vadd.f32 %v527, 0.0
      %v530 = vld [vmem:[%s453] sm:$0xff]
      %v531 = vld [vmem:[%s453 + $0x8] sm:$0xff]
      %v532 = vld [vmem:[%s453 + $0x10] sm:$0xff]
      %v533 = vld [vmem:[%s453 + $0x18] sm:$0xff]
      %v534 = vld [vmem:[%s453 + $0x20] sm:$0xff]
      %v535 = vld [vmem:[%s453 + $0x28] sm:$0xff]
      %v536 = vld [vmem:[%s453 + $0x30] sm:$0xff]
      %v537 = vld [vmem:[%s453 + $0x38] sm:$0xff]
      %v538 = vld [vmem:[%s3] sm:$0x1]
      %v540 = vperm.slane %v538, 0
      %v542 = vmul.f32 %v530, %v540
      %v543 = vmul.f32 %v531, %v540
      %v544 = vmul.f32 %v532, %v540
      %v545 = vmul.f32 %v533, %v540
      %v546 = vmul.f32 %v534, %v540
      %v547 = vmul.f32 %v535, %v540
      %v548 = vmul.f32 %v536, %v540
      %v549 = vmul.f32 %v537, %v540
      %v550 = vld [vmem:[%s4] sm:$0x1]
      %v552 = vperm.slane %v550, 0
      %v554 = vadd.f32 %v542, %v552
      %v555 = vadd.f32 %v543, %v552
      %v556 = vadd.f32 %v544, %v552
      %v557 = vadd.f32 %v545, %v552
      %v558 = vadd.f32 %v546, %v552
      %v559 = vadd.f32 %v547, %v552
      %v560 = vadd.f32 %v548, %v552
      %v561 = vadd.f32 %v549, %v552
      %s562 = sadd.s32 %s26, 4294967295
      %p563 = scmp.ge.s32.totalorder %s562, 0
      %p564 = scmp.lt.s32.totalorder %s562, 8
      %p565 = pnand %p563, %p564
      %p566 = pneg %p565
      %s567 = scalar_select %p566, 1.0, 0.0
      %v568 = vstv %s567
      %v569 = vmul.f32 %v554, %v568
      %v570 = vmul.f32 %v555, %v568
      %v571 = vmul.f32 %v556, %v568
      %v572 = vmul.f32 %v557, %v568
      %v573 = vmul.f32 %v558, %v568
      %v574 = vmul.f32 %v559, %v568
      %v575 = vmul.f32 %v560, %v568
      %v576 = vmul.f32 %v561, %v568
      %s577 = scalar_lea.vmem [#allocation2], 16
      %vm578 = vcmask 64512
      %579 = vst.msk [vmem:[%s577 + $0x1] sm:$0xff] %vm578, %v569
      %580 = vst.msk [vmem:[%s577 + $0x11] sm:$0xff] %vm578, %v570
      %581 = vst.msk [vmem:[%s577 + $0x21] sm:$0xff] %vm578, %v571
      %582 = vst.msk [vmem:[%s577 + $0x31] sm:$0xff] %vm578, %v572
      %583 = vst.msk [vmem:[%s577 + $0x41] sm:$0xff] %vm578, %v573
      %584 = vst.msk [vmem:[%s577 + $0x51] sm:$0xff] %vm578, %v574
      %585 = vst.msk [vmem:[%s577 + $0x61] sm:$0xff] %vm578, %v575
      %586 = vst.msk [vmem:[%s577 + $0x71] sm:$0xff] %vm578, %v576
      %v587 = vld [vmem:[#allocation2] sm:$0xff]
      %v588 = vld [vmem:[#allocation2 + $0x10] sm:$0xff]
      %v589 = vld [vmem:[#allocation2 + $0x20] sm:$0xff]
      %v590 = vld [vmem:[#allocation2 + $0x30] sm:$0xff]
      %v591 = vld [vmem:[#allocation2 + $0x40] sm:$0xff]
      %v592 = vld [vmem:[#allocation2 + $0x50] sm:$0xff]
      %v593 = vld [vmem:[#allocation2 + $0x60] sm:$0xff]
      %v594 = vld [vmem:[#allocation2 + $0x70] sm:$0xff]
      %v595 = vld [vmem:[%s5] sm:$0xff]
      %v597 = vsel %vm578, %v587, 0
      %v600 = vsel %vm578, %v588, 0
      %v603 = vsel %vm578, %v589, 0
      %v606 = vsel %vm578, %v590, 0
      %v609 = vsel %vm578, %v591, 0
      %v612 = vsel %vm578, %v592, 0
      %v615 = vsel %vm578, %v593, 0
      %v618 = vsel %vm578, %v594, 0
      %620 = vmatpush.msra.mxu0 0.0
      %621 = vmatpush.msra.mxu0 0.0
      %622 = vmatpush.msra.mxu0 0.0
      %623 = vmatpush.msra.mxu0 0.0
      %624 = vmatpush.msra.mxu0 0.0
      %625 = vmatpush.msra.mxu0 0.0
      %626 = vmatpush.msra.mxu0 0.0
      %627 = vmatpush.msra.mxu0 0.0
      %628 = vmatpush.msra.mxu0 0.0
      %629 = vmatpush.msra.mxu0 0.0
      %630 = vmatpush.msra.mxu0 0.0
      %631 = vmatpush.msra.mxu0 0.0
      %632 = vmatpush.msra.mxu0 0.0
      %633 = vmatpush.msra.mxu0 0.0
      %634 = vmatpush.msra.mxu0 0.0
      %635 = vmatpush.msra.mxu0 %v595
      %636 = vmatmul.f32.gmra.mxu0 %v597
      %v637 = vpop.f32.mrf.mxu0
      %v638 = vadd.f32 0.0, %v637
      %639 = vmatmul.f32.gmra.mxu0 %v600
      %v640 = vpop.f32.mrf.mxu0
      %v641 = vadd.f32 0.0, %v640
      %642 = vmatmul.f32.gmra.mxu0 %v603
      %v643 = vpop.f32.mrf.mxu0
      %v644 = vadd.f32 0.0, %v643
      %645 = vmatmul.f32.gmra.mxu0 %v606
      %v646 = vpop.f32.mrf.mxu0
      %v647 = vadd.f32 0.0, %v646
      %648 = vmatmul.f32.gmra.mxu0 %v609
      %v649 = vpop.f32.mrf.mxu0
      %v650 = vadd.f32 0.0, %v649
      %651 = vmatmul.f32.gmra.mxu0 %v612
      %v652 = vpop.f32.mrf.mxu0
      %v653 = vadd.f32 0.0, %v652
      %654 = vmatmul.f32.gmra.mxu0 %v615
      %v655 = vpop.f32.mrf.mxu0
      %v656 = vadd.f32 0.0, %v655
      %657 = vmatmul.f32.gmra.mxu0 %v618
      %v658 = vpop.f32.mrf.mxu0
      %v659 = vadd.f32 0.0, %v658
      %660 = vdwg.mxu0
      %v661 = vadd.f32 %v529, %v638
      %v662 = vadd.f32 %v529, %v641
      %v663 = vadd.f32 %v529, %v644
      %v664 = vadd.f32 %v529, %v647
      %v665 = vadd.f32 %v529, %v650
      %v666 = vadd.f32 %v529, %v653
      %v667 = vadd.f32 %v529, %v656
      %v668 = vadd.f32 %v529, %v659
      %v669 = vld [vmem:[#allocation2 + $0x1] sm:$0xff]
      %v670 = vld [vmem:[#allocation2 + $0x11] sm:$0xff]
      %v671 = vld [vmem:[#allocation2 + $0x21] sm:$0xff]
      %v672 = vld [vmem:[#allocation2 + $0x31] sm:$0xff]
      %v673 = vld [vmem:[#allocation2 + $0x41] sm:$0xff]
      %v674 = vld [vmem:[#allocation2 + $0x51] sm:$0xff]
      %v675 = vld [vmem:[#allocation2 + $0x61] sm:$0xff]
      %v676 = vld [vmem:[#allocation2 + $0x71] sm:$0xff]
      %s677 = scalar_lea.vmem %s5, 8
      %v678 = vld [vmem:[%s677] sm:$0xff]
      %v680 = vsel %vm578, %v669, 0
      %v683 = vsel %vm578, %v670, 0
      %v686 = vsel %vm578, %v671, 0
      %v689 = vsel %vm578, %v672, 0
      %v692 = vsel %vm578, %v673, 0
      %v695 = vsel %vm578, %v674, 0
      %v698 = vsel %vm578, %v675, 0
      %v701 = vsel %vm578, %v676, 0
      %703 = vmatpush.msra.mxu0 0.0
      %704 = vmatpush.msra.mxu0 0.0
      %705 = vmatpush.msra.mxu0 0.0
      %706 = vmatpush.msra.mxu0 0.0
      %707 = vmatpush.msra.mxu0 0.0
      %708 = vmatpush.msra.mxu0 0.0
      %709 = vmatpush.msra.mxu0 0.0
      %710 = vmatpush.msra.mxu0 0.0
      %711 = vmatpush.msra.mxu0 0.0
      %712 = vmatpush.msra.mxu0 0.0
      %713 = vmatpush.msra.mxu0 0.0
      %714 = vmatpush.msra.mxu0 0.0
      %715 = vmatpush.msra.mxu0 0.0
      %716 = vmatpush.msra.mxu0 0.0
      %717 = vmatpush.msra.mxu0 0.0
      %718 = vmatpush.msra.mxu0 %v678
      %719 = vmatmul.f32.gmra.mxu0 %v680
      %v720 = vpop.f32.mrf.mxu0
      %v721 = vadd.f32 0.0, %v720
      %722 = vmatmul.f32.gmra.mxu0 %v683
      %v723 = vpop.f32.mrf.mxu0
      %v724 = vadd.f32 0.0, %v723
      %725 = vmatmul.f32.gmra.mxu0 %v686
      %v726 = vpop.f32.mrf.mxu0
      %v727 = vadd.f32 0.0, %v726
      %728 = vmatmul.f32.gmra.mxu0 %v689
      %v729 = vpop.f32.mrf.mxu0
      %v730 = vadd.f32 0.0, %v729
      %731 = vmatmul.f32.gmra.mxu0 %v692
      %v732 = vpop.f32.mrf.mxu0
      %v733 = vadd.f32 0.0, %v732
      %734 = vmatmul.f32.gmra.mxu0 %v695
      %v735 = vpop.f32.mrf.mxu0
      %v736 = vadd.f32 0.0, %v735
      %737 = vmatmul.f32.gmra.mxu0 %v698
      %v738 = vpop.f32.mrf.mxu0
      %v739 = vadd.f32 0.0, %v738
      %740 = vmatmul.f32.gmra.mxu0 %v701
      %v741 = vpop.f32.mrf.mxu0
      %v742 = vadd.f32 0.0, %v741
      %743 = vdwg.mxu0
      %v744 = vadd.f32 %v661, %v721
      %v745 = vadd.f32 %v662, %v724
      %v746 = vadd.f32 %v663, %v727
      %v747 = vadd.f32 %v664, %v730
      %v748 = vadd.f32 %v665, %v733
      %v749 = vadd.f32 %v666, %v736
      %v750 = vadd.f32 %v667, %v739
      %v751 = vadd.f32 %v668, %v742
      %v752 = vld [vmem:[#allocation2 + $0x2] sm:$0xff]
      %v753 = vld [vmem:[#allocation2 + $0x12] sm:$0xff]
      %v754 = vld [vmem:[#allocation2 + $0x22] sm:$0xff]
      %v755 = vld [vmem:[#allocation2 + $0x32] sm:$0xff]
      %v756 = vld [vmem:[#allocation2 + $0x42] sm:$0xff]
      %v757 = vld [vmem:[#allocation2 + $0x52] sm:$0xff]
      %v758 = vld [vmem:[#allocation2 + $0x62] sm:$0xff]
      %v759 = vld [vmem:[#allocation2 + $0x72] sm:$0xff]
      %s760 = scalar_lea.vmem %s5, 16
      %v761 = vld [vmem:[%s760] sm:$0xff]
      %v763 = vsel %vm578, %v752, 0
      %v766 = vsel %vm578, %v753, 0
      %v769 = vsel %vm578, %v754, 0
      %v772 = vsel %vm578, %v755, 0
      %v775 = vsel %vm578, %v756, 0
      %v778 = vsel %vm578, %v757, 0
      %v781 = vsel %vm578, %v758, 0
      %v784 = vsel %vm578, %v759, 0
      %786 = vmatpush.msra.mxu0 0.0
      %787 = vmatpush.msra.mxu0 0.0
      %788 = vmatpush.msra.mxu0 0.0
      %789 = vmatpush.msra.mxu0 0.0
      %790 = vmatpush.msra.mxu0 0.0
      %791 = vmatpush.msra.mxu0 0.0
      %792 = vmatpush.msra.mxu0 0.0
      %793 = vmatpush.msra.mxu0 0.0
      %794 = vmatpush.msra.mxu0 0.0
      %795 = vmatpush.msra.mxu0 0.0
      %796 = vmatpush.msra.mxu0 0.0
      %797 = vmatpush.msra.mxu0 0.0
      %798 = vmatpush.msra.mxu0 0.0
      %799 = vmatpush.msra.mxu0 0.0
      %800 = vmatpush.msra.mxu0 0.0
      %801 = vmatpush.msra.mxu0 %v761
      %802 = vmatmul.f32.gmra.mxu0 %v763
      %v803 = vpop.f32.mrf.mxu0
      %v804 = vadd.f32 0.0, %v803
      %805 = vmatmul.f32.gmra.mxu0 %v766
      %v806 = vpop.f32.mrf.mxu0
      %v807 = vadd.f32 0.0, %v806
      %808 = vmatmul.f32.gmra.mxu0 %v769
      %v809 = vpop.f32.mrf.mxu0
      %v810 = vadd.f32 0.0, %v809
      %811 = vmatmul.f32.gmra.mxu0 %v772
      %v812 = vpop.f32.mrf.mxu0
      %v813 = vadd.f32 0.0, %v812
      %814 = vmatmul.f32.gmra.mxu0 %v775
      %v815 = vpop.f32.mrf.mxu0
      %v816 = vadd.f32 0.0, %v815
      %817 = vmatmul.f32.gmra.mxu0 %v778
      %v818 = vpop.f32.mrf.mxu0
      %v819 = vadd.f32 0.0, %v818
      %820 = vmatmul.f32.gmra.mxu0 %v781
      %v821 = vpop.f32.mrf.mxu0
      %v822 = vadd.f32 0.0, %v821
      %823 = vmatmul.f32.gmra.mxu0 %v784
      %v824 = vpop.f32.mrf.mxu0
      %v825 = vadd.f32 0.0, %v824
      %826 = vdwg.mxu0
      %v827 = vadd.f32 %v744, %v804
      %v828 = vadd.f32 %v745, %v807
      %v829 = vadd.f32 %v746, %v810
      %v830 = vadd.f32 %v747, %v813
      %v831 = vadd.f32 %v748, %v816
      %v832 = vadd.f32 %v749, %v819
      %v833 = vadd.f32 %v750, %v822
      %v834 = vadd.f32 %v751, %v825
      %v835 = vld [vmem:[%s577] sm:$0xff]
      %v836 = vld [vmem:[%s577 + $0x10] sm:$0xff]
      %v837 = vld [vmem:[%s577 + $0x20] sm:$0xff]
      %v838 = vld [vmem:[%s577 + $0x30] sm:$0xff]
      %v839 = vld [vmem:[%s577 + $0x40] sm:$0xff]
      %v840 = vld [vmem:[%s577 + $0x50] sm:$0xff]
      %v841 = vld [vmem:[%s577 + $0x60] sm:$0xff]
      %v842 = vld [vmem:[%s577 + $0x70] sm:$0xff]
      %s843 = scalar_lea.vmem %s5, 24
      %v844 = vld [vmem:[%s843] sm:$0xff]
      %v846 = vsel %vm578, %v835, 0
      %v849 = vsel %vm578, %v836, 0
      %v852 = vsel %vm578, %v837, 0
      %v855 = vsel %vm578, %v838, 0
      %v858 = vsel %vm578, %v839, 0
      %v861 = vsel %vm578, %v840, 0
      %v864 = vsel %vm578, %v841, 0
      %v867 = vsel %vm578, %v842, 0
      %869 = vmatpush.msra.mxu0 0.0
      %870 = vmatpush.msra.mxu0 0.0
      %871 = vmatpush.msra.mxu0 0.0
      %872 = vmatpush.msra.mxu0 0.0
      %873 = vmatpush.msra.mxu0 0.0
      %874 = vmatpush.msra.mxu0 0.0
      %875 = vmatpush.msra.mxu0 0.0
      %876 = vmatpush.msra.mxu0 0.0
      %877 = vmatpush.msra.mxu0 0.0
      %878 = vmatpush.msra.mxu0 0.0
      %879 = vmatpush.msra.mxu0 0.0
      %880 = vmatpush.msra.mxu0 0.0
      %881 = vmatpush.msra.mxu0 0.0
      %882 = vmatpush.msra.mxu0 0.0
      %883 = vmatpush.msra.mxu0 0.0
      %884 = vmatpush.msra.mxu0 %v844
      %885 = vmatmul.f32.gmra.mxu0 %v846
      %v886 = vpop.f32.mrf.mxu0
      %v887 = vadd.f32 0.0, %v886
      %888 = vmatmul.f32.gmra.mxu0 %v849
      %v889 = vpop.f32.mrf.mxu0
      %v890 = vadd.f32 0.0, %v889
      %891 = vmatmul.f32.gmra.mxu0 %v852
      %v892 = vpop.f32.mrf.mxu0
      %v893 = vadd.f32 0.0, %v892
      %894 = vmatmul.f32.gmra.mxu0 %v855
      %v895 = vpop.f32.mrf.mxu0
      %v896 = vadd.f32 0.0, %v895
      %897 = vmatmul.f32.gmra.mxu0 %v858
      %v898 = vpop.f32.mrf.mxu0
      %v899 = vadd.f32 0.0, %v898
      %900 = vmatmul.f32.gmra.mxu0 %v861
      %v901 = vpop.f32.mrf.mxu0
      %v902 = vadd.f32 0.0, %v901
      %903 = vmatmul.f32.gmra.mxu0 %v864
      %v904 = vpop.f32.mrf.mxu0
      %v905 = vadd.f32 0.0, %v904
      %906 = vmatmul.f32.gmra.mxu0 %v867
      %v907 = vpop.f32.mrf.mxu0
      %v908 = vadd.f32 0.0, %v907
      %909 = vdwg.mxu0
      %v910 = vadd.f32 %v827, %v887
      %v911 = vadd.f32 %v828, %v890
      %v912 = vadd.f32 %v829, %v893
      %v913 = vadd.f32 %v830, %v896
      %v914 = vadd.f32 %v831, %v899
      %v915 = vadd.f32 %v832, %v902
      %v916 = vadd.f32 %v833, %v905
      %v917 = vadd.f32 %v834, %v908
      %v918 = vld [vmem:[%s577 + $0x1] sm:$0xff]
      %v919 = vld [vmem:[%s577 + $0x11] sm:$0xff]
      %v920 = vld [vmem:[%s577 + $0x21] sm:$0xff]
      %v921 = vld [vmem:[%s577 + $0x31] sm:$0xff]
      %v922 = vld [vmem:[%s577 + $0x41] sm:$0xff]
      %v923 = vld [vmem:[%s577 + $0x51] sm:$0xff]
      %v924 = vld [vmem:[%s577 + $0x61] sm:$0xff]
      %v925 = vld [vmem:[%s577 + $0x71] sm:$0xff]
      %s926 = scalar_lea.vmem %s5, 32
      %v927 = vld [vmem:[%s926] sm:$0xff]
      %v929 = vsel %vm578, %v918, 0
      %v932 = vsel %vm578, %v919, 0
      %v935 = vsel %vm578, %v920, 0
      %v938 = vsel %vm578, %v921, 0
      %v941 = vsel %vm578, %v922, 0
      %v944 = vsel %vm578, %v923, 0
      %v947 = vsel %vm578, %v924, 0
      %v950 = vsel %vm578, %v925, 0
      %952 = vmatpush.msra.mxu0 0.0
      %953 = vmatpush.msra.mxu0 0.0
      %954 = vmatpush.msra.mxu0 0.0
      %955 = vmatpush.msra.mxu0 0.0
      %956 = vmatpush.msra.mxu0 0.0
      %957 = vmatpush.msra.mxu0 0.0
      %958 = vmatpush.msra.mxu0 0.0
      %959 = vmatpush.msra.mxu0 0.0
      %960 = vmatpush.msra.mxu0 0.0
      %961 = vmatpush.msra.mxu0 0.0
      %962 = vmatpush.msra.mxu0 0.0
      %963 = vmatpush.msra.mxu0 0.0
      %964 = vmatpush.msra.mxu0 0.0
      %965 = vmatpush.msra.mxu0 0.0
      %966 = vmatpush.msra.mxu0 0.0
      %967 = vmatpush.msra.mxu0 %v927
      %968 = vmatmul.f32.gmra.mxu0 %v929
      %v969 = vpop.f32.mrf.mxu0
      %v970 = vadd.f32 0.0, %v969
      %971 = vmatmul.f32.gmra.mxu0 %v932
      %v972 = vpop.f32.mrf.mxu0
      %v973 = vadd.f32 0.0, %v972
      %974 = vmatmul.f32.gmra.mxu0 %v935
      %v975 = vpop.f32.mrf.mxu0
      %v976 = vadd.f32 0.0, %v975
      %977 = vmatmul.f32.gmra.mxu0 %v938
      %v978 = vpop.f32.mrf.mxu0
      %v979 = vadd.f32 0.0, %v978
      %980 = vmatmul.f32.gmra.mxu0 %v941
      %v981 = vpop.f32.mrf.mxu0
      %v982 = vadd.f32 0.0, %v981
      %983 = vmatmul.f32.gmra.mxu0 %v944
      %v984 = vpop.f32.mrf.mxu0
      %v985 = vadd.f32 0.0, %v984
      %986 = vmatmul.f32.gmra.mxu0 %v947
      %v987 = vpop.f32.mrf.mxu0
      %v988 = vadd.f32 0.0, %v987
      %989 = vmatmul.f32.gmra.mxu0 %v950
      %v990 = vpop.f32.mrf.mxu0
      %v991 = vadd.f32 0.0, %v990
      %992 = vdwg.mxu0
      %v993 = vadd.f32 %v910, %v970
      %v994 = vadd.f32 %v911, %v973
      %v995 = vadd.f32 %v912, %v976
      %v996 = vadd.f32 %v913, %v979
      %v997 = vadd.f32 %v914, %v982
      %v998 = vadd.f32 %v915, %v985
      %v999 = vadd.f32 %v916, %v988
      %v1000 = vadd.f32 %v917, %v991
      %v1001 = vld [vmem:[%s577 + $0x2] sm:$0xff]
      %v1002 = vld [vmem:[%s577 + $0x12] sm:$0xff]
      %v1003 = vld [vmem:[%s577 + $0x22] sm:$0xff]
      %v1004 = vld [vmem:[%s577 + $0x32] sm:$0xff]
      %v1005 = vld [vmem:[%s577 + $0x42] sm:$0xff]
      %v1006 = vld [vmem:[%s577 + $0x52] sm:$0xff]
      %v1007 = vld [vmem:[%s577 + $0x62] sm:$0xff]
      %v1008 = vld [vmem:[%s577 + $0x72] sm:$0xff]
      %s1009 = scalar_lea.vmem %s5, 40
      %v1010 = vld [vmem:[%s1009] sm:$0xff]
      %v1012 = vsel %vm578, %v1001, 0
      %v1015 = vsel %vm578, %v1002, 0
      %v1018 = vsel %vm578, %v1003, 0
      %v1021 = vsel %vm578, %v1004, 0
      %v1024 = vsel %vm578, %v1005, 0
      %v1027 = vsel %vm578, %v1006, 0
      %v1030 = vsel %vm578, %v1007, 0
      %v1033 = vsel %vm578, %v1008, 0
      %1035 = vmatpush.msra.mxu0 0.0
      %1036 = vmatpush.msra.mxu0 0.0
      %1037 = vmatpush.msra.mxu0 0.0
      %1038 = vmatpush.msra.mxu0 0.0
      %1039 = vmatpush.msra.mxu0 0.0
      %1040 = vmatpush.msra.mxu0 0.0
      %1041 = vmatpush.msra.mxu0 0.0
      %1042 = vmatpush.msra.mxu0 0.0
      %1043 = vmatpush.msra.mxu0 0.0
      %1044 = vmatpush.msra.mxu0 0.0
      %1045 = vmatpush.msra.mxu0 0.0
      %1046 = vmatpush.msra.mxu0 0.0
      %1047 = vmatpush.msra.mxu0 0.0
      %1048 = vmatpush.msra.mxu0 0.0
      %1049 = vmatpush.msra.mxu0 0.0
      %1050 = vmatpush.msra.mxu0 %v1010
      %1051 = vmatmul.f32.gmra.mxu0 %v1012
      %v1052 = vpop.f32.mrf.mxu0
      %v1053 = vadd.f32 0.0, %v1052
      %1054 = vmatmul.f32.gmra.mxu0 %v1015
      %v1055 = vpop.f32.mrf.mxu0
      %v1056 = vadd.f32 0.0, %v1055
      %1057 = vmatmul.f32.gmra.mxu0 %v1018
      %v1058 = vpop.f32.mrf.mxu0
      %v1059 = vadd.f32 0.0, %v1058
      %1060 = vmatmul.f32.gmra.mxu0 %v1021
      %v1061 = vpop.f32.mrf.mxu0
      %v1062 = vadd.f32 0.0, %v1061
      %1063 = vmatmul.f32.gmra.mxu0 %v1024
      %v1064 = vpop.f32.mrf.mxu0
      %v1065 = vadd.f32 0.0, %v1064
      %1066 = vmatmul.f32.gmra.mxu0 %v1027
      %v1067 = vpop.f32.mrf.mxu0
      %v1068 = vadd.f32 0.0, %v1067
      %1069 = vmatmul.f32.gmra.mxu0 %v1030
      %v1070 = vpop.f32.mrf.mxu0
      %v1071 = vadd.f32 0.0, %v1070
      %1072 = vmatmul.f32.gmra.mxu0 %v1033
      %v1073 = vpop.f32.mrf.mxu0
      %v1074 = vadd.f32 0.0, %v1073
      %1075 = vdwg.mxu0
      %v1076 = vadd.f32 %v993, %v1053
      %v1077 = vadd.f32 %v994, %v1056
      %v1078 = vadd.f32 %v995, %v1059
      %v1079 = vadd.f32 %v996, %v1062
      %v1080 = vadd.f32 %v997, %v1065
      %v1081 = vadd.f32 %v998, %v1068
      %v1082 = vadd.f32 %v999, %v1071
      %v1083 = vadd.f32 %v1000, %v1074
      %s1084 = scalar_lea.vmem [#allocation2], 32
      %v1085 = vld [vmem:[%s1084] sm:$0xff]
      %v1086 = vld [vmem:[%s1084 + $0x10] sm:$0xff]
      %v1087 = vld [vmem:[%s1084 + $0x20] sm:$0xff]
      %v1088 = vld [vmem:[%s1084 + $0x30] sm:$0xff]
      %v1089 = vld [vmem:[%s1084 + $0x40] sm:$0xff]
      %v1090 = vld [vmem:[%s1084 + $0x50] sm:$0xff]
      %v1091 = vld [vmem:[%s1084 + $0x60] sm:$0xff]
      %v1092 = vld [vmem:[%s1084 + $0x70] sm:$0xff]
      %s1093 = scalar_lea.vmem %s5, 48
      %v1094 = vld [vmem:[%s1093] sm:$0xff]
      %v1096 = vsel %vm578, %v1085, 0
      %v1099 = vsel %vm578, %v1086, 0
      %v1102 = vsel %vm578, %v1087, 0
      %v1105 = vsel %vm578, %v1088, 0
      %v1108 = vsel %vm578, %v1089, 0
      %v1111 = vsel %vm578, %v1090, 0
      %v1114 = vsel %vm578, %v1091, 0
      %v1117 = vsel %vm578, %v1092, 0
      %1119 = vmatpush.msra.mxu0 0.0
      %1120 = vmatpush.msra.mxu0 0.0
      %1121 = vmatpush.msra.mxu0 0.0
      %1122 = vmatpush.msra.mxu0 0.0
      %1123 = vmatpush.msra.mxu0 0.0
      %1124 = vmatpush.msra.mxu0 0.0
      %1125 = vmatpush.msra.mxu0 0.0
      %1126 = vmatpush.msra.mxu0 0.0
      %1127 = vmatpush.msra.mxu0 0.0
      %1128 = vmatpush.msra.mxu0 0.0
      %1129 = vmatpush.msra.mxu0 0.0
      %1130 = vmatpush.msra.mxu0 0.0
      %1131 = vmatpush.msra.mxu0 0.0
      %1132 = vmatpush.msra.mxu0 0.0
      %1133 = vmatpush.msra.mxu0 0.0
      %1134 = vmatpush.msra.mxu0 %v1094
      %1135 = vmatmul.f32.gmra.mxu0 %v1096
      %v1136 = vpop.f32.mrf.mxu0
      %v1137 = vadd.f32 0.0, %v1136
      %1138 = vmatmul.f32.gmra.mxu0 %v1099
      %v1139 = vpop.f32.mrf.mxu0
      %v1140 = vadd.f32 0.0, %v1139
      %1141 = vmatmul.f32.gmra.mxu0 %v1102
      %v1142 = vpop.f32.mrf.mxu0
      %v1143 = vadd.f32 0.0, %v1142
      %1144 = vmatmul.f32.gmra.mxu0 %v1105
      %v1145 = vpop.f32.mrf.mxu0
      %v1146 = vadd.f32 0.0, %v1145
      %1147 = vmatmul.f32.gmra.mxu0 %v1108
      %v1148 = vpop.f32.mrf.mxu0
      %v1149 = vadd.f32 0.0, %v1148
      %1150 = vmatmul.f32.gmra.mxu0 %v1111
      %v1151 = vpop.f32.mrf.mxu0
      %v1152 = vadd.f32 0.0, %v1151
      %1153 = vmatmul.f32.gmra.mxu0 %v1114
      %v1154 = vpop.f32.mrf.mxu0
      %v1155 = vadd.f32 0.0, %v1154
      %1156 = vmatmul.f32.gmra.mxu0 %v1117
      %v1157 = vpop.f32.mrf.mxu0
      %v1158 = vadd.f32 0.0, %v1157
      %1159 = vdwg.mxu0
      %v1160 = vadd.f32 %v1076, %v1137
      %v1161 = vadd.f32 %v1077, %v1140
      %v1162 = vadd.f32 %v1078, %v1143
      %v1163 = vadd.f32 %v1079, %v1146
      %v1164 = vadd.f32 %v1080, %v1149
      %v1165 = vadd.f32 %v1081, %v1152
      %v1166 = vadd.f32 %v1082, %v1155
      %v1167 = vadd.f32 %v1083, %v1158
      %v1168 = vld [vmem:[%s1084 + $0x1] sm:$0xff]
      %v1169 = vld [vmem:[%s1084 + $0x11] sm:$0xff]
      %v1170 = vld [vmem:[%s1084 + $0x21] sm:$0xff]
      %v1171 = vld [vmem:[%s1084 + $0x31] sm:$0xff]
      %v1172 = vld [vmem:[%s1084 + $0x41] sm:$0xff]
      %v1173 = vld [vmem:[%s1084 + $0x51] sm:$0xff]
      %v1174 = vld [vmem:[%s1084 + $0x61] sm:$0xff]
      %v1175 = vld [vmem:[%s1084 + $0x71] sm:$0xff]
      %s1176 = scalar_lea.vmem %s5, 56
      %v1177 = vld [vmem:[%s1176] sm:$0xff]
      %v1179 = vsel %vm578, %v1168, 0
      %v1182 = vsel %vm578, %v1169, 0
      %v1185 = vsel %vm578, %v1170, 0
      %v1188 = vsel %vm578, %v1171, 0
      %v1191 = vsel %vm578, %v1172, 0
      %v1194 = vsel %vm578, %v1173, 0
      %v1197 = vsel %vm578, %v1174, 0
      %v1200 = vsel %vm578, %v1175, 0
      %1202 = vmatpush.msra.mxu0 0.0
      %1203 = vmatpush.msra.mxu0 0.0
      %1204 = vmatpush.msra.mxu0 0.0
      %1205 = vmatpush.msra.mxu0 0.0
      %1206 = vmatpush.msra.mxu0 0.0
      %1207 = vmatpush.msra.mxu0 0.0
      %1208 = vmatpush.msra.mxu0 0.0
      %1209 = vmatpush.msra.mxu0 0.0
      %1210 = vmatpush.msra.mxu0 0.0
      %1211 = vmatpush.msra.mxu0 0.0
      %1212 = vmatpush.msra.mxu0 0.0
      %1213 = vmatpush.msra.mxu0 0.0
      %1214 = vmatpush.msra.mxu0 0.0
      %1215 = vmatpush.msra.mxu0 0.0
      %1216 = vmatpush.msra.mxu0 0.0
      %1217 = vmatpush.msra.mxu0 %v1177
      %1218 = vmatmul.f32.gmra.mxu0 %v1179
      %v1219 = vpop.f32.mrf.mxu0
      %v1220 = vadd.f32 0.0, %v1219
      %1221 = vmatmul.f32.gmra.mxu0 %v1182
      %v1222 = vpop.f32.mrf.mxu0
      %v1223 = vadd.f32 0.0, %v1222
      %1224 = vmatmul.f32.gmra.mxu0 %v1185
      %v1225 = vpop.f32.mrf.mxu0
      %v1226 = vadd.f32 0.0, %v1225
      %1227 = vmatmul.f32.gmra.mxu0 %v1188
      %v1228 = vpop.f32.mrf.mxu0
      %v1229 = vadd.f32 0.0, %v1228
      %1230 = vmatmul.f32.gmra.mxu0 %v1191
      %v1231 = vpop.f32.mrf.mxu0
      %v1232 = vadd.f32 0.0, %v1231
      %1233 = vmatmul.f32.gmra.mxu0 %v1194
      %v1234 = vpop.f32.mrf.mxu0
      %v1235 = vadd.f32 0.0, %v1234
      %1236 = vmatmul.f32.gmra.mxu0 %v1197
      %v1237 = vpop.f32.mrf.mxu0
      %v1238 = vadd.f32 0.0, %v1237
      %1239 = vmatmul.f32.gmra.mxu0 %v1200
      %v1240 = vpop.f32.mrf.mxu0
      %v1241 = vadd.f32 0.0, %v1240
      %1242 = vdwg.mxu0
      %v1243 = vadd.f32 %v1160, %v1220
      %v1244 = vadd.f32 %v1161, %v1223
      %v1245 = vadd.f32 %v1162, %v1226
      %v1246 = vadd.f32 %v1163, %v1229
      %v1247 = vadd.f32 %v1164, %v1232
      %v1248 = vadd.f32 %v1165, %v1235
      %v1249 = vadd.f32 %v1166, %v1238
      %v1250 = vadd.f32 %v1167, %v1241
      %v1251 = vld [vmem:[%s1084 + $0x2] sm:$0xff]
      %v1252 = vld [vmem:[%s1084 + $0x12] sm:$0xff]
      %v1253 = vld [vmem:[%s1084 + $0x22] sm:$0xff]
      %v1254 = vld [vmem:[%s1084 + $0x32] sm:$0xff]
      %v1255 = vld [vmem:[%s1084 + $0x42] sm:$0xff]
      %v1256 = vld [vmem:[%s1084 + $0x52] sm:$0xff]
      %v1257 = vld [vmem:[%s1084 + $0x62] sm:$0xff]
      %v1258 = vld [vmem:[%s1084 + $0x72] sm:$0xff]
      %s1259 = scalar_lea.vmem %s5, 64
      %v1260 = vld [vmem:[%s1259] sm:$0xff]
      %v1262 = vsel %vm578, %v1251, 0
      %v1265 = vsel %vm578, %v1252, 0
      %v1268 = vsel %vm578, %v1253, 0
      %v1271 = vsel %vm578, %v1254, 0
      %v1274 = vsel %vm578, %v1255, 0
      %v1277 = vsel %vm578, %v1256, 0
      %v1280 = vsel %vm578, %v1257, 0
      %v1283 = vsel %vm578, %v1258, 0
      %1285 = vmatpush.msra.mxu0 0.0
      %1286 = vmatpush.msra.mxu0 0.0
      %1287 = vmatpush.msra.mxu0 0.0
      %1288 = vmatpush.msra.mxu0 0.0
      %1289 = vmatpush.msra.mxu0 0.0
      %1290 = vmatpush.msra.mxu0 0.0
      %1291 = vmatpush.msra.mxu0 0.0
      %1292 = vmatpush.msra.mxu0 0.0
      %1293 = vmatpush.msra.mxu0 0.0
      %1294 = vmatpush.msra.mxu0 0.0
      %1295 = vmatpush.msra.mxu0 0.0
      %1296 = vmatpush.msra.mxu0 0.0
      %1297 = vmatpush.msra.mxu0 0.0
      %1298 = vmatpush.msra.mxu0 0.0
      %1299 = vmatpush.msra.mxu0 0.0
      %1300 = vmatpush.msra.mxu0 %v1260
      %1301 = vmatmul.f32.gmra.mxu0 %v1262
      %v1302 = vpop.f32.mrf.mxu0
      %v1303 = vadd.f32 0.0, %v1302
      %1304 = vmatmul.f32.gmra.mxu0 %v1265
      %v1305 = vpop.f32.mrf.mxu0
      %v1306 = vadd.f32 0.0, %v1305
      %1307 = vmatmul.f32.gmra.mxu0 %v1268
      %v1308 = vpop.f32.mrf.mxu0
      %v1309 = vadd.f32 0.0, %v1308
      %1310 = vmatmul.f32.gmra.mxu0 %v1271
      %v1311 = vpop.f32.mrf.mxu0
      %v1312 = vadd.f32 0.0, %v1311
      %1313 = vmatmul.f32.gmra.mxu0 %v1274
      %v1314 = vpop.f32.mrf.mxu0
      %v1315 = vadd.f32 0.0, %v1314
      %1316 = vmatmul.f32.gmra.mxu0 %v1277
      %v1317 = vpop.f32.mrf.mxu0
      %v1318 = vadd.f32 0.0, %v1317
      %1319 = vmatmul.f32.gmra.mxu0 %v1280
      %v1320 = vpop.f32.mrf.mxu0
      %v1321 = vadd.f32 0.0, %v1320
      %1322 = vmatmul.f32.gmra.mxu0 %v1283
      %v1323 = vpop.f32.mrf.mxu0
      %v1324 = vadd.f32 0.0, %v1323
      %1325 = vdwg.mxu0
      %v1326 = vadd.f32 %v1243, %v1303
      %v1327 = vadd.f32 %v1244, %v1306
      %v1328 = vadd.f32 %v1245, %v1309
      %v1329 = vadd.f32 %v1246, %v1312
      %v1330 = vadd.f32 %v1247, %v1315
      %v1331 = vadd.f32 %v1248, %v1318
      %v1332 = vadd.f32 %v1249, %v1321
      %v1333 = vadd.f32 %v1250, %v1324
      %v1334 = vld [vmem:[%s465] sm:$0xff]
      %v1335 = vld [vmem:[%s465 + $0x8] sm:$0xff]
      %v1336 = vld [vmem:[%s465 + $0x10] sm:$0xff]
      %v1337 = vld [vmem:[%s465 + $0x18] sm:$0xff]
      %v1338 = vld [vmem:[%s465 + $0x20] sm:$0xff]
      %v1339 = vld [vmem:[%s465 + $0x28] sm:$0xff]
      %v1340 = vld [vmem:[%s465 + $0x30] sm:$0xff]
      %v1341 = vld [vmem:[%s465 + $0x38] sm:$0xff]
      %v1342 = vld [vmem:[%s3] sm:$0x1]
      %v1344 = vperm.slane %v1342, 0
      %v1346 = vmul.f32 %v1334, %v1344
      %v1347 = vmul.f32 %v1335, %v1344
      %v1348 = vmul.f32 %v1336, %v1344
      %v1349 = vmul.f32 %v1337, %v1344
      %v1350 = vmul.f32 %v1338, %v1344
      %v1351 = vmul.f32 %v1339, %v1344
      %v1352 = vmul.f32 %v1340, %v1344
      %v1353 = vmul.f32 %v1341, %v1344
      %v1354 = vld [vmem:[%s4] sm:$0x1]
      %v1356 = vperm.slane %v1354, 0
      %v1358 = vadd.f32 %v1346, %v1356
      %v1359 = vadd.f32 %v1347, %v1356
      %v1360 = vadd.f32 %v1348, %v1356
      %v1361 = vadd.f32 %v1349, %v1356
      %v1362 = vadd.f32 %v1350, %v1356
      %v1363 = vadd.f32 %v1351, %v1356
      %v1364 = vadd.f32 %v1352, %v1356
      %v1365 = vadd.f32 %v1353, %v1356
      %1366 = vst.msk [vmem:[%s577 + $0x1] sm:$0xff] %vm578, %v1358
      %1367 = vst.msk [vmem:[%s577 + $0x11] sm:$0xff] %vm578, %v1359
      %1368 = vst.msk [vmem:[%s577 + $0x21] sm:$0xff] %vm578, %v1360
      %1369 = vst.msk [vmem:[%s577 + $0x31] sm:$0xff] %vm578, %v1361
      %1370 = vst.msk [vmem:[%s577 + $0x41] sm:$0xff] %vm578, %v1362
      %1371 = vst.msk [vmem:[%s577 + $0x51] sm:$0xff] %vm578, %v1363
      %1372 = vst.msk [vmem:[%s577 + $0x61] sm:$0xff] %vm578, %v1364
      %1373 = vst.msk [vmem:[%s577 + $0x71] sm:$0xff] %vm578, %v1365
      %v1374 = vld [vmem:[#allocation2] sm:$0xff]
      %v1375 = vld [vmem:[#allocation2 + $0x10] sm:$0xff]
      %v1376 = vld [vmem:[#allocation2 + $0x20] sm:$0xff]
      %v1377 = vld [vmem:[#allocation2 + $0x30] sm:$0xff]
      %v1378 = vld [vmem:[#allocation2 + $0x40] sm:$0xff]
      %v1379 = vld [vmem:[#allocation2 + $0x50] sm:$0xff]
      %v1380 = vld [vmem:[#allocation2 + $0x60] sm:$0xff]
      %v1381 = vld [vmem:[#allocation2 + $0x70] sm:$0xff]
      %s1382 = scalar_lea.vmem %s5, 72
      %v1383 = vld [vmem:[%s1382] sm:$0xff]
      %v1385 = vsel %vm578, %v1374, 0
      %v1388 = vsel %vm578, %v1375, 0
      %v1391 = vsel %vm578, %v1376, 0
      %v1394 = vsel %vm578, %v1377, 0
      %v1397 = vsel %vm578, %v1378, 0
      %v1400 = vsel %vm578, %v1379, 0
      %v1403 = vsel %vm578, %v1380, 0
      %v1406 = vsel %vm578, %v1381, 0
      %1408 = vmatpush.msra.mxu0 0.0
      %1409 = vmatpush.msra.mxu0 0.0
      %1410 = vmatpush.msra.mxu0 0.0
      %1411 = vmatpush.msra.mxu0 0.0
      %1412 = vmatpush.msra.mxu0 0.0
      %1413 = vmatpush.msra.mxu0 0.0
      %1414 = vmatpush.msra.mxu0 0.0
      %1415 = vmatpush.msra.mxu0 0.0
      %1416 = vmatpush.msra.mxu0 0.0
      %1417 = vmatpush.msra.mxu0 0.0
      %1418 = vmatpush.msra.mxu0 0.0
      %1419 = vmatpush.msra.mxu0 0.0
      %1420 = vmatpush.msra.mxu0 0.0
      %1421 = vmatpush.msra.mxu0 0.0
      %1422 = vmatpush.msra.mxu0 0.0
      %1423 = vmatpush.msra.mxu0 %v1383
      %1424 = vmatmul.f32.gmra.mxu0 %v1385
      %v1425 = vpop.f32.mrf.mxu0
      %v1426 = vadd.f32 0.0, %v1425
      %1427 = vmatmul.f32.gmra.mxu0 %v1388
      %v1428 = vpop.f32.mrf.mxu0
      %v1429 = vadd.f32 0.0, %v1428
      %1430 = vmatmul.f32.gmra.mxu0 %v1391
      %v1431 = vpop.f32.mrf.mxu0
      %v1432 = vadd.f32 0.0, %v1431
      %1433 = vmatmul.f32.gmra.mxu0 %v1394
      %v1434 = vpop.f32.mrf.mxu0
      %v1435 = vadd.f32 0.0, %v1434
      %1436 = vmatmul.f32.gmra.mxu0 %v1397
      %v1437 = vpop.f32.mrf.mxu0
      %v1438 = vadd.f32 0.0, %v1437
      %1439 = vmatmul.f32.gmra.mxu0 %v1400
      %v1440 = vpop.f32.mrf.mxu0
      %v1441 = vadd.f32 0.0, %v1440
      %1442 = vmatmul.f32.gmra.mxu0 %v1403
      %v1443 = vpop.f32.mrf.mxu0
      %v1444 = vadd.f32 0.0, %v1443
      %1445 = vmatmul.f32.gmra.mxu0 %v1406
      %v1446 = vpop.f32.mrf.mxu0
      %v1447 = vadd.f32 0.0, %v1446
      %1448 = vdwg.mxu0
      %v1449 = vadd.f32 %v1326, %v1426
      %v1450 = vadd.f32 %v1327, %v1429
      %v1451 = vadd.f32 %v1328, %v1432
      %v1452 = vadd.f32 %v1329, %v1435
      %v1453 = vadd.f32 %v1330, %v1438
      %v1454 = vadd.f32 %v1331, %v1441
      %v1455 = vadd.f32 %v1332, %v1444
      %v1456 = vadd.f32 %v1333, %v1447
      %v1457 = vld [vmem:[#allocation2 + $0x1] sm:$0xff]
      %v1458 = vld [vmem:[#allocation2 + $0x11] sm:$0xff]
      %v1459 = vld [vmem:[#allocation2 + $0x21] sm:$0xff]
      %v1460 = vld [vmem:[#allocation2 + $0x31] sm:$0xff]
      %v1461 = vld [vmem:[#allocation2 + $0x41] sm:$0xff]
      %v1462 = vld [vmem:[#allocation2 + $0x51] sm:$0xff]
      %v1463 = vld [vmem:[#allocation2 + $0x61] sm:$0xff]
      %v1464 = vld [vmem:[#allocation2 + $0x71] sm:$0xff]
      %s1465 = scalar_lea.vmem %s5, 80
      %v1466 = vld [vmem:[%s1465] sm:$0xff]
      %v1468 = vsel %vm578, %v1457, 0
      %v1471 = vsel %vm578, %v1458, 0
      %v1474 = vsel %vm578, %v1459, 0
      %v1477 = vsel %vm578, %v1460, 0
      %v1480 = vsel %vm578, %v1461, 0
      %v1483 = vsel %vm578, %v1462, 0
      %v1486 = vsel %vm578, %v1463, 0
      %v1489 = vsel %vm578, %v1464, 0
      %1491 = vmatpush.msra.mxu0 0.0
      %1492 = vmatpush.msra.mxu0 0.0
      %1493 = vmatpush.msra.mxu0 0.0
      %1494 = vmatpush.msra.mxu0 0.0
      %1495 = vmatpush.msra.mxu0 0.0
      %1496 = vmatpush.msra.mxu0 0.0
      %1497 = vmatpush.msra.mxu0 0.0
      %1498 = vmatpush.msra.mxu0 0.0
      %1499 = vmatpush.msra.mxu0 0.0
      %1500 = vmatpush.msra.mxu0 0.0
      %1501 = vmatpush.msra.mxu0 0.0
      %1502 = vmatpush.msra.mxu0 0.0
      %1503 = vmatpush.msra.mxu0 0.0
      %1504 = vmatpush.msra.mxu0 0.0
      %1505 = vmatpush.msra.mxu0 0.0
      %1506 = vmatpush.msra.mxu0 %v1466
      %1507 = vmatmul.f32.gmra.mxu0 %v1468
      %v1508 = vpop.f32.mrf.mxu0
      %v1509 = vadd.f32 0.0, %v1508
      %1510 = vmatmul.f32.gmra.mxu0 %v1471
      %v1511 = vpop.f32.mrf.mxu0
      %v1512 = vadd.f32 0.0, %v1511
      %1513 = vmatmul.f32.gmra.mxu0 %v1474
      %v1514 = vpop.f32.mrf.mxu0
      %v1515 = vadd.f32 0.0, %v1514
      %1516 = vmatmul.f32.gmra.mxu0 %v1477
      %v1517 = vpop.f32.mrf.mxu0
      %v1518 = vadd.f32 0.0, %v1517
      %1519 = vmatmul.f32.gmra.mxu0 %v1480
      %v1520 = vpop.f32.mrf.mxu0
      %v1521 = vadd.f32 0.0, %v1520
      %1522 = vmatmul.f32.gmra.mxu0 %v1483
      %v1523 = vpop.f32.mrf.mxu0
      %v1524 = vadd.f32 0.0, %v1523
      %1525 = vmatmul.f32.gmra.mxu0 %v1486
      %v1526 = vpop.f32.mrf.mxu0
      %v1527 = vadd.f32 0.0, %v1526
      %1528 = vmatmul.f32.gmra.mxu0 %v1489
      %v1529 = vpop.f32.mrf.mxu0
      %v1530 = vadd.f32 0.0, %v1529
      %1531 = vdwg.mxu0
      %v1532 = vadd.f32 %v1449, %v1509
      %v1533 = vadd.f32 %v1450, %v1512
      %v1534 = vadd.f32 %v1451, %v1515
      %v1535 = vadd.f32 %v1452, %v1518
      %v1536 = vadd.f32 %v1453, %v1521
      %v1537 = vadd.f32 %v1454, %v1524
      %v1538 = vadd.f32 %v1455, %v1527
      %v1539 = vadd.f32 %v1456, %v1530
      %v1540 = vld [vmem:[#allocation2 + $0x2] sm:$0xff]
      %v1541 = vld [vmem:[#allocation2 + $0x12] sm:$0xff]
      %v1542 = vld [vmem:[#allocation2 + $0x22] sm:$0xff]
      %v1543 = vld [vmem:[#allocation2 + $0x32] sm:$0xff]
      %v1544 = vld [vmem:[#allocation2 + $0x42] sm:$0xff]
      %v1545 = vld [vmem:[#allocation2 + $0x52] sm:$0xff]
      %v1546 = vld [vmem:[#allocation2 + $0x62] sm:$0xff]
      %v1547 = vld [vmem:[#allocation2 + $0x72] sm:$0xff]
      %s1548 = scalar_lea.vmem %s5, 88
      %v1549 = vld [vmem:[%s1548] sm:$0xff]
      %v1551 = vsel %vm578, %v1540, 0
      %v1554 = vsel %vm578, %v1541, 0
      %v1557 = vsel %vm578, %v1542, 0
      %v1560 = vsel %vm578, %v1543, 0
      %v1563 = vsel %vm578, %v1544, 0
      %v1566 = vsel %vm578, %v1545, 0
      %v1569 = vsel %vm578, %v1546, 0
      %v1572 = vsel %vm578, %v1547, 0
      %1574 = vmatpush.msra.mxu0 0.0
      %1575 = vmatpush.msra.mxu0 0.0
      %1576 = vmatpush.msra.mxu0 0.0
      %1577 = vmatpush.msra.mxu0 0.0
      %1578 = vmatpush.msra.mxu0 0.0
      %1579 = vmatpush.msra.mxu0 0.0
      %1580 = vmatpush.msra.mxu0 0.0
      %1581 = vmatpush.msra.mxu0 0.0
      %1582 = vmatpush.msra.mxu0 0.0
      %1583 = vmatpush.msra.mxu0 0.0
      %1584 = vmatpush.msra.mxu0 0.0
      %1585 = vmatpush.msra.mxu0 0.0
      %1586 = vmatpush.msra.mxu0 0.0
      %1587 = vmatpush.msra.mxu0 0.0
      %1588 = vmatpush.msra.mxu0 0.0
      %1589 = vmatpush.msra.mxu0 %v1549
      %1590 = vmatmul.f32.gmra.mxu0 %v1551
      %v1591 = vpop.f32.mrf.mxu0
      %v1592 = vadd.f32 0.0, %v1591
      %1593 = vmatmul.f32.gmra.mxu0 %v1554
      %v1594 = vpop.f32.mrf.mxu0
      %v1595 = vadd.f32 0.0, %v1594
      %1596 = vmatmul.f32.gmra.mxu0 %v1557
      %v1597 = vpop.f32.mrf.mxu0
      %v1598 = vadd.f32 0.0, %v1597
      %1599 = vmatmul.f32.gmra.mxu0 %v1560
      %v1600 = vpop.f32.mrf.mxu0
      %v1601 = vadd.f32 0.0, %v1600
      %1602 = vmatmul.f32.gmra.mxu0 %v1563
      %v1603 = vpop.f32.mrf.mxu0
      %v1604 = vadd.f32 0.0, %v1603
      %1605 = vmatmul.f32.gmra.mxu0 %v1566
      %v1606 = vpop.f32.mrf.mxu0
      %v1607 = vadd.f32 0.0, %v1606
      %1608 = vmatmul.f32.gmra.mxu0 %v1569
      %v1609 = vpop.f32.mrf.mxu0
      %v1610 = vadd.f32 0.0, %v1609
      %1611 = vmatmul.f32.gmra.mxu0 %v1572
      %v1612 = vpop.f32.mrf.mxu0
      %v1613 = vadd.f32 0.0, %v1612
      %1614 = vdwg.mxu0
      %v1615 = vadd.f32 %v1532, %v1592
      %v1616 = vadd.f32 %v1533, %v1595
      %v1617 = vadd.f32 %v1534, %v1598
      %v1618 = vadd.f32 %v1535, %v1601
      %v1619 = vadd.f32 %v1536, %v1604
      %v1620 = vadd.f32 %v1537, %v1607
      %v1621 = vadd.f32 %v1538, %v1610
      %v1622 = vadd.f32 %v1539, %v1613
      %v1623 = vld [vmem:[%s577] sm:$0xff]
      %v1624 = vld [vmem:[%s577 + $0x10] sm:$0xff]
      %v1625 = vld [vmem:[%s577 + $0x20] sm:$0xff]
      %v1626 = vld [vmem:[%s577 + $0x30] sm:$0xff]
      %v1627 = vld [vmem:[%s577 + $0x40] sm:$0xff]
      %v1628 = vld [vmem:[%s577 + $0x50] sm:$0xff]
      %v1629 = vld [vmem:[%s577 + $0x60] sm:$0xff]
      %v1630 = vld [vmem:[%s577 + $0x70] sm:$0xff]
      %s1631 = scalar_lea.vmem %s5, 96
      %v1632 = vld [vmem:[%s1631] sm:$0xff]
      %v1634 = vsel %vm578, %v1623, 0
      %v1637 = vsel %vm578, %v1624, 0
      %v1640 = vsel %vm578, %v1625, 0
      %v1643 = vsel %vm578, %v1626, 0
      %v1646 = vsel %vm578, %v1627, 0
      %v1649 = vsel %vm578, %v1628, 0
      %v1652 = vsel %vm578, %v1629, 0
      %v1655 = vsel %vm578, %v1630, 0
      %1657 = vmatpush.msra.mxu0 0.0
      %1658 = vmatpush.msra.mxu0 0.0
      %1659 = vmatpush.msra.mxu0 0.0
      %1660 = vmatpush.msra.mxu0 0.0
      %1661 = vmatpush.msra.mxu0 0.0
      %1662 = vmatpush.msra.mxu0 0.0
      %1663 = vmatpush.msra.mxu0 0.0
      %1664 = vmatpush.msra.mxu0 0.0
      %1665 = vmatpush.msra.mxu0 0.0
      %1666 = vmatpush.msra.mxu0 0.0
      %1667 = vmatpush.msra.mxu0 0.0
      %1668 = vmatpush.msra.mxu0 0.0
      %1669 = vmatpush.msra.mxu0 0.0
      %1670 = vmatpush.msra.mxu0 0.0
      %1671 = vmatpush.msra.mxu0 0.0
      %1672 = vmatpush.msra.mxu0 %v1632
      %1673 = vmatmul.f32.gmra.mxu0 %v1634
      %v1674 = vpop.f32.mrf.mxu0
      %v1675 = vadd.f32 0.0, %v1674
      %1676 = vmatmul.f32.gmra.mxu0 %v1637
      %v1677 = vpop.f32.mrf.mxu0
      %v1678 = vadd.f32 0.0, %v1677
      %1679 = vmatmul.f32.gmra.mxu0 %v1640
      %v1680 = vpop.f32.mrf.mxu0
      %v1681 = vadd.f32 0.0, %v1680
      %1682 = vmatmul.f32.gmra.mxu0 %v1643
      %v1683 = vpop.f32.mrf.mxu0
      %v1684 = vadd.f32 0.0, %v1683
      %1685 = vmatmul.f32.gmra.mxu0 %v1646
      %v1686 = vpop.f32.mrf.mxu0
      %v1687 = vadd.f32 0.0, %v1686
      %1688 = vmatmul.f32.gmra.mxu0 %v1649
      %v1689 = vpop.f32.mrf.mxu0
      %v1690 = vadd.f32 0.0, %v1689
      %1691 = vmatmul.f32.gmra.mxu0 %v1652
      %v1692 = vpop.f32.mrf.mxu0
      %v1693 = vadd.f32 0.0, %v1692
      %1694 = vmatmul.f32.gmra.mxu0 %v1655
      %v1695 = vpop.f32.mrf.mxu0
      %v1696 = vadd.f32 0.0, %v1695
      %1697 = vdwg.mxu0
      %v1698 = vadd.f32 %v1615, %v1675
      %v1699 = vadd.f32 %v1616, %v1678
      %v1700 = vadd.f32 %v1617, %v1681
      %v1701 = vadd.f32 %v1618, %v1684
      %v1702 = vadd.f32 %v1619, %v1687
      %v1703 = vadd.f32 %v1620, %v1690
      %v1704 = vadd.f32 %v1621, %v1693
      %v1705 = vadd.f32 %v1622, %v1696
      %v1706 = vld [vmem:[%s577 + $0x1] sm:$0xff]
      %v1707 = vld [vmem:[%s577 + $0x11] sm:$0xff]
      %v1708 = vld [vmem:[%s577 + $0x21] sm:$0xff]
      %v1709 = vld [vmem:[%s577 + $0x31] sm:$0xff]
      %v1710 = vld [vmem:[%s577 + $0x41] sm:$0xff]
      %v1711 = vld [vmem:[%s577 + $0x51] sm:$0xff]
      %v1712 = vld [vmem:[%s577 + $0x61] sm:$0xff]
      %v1713 = vld [vmem:[%s577 + $0x71] sm:$0xff]
      %s1714 = scalar_lea.vmem %s5, 104
      %v1715 = vld [vmem:[%s1714] sm:$0xff]
      %v1717 = vsel %vm578, %v1706, 0
      %v1720 = vsel %vm578, %v1707, 0
      %v1723 = vsel %vm578, %v1708, 0
      %v1726 = vsel %vm578, %v1709, 0
      %v1729 = vsel %vm578, %v1710, 0
      %v1732 = vsel %vm578, %v1711, 0
      %v1735 = vsel %vm578, %v1712, 0
      %v1738 = vsel %vm578, %v1713, 0
      %1740 = vmatpush.msra.mxu0 0.0
      %1741 = vmatpush.msra.mxu0 0.0
      %1742 = vmatpush.msra.mxu0 0.0
      %1743 = vmatpush.msra.mxu0 0.0
      %1744 = vmatpush.msra.mxu0 0.0
      %1745 = vmatpush.msra.mxu0 0.0
      %1746 = vmatpush.msra.mxu0 0.0
      %1747 = vmatpush.msra.mxu0 0.0
      %1748 = vmatpush.msra.mxu0 0.0
      %1749 = vmatpush.msra.mxu0 0.0
      %1750 = vmatpush.msra.mxu0 0.0
      %1751 = vmatpush.msra.mxu0 0.0
      %1752 = vmatpush.msra.mxu0 0.0
      %1753 = vmatpush.msra.mxu0 0.0
      %1754 = vmatpush.msra.mxu0 0.0
      %1755 = vmatpush.msra.mxu0 %v1715
      %1756 = vmatmul.f32.gmra.mxu0 %v1717
      %v1757 = vpop.f32.mrf.mxu0
      %v1758 = vadd.f32 0.0, %v1757
      %1759 = vmatmul.f32.gmra.mxu0 %v1720
      %v1760 = vpop.f32.mrf.mxu0
      %v1761 = vadd.f32 0.0, %v1760
      %1762 = vmatmul.f32.gmra.mxu0 %v1723
      %v1763 = vpop.f32.mrf.mxu0
      %v1764 = vadd.f32 0.0, %v1763
      %1765 = vmatmul.f32.gmra.mxu0 %v1726
      %v1766 = vpop.f32.mrf.mxu0
      %v1767 = vadd.f32 0.0, %v1766
      %1768 = vmatmul.f32.gmra.mxu0 %v1729
      %v1769 = vpop.f32.mrf.mxu0
      %v1770 = vadd.f32 0.0, %v1769
      %1771 = vmatmul.f32.gmra.mxu0 %v1732
      %v1772 = vpop.f32.mrf.mxu0
      %v1773 = vadd.f32 0.0, %v1772
      %1774 = vmatmul.f32.gmra.mxu0 %v1735
      %v1775 = vpop.f32.mrf.mxu0
      %v1776 = vadd.f32 0.0, %v1775
      %1777 = vmatmul.f32.gmra.mxu0 %v1738
      %v1778 = vpop.f32.mrf.mxu0
      %v1779 = vadd.f32 0.0, %v1778
      %1780 = vdwg.mxu0
      %v1781 = vadd.f32 %v1698, %v1758
      %v1782 = vadd.f32 %v1699, %v1761
      %v1783 = vadd.f32 %v1700, %v1764
      %v1784 = vadd.f32 %v1701, %v1767
      %v1785 = vadd.f32 %v1702, %v1770
      %v1786 = vadd.f32 %v1703, %v1773
      %v1787 = vadd.f32 %v1704, %v1776
      %v1788 = vadd.f32 %v1705, %v1779
      %v1789 = vld [vmem:[%s577 + $0x2] sm:$0xff]
      %v1790 = vld [vmem:[%s577 + $0x12] sm:$0xff]
      %v1791 = vld [vmem:[%s577 + $0x22] sm:$0xff]
      %v1792 = vld [vmem:[%s577 + $0x32] sm:$0xff]
      %v1793 = vld [vmem:[%s577 + $0x42] sm:$0xff]
      %v1794 = vld [vmem:[%s577 + $0x52] sm:$0xff]
      %v1795 = vld [vmem:[%s577 + $0x62] sm:$0xff]
      %v1796 = vld [vmem:[%s577 + $0x72] sm:$0xff]
      %s1797 = scalar_lea.vmem %s5, 112
      %v1798 = vld [vmem:[%s1797] sm:$0xff]
      %v1800 = vsel %vm578, %v1789, 0
      %v1803 = vsel %vm578, %v1790, 0
      %v1806 = vsel %vm578, %v1791, 0
      %v1809 = vsel %vm578, %v1792, 0
      %v1812 = vsel %vm578, %v1793, 0
      %v1815 = vsel %vm578, %v1794, 0
      %v1818 = vsel %vm578, %v1795, 0
      %v1821 = vsel %vm578, %v1796, 0
      %1823 = vmatpush.msra.mxu0 0.0
      %1824 = vmatpush.msra.mxu0 0.0
      %1825 = vmatpush.msra.mxu0 0.0
      %1826 = vmatpush.msra.mxu0 0.0
      %1827 = vmatpush.msra.mxu0 0.0
      %1828 = vmatpush.msra.mxu0 0.0
      %1829 = vmatpush.msra.mxu0 0.0
      %1830 = vmatpush.msra.mxu0 0.0
      %1831 = vmatpush.msra.mxu0 0.0
      %1832 = vmatpush.msra.mxu0 0.0
      %1833 = vmatpush.msra.mxu0 0.0
      %1834 = vmatpush.msra.mxu0 0.0
      %1835 = vmatpush.msra.mxu0 0.0
      %1836 = vmatpush.msra.mxu0 0.0
      %1837 = vmatpush.msra.mxu0 0.0
      %1838 = vmatpush.msra.mxu0 %v1798
      %1839 = vmatmul.f32.gmra.mxu0 %v1800
      %v1840 = vpop.f32.mrf.mxu0
      %v1841 = vadd.f32 0.0, %v1840
      %1842 = vmatmul.f32.gmra.mxu0 %v1803
      %v1843 = vpop.f32.mrf.mxu0
      %v1844 = vadd.f32 0.0, %v1843
      %1845 = vmatmul.f32.gmra.mxu0 %v1806
      %v1846 = vpop.f32.mrf.mxu0
      %v1847 = vadd.f32 0.0, %v1846
      %1848 = vmatmul.f32.gmra.mxu0 %v1809
      %v1849 = vpop.f32.mrf.mxu0
      %v1850 = vadd.f32 0.0, %v1849
      %1851 = vmatmul.f32.gmra.mxu0 %v1812
      %v1852 = vpop.f32.mrf.mxu0
      %v1853 = vadd.f32 0.0, %v1852
      %1854 = vmatmul.f32.gmra.mxu0 %v1815
      %v1855 = vpop.f32.mrf.mxu0
      %v1856 = vadd.f32 0.0, %v1855
      %1857 = vmatmul.f32.gmra.mxu0 %v1818
      %v1858 = vpop.f32.mrf.mxu0
      %v1859 = vadd.f32 0.0, %v1858
      %1860 = vmatmul.f32.gmra.mxu0 %v1821
      %v1861 = vpop.f32.mrf.mxu0
      %v1862 = vadd.f32 0.0, %v1861
      %1863 = vdwg.mxu0
      %v1864 = vadd.f32 %v1781, %v1841
      %v1865 = vadd.f32 %v1782, %v1844
      %v1866 = vadd.f32 %v1783, %v1847
      %v1867 = vadd.f32 %v1784, %v1850
      %v1868 = vadd.f32 %v1785, %v1853
      %v1869 = vadd.f32 %v1786, %v1856
      %v1870 = vadd.f32 %v1787, %v1859
      %v1871 = vadd.f32 %v1788, %v1862
      %v1872 = vld [vmem:[%s1084] sm:$0xff]
      %v1873 = vld [vmem:[%s1084 + $0x10] sm:$0xff]
      %v1874 = vld [vmem:[%s1084 + $0x20] sm:$0xff]
      %v1875 = vld [vmem:[%s1084 + $0x30] sm:$0xff]
      %v1876 = vld [vmem:[%s1084 + $0x40] sm:$0xff]
      %v1877 = vld [vmem:[%s1084 + $0x50] sm:$0xff]
      %v1878 = vld [vmem:[%s1084 + $0x60] sm:$0xff]
      %v1879 = vld [vmem:[%s1084 + $0x70] sm:$0xff]
      %s1880 = scalar_lea.vmem %s5, 120
      %v1881 = vld [vmem:[%s1880] sm:$0xff]
      %v1883 = vsel %vm578, %v1872, 0
      %v1886 = vsel %vm578, %v1873, 0
      %v1889 = vsel %vm578, %v1874, 0
      %v1892 = vsel %vm578, %v1875, 0
      %v1895 = vsel %vm578, %v1876, 0
      %v1898 = vsel %vm578, %v1877, 0
      %v1901 = vsel %vm578, %v1878, 0
      %v1904 = vsel %vm578, %v1879, 0
      %1906 = vmatpush.msra.mxu0 0.0
      %1907 = vmatpush.msra.mxu0 0.0
      %1908 = vmatpush.msra.mxu0 0.0
      %1909 = vmatpush.msra.mxu0 0.0
      %1910 = vmatpush.msra.mxu0 0.0
      %1911 = vmatpush.msra.mxu0 0.0
      %1912 = vmatpush.msra.mxu0 0.0
      %1913 = vmatpush.msra.mxu0 0.0
      %1914 = vmatpush.msra.mxu0 0.0
      %1915 = vmatpush.msra.mxu0 0.0
      %1916 = vmatpush.msra.mxu0 0.0
      %1917 = vmatpush.msra.mxu0 0.0
      %1918 = vmatpush.msra.mxu0 0.0
      %1919 = vmatpush.msra.mxu0 0.0
      %1920 = vmatpush.msra.mxu0 0.0
      %1921 = vmatpush.msra.mxu0 %v1881
      %1922 = vmatmul.f32.gmra.mxu0 %v1883
      %v1923 = vpop.f32.mrf.mxu0
      %v1924 = vadd.f32 0.0, %v1923
      %1925 = vmatmul.f32.gmra.mxu0 %v1886
      %v1926 = vpop.f32.mrf.mxu0
      %v1927 = vadd.f32 0.0, %v1926
      %1928 = vmatmul.f32.gmra.mxu0 %v1889
      %v1929 = vpop.f32.mrf.mxu0
      %v1930 = vadd.f32 0.0, %v1929
      %1931 = vmatmul.f32.gmra.mxu0 %v1892
      %v1932 = vpop.f32.mrf.mxu0
      %v1933 = vadd.f32 0.0, %v1932
      %1934 = vmatmul.f32.gmra.mxu0 %v1895
      %v1935 = vpop.f32.mrf.mxu0
      %v1936 = vadd.f32 0.0, %v1935
      %1937 = vmatmul.f32.gmra.mxu0 %v1898
      %v1938 = vpop.f32.mrf.mxu0
      %v1939 = vadd.f32 0.0, %v1938
      %1940 = vmatmul.f32.gmra.mxu0 %v1901
      %v1941 = vpop.f32.mrf.mxu0
      %v1942 = vadd.f32 0.0, %v1941
      %1943 = vmatmul.f32.gmra.mxu0 %v1904
      %v1944 = vpop.f32.mrf.mxu0
      %v1945 = vadd.f32 0.0, %v1944
      %1946 = vdwg.mxu0
      %v1947 = vadd.f32 %v1864, %v1924
      %v1948 = vadd.f32 %v1865, %v1927
      %v1949 = vadd.f32 %v1866, %v1930
      %v1950 = vadd.f32 %v1867, %v1933
      %v1951 = vadd.f32 %v1868, %v1936
      %v1952 = vadd.f32 %v1869, %v1939
      %v1953 = vadd.f32 %v1870, %v1942
      %v1954 = vadd.f32 %v1871, %v1945
      %v1955 = vld [vmem:[%s1084 + $0x1] sm:$0xff]
      %v1956 = vld [vmem:[%s1084 + $0x11] sm:$0xff]
      %v1957 = vld [vmem:[%s1084 + $0x21] sm:$0xff]
      %v1958 = vld [vmem:[%s1084 + $0x31] sm:$0xff]
      %v1959 = vld [vmem:[%s1084 + $0x41] sm:$0xff]
      %v1960 = vld [vmem:[%s1084 + $0x51] sm:$0xff]
      %v1961 = vld [vmem:[%s1084 + $0x61] sm:$0xff]
      %v1962 = vld [vmem:[%s1084 + $0x71] sm:$0xff]
      %s1963 = scalar_lea.vmem %s5, 128
      %v1964 = vld [vmem:[%s1963] sm:$0xff]
      %v1966 = vsel %vm578, %v1955, 0
      %v1969 = vsel %vm578, %v1956, 0
      %v1972 = vsel %vm578, %v1957, 0
      %v1975 = vsel %vm578, %v1958, 0
      %v1978 = vsel %vm578, %v1959, 0
      %v1981 = vsel %vm578, %v1960, 0
      %v1984 = vsel %vm578, %v1961, 0
      %v1987 = vsel %vm578, %v1962, 0
      %1989 = vmatpush.msra.mxu0 0.0
      %1990 = vmatpush.msra.mxu0 0.0
      %1991 = vmatpush.msra.mxu0 0.0
      %1992 = vmatpush.msra.mxu0 0.0
      %1993 = vmatpush.msra.mxu0 0.0
      %1994 = vmatpush.msra.mxu0 0.0
      %1995 = vmatpush.msra.mxu0 0.0
      %1996 = vmatpush.msra.mxu0 0.0
      %1997 = vmatpush.msra.mxu0 0.0
      %1998 = vmatpush.msra.mxu0 0.0
      %1999 = vmatpush.msra.mxu0 0.0
      %2000 = vmatpush.msra.mxu0 0.0
      %2001 = vmatpush.msra.mxu0 0.0
      %2002 = vmatpush.msra.mxu0 0.0
      %2003 = vmatpush.msra.mxu0 0.0
      %2004 = vmatpush.msra.mxu0 %v1964
      %2005 = vmatmul.f32.gmra.mxu0 %v1966
      %v2006 = vpop.f32.mrf.mxu0
      %v2007 = vadd.f32 0.0, %v2006
      %2008 = vmatmul.f32.gmra.mxu0 %v1969
      %v2009 = vpop.f32.mrf.mxu0
      %v2010 = vadd.f32 0.0, %v2009
      %2011 = vmatmul.f32.gmra.mxu0 %v1972
      %v2012 = vpop.f32.mrf.mxu0
      %v2013 = vadd.f32 0.0, %v2012
      %2014 = vmatmul.f32.gmra.mxu0 %v1975
      %v2015 = vpop.f32.mrf.mxu0
      %v2016 = vadd.f32 0.0, %v2015
      %2017 = vmatmul.f32.gmra.mxu0 %v1978
      %v2018 = vpop.f32.mrf.mxu0
      %v2019 = vadd.f32 0.0, %v2018
      %2020 = vmatmul.f32.gmra.mxu0 %v1981
      %v2021 = vpop.f32.mrf.mxu0
      %v2022 = vadd.f32 0.0, %v2021
      %2023 = vmatmul.f32.gmra.mxu0 %v1984
      %v2024 = vpop.f32.mrf.mxu0
      %v2025 = vadd.f32 0.0, %v2024
      %2026 = vmatmul.f32.gmra.mxu0 %v1987
      %v2027 = vpop.f32.mrf.mxu0
      %v2028 = vadd.f32 0.0, %v2027
      %2029 = vdwg.mxu0
      %v2030 = vadd.f32 %v1947, %v2007
      %v2031 = vadd.f32 %v1948, %v2010
      %v2032 = vadd.f32 %v1949, %v2013
      %v2033 = vadd.f32 %v1950, %v2016
      %v2034 = vadd.f32 %v1951, %v2019
      %v2035 = vadd.f32 %v1952, %v2022
      %v2036 = vadd.f32 %v1953, %v2025
      %v2037 = vadd.f32 %v1954, %v2028
      %v2038 = vld [vmem:[%s1084 + $0x2] sm:$0xff]
      %v2039 = vld [vmem:[%s1084 + $0x12] sm:$0xff]
      %v2040 = vld [vmem:[%s1084 + $0x22] sm:$0xff]
      %v2041 = vld [vmem:[%s1084 + $0x32] sm:$0xff]
      %v2042 = vld [vmem:[%s1084 + $0x42] sm:$0xff]
      %v2043 = vld [vmem:[%s1084 + $0x52] sm:$0xff]
      %v2044 = vld [vmem:[%s1084 + $0x62] sm:$0xff]
      %v2045 = vld [vmem:[%s1084 + $0x72] sm:$0xff]
      %s2046 = scalar_lea.vmem %s5, 136
      %v2047 = vld [vmem:[%s2046] sm:$0xff]
      %v2049 = vsel %vm578, %v2038, 0
      %v2052 = vsel %vm578, %v2039, 0
      %v2055 = vsel %vm578, %v2040, 0
      %v2058 = vsel %vm578, %v2041, 0
      %v2061 = vsel %vm578, %v2042, 0
      %v2064 = vsel %vm578, %v2043, 0
      %v2067 = vsel %vm578, %v2044, 0
      %v2070 = vsel %vm578, %v2045, 0
      %2072 = vmatpush.msra.mxu0 0.0
      %2073 = vmatpush.msra.mxu0 0.0
      %2074 = vmatpush.msra.mxu0 0.0
      %2075 = vmatpush.msra.mxu0 0.0
      %2076 = vmatpush.msra.mxu0 0.0
      %2077 = vmatpush.msra.mxu0 0.0
      %2078 = vmatpush.msra.mxu0 0.0
      %2079 = vmatpush.msra.mxu0 0.0
      %2080 = vmatpush.msra.mxu0 0.0
      %2081 = vmatpush.msra.mxu0 0.0
      %2082 = vmatpush.msra.mxu0 0.0
      %2083 = vmatpush.msra.mxu0 0.0
      %2084 = vmatpush.msra.mxu0 0.0
      %2085 = vmatpush.msra.mxu0 0.0
      %2086 = vmatpush.msra.mxu0 0.0
      %2087 = vmatpush.msra.mxu0 %v2047
      %2088 = vmatmul.f32.gmra.mxu0 %v2049
      %v2089 = vpop.f32.mrf.mxu0
      %v2090 = vadd.f32 0.0, %v2089
      %2091 = vmatmul.f32.gmra.mxu0 %v2052
      %v2092 = vpop.f32.mrf.mxu0
      %v2093 = vadd.f32 0.0, %v2092
      %2094 = vmatmul.f32.gmra.mxu0 %v2055
      %v2095 = vpop.f32.mrf.mxu0
      %v2096 = vadd.f32 0.0, %v2095
      %2097 = vmatmul.f32.gmra.mxu0 %v2058
      %v2098 = vpop.f32.mrf.mxu0
      %v2099 = vadd.f32 0.0, %v2098
      %2100 = vmatmul.f32.gmra.mxu0 %v2061
      %v2101 = vpop.f32.mrf.mxu0
      %v2102 = vadd.f32 0.0, %v2101
      %2103 = vmatmul.f32.gmra.mxu0 %v2064
      %v2104 = vpop.f32.mrf.mxu0
      %v2105 = vadd.f32 0.0, %v2104
      %2106 = vmatmul.f32.gmra.mxu0 %v2067
      %v2107 = vpop.f32.mrf.mxu0
      %v2108 = vadd.f32 0.0, %v2107
      %2109 = vmatmul.f32.gmra.mxu0 %v2070
      %v2110 = vpop.f32.mrf.mxu0
      %v2111 = vadd.f32 0.0, %v2110
      %2112 = vdwg.mxu0
      %v2113 = vadd.f32 %v2030, %v2090
      %v2114 = vadd.f32 %v2031, %v2093
      %v2115 = vadd.f32 %v2032, %v2096
      %v2116 = vadd.f32 %v2033, %v2099
      %v2117 = vadd.f32 %v2034, %v2102
      %v2118 = vadd.f32 %v2035, %v2105
      %v2119 = vadd.f32 %v2036, %v2108
      %v2120 = vadd.f32 %v2037, %v2111
      %v2121 = vld [vmem:[%s477] sm:$0xff]
      %v2122 = vld [vmem:[%s477 + $0x8] sm:$0xff]
      %v2123 = vld [vmem:[%s477 + $0x10] sm:$0xff]
      %v2124 = vld [vmem:[%s477 + $0x18] sm:$0xff]
      %v2125 = vld [vmem:[%s477 + $0x20] sm:$0xff]
      %v2126 = vld [vmem:[%s477 + $0x28] sm:$0xff]
      %v2127 = vld [vmem:[%s477 + $0x30] sm:$0xff]
      %v2128 = vld [vmem:[%s477 + $0x38] sm:$0xff]
      %v2129 = vld [vmem:[%s3] sm:$0x1]
      %v2131 = vperm.slane %v2129, 0
      %v2133 = vmul.f32 %v2121, %v2131
      %v2134 = vmul.f32 %v2122, %v2131
      %v2135 = vmul.f32 %v2123, %v2131
      %v2136 = vmul.f32 %v2124, %v2131
      %v2137 = vmul.f32 %v2125, %v2131
      %v2138 = vmul.f32 %v2126, %v2131
      %v2139 = vmul.f32 %v2127, %v2131
      %v2140 = vmul.f32 %v2128, %v2131
      %v2141 = vld [vmem:[%s4] sm:$0x1]
      %v2143 = vperm.slane %v2141, 0
      %v2145 = vadd.f32 %v2133, %v2143
      %v2146 = vadd.f32 %v2134, %v2143
      %v2147 = vadd.f32 %v2135, %v2143
      %v2148 = vadd.f32 %v2136, %v2143
      %v2149 = vadd.f32 %v2137, %v2143
      %v2150 = vadd.f32 %v2138, %v2143
      %v2151 = vadd.f32 %v2139, %v2143
      %v2152 = vadd.f32 %v2140, %v2143
      %s2153 = sadd.s32 %s26, 1
      %p2154 = scmp.ge.s32.totalorder %s2153, 0
      %p2155 = scmp.lt.s32.totalorder %s2153, 8
      %p2156 = pnand %p2154, %p2155
      %p2157 = pneg %p2156
      %s2158 = scalar_select %p2157, 1.0, 0.0
      %v2159 = vstv %s2158
      %v2160 = vmul.f32 %v2145, %v2159
      %v2161 = vmul.f32 %v2146, %v2159
      %v2162 = vmul.f32 %v2147, %v2159
      %v2163 = vmul.f32 %v2148, %v2159
      %v2164 = vmul.f32 %v2149, %v2159
      %v2165 = vmul.f32 %v2150, %v2159
      %v2166 = vmul.f32 %v2151, %v2159
      %v2167 = vmul.f32 %v2152, %v2159
      %2168 = vst.msk [vmem:[%s577 + $0x1] sm:$0xff] %vm578, %v2160
      %2169 = vst.msk [vmem:[%s577 + $0x11] sm:$0xff] %vm578, %v2161
      %2170 = vst.msk [vmem:[%s577 + $0x21] sm:$0xff] %vm578, %v2162
      %2171 = vst.msk [vmem:[%s577 + $0x31] sm:$0xff] %vm578, %v2163
      %2172 = vst.msk [vmem:[%s577 + $0x41] sm:$0xff] %vm578, %v2164
      %2173 = vst.msk [vmem:[%s577 + $0x51] sm:$0xff] %vm578, %v2165
      %2174 = vst.msk [vmem:[%s577 + $0x61] sm:$0xff] %vm578, %v2166
      %2175 = vst.msk [vmem:[%s577 + $0x71] sm:$0xff] %vm578, %v2167
      %v2176 = vld [vmem:[#allocation2] sm:$0xff]
      %v2177 = vld [vmem:[#allocation2 + $0x10] sm:$0xff]
      %v2178 = vld [vmem:[#allocation2 + $0x20] sm:$0xff]
      %v2179 = vld [vmem:[#allocation2 + $0x30] sm:$0xff]
      %v2180 = vld [vmem:[#allocation2 + $0x40] sm:$0xff]
      %v2181 = vld [vmem:[#allocation2 + $0x50] sm:$0xff]
      %v2182 = vld [vmem:[#allocation2 + $0x60] sm:$0xff]
      %v2183 = vld [vmem:[#allocation2 + $0x70] sm:$0xff]
      %s2184 = scalar_lea.vmem %s5, 144
      %v2185 = vld [vmem:[%s2184] sm:$0xff]
      %v2187 = vsel %vm578, %v2176, 0
      %v2190 = vsel %vm578, %v2177, 0
      %v2193 = vsel %vm578, %v2178, 0
      %v2196 = vsel %vm578, %v2179, 0
      %v2199 = vsel %vm578, %v2180, 0
      %v2202 = vsel %vm578, %v2181, 0
      %v2205 = vsel %vm578, %v2182, 0
      %v2208 = vsel %vm578, %v2183, 0
      %2210 = vmatpush.msra.mxu0 0.0
      %2211 = vmatpush.msra.mxu0 0.0
      %2212 = vmatpush.msra.mxu0 0.0
      %2213 = vmatpush.msra.mxu0 0.0
      %2214 = vmatpush.msra.mxu0 0.0
      %2215 = vmatpush.msra.mxu0 0.0
      %2216 = vmatpush.msra.mxu0 0.0
      %2217 = vmatpush.msra.mxu0 0.0
      %2218 = vmatpush.msra.mxu0 0.0
      %2219 = vmatpush.msra.mxu0 0.0
      %2220 = vmatpush.msra.mxu0 0.0
      %2221 = vmatpush.msra.mxu0 0.0
      %2222 = vmatpush.msra.mxu0 0.0
      %2223 = vmatpush.msra.mxu0 0.0
      %2224 = vmatpush.msra.mxu0 0.0
      %2225 = vmatpush.msra.mxu0 %v2185
      %2226 = vmatmul.f32.gmra.mxu0 %v2187
      %v2227 = vpop.f32.mrf.mxu0
      %v2228 = vadd.f32 0.0, %v2227
      %2229 = vmatmul.f32.gmra.mxu0 %v2190
      %v2230 = vpop.f32.mrf.mxu0
      %v2231 = vadd.f32 0.0, %v2230
      %2232 = vmatmul.f32.gmra.mxu0 %v2193
      %v2233 = vpop.f32.mrf.mxu0
      %v2234 = vadd.f32 0.0, %v2233
      %2235 = vmatmul.f32.gmra.mxu0 %v2196
      %v2236 = vpop.f32.mrf.mxu0
      %v2237 = vadd.f32 0.0, %v2236
      %2238 = vmatmul.f32.gmra.mxu0 %v2199
      %v2239 = vpop.f32.mrf.mxu0
      %v2240 = vadd.f32 0.0, %v2239
      %2241 = vmatmul.f32.gmra.mxu0 %v2202
      %v2242 = vpop.f32.mrf.mxu0
      %v2243 = vadd.f32 0.0, %v2242
      %2244 = vmatmul.f32.gmra.mxu0 %v2205
      %v2245 = vpop.f32.mrf.mxu0
      %v2246 = vadd.f32 0.0, %v2245
      %2247 = vmatmul.f32.gmra.mxu0 %v2208
      %v2248 = vpop.f32.mrf.mxu0
      %v2249 = vadd.f32 0.0, %v2248
      %2250 = vdwg.mxu0
      %v2251 = vadd.f32 %v2113, %v2228
      %v2252 = vadd.f32 %v2114, %v2231
      %v2253 = vadd.f32 %v2115, %v2234
      %v2254 = vadd.f32 %v2116, %v2237
      %v2255 = vadd.f32 %v2117, %v2240
      %v2256 = vadd.f32 %v2118, %v2243
      %v2257 = vadd.f32 %v2119, %v2246
      %v2258 = vadd.f32 %v2120, %v2249
      %v2259 = vld [vmem:[#allocation2 + $0x1] sm:$0xff]
      %v2260 = vld [vmem:[#allocation2 + $0x11] sm:$0xff]
      %v2261 = vld [vmem:[#allocation2 + $0x21] sm:$0xff]
      %v2262 = vld [vmem:[#allocation2 + $0x31] sm:$0xff]
      %v2263 = vld [vmem:[#allocation2 + $0x41] sm:$0xff]
      %v2264 = vld [vmem:[#allocation2 + $0x51] sm:$0xff]
      %v2265 = vld [vmem:[#allocation2 + $0x61] sm:$0xff]
      %v2266 = vld [vmem:[#allocation2 + $0x71] sm:$0xff]
      %s2267 = scalar_lea.vmem %s5, 152
      %v2268 = vld [vmem:[%s2267] sm:$0xff]
      %v2270 = vsel %vm578, %v2259, 0
      %v2273 = vsel %vm578, %v2260, 0
      %v2276 = vsel %vm578, %v2261, 0
      %v2279 = vsel %vm578, %v2262, 0
      %v2282 = vsel %vm578, %v2263, 0
      %v2285 = vsel %vm578, %v2264, 0
      %v2288 = vsel %vm578, %v2265, 0
      %v2291 = vsel %vm578, %v2266, 0
      %2293 = vmatpush.msra.mxu0 0.0
      %2294 = vmatpush.msra.mxu0 0.0
      %2295 = vmatpush.msra.mxu0 0.0
      %2296 = vmatpush.msra.mxu0 0.0
      %2297 = vmatpush.msra.mxu0 0.0
      %2298 = vmatpush.msra.mxu0 0.0
      %2299 = vmatpush.msra.mxu0 0.0
      %2300 = vmatpush.msra.mxu0 0.0
      %2301 = vmatpush.msra.mxu0 0.0
      %2302 = vmatpush.msra.mxu0 0.0
      %2303 = vmatpush.msra.mxu0 0.0
      %2304 = vmatpush.msra.mxu0 0.0
      %2305 = vmatpush.msra.mxu0 0.0
      %2306 = vmatpush.msra.mxu0 0.0
      %2307 = vmatpush.msra.mxu0 0.0
      %2308 = vmatpush.msra.mxu0 %v2268
      %2309 = vmatmul.f32.gmra.mxu0 %v2270
      %v2310 = vpop.f32.mrf.mxu0
      %v2311 = vadd.f32 0.0, %v2310
      %2312 = vmatmul.f32.gmra.mxu0 %v2273
      %v2313 = vpop.f32.mrf.mxu0
      %v2314 = vadd.f32 0.0, %v2313
      %2315 = vmatmul.f32.gmra.mxu0 %v2276
      %v2316 = vpop.f32.mrf.mxu0
      %v2317 = vadd.f32 0.0, %v2316
      %2318 = vmatmul.f32.gmra.mxu0 %v2279
      %v2319 = vpop.f32.mrf.mxu0
      %v2320 = vadd.f32 0.0, %v2319
      %2321 = vmatmul.f32.gmra.mxu0 %v2282
      %v2322 = vpop.f32.mrf.mxu0
      %v2323 = vadd.f32 0.0, %v2322
      %2324 = vmatmul.f32.gmra.mxu0 %v2285
      %v2325 = vpop.f32.mrf.mxu0
      %v2326 = vadd.f32 0.0, %v2325
      %2327 = vmatmul.f32.gmra.mxu0 %v2288
      %v2328 = vpop.f32.mrf.mxu0
      %v2329 = vadd.f32 0.0, %v2328
      %2330 = vmatmul.f32.gmra.mxu0 %v2291
      %v2331 = vpop.f32.mrf.mxu0
      %v2332 = vadd.f32 0.0, %v2331
      %2333 = vdwg.mxu0
      %v2334 = vadd.f32 %v2251, %v2311
      %v2335 = vadd.f32 %v2252, %v2314
      %v2336 = vadd.f32 %v2253, %v2317
      %v2337 = vadd.f32 %v2254, %v2320
      %v2338 = vadd.f32 %v2255, %v2323
      %v2339 = vadd.f32 %v2256, %v2326
      %v2340 = vadd.f32 %v2257, %v2329
      %v2341 = vadd.f32 %v2258, %v2332
      %v2342 = vld [vmem:[#allocation2 + $0x2] sm:$0xff]
      %v2343 = vld [vmem:[#allocation2 + $0x12] sm:$0xff]
      %v2344 = vld [vmem:[#allocation2 + $0x22] sm:$0xff]
      %v2345 = vld [vmem:[#allocation2 + $0x32] sm:$0xff]
      %v2346 = vld [vmem:[#allocation2 + $0x42] sm:$0xff]
      %v2347 = vld [vmem:[#allocation2 + $0x52] sm:$0xff]
      %v2348 = vld [vmem:[#allocation2 + $0x62] sm:$0xff]
      %v2349 = vld [vmem:[#allocation2 + $0x72] sm:$0xff]
      %s2350 = scalar_lea.vmem %s5, 160
      %v2351 = vld [vmem:[%s2350] sm:$0xff]
      %v2353 = vsel %vm578, %v2342, 0
      %v2356 = vsel %vm578, %v2343, 0
      %v2359 = vsel %vm578, %v2344, 0
      %v2362 = vsel %vm578, %v2345, 0
      %v2365 = vsel %vm578, %v2346, 0
      %v2368 = vsel %vm578, %v2347, 0
      %v2371 = vsel %vm578, %v2348, 0
      %v2374 = vsel %vm578, %v2349, 0
      %2376 = vmatpush.msra.mxu0 0.0
      %2377 = vmatpush.msra.mxu0 0.0
      %2378 = vmatpush.msra.mxu0 0.0
      %2379 = vmatpush.msra.mxu0 0.0
      %2380 = vmatpush.msra.mxu0 0.0
      %2381 = vmatpush.msra.mxu0 0.0
      %2382 = vmatpush.msra.mxu0 0.0
      %2383 = vmatpush.msra.mxu0 0.0
      %2384 = vmatpush.msra.mxu0 0.0
      %2385 = vmatpush.msra.mxu0 0.0
      %2386 = vmatpush.msra.mxu0 0.0
      %2387 = vmatpush.msra.mxu0 0.0
      %2388 = vmatpush.msra.mxu0 0.0
      %2389 = vmatpush.msra.mxu0 0.0
      %2390 = vmatpush.msra.mxu0 0.0
      %2391 = vmatpush.msra.mxu0 %v2351
      %2392 = vmatmul.f32.gmra.mxu0 %v2353
      %v2393 = vpop.f32.mrf.mxu0
      %v2394 = vadd.f32 0.0, %v2393
      %2395 = vmatmul.f32.gmra.mxu0 %v2356
      %v2396 = vpop.f32.mrf.mxu0
      %v2397 = vadd.f32 0.0, %v2396
      %2398 = vmatmul.f32.gmra.mxu0 %v2359
      %v2399 = vpop.f32.mrf.mxu0
      %v2400 = vadd.f32 0.0, %v2399
      %2401 = vmatmul.f32.gmra.mxu0 %v2362
      %v2402 = vpop.f32.mrf.mxu0
      %v2403 = vadd.f32 0.0, %v2402
      %2404 = vmatmul.f32.gmra.mxu0 %v2365
      %v2405 = vpop.f32.mrf.mxu0
      %v2406 = vadd.f32 0.0, %v2405
      %2407 = vmatmul.f32.gmra.mxu0 %v2368
      %v2408 = vpop.f32.mrf.mxu0
      %v2409 = vadd.f32 0.0, %v2408
      %2410 = vmatmul.f32.gmra.mxu0 %v2371
      %v2411 = vpop.f32.mrf.mxu0
      %v2412 = vadd.f32 0.0, %v2411
      %2413 = vmatmul.f32.gmra.mxu0 %v2374
      %v2414 = vpop.f32.mrf.mxu0
      %v2415 = vadd.f32 0.0, %v2414
      %2416 = vdwg.mxu0
      %v2417 = vadd.f32 %v2334, %v2394
      %v2418 = vadd.f32 %v2335, %v2397
      %v2419 = vadd.f32 %v2336, %v2400
      %v2420 = vadd.f32 %v2337, %v2403
      %v2421 = vadd.f32 %v2338, %v2406
      %v2422 = vadd.f32 %v2339, %v2409
      %v2423 = vadd.f32 %v2340, %v2412
      %v2424 = vadd.f32 %v2341, %v2415
      %v2425 = vld [vmem:[%s577] sm:$0xff]
      %v2426 = vld [vmem:[%s577 + $0x10] sm:$0xff]
      %v2427 = vld [vmem:[%s577 + $0x20] sm:$0xff]
      %v2428 = vld [vmem:[%s577 + $0x30] sm:$0xff]
      %v2429 = vld [vmem:[%s577 + $0x40] sm:$0xff]
      %v2430 = vld [vmem:[%s577 + $0x50] sm:$0xff]
      %v2431 = vld [vmem:[%s577 + $0x60] sm:$0xff]
      %v2432 = vld [vmem:[%s577 + $0x70] sm:$0xff]
      %s2433 = scalar_lea.vmem %s5, 168
      %v2434 = vld [vmem:[%s2433] sm:$0xff]
      %v2436 = vsel %vm578, %v2425, 0
      %v2439 = vsel %vm578, %v2426, 0
      %v2442 = vsel %vm578, %v2427, 0
      %v2445 = vsel %vm578, %v2428, 0
      %v2448 = vsel %vm578, %v2429, 0
      %v2451 = vsel %vm578, %v2430, 0
      %v2454 = vsel %vm578, %v2431, 0
      %v2457 = vsel %vm578, %v2432, 0
      %2459 = vmatpush.msra.mxu0 0.0
      %2460 = vmatpush.msra.mxu0 0.0
      %2461 = vmatpush.msra.mxu0 0.0
      %2462 = vmatpush.msra.mxu0 0.0
      %2463 = vmatpush.msra.mxu0 0.0
      %2464 = vmatpush.msra.mxu0 0.0
      %2465 = vmatpush.msra.mxu0 0.0
      %2466 = vmatpush.msra.mxu0 0.0
      %2467 = vmatpush.msra.mxu0 0.0
      %2468 = vmatpush.msra.mxu0 0.0
      %2469 = vmatpush.msra.mxu0 0.0
      %2470 = vmatpush.msra.mxu0 0.0
      %2471 = vmatpush.msra.mxu0 0.0
      %2472 = vmatpush.msra.mxu0 0.0
      %2473 = vmatpush.msra.mxu0 0.0
      %2474 = vmatpush.msra.mxu0 %v2434
      %2475 = vmatmul.f32.gmra.mxu0 %v2436
      %v2476 = vpop.f32.mrf.mxu0
      %v2477 = vadd.f32 0.0, %v2476
      %2478 = vmatmul.f32.gmra.mxu0 %v2439
      %v2479 = vpop.f32.mrf.mxu0
      %v2480 = vadd.f32 0.0, %v2479
      %2481 = vmatmul.f32.gmra.mxu0 %v2442
      %v2482 = vpop.f32.mrf.mxu0
      %v2483 = vadd.f32 0.0, %v2482
      %2484 = vmatmul.f32.gmra.mxu0 %v2445
      %v2485 = vpop.f32.mrf.mxu0
      %v2486 = vadd.f32 0.0, %v2485
      %2487 = vmatmul.f32.gmra.mxu0 %v2448
      %v2488 = vpop.f32.mrf.mxu0
      %v2489 = vadd.f32 0.0, %v2488
      %2490 = vmatmul.f32.gmra.mxu0 %v2451
      %v2491 = vpop.f32.mrf.mxu0
      %v2492 = vadd.f32 0.0, %v2491
      %2493 = vmatmul.f32.gmra.mxu0 %v2454
      %v2494 = vpop.f32.mrf.mxu0
      %v2495 = vadd.f32 0.0, %v2494
      %2496 = vmatmul.f32.gmra.mxu0 %v2457
      %v2497 = vpop.f32.mrf.mxu0
      %v2498 = vadd.f32 0.0, %v2497
      %2499 = vdwg.mxu0
      %v2500 = vadd.f32 %v2417, %v2477
      %v2501 = vadd.f32 %v2418, %v2480
      %v2502 = vadd.f32 %v2419, %v2483
      %v2503 = vadd.f32 %v2420, %v2486
      %v2504 = vadd.f32 %v2421, %v2489
      %v2505 = vadd.f32 %v2422, %v2492
      %v2506 = vadd.f32 %v2423, %v2495
      %v2507 = vadd.f32 %v2424, %v2498
      %v2508 = vld [vmem:[%s577 + $0x1] sm:$0xff]
      %v2509 = vld [vmem:[%s577 + $0x11] sm:$0xff]
      %v2510 = vld [vmem:[%s577 + $0x21] sm:$0xff]
      %v2511 = vld [vmem:[%s577 + $0x31] sm:$0xff]
      %v2512 = vld [vmem:[%s577 + $0x41] sm:$0xff]
      %v2513 = vld [vmem:[%s577 + $0x51] sm:$0xff]
      %v2514 = vld [vmem:[%s577 + $0x61] sm:$0xff]
      %v2515 = vld [vmem:[%s577 + $0x71] sm:$0xff]
      %s2516 = scalar_lea.vmem %s5, 176
      %v2517 = vld [vmem:[%s2516] sm:$0xff]
      %v2519 = vsel %vm578, %v2508, 0
      %v2522 = vsel %vm578, %v2509, 0
      %v2525 = vsel %vm578, %v2510, 0
      %v2528 = vsel %vm578, %v2511, 0
      %v2531 = vsel %vm578, %v2512, 0
      %v2534 = vsel %vm578, %v2513, 0
      %v2537 = vsel %vm578, %v2514, 0
      %v2540 = vsel %vm578, %v2515, 0
      %2542 = vmatpush.msra.mxu0 0.0
      %2543 = vmatpush.msra.mxu0 0.0
      %2544 = vmatpush.msra.mxu0 0.0
      %2545 = vmatpush.msra.mxu0 0.0
      %2546 = vmatpush.msra.mxu0 0.0
      %2547 = vmatpush.msra.mxu0 0.0
      %2548 = vmatpush.msra.mxu0 0.0
      %2549 = vmatpush.msra.mxu0 0.0
      %2550 = vmatpush.msra.mxu0 0.0
      %2551 = vmatpush.msra.mxu0 0.0
      %2552 = vmatpush.msra.mxu0 0.0
      %2553 = vmatpush.msra.mxu0 0.0
      %2554 = vmatpush.msra.mxu0 0.0
      %2555 = vmatpush.msra.mxu0 0.0
      %2556 = vmatpush.msra.mxu0 0.0
      %2557 = vmatpush.msra.mxu0 %v2517
      %2558 = vmatmul.f32.gmra.mxu0 %v2519
      %v2559 = vpop.f32.mrf.mxu0
      %v2560 = vadd.f32 0.0, %v2559
      %2561 = vmatmul.f32.gmra.mxu0 %v2522
      %v2562 = vpop.f32.mrf.mxu0
      %v2563 = vadd.f32 0.0, %v2562
      %2564 = vmatmul.f32.gmra.mxu0 %v2525
      %v2565 = vpop.f32.mrf.mxu0
      %v2566 = vadd.f32 0.0, %v2565
      %2567 = vmatmul.f32.gmra.mxu0 %v2528
      %v2568 = vpop.f32.mrf.mxu0
      %v2569 = vadd.f32 0.0, %v2568
      %2570 = vmatmul.f32.gmra.mxu0 %v2531
      %v2571 = vpop.f32.mrf.mxu0
      %v2572 = vadd.f32 0.0, %v2571
      %2573 = vmatmul.f32.gmra.mxu0 %v2534
      %v2574 = vpop.f32.mrf.mxu0
      %v2575 = vadd.f32 0.0, %v2574
      %2576 = vmatmul.f32.gmra.mxu0 %v2537
      %v2577 = vpop.f32.mrf.mxu0
      %v2578 = vadd.f32 0.0, %v2577
      %2579 = vmatmul.f32.gmra.mxu0 %v2540
      %v2580 = vpop.f32.mrf.mxu0
      %v2581 = vadd.f32 0.0, %v2580
      %2582 = vdwg.mxu0
      %v2583 = vadd.f32 %v2500, %v2560
      %v2584 = vadd.f32 %v2501, %v2563
      %v2585 = vadd.f32 %v2502, %v2566
      %v2586 = vadd.f32 %v2503, %v2569
      %v2587 = vadd.f32 %v2504, %v2572
      %v2588 = vadd.f32 %v2505, %v2575
      %v2589 = vadd.f32 %v2506, %v2578
      %v2590 = vadd.f32 %v2507, %v2581
      %v2591 = vld [vmem:[%s577 + $0x2] sm:$0xff]
      %v2592 = vld [vmem:[%s577 + $0x12] sm:$0xff]
      %v2593 = vld [vmem:[%s577 + $0x22] sm:$0xff]
      %v2594 = vld [vmem:[%s577 + $0x32] sm:$0xff]
      %v2595 = vld [vmem:[%s577 + $0x42] sm:$0xff]
      %v2596 = vld [vmem:[%s577 + $0x52] sm:$0xff]
      %v2597 = vld [vmem:[%s577 + $0x62] sm:$0xff]
      %v2598 = vld [vmem:[%s577 + $0x72] sm:$0xff]
      %s2599 = scalar_lea.vmem %s5, 184
      %v2600 = vld [vmem:[%s2599] sm:$0xff]
      %v2602 = vsel %vm578, %v2591, 0
      %v2605 = vsel %vm578, %v2592, 0
      %v2608 = vsel %vm578, %v2593, 0
      %v2611 = vsel %vm578, %v2594, 0
      %v2614 = vsel %vm578, %v2595, 0
      %v2617 = vsel %vm578, %v2596, 0
      %v2620 = vsel %vm578, %v2597, 0
      %v2623 = vsel %vm578, %v2598, 0
      %2625 = vmatpush.msra.mxu0 0.0
      %2626 = vmatpush.msra.mxu0 0.0
      %2627 = vmatpush.msra.mxu0 0.0
      %2628 = vmatpush.msra.mxu0 0.0
      %2629 = vmatpush.msra.mxu0 0.0
      %2630 = vmatpush.msra.mxu0 0.0
      %2631 = vmatpush.msra.mxu0 0.0
      %2632 = vmatpush.msra.mxu0 0.0
      %2633 = vmatpush.msra.mxu0 0.0
      %2634 = vmatpush.msra.mxu0 0.0
      %2635 = vmatpush.msra.mxu0 0.0
      %2636 = vmatpush.msra.mxu0 0.0
      %2637 = vmatpush.msra.mxu0 0.0
      %2638 = vmatpush.msra.mxu0 0.0
      %2639 = vmatpush.msra.mxu0 0.0
      %2640 = vmatpush.msra.mxu0 %v2600
      %2641 = vmatmul.f32.gmra.mxu0 %v2602
      %v2642 = vpop.f32.mrf.mxu0
      %v2643 = vadd.f32 0.0, %v2642
      %2644 = vmatmul.f32.gmra.mxu0 %v2605
      %v2645 = vpop.f32.mrf.mxu0
      %v2646 = vadd.f32 0.0, %v2645
      %2647 = vmatmul.f32.gmra.mxu0 %v2608
      %v2648 = vpop.f32.mrf.mxu0
      %v2649 = vadd.f32 0.0, %v2648
      %2650 = vmatmul.f32.gmra.mxu0 %v2611
      %v2651 = vpop.f32.mrf.mxu0
      %v2652 = vadd.f32 0.0, %v2651
      %2653 = vmatmul.f32.gmra.mxu0 %v2614
      %v2654 = vpop.f32.mrf.mxu0
      %v2655 = vadd.f32 0.0, %v2654
      %2656 = vmatmul.f32.gmra.mxu0 %v2617
      %v2657 = vpop.f32.mrf.mxu0
      %v2658 = vadd.f32 0.0, %v2657
      %2659 = vmatmul.f32.gmra.mxu0 %v2620
      %v2660 = vpop.f32.mrf.mxu0
      %v2661 = vadd.f32 0.0, %v2660
      %2662 = vmatmul.f32.gmra.mxu0 %v2623
      %v2663 = vpop.f32.mrf.mxu0
      %v2664 = vadd.f32 0.0, %v2663
      %2665 = vdwg.mxu0
      %v2666 = vadd.f32 %v2583, %v2643
      %v2667 = vadd.f32 %v2584, %v2646
      %v2668 = vadd.f32 %v2585, %v2649
      %v2669 = vadd.f32 %v2586, %v2652
      %v2670 = vadd.f32 %v2587, %v2655
      %v2671 = vadd.f32 %v2588, %v2658
      %v2672 = vadd.f32 %v2589, %v2661
      %v2673 = vadd.f32 %v2590, %v2664
      %v2674 = vld [vmem:[%s1084] sm:$0xff]
      %v2675 = vld [vmem:[%s1084 + $0x10] sm:$0xff]
      %v2676 = vld [vmem:[%s1084 + $0x20] sm:$0xff]
      %v2677 = vld [vmem:[%s1084 + $0x30] sm:$0xff]
      %v2678 = vld [vmem:[%s1084 + $0x40] sm:$0xff]
      %v2679 = vld [vmem:[%s1084 + $0x50] sm:$0xff]
      %v2680 = vld [vmem:[%s1084 + $0x60] sm:$0xff]
      %v2681 = vld [vmem:[%s1084 + $0x70] sm:$0xff]
      %s2682 = scalar_lea.vmem %s5, 192
      %v2683 = vld [vmem:[%s2682] sm:$0xff]
      %v2685 = vsel %vm578, %v2674, 0
      %v2688 = vsel %vm578, %v2675, 0
      %v2691 = vsel %vm578, %v2676, 0
      %v2694 = vsel %vm578, %v2677, 0
      %v2697 = vsel %vm578, %v2678, 0
      %v2700 = vsel %vm578, %v2679, 0
      %v2703 = vsel %vm578, %v2680, 0
      %v2706 = vsel %vm578, %v2681, 0
      %2708 = vmatpush.msra.mxu0 0.0
      %2709 = vmatpush.msra.mxu0 0.0
      %2710 = vmatpush.msra.mxu0 0.0
      %2711 = vmatpush.msra.mxu0 0.0
      %2712 = vmatpush.msra.mxu0 0.0
      %2713 = vmatpush.msra.mxu0 0.0
      %2714 = vmatpush.msra.mxu0 0.0
      %2715 = vmatpush.msra.mxu0 0.0
      %2716 = vmatpush.msra.mxu0 0.0
      %2717 = vmatpush.msra.mxu0 0.0
      %2718 = vmatpush.msra.mxu0 0.0
      %2719 = vmatpush.msra.mxu0 0.0
      %2720 = vmatpush.msra.mxu0 0.0
      %2721 = vmatpush.msra.mxu0 0.0
      %2722 = vmatpush.msra.mxu0 0.0
      %2723 = vmatpush.msra.mxu0 %v2683
      %2724 = vmatmul.f32.gmra.mxu0 %v2685
      %v2725 = vpop.f32.mrf.mxu0
      %v2726 = vadd.f32 0.0, %v2725
      %2727 = vmatmul.f32.gmra.mxu0 %v2688
      %v2728 = vpop.f32.mrf.mxu0
      %v2729 = vadd.f32 0.0, %v2728
      %2730 = vmatmul.f32.gmra.mxu0 %v2691
      %v2731 = vpop.f32.mrf.mxu0
      %v2732 = vadd.f32 0.0, %v2731
      %2733 = vmatmul.f32.gmra.mxu0 %v2694
      %v2734 = vpop.f32.mrf.mxu0
      %v2735 = vadd.f32 0.0, %v2734
      %2736 = vmatmul.f32.gmra.mxu0 %v2697
      %v2737 = vpop.f32.mrf.mxu0
      %v2738 = vadd.f32 0.0, %v2737
      %2739 = vmatmul.f32.gmra.mxu0 %v2700
      %v2740 = vpop.f32.mrf.mxu0
      %v2741 = vadd.f32 0.0, %v2740
      %2742 = vmatmul.f32.gmra.mxu0 %v2703
      %v2743 = vpop.f32.mrf.mxu0
      %v2744 = vadd.f32 0.0, %v2743
      %2745 = vmatmul.f32.gmra.mxu0 %v2706
      %v2746 = vpop.f32.mrf.mxu0
      %v2747 = vadd.f32 0.0, %v2746
      %2748 = vdwg.mxu0
      %v2749 = vadd.f32 %v2666, %v2726
      %v2750 = vadd.f32 %v2667, %v2729
      %v2751 = vadd.f32 %v2668, %v2732
      %v2752 = vadd.f32 %v2669, %v2735
      %v2753 = vadd.f32 %v2670, %v2738
      %v2754 = vadd.f32 %v2671, %v2741
      %v2755 = vadd.f32 %v2672, %v2744
      %v2756 = vadd.f32 %v2673, %v2747
      %v2757 = vld [vmem:[%s1084 + $0x1] sm:$0xff]
      %v2758 = vld [vmem:[%s1084 + $0x11] sm:$0xff]
      %v2759 = vld [vmem:[%s1084 + $0x21] sm:$0xff]
      %v2760 = vld [vmem:[%s1084 + $0x31] sm:$0xff]
      %v2761 = vld [vmem:[%s1084 + $0x41] sm:$0xff]
      %v2762 = vld [vmem:[%s1084 + $0x51] sm:$0xff]
      %v2763 = vld [vmem:[%s1084 + $0x61] sm:$0xff]
      %v2764 = vld [vmem:[%s1084 + $0x71] sm:$0xff]
      %s2765 = scalar_lea.vmem %s5, 200
      %v2766 = vld [vmem:[%s2765] sm:$0xff]
      %v2768 = vsel %vm578, %v2757, 0
      %v2771 = vsel %vm578, %v2758, 0
      %v2774 = vsel %vm578, %v2759, 0
      %v2777 = vsel %vm578, %v2760, 0
      %v2780 = vsel %vm578, %v2761, 0
      %v2783 = vsel %vm578, %v2762, 0
      %v2786 = vsel %vm578, %v2763, 0
      %v2789 = vsel %vm578, %v2764, 0
      %2791 = vmatpush.msra.mxu0 0.0
      %2792 = vmatpush.msra.mxu0 0.0
      %2793 = vmatpush.msra.mxu0 0.0
      %2794 = vmatpush.msra.mxu0 0.0
      %2795 = vmatpush.msra.mxu0 0.0
      %2796 = vmatpush.msra.mxu0 0.0
      %2797 = vmatpush.msra.mxu0 0.0
      %2798 = vmatpush.msra.mxu0 0.0
      %2799 = vmatpush.msra.mxu0 0.0
      %2800 = vmatpush.msra.mxu0 0.0
      %2801 = vmatpush.msra.mxu0 0.0
      %2802 = vmatpush.msra.mxu0 0.0
      %2803 = vmatpush.msra.mxu0 0.0
      %2804 = vmatpush.msra.mxu0 0.0
      %2805 = vmatpush.msra.mxu0 0.0
      %2806 = vmatpush.msra.mxu0 %v2766
      %2807 = vmatmul.f32.gmra.mxu0 %v2768
      %v2808 = vpop.f32.mrf.mxu0
      %v2809 = vadd.f32 0.0, %v2808
      %2810 = vmatmul.f32.gmra.mxu0 %v2771
      %v2811 = vpop.f32.mrf.mxu0
      %v2812 = vadd.f32 0.0, %v2811
      %2813 = vmatmul.f32.gmra.mxu0 %v2774
      %v2814 = vpop.f32.mrf.mxu0
      %v2815 = vadd.f32 0.0, %v2814
      %2816 = vmatmul.f32.gmra.mxu0 %v2777
      %v2817 = vpop.f32.mrf.mxu0
      %v2818 = vadd.f32 0.0, %v2817
      %2819 = vmatmul.f32.gmra.mxu0 %v2780
      %v2820 = vpop.f32.mrf.mxu0
      %v2821 = vadd.f32 0.0, %v2820
      %2822 = vmatmul.f32.gmra.mxu0 %v2783
      %v2823 = vpop.f32.mrf.mxu0
      %v2824 = vadd.f32 0.0, %v2823
      %2825 = vmatmul.f32.gmra.mxu0 %v2786
      %v2826 = vpop.f32.mrf.mxu0
      %v2827 = vadd.f32 0.0, %v2826
      %2828 = vmatmul.f32.gmra.mxu0 %v2789
      %v2829 = vpop.f32.mrf.mxu0
      %v2830 = vadd.f32 0.0, %v2829
      %2831 = vdwg.mxu0
      %v2832 = vadd.f32 %v2749, %v2809
      %v2833 = vadd.f32 %v2750, %v2812
      %v2834 = vadd.f32 %v2751, %v2815
      %v2835 = vadd.f32 %v2752, %v2818
      %v2836 = vadd.f32 %v2753, %v2821
      %v2837 = vadd.f32 %v2754, %v2824
      %v2838 = vadd.f32 %v2755, %v2827
      %v2839 = vadd.f32 %v2756, %v2830
      %v2840 = vld [vmem:[%s1084 + $0x2] sm:$0xff]
      %v2841 = vld [vmem:[%s1084 + $0x12] sm:$0xff]
      %v2842 = vld [vmem:[%s1084 + $0x22] sm:$0xff]
      %v2843 = vld [vmem:[%s1084 + $0x32] sm:$0xff]
      %v2844 = vld [vmem:[%s1084 + $0x42] sm:$0xff]
      %v2845 = vld [vmem:[%s1084 + $0x52] sm:$0xff]
      %v2846 = vld [vmem:[%s1084 + $0x62] sm:$0xff]
      %v2847 = vld [vmem:[%s1084 + $0x72] sm:$0xff]
      %s2848 = scalar_lea.vmem %s5, 208
      %v2849 = vld [vmem:[%s2848] sm:$0xff]
      %v2851 = vsel %vm578, %v2840, 0
      %v2854 = vsel %vm578, %v2841, 0
      %v2857 = vsel %vm578, %v2842, 0
      %v2860 = vsel %vm578, %v2843, 0
      %v2863 = vsel %vm578, %v2844, 0
      %v2866 = vsel %vm578, %v2845, 0
      %v2869 = vsel %vm578, %v2846, 0
      %v2872 = vsel %vm578, %v2847, 0
      %2874 = vmatpush.msra.mxu0 0.0
      %2875 = vmatpush.msra.mxu0 0.0
      %2876 = vmatpush.msra.mxu0 0.0
      %2877 = vmatpush.msra.mxu0 0.0
      %2878 = vmatpush.msra.mxu0 0.0
      %2879 = vmatpush.msra.mxu0 0.0
      %2880 = vmatpush.msra.mxu0 0.0
      %2881 = vmatpush.msra.mxu0 0.0
      %2882 = vmatpush.msra.mxu0 0.0
      %2883 = vmatpush.msra.mxu0 0.0
      %2884 = vmatpush.msra.mxu0 0.0
      %2885 = vmatpush.msra.mxu0 0.0
      %2886 = vmatpush.msra.mxu0 0.0
      %2887 = vmatpush.msra.mxu0 0.0
      %2888 = vmatpush.msra.mxu0 0.0
      %2889 = vmatpush.msra.mxu0 %v2849
      %2890 = vmatmul.f32.gmra.mxu0 %v2851
      %v2891 = vpop.f32.mrf.mxu0
      %v2892 = vadd.f32 0.0, %v2891
      %2893 = vmatmul.f32.gmra.mxu0 %v2854
      %v2894 = vpop.f32.mrf.mxu0
      %v2895 = vadd.f32 0.0, %v2894
      %2896 = vmatmul.f32.gmra.mxu0 %v2857
      %v2897 = vpop.f32.mrf.mxu0
      %v2898 = vadd.f32 0.0, %v2897
      %2899 = vmatmul.f32.gmra.mxu0 %v2860
      %v2900 = vpop.f32.mrf.mxu0
      %v2901 = vadd.f32 0.0, %v2900
      %2902 = vmatmul.f32.gmra.mxu0 %v2863
      %v2903 = vpop.f32.mrf.mxu0
      %v2904 = vadd.f32 0.0, %v2903
      %2905 = vmatmul.f32.gmra.mxu0 %v2866
      %v2906 = vpop.f32.mrf.mxu0
      %v2907 = vadd.f32 0.0, %v2906
      %2908 = vmatmul.f32.gmra.mxu0 %v2869
      %v2909 = vpop.f32.mrf.mxu0
      %v2910 = vadd.f32 0.0, %v2909
      %2911 = vmatmul.f32.gmra.mxu0 %v2872
      %v2912 = vpop.f32.mrf.mxu0
      %v2913 = vadd.f32 0.0, %v2912
      %2914 = vdwg.mxu0
      %v2915 = vadd.f32 %v2832, %v2892
      %v2916 = vadd.f32 %v2833, %v2895
      %v2917 = vadd.f32 %v2834, %v2898
      %v2918 = vadd.f32 %v2835, %v2901
      %v2919 = vadd.f32 %v2836, %v2904
      %v2920 = vadd.f32 %v2837, %v2907
      %v2921 = vadd.f32 %v2838, %v2910
      %v2922 = vadd.f32 %v2839, %v2913
      %vm2923 = vcmp.gt.f32.partialorder %v2915, 0.0
      %vm2924 = vcmp.gt.f32.partialorder %v2916, 0.0
      %vm2925 = vcmp.gt.f32.partialorder %v2917, 0.0
      %vm2926 = vcmp.gt.f32.partialorder %v2918, 0.0
      %vm2927 = vcmp.gt.f32.partialorder %v2919, 0.0
      %vm2928 = vcmp.gt.f32.partialorder %v2920, 0.0
      %vm2929 = vcmp.gt.f32.partialorder %v2921, 0.0
      %vm2930 = vcmp.gt.f32.partialorder %v2922, 0.0
      %v2931 = vmul.f32 %v2915, 0.01
      %v2932 = vmul.f32 %v2916, 0.01
      %v2933 = vmul.f32 %v2917, 0.01
      %v2934 = vmul.f32 %v2918, 0.01
      %v2935 = vmul.f32 %v2919, 0.01
      %v2936 = vmul.f32 %v2920, 0.01
      %v2937 = vmul.f32 %v2921, 0.01
      %v2938 = vmul.f32 %v2922, 0.01
      %v2939 = vsel %vm2923, %v2915, %v2931
      %v2940 = vsel %vm2924, %v2916, %v2932
      %v2941 = vsel %vm2925, %v2917, %v2933
      %v2942 = vsel %vm2926, %v2918, %v2934
      %v2943 = vsel %vm2927, %v2919, %v2935
      %v2944 = vsel %vm2928, %v2920, %v2936
      %v2945 = vsel %vm2929, %v2921, %v2937
      %v2946 = vsel %vm2930, %v2922, %v2938
      %2947 = vst.msk [vmem:[%s489] sm:$0xff] %vm578, %v2939
      %2948 = vst.msk [vmem:[%s489 + $0x8] sm:$0xff] %vm578, %v2940
      %2949 = vst.msk [vmem:[%s489 + $0x10] sm:$0xff] %vm578, %v2941
      %2950 = vst.msk [vmem:[%s489 + $0x18] sm:$0xff] %vm578, %v2942
      %2951 = vst.msk [vmem:[%s489 + $0x20] sm:$0xff] %vm578, %v2943
      %2952 = vst.msk [vmem:[%s489 + $0x28] sm:$0xff] %vm578, %v2944
      %2953 = vst.msk [vmem:[%s489 + $0x30] sm:$0xff] %vm578, %v2945
      %2954 = vst.msk [vmem:[%s489 + $0x38] sm:$0xff] %vm578, %v2946
      %v2955 = vld [vmem:[%s492] sm:$0x1]
      %v2956 = vsel %vm578, %v2939, 0.0
      %v2957 = vsel %vm578, %v2940, 0.0
      %v2958 = vadd.f32 %v2956, %v2957
      %v2959 = vsel %vm578, %v2941, 0.0
      %v2960 = vadd.f32 %v2958, %v2959
      %v2961 = vsel %vm578, %v2942, 0.0
      %v2962 = vadd.f32 %v2960, %v2961
      %v2963 = vsel %vm578, %v2943, 0.0
      %v2964 = vadd.f32 %v2962, %v2963
      %v2965 = vsel %vm578, %v2944, 0.0
      %v2966 = vadd.f32 %v2964, %v2965
      %v2967 = vsel %vm578, %v2945, 0.0
      %v2968 = vadd.f32 %v2966, %v2967
      %v2969 = vsel %vm578, %v2946, 0.0
      %v2970 = vadd.f32 %v2968, %v2969
      %v2971 = vrot.slane %v2970, 4
      %v2972 = vadd.f32 %v2970, %v2971
      %v2973 = vrot.slane %v2972, 2
      %v2974 = vadd.f32 %v2972, %v2973
      %v2975 = vrot.slane %v2974, 1
      %v2976 = vadd.f32 %v2974, %v2975
      %v2977 = vadd.f32 %v2955, %v2976
      %vm2978 = vcmask 57344
      %2979 = vst.msk [vmem:[%s492] sm:$0x1] %vm2978, %v2977
      %v2980 = vld [vmem:[%s495] sm:$0x1]
      %v2981 = vmul.f32 %v2939, %v2939
      %v2982 = vmul.f32 %v2940, %v2940
      %v2983 = vmul.f32 %v2941, %v2941
      %v2984 = vmul.f32 %v2942, %v2942
      %v2985 = vmul.f32 %v2943, %v2943
      %v2986 = vmul.f32 %v2944, %v2944
      %v2987 = vmul.f32 %v2945, %v2945
      %v2988 = vmul.f32 %v2946, %v2946
      %v2989 = vsel %vm578, %v2981, 0.0
      %v2990 = vsel %vm578, %v2982, 0.0
      %v2991 = vadd.f32 %v2989, %v2990
      %v2992 = vsel %vm578, %v2983, 0.0
      %v2993 = vadd.f32 %v2991, %v2992
      %v2994 = vsel %vm578, %v2984, 0.0
      %v2995 = vadd.f32 %v2993, %v2994
      %v2996 = vsel %vm578, %v2985, 0.0
      %v2997 = vadd.f32 %v2995, %v2996
      %v2998 = vsel %vm578, %v2986, 0.0
      %v2999 = vadd.f32 %v2997, %v2998
      %v3000 = vsel %vm578, %v2987, 0.0
      %v3001 = vadd.f32 %v2999, %v3000
      %v3002 = vsel %vm578, %v2988, 0.0
      %v3003 = vadd.f32 %v3001, %v3002
      %v3004 = vrot.slane %v3003, 4
      %v3005 = vadd.f32 %v3003, %v3004
      %v3006 = vrot.slane %v3005, 2
      %v3007 = vadd.f32 %v3005, %v3006
      %v3008 = vrot.slane %v3007, 1
      %v3009 = vadd.f32 %v3007, %v3008
      %v3010 = vadd.f32 %v2980, %v3009
      %3011 = vst.msk [vmem:[%s495] sm:$0x1] %vm2978, %v3010
      %p3012 = scmp.lt.s32.totalorder %s25, 1
      %s3013 = scalar_select %p3012, %s25, 1
      %p3014 = scmp.lt.s32.totalorder %s26, 7
      %s3015 = scalar_select %p3014, %s26, 7
      %s3016 = smul.addr %s3015, 8
      %s3017 = smul.addr %s3013, 64
      %s3018 = sadd.s32 %s3016, %s3017
      %s3019 = smul.addr %s3018, 8
      %s3020 = scalar_lea.vmem %s7, %s3019
      %p3021 = scmp.lt.s32.totalorder %s25, 1
      %s3022 = scalar_select %p3021, %s25, 1
      %s3023 = scalar_lea.vmem %s8, %s3022
      %p3024 = scmp.lt.s32.totalorder %s25, 1
      %s3025 = scalar_select %p3024, %s25, 1
      %s3026 = scalar_lea.vmem %s9, %s3025
      // Predicated region
      $region53: #{unet_dblock_forward.4} parent=47 // pred_check
        %p3027 = pneg %p233
      $region54: #{unet_dblock_forward.4} parent=47 // pred_check_branch
        %3029 = sbr.rel (%p3027) target = $region56
      $region55: #{unet_dblock_forward.4} parent=47 // pred_region
        _
      $region56: #{unet_dblock_forward.4} parent=47 // pred_fallthru
        _
      // Predicated region
      $region57: #{unet_dblock_forward.4} parent=47 // pred_check
        %p3030 = pneg %p259
      $region58: #{unet_dblock_forward.4} parent=47 // pred_check_branch
        %3032 = sbr.rel (%p3030) target = $region60
      $region59: #{unet_dblock_forward.4} parent=47 // pred_region
        _
      $region60: #{unet_dblock_forward.4} parent=47 // pred_fallthru
        _
      // Predicated region
      $region61: #{unet_dblock_forward.4} parent=47 // pred_check
        %p3033 = pneg %p285
      $region62: #{unet_dblock_forward.4} parent=47 // pred_check_branch
        %3035 = sbr.rel (%p3033) target = $region64
      $region63: #{unet_dblock_forward.4} parent=47 // pred_region
        _
      $region64: #{unet_dblock_forward.4} parent=47 // pred_fallthru
        _
    $region48: #{unet_dblock_forward.4} parent=5 // pred_fallthru
      _
    %p3036 = scmp.le.s32.totalorder 2, %s16
    // Predicated region
    $region65: #{unet_dblock_forward.4} parent=5 // pred_check
      %p3037 = pneg %p3036
    $region66: #{unet_dblock_forward.4} parent=5 // pred_check_branch
      %3039 = sbr.rel (%p3037) target = $region68
    $region67: #{unet_dblock_forward.4} parent=5 // pred_region
      %s3040 = ssub.s32 %s16, 2
      // Predicated region
      $region69: #{unet_dblock_forward.4} parent=67 // pred_check
        %p3041 = pneg %p239
      $region70: #{unet_dblock_forward.4} parent=67 // pred_check_branch
        %3043 = sbr.rel (%p3041) target = $region72
      $region71: #{unet_dblock_forward.4} parent=67 // pred_region
        %p3044 = scmp.lt.s32.totalorder %s27, 1
        %s3045 = scalar_select %p3044, %s27, 1
        %p3046 = scmp.lt.s32.totalorder %s28, 7
        %s3047 = scalar_select %p3046, %s28, 7
        %s3048 = smul.addr %s3047, 8
        %s3049 = smul.addr %s3045, 64
        %s3050 = sadd.s32 %s3048, %s3049
        %s3051 = smul.addr %s3050, 8
        %s3052 = scalar_lea.vmem %s7, %s3051
      $region72: #{unet_dblock_forward.4} parent=67 // pred_fallthru
        _
      // Predicated region
      $region73: #{unet_dblock_forward.4} parent=67 // pred_check
        %p3053 = pneg %p265
      $region74: #{unet_dblock_forward.4} parent=67 // pred_check_branch
        %3055 = sbr.rel (%p3053) target = $region76
      $region75: #{unet_dblock_forward.4} parent=67 // pred_region
        %p3056 = scmp.lt.s32.totalorder %s27, 1
        %s3057 = scalar_select %p3056, %s27, 1
        %s3058 = scalar_lea.vmem %s8, %s3057
      $region76: #{unet_dblock_forward.4} parent=67 // pred_fallthru
        _
      // Predicated region
      $region77: #{unet_dblock_forward.4} parent=67 // pred_check
        %p3059 = pneg %p291
      $region78: #{unet_dblock_forward.4} parent=67 // pred_check_branch
        %3061 = sbr.rel (%p3059) target = $region80
      $region79: #{unet_dblock_forward.4} parent=67 // pred_region
        %p3062 = scmp.lt.s32.totalorder %s27, 1
        %s3063 = scalar_select %p3062, %s27, 1
        %s3064 = scalar_lea.vmem %s9, %s3063
      $region80: #{unet_dblock_forward.4} parent=67 // pred_fallthru
        _
    $region68: #{unet_dblock_forward.4} parent=5 // pred_fallthru
      _
  $region6: #{unet_dblock_forward.4} parent=0 // loop_footer
    %s20 = sadd.s32 1, %s16
  $region7: #{unet_dblock_forward.4} parent=0 // loop_footer_branch
    %15 = sbr.rel target = $region3
  $region8: #{unet_dblock_forward.4} parent=0 // loop_exit
    _

</llo_original>
